<compile_context>
chip_gen: v6e
topology: v6e:2x2x1
jax: 0.10.0
libtpu: 0.0.40
codegen_flags: <defaults>
</compile_context>

<pallas_src>
import numpy as np

import jax
import jax.numpy as jnp
from jax.experimental import pallas as pl
from jax.experimental.pallas import tpu as pltpu


# ----------------------------------------------------------------------------
# Static geometry (batch fixed at 2, input 1x12x12)
# ----------------------------------------------------------------------------
N = 2                       # batch
H0 = W0 = 12                # input spatial size

HP1 = WP1 = 14              # conv1 padded grid (12 + 2*1); valid conv1 output 13x13
R1_VALID = N * HP1 * WP1    # 392 real rows
R1P = 400                   # rows of the pre-maxed pool-1 operand / s1 columns
R1Y = 416                   # conv1 output rows computed (>= R1P + max pool shift 15)
R1_FLAT = 432               # padded flat input length (>= R1Y + 15)

HP2 = WP2 = 8               # conv2 / conv3 padded grid (6 + 2*1)
R2 = N * HP2 * WP2          # 128
R2_ALLOC = 160              # x2 rows (>= 128 + max conv2 tap shift 18)
R3_ALLOC = 144              # x3 rows (>= 128 + max conv3 tap shift 9)
R3Y = 144                   # y3 rows (128 + zeroed tail for pool-2 shifted max)

POOL_ROWS = 80              # pool-2 rows: (ph*3+pw)*8 + n  (9 spatial blocks of 8)

# wbuf (lane-128 bf16 constant buffer) row offsets
W2_OFF = 0                  # (288, 128) conv2 taps
S2_OFF = 288                # (144, 128) conv2->conv3 re-embed selection
S3_OFF = 432                # ( 80, 128) pool-2 selection (pre-maxed)
W5_OFF = 512                # (256, 128) fc2 weight (cols 64:128 zero)
W6_OFF = 768                # (128, 128) head weight (rows 64:, cols 2: zero)
WBUF_ROWS = 896

_VMEM = pl.BlockSpec(memory_space=pltpu.MemorySpace.VMEM)
_ANY = pl.BlockSpec(memory_space=pl.ANY)


# ----------------------------------------------------------------------------
# Fused forward kernel
# ----------------------------------------------------------------------------
def _cnn_fused_kernel(x1_ref, cb_ref, wb_ref, s1_ref, w3_hbm, w4_hbm, o_ref,
                      w3_vmem, w4_vmem, y1_ref, x2_ref, x3_ref, y3_ref, sem):
    f32 = jnp.float32
    bf16 = jnp.bfloat16

    # Kick off the big late-layer weight DMAs so they overlap conv1/pool1/conv2.
    cp3 = pltpu.make_async_copy(w3_hbm, w3_vmem, sem.at[0])
    cp4 = pltpu.make_async_copy(w4_hbm, w4_vmem, sem.at[1])
    cp3.start()
    cp4.start()

    # ---- layer1: Conv2d(1->32, k=2, p=1) + ReLU on the padded 14x14 grid.
    # Input is pre-im2col'd (lane-resident taps): one (416,8)@(8,32) matmul.
    w1 = cb_ref[0:8, 0:32]
    b1 = cb_ref[8:9, 0:32]
    a1 = jnp.dot(x1_ref[...], w1, preferred_element_type=f32) + b1
    y1_ref[...] = jnp.maximum(a1, 0.0).astype(bf16)                     # (416, 32)

    # ---- MaxPool2d(2,2): VPU pre-max over the 4 shifted row slices, then ONE
    # 0/1 selection matmul re-embedding into conv2's zero-padded 8x8 grid.
    m1 = jnp.maximum(jnp.maximum(y1_ref[0:R1P, :], y1_ref[1:R1P + 1, :]),
                     jnp.maximum(y1_ref[WP1:WP1 + R1P, :],
                                 y1_ref[WP1 + 1:WP1 + 1 + R1P, :]))     # (400, 32)
    x2_ref[...] = jnp.dot(s1_ref[...], m1,
                          preferred_element_type=f32).astype(bf16)      # (160, 32)

    # ---- layer2: Conv2d(32->128, k=3, p=1) + ReLU (9 shifted MXU taps).
    b2 = cb_ref[9:10, 0:128]
    acc2 = jnp.zeros((R2, 128), f32)
    for t in range(9):
        i, j = divmod(t, 3)
        sh = i * WP2 + j
        acc2 = acc2 + jnp.dot(x2_ref[sh:sh + R2, :],
                              wb_ref[W2_OFF + t * 32:W2_OFF + (t + 1) * 32, :],
                              preferred_element_type=f32)
    y2 = jnp.maximum(acc2 + b2, 0.0).astype(bf16)                        # (128, 128)

    # ---- re-embed conv2's valid 6x6 output into conv3's padded 8x8 grid.
    x3_ref[...] = jnp.dot(wb_ref[S2_OFF:S2_OFF + R3_ALLOC, :], y2,
                          preferred_element_type=f32).astype(bf16)       # (144, 128)

    # ---- layer3: Conv2d(128->256, k=2, p=1) + ReLU (4 shifted MXU taps).
    cp3.wait()                                     # w3 must be resident from here
    b3 = cb_ref[10:11, 0:256]
    acc3 = jnp.zeros((R2, 256), f32)
    for t in range(4):
        i, j = divmod(t, 2)
        sh = i * WP2 + j
        acc3 = acc3 + jnp.dot(x3_ref[sh:sh + R2, :],
                              w3_vmem[t * 128:(t + 1) * 128, :],
                              preferred_element_type=f32)
    y3_ref[0:R2, :] = jnp.maximum(acc3 + b3, 0.0).astype(bf16)           # (128, 256)
    y3_ref[R2:R3Y, :] = jnp.zeros((R3Y - R2, 256), bf16)  # finite tail for shifted max

    # ---- MaxPool2d(2,2) over the 7x7 valid region: VPU pre-max + ONE selection
    # matmul into rows (ph*3+pw)*8 + n.
    m3 = jnp.maximum(jnp.maximum(y3_ref[0:R2, :], y3_ref[1:R2 + 1, :]),
                     jnp.maximum(y3_ref[WP2:WP2 + R2, :],
                                 y3_ref[WP2 + 1:WP2 + 1 + R2, :]))       # (128, 256)
    pool = jnp.dot(wb_ref[S3_OFF:S3_OFF + POOL_ROWS, :], m3,
                   preferred_element_type=f32)                           # (80, 256)

    # ---- layer4 fc1: Linear(2304, 256) + ReLU.
    # PyTorch NCHW flatten order absorbed into pre-permuted w4 rows, so the
    # 2304-wide dot decomposes into 9 per-spatial-position 256x256 blocks.
    cp4.wait()                                     # w4 must be resident from here
    b4 = cb_ref[11:12, 0:256]
    acc4 = jnp.zeros((8, 256), f32)
    for s in range(9):
        acc4 = acc4 + jnp.dot(pool[s * 8:(s + 1) * 8, :].astype(bf16),
                              w4_vmem[s * 256:(s + 1) * 256, :],
                              preferred_element_type=f32)
    h4 = jnp.maximum(acc4 + b4, 0.0).astype(bf16)                        # (8, 256)

    # ---- layer4 fc2: Linear(256, 64) + numerically stable sigmoid.
    # Lane-padded to 128 (extra cols produce sigmoid(0)=0.5 which hit zero w6 rows).
    b5 = cb_ref[12:13, 0:128]
    a5 = jnp.dot(h4, wb_ref[W5_OFF:W5_OFF + 256, :],
                 preferred_element_type=f32) + b5
    z = jnp.exp(-jnp.abs(a5))
    h5 = jnp.where(a5 >= 0.0, 1.0 / (1.0 + z), z / (1.0 + z)).astype(bf16)  # (8, 128)

    # ---- fc2 head: Linear(64, 2) (output padded to 128 lanes, sliced in wrapper).
    b6 = cb_ref[13:14, 0:128]
    o_ref[...] = (jnp.dot(h5, wb_ref[W6_OFF:W6_OFF + 128, :],
                          preferred_element_type=f32) + b6).astype(o_ref.dtype)


# ----------------------------------------------------------------------------
# One-time packing: weights, biases, 0/1 selection matrices
# ----------------------------------------------------------------------------
def _selection_matrices():
    # pool-1 (pre-maxed): 13x13 conv1 output -> 6x6 placed at (+1,+1) of conv2's
    # padded 8x8 grid. ONE matrix; src = top-left row of each 2x2 window.
    s1 = np.zeros((R2_ALLOC, R1P), np.float32)
    for n in range(N):
        for ph in range(6):
            for pw in range(6):
                dst = n * 64 + (ph + 1) * 8 + (pw + 1)
                src = n * HP1 * WP1 + (2 * ph) * WP1 + (2 * pw)
                s1[dst, src] = 1.0
    # conv2 valid 6x6 output placed at (+1,+1) of conv3's padded 8x8 grid.
    s2 = np.zeros((R3_ALLOC, R2), np.float32)
    for n in range(N):
        for h in range(6):
            for w in range(6):
                s2[n * 64 + (h + 1) * 8 + (w + 1), n * 64 + h * 8 + w] = 1.0
    # pool-2 (pre-maxed): 7x7 conv3 output -> 3x3; dst rows (ph*3+pw)*8 + n.
    s3 = np.zeros((POOL_ROWS, R2), np.float32)
    for n in range(N):
        for ph in range(3):
            for pw in range(3):
                s3[(ph * 3 + pw) * 8 + n, n * 64 + (2 * ph) * 8 + (2 * pw)] = 1.0
    return s1, s2, s3


def init_params(key):
    """PyTorch-layout parameters (deterministic synthetic init)."""
    ks = jax.random.split(key, 6)
    s = 0.05
    return {
        "w1": s * jax.random.normal(ks[0], (32, 1, 2, 2), jnp.float32),
        "b1": jnp.zeros((32,), jnp.float32),
        "w2": s * jax.random.normal(ks[1], (128, 32, 3, 3), jnp.float32),
        "b2": jnp.zeros((128,), jnp.float32),
        "w3": s * jax.random.normal(ks[2], (256, 128, 2, 2), jnp.float32),
        "b3": jnp.zeros((256,), jnp.float32),
        "w4": s * jax.random.normal(ks[3], (256, 2304), jnp.float32),  # (out, in) NCHW-flat
        "b4": jnp.zeros((256,), jnp.float32),
        "w5": s * jax.random.normal(ks[4], (64, 256), jnp.float32),
        "b5": jnp.zeros((64,), jnp.float32),
        "w6": s * jax.random.normal(ks[5], (2, 64), jnp.float32),
        "b6": jnp.zeros((2,), jnp.float32),
    }


def pack_params(p):
    """Pad / permute / cast / concatenate everything once (few big DMAs at run)."""
    bf16 = jnp.bfloat16
    s1, s2, s3 = _selection_matrices()

    # conv taps laid out tap-major: rows = (tap, cin), cols = cout.
    w2k = p["w2"].transpose(2, 3, 1, 0).reshape(9 * 32, 128).astype(bf16)
    w3k = p["w3"].transpose(2, 3, 1, 0).reshape(4 * 128, 256).astype(bf16)
    # fc1: permute torch NCHW-flatten rows (c*9 + s) -> resident order (s*256 + c).
    w4k = (p["w4"].reshape(256, 256, 3, 3).transpose(2, 3, 1, 0)
           .reshape(2304, 256).astype(bf16))
    # fc2 / head lane-padded to 128.
    w5k = jnp.zeros((256, 128), bf16).at[:, :64].set(p["w5"].T.astype(bf16))
    w6k = jnp.zeros((128, 128), bf16).at[:64, :2].set(p["w6"].T.astype(bf16))

    # One lane-128 bf16 constant buffer: w2 | s2 | s3 | w5 | w6.
    wbuf = jnp.concatenate([w2k,
                            jnp.asarray(s2, bf16),
                            jnp.asarray(s3, bf16),
                            w5k, w6k], axis=0)
    assert wbuf.shape == (WBUF_ROWS, 128), wbuf.shape

    # One f32 constant buffer: conv1 weight (tap-major) + all biases.
    cbuf = jnp.zeros((16, 256), jnp.float32)
    cbuf = cbuf.at[0:4, 0:32].set(p["w1"].reshape(32, 4).T)   # rows 4:8 stay zero (K pad)
    cbuf = cbuf.at[8, 0:32].set(p["b1"])
    cbuf = cbuf.at[9, 0:128].set(p["b2"])
    cbuf = cbuf.at[10, 0:256].set(p["b3"])
    cbuf = cbuf.at[11, 0:256].set(p["b4"])
    cbuf = cbuf.at[12, 0:64].set(p["b5"])
    cbuf = cbuf.at[13, 0:2].set(p["b6"])

    return {"cbuf": cbuf, "wbuf": wbuf,
            "s1": jnp.asarray(s1, bf16),
            "w3": w3k,          # async-copied inside the kernel
            "w4": w4k}          # async-copied inside the kernel


# ----------------------------------------------------------------------------
# Forward
# ----------------------------------------------------------------------------
def _prep_input(x):
    """NCHW (N,1,12,12) -> zero-padded 14x14 grid, flattened, 4-tap im2col (416,8)."""
    xp = jnp.pad(x[:, 0, :, :].astype(jnp.float32), ((0, 0), (1, 1), (1, 1)))
    flat = jnp.pad(xp.reshape(-1), (0, R1_FLAT - R1_VALID))               # (432,)
    cols = [flat[sh:sh + R1Y] for sh in (0, 1, WP1, WP1 + 1)]
    zeros = jnp.zeros((R1Y,), jnp.float32)
    return jnp.stack(cols + [zeros, zeros, zeros, zeros], axis=1)         # (416, 8)


@jax.jit
def cnn_forward(packed, x):
    x1 = _prep_input(x)
    out = pl.pallas_call(
        _cnn_fused_kernel,
        out_shape=jax.ShapeDtypeStruct((8, 128), jnp.float32),
        in_specs=[_VMEM, _VMEM, _VMEM, _VMEM, _ANY, _ANY],
        out_specs=_VMEM,
        scratch_shapes=[
            pltpu.VMEM((512, 256), jnp.bfloat16),       # w3 landing buffer
            pltpu.VMEM((2304, 256), jnp.bfloat16),      # w4 landing buffer
            pltpu.VMEM((R1Y, 32), jnp.bfloat16),        # y1 (conv1 ReLU output)
            pltpu.VMEM((R2_ALLOC, 32), jnp.bfloat16),   # x2 (conv2 padded input)
            pltpu.VMEM((R3_ALLOC, 128), jnp.bfloat16),  # x3 (conv3 padded input)
            pltpu.VMEM((R3Y, 256), jnp.bfloat16),       # y3 (conv3 ReLU output)
            pltpu.SemaphoreType.DMA((2,)),
        ],
        # ~3 MB resident: no tiling needed on any generation; just leave headroom.
        compiler_params=pltpu.CompilerParams(vmem_limit_bytes=32 * 1024 * 1024),
    )(x1, packed["cbuf"], packed["wbuf"], packed["s1"], packed["w3"], packed["w4"])
    return out[:N, :2]


if __name__ == "__main__":
    key = jax.random.PRNGKey(0)
    pkey, xkey = jax.random.split(key)
    params = init_params(pkey)
    packed = pack_params(params)

    # NCHW input: batch=2, channels=1, 12x12 spatial (required for the 2304 flatten)
    x = jax.random.normal(xkey, (N, 1, H0, W0), jnp.float32)
    y = cnn_forward(packed, x)
    jax.block_until_ready(y)
    assert y.shape == (N, 2), y.shape
    assert bool(jnp.all(jnp.isfinite(y)))
    print("KERNEL_OK")
</pallas_src>

<mosaic_0001>
module attributes {stable_mosaic.version = 11 : i64} {
  func.func @_cnn_fused_kernel(%arg0: memref<416x8xf32, #tpu.memory_space<vmem>>, %arg1: memref<16x256xf32, #tpu.memory_space<vmem>>, %arg2: memref<896x128xbf16, #tpu.memory_space<vmem>>, %arg3: memref<160x400xbf16, #tpu.memory_space<vmem>>, %arg4: memref<512x256xbf16, #tpu.memory_space<any>>, %arg5: memref<2304x256xbf16, #tpu.memory_space<any>>, %arg6: memref<8x128xf32, #tpu.memory_space<vmem>>, %arg7: memref<512x256xbf16, #tpu.memory_space<vmem>>, %arg8: memref<2304x256xbf16, #tpu.memory_space<vmem>>, %arg9: memref<416x32xbf16, #tpu.memory_space<vmem>>, %arg10: memref<160x32xbf16, #tpu.memory_space<vmem>>, %arg11: memref<144x128xbf16, #tpu.memory_space<vmem>>, %arg12: memref<144x256xbf16, #tpu.memory_space<vmem>>, %arg13: memref<2x!tpu.dma_semaphore, #tpu.memory_space<semaphore_mem>>) attributes {dimension_semantics = [], scalar_prefetch = 0 : i64, scratch_operands = 7 : i64, tpu.core_type = #tpu.core_type<tc>} {
    %c0_i32 = arith.constant 0 : i32
    %0 = tpu.memref_slice %arg13[%c0_i32] : memref<2x!tpu.dma_semaphore, #tpu.memory_space<semaphore_mem>> -> memref<1x!tpu.dma_semaphore, #tpu.memory_space<semaphore_mem>>
    %1 = tpu.memref_squeeze %0 : memref<1x!tpu.dma_semaphore, #tpu.memory_space<semaphore_mem>> -> memref<!tpu.dma_semaphore, #tpu.memory_space<semaphore_mem>>
    tpu.enqueue_dma source(%arg4 : memref<512x256xbf16, #tpu.memory_space<any>>) target(%arg7 : memref<512x256xbf16, #tpu.memory_space<vmem>>) target_semaphore(%1 : memref<!tpu.dma_semaphore, #tpu.memory_space<semaphore_mem>>)
    %c1_i32 = arith.constant 1 : i32
    %2 = tpu.memref_slice %arg13[%c1_i32] : memref<2x!tpu.dma_semaphore, #tpu.memory_space<semaphore_mem>> -> memref<1x!tpu.dma_semaphore, #tpu.memory_space<semaphore_mem>>
    %3 = tpu.memref_squeeze %2 : memref<1x!tpu.dma_semaphore, #tpu.memory_space<semaphore_mem>> -> memref<!tpu.dma_semaphore, #tpu.memory_space<semaphore_mem>>
    tpu.enqueue_dma source(%arg5 : memref<2304x256xbf16, #tpu.memory_space<any>>) target(%arg8 : memref<2304x256xbf16, #tpu.memory_space<vmem>>) target_semaphore(%3 : memref<!tpu.dma_semaphore, #tpu.memory_space<semaphore_mem>>)
    %c0 = arith.constant 0 : index
    %c0_0 = arith.constant 0 : index
    %4 = vector.load %arg1[%c0, %c0_0] : memref<16x256xf32, #tpu.memory_space<vmem>>, vector<8x32xf32>
    %c8 = arith.constant 8 : index
    %c0_1 = arith.constant 0 : index
    %5 = vector.load %arg1[%c8, %c0_1] : memref<16x256xf32, #tpu.memory_space<vmem>>, vector<1x32xf32>
    %c0_2 = arith.constant 0 : index
    %c0_3 = arith.constant 0 : index
    %6 = vector.load %arg0[%c0_2, %c0_3] : memref<416x8xf32, #tpu.memory_space<vmem>>, vector<416x8xf32>
    %cst = arith.constant dense<0.000000e+00> : vector<416x32xf32>
    %7 = tpu.matmul %6, %4, %cst {dimension_numbers = #tpu.dot_dimension_numbers<[1], [0], [0], [1], [0, 0, 1, 1], [], []>} : vector<416x8xf32>, vector<8x32xf32>, vector<416x32xf32> -> vector<416x32xf32>
    %8 = vector.broadcast %5 : vector<1x32xf32> to vector<416x32xf32>
    %9 = arith.addf %7, %8 : vector<416x32xf32>
    %cst_4 = arith.constant 0.000000e+00 : f32
    %10 = vector.broadcast %cst_4 : f32 to vector<416x32xf32>
    %11 = arith.maximumf %9, %10 : vector<416x32xf32>
    %12 = arith.truncf %11 : vector<416x32xf32> to vector<416x32xbf16>
    %c0_5 = arith.constant 0 : index
    %c0_6 = arith.constant 0 : index
    %13 = vector.load %arg9[%c0_5, %c0_6] : memref<416x32xbf16, #tpu.memory_space<vmem>>, vector<416x32xbf16>
    tpu.vector_store %arg9[%c0_5, %c0_6], %12 {strides = array<i32>} : memref<416x32xbf16, #tpu.memory_space<vmem>>, vector<416x32xbf16>,
    %c0_7 = arith.constant 0 : index
    %c0_8 = arith.constant 0 : index
    %14 = vector.load %arg9[%c0_7, %c0_8] : memref<416x32xbf16, #tpu.memory_space<vmem>>, vector<400x32xbf16>
    %c1 = arith.constant 1 : index
    %c0_9 = arith.constant 0 : index
    %15 = vector.load %arg9[%c1, %c0_9] : memref<416x32xbf16, #tpu.memory_space<vmem>>, vector<400x32xbf16>
    %16 = arith.maximumf %14, %15 : vector<400x32xbf16>
    %c14 = arith.constant 14 : index
    %c0_10 = arith.constant 0 : index
    %17 = vector.load %arg9[%c14, %c0_10] : memref<416x32xbf16, #tpu.memory_space<vmem>>, vector<400x32xbf16>
    %c15 = arith.constant 15 : index
    %c0_11 = arith.constant 0 : index
    %18 = vector.load %arg9[%c15, %c0_11] : memref<416x32xbf16, #tpu.memory_space<vmem>>, vector<400x32xbf16>
    %19 = arith.maximumf %17, %18 : vector<400x32xbf16>
    %20 = arith.maximumf %16, %19 : vector<400x32xbf16>
    %c0_12 = arith.constant 0 : index
    %c0_13 = arith.constant 0 : index
    %21 = vector.load %arg3[%c0_12, %c0_13] : memref<160x400xbf16, #tpu.memory_space<vmem>>, vector<160x400xbf16>
    %cst_14 = arith.constant dense<0.000000e+00> : vector<160x32xf32>
    %22 = tpu.matmul %21, %20, %cst_14 {dimension_numbers = #tpu.dot_dimension_numbers<[1], [0], [0], [1], [0, 0, 1, 1], [], []>} : vector<160x400xbf16>, vector<400x32xbf16>, vector<160x32xf32> -> vector<160x32xf32>
    %23 = arith.truncf %22 : vector<160x32xf32> to vector<160x32xbf16>
    %c0_15 = arith.constant 0 : index
    %c0_16 = arith.constant 0 : index
    %24 = vector.load %arg10[%c0_15, %c0_16] : memref<160x32xbf16, #tpu.memory_space<vmem>>, vector<160x32xbf16>
    tpu.vector_store %arg10[%c0_15, %c0_16], %23 {strides = array<i32>} : memref<160x32xbf16, #tpu.memory_space<vmem>>, vector<160x32xbf16>,
    %c9 = arith.constant 9 : index
    %c0_17 = arith.constant 0 : index
    %25 = vector.load %arg1[%c9, %c0_17] : memref<16x256xf32, #tpu.memory_space<vmem>>, vector<1x128xf32>
    %cst_18 = arith.constant 0.000000e+00 : f32
    %26 = vector.broadcast %cst_18 : f32 to vector<128x128xf32>
    %c0_19 = arith.constant 0 : index
    %c0_20 = arith.constant 0 : index
    %27 = vector.load %arg10[%c0_19, %c0_20] : memref<160x32xbf16, #tpu.memory_space<vmem>>, vector<128x32xbf16>
    %c0_21 = arith.constant 0 : index
    %c0_22 = arith.constant 0 : index
    %28 = vector.load %arg2[%c0_21, %c0_22] : memref<896x128xbf16, #tpu.memory_space<vmem>>, vector<32x128xbf16>
    %cst_23 = arith.constant dense<0.000000e+00> : vector<128x128xf32>
    %29 = tpu.matmul %27, %28, %cst_23 {dimension_numbers = #tpu.dot_dimension_numbers<[1], [0], [0], [1], [0, 0, 1, 1], [], []>} : vector<128x32xbf16>, vector<32x128xbf16>, vector<128x128xf32> -> vector<128x128xf32>
    %30 = arith.addf %26, %29 : vector<128x128xf32>
    %c1_24 = arith.constant 1 : index
    %c0_25 = arith.constant 0 : index
    %31 = vector.load %arg10[%c1_24, %c0_25] : memref<160x32xbf16, #tpu.memory_space<vmem>>, vector<128x32xbf16>
    %c32 = arith.constant 32 : index
    %c0_26 = arith.constant 0 : index
    %32 = vector.load %arg2[%c32, %c0_26] : memref<896x128xbf16, #tpu.memory_space<vmem>>, vector<32x128xbf16>
    %cst_27 = arith.constant dense<0.000000e+00> : vector<128x128xf32>
    %33 = tpu.matmul %31, %32, %cst_27 {dimension_numbers = #tpu.dot_dimension_numbers<[1], [0], [0], [1], [0, 0, 1, 1], [], []>} : vector<128x32xbf16>, vector<32x128xbf16>, vector<128x128xf32> -> vector<128x128xf32>
    %34 = arith.addf %30, %33 : vector<128x128xf32>
    %c2 = arith.constant 2 : index
    %c0_28 = arith.constant 0 : index
    %35 = vector.load %arg10[%c2, %c0_28] : memref<160x32xbf16, #tpu.memory_space<vmem>>, vector<128x32xbf16>
    %c64 = arith.constant 64 : index
    %c0_29 = arith.constant 0 : index
    %36 = vector.load %arg2[%c64, %c0_29] : memref<896x128xbf16, #tpu.memory_space<vmem>>, vector<32x128xbf16>
    %cst_30 = arith.constant dense<0.000000e+00> : vector<128x128xf32>
    %37 = tpu.matmul %35, %36, %cst_30 {dimension_numbers = #tpu.dot_dimension_numbers<[1], [0], [0], [1], [0, 0, 1, 1], [], []>} : vector<128x32xbf16>, vector<32x128xbf16>, vector<128x128xf32> -> vector<128x128xf32>
    %38 = arith.addf %34, %37 : vector<128x128xf32>
    %c8_31 = arith.constant 8 : index
    %c0_32 = arith.constant 0 : index
    %39 = vector.load %arg10[%c8_31, %c0_32] : memref<160x32xbf16, #tpu.memory_space<vmem>>, vector<128x32xbf16>
    %c96 = arith.constant 96 : index
    %c0_33 = arith.constant 0 : index
    %40 = vector.load %arg2[%c96, %c0_33] : memref<896x128xbf16, #tpu.memory_space<vmem>>, vector<32x128xbf16>
    %cst_34 = arith.constant dense<0.000000e+00> : vector<128x128xf32>
    %41 = tpu.matmul %39, %40, %cst_34 {dimension_numbers = #tpu.dot_dimension_numbers<[1], [0], [0], [1], [0, 0, 1, 1], [], []>} : vector<128x32xbf16>, vector<32x128xbf16>, vector<128x128xf32> -> vector<128x128xf32>
    %42 = arith.addf %38, %41 : vector<128x128xf32>
    %c9_35 = arith.constant 9 : index
    %c0_36 = arith.constant 0 : index
    %43 = vector.load %arg10[%c9_35, %c0_36] : memref<160x32xbf16, #tpu.memory_space<vmem>>, vector<128x32xbf16>
    %c128 = arith.constant 128 : index
    %c0_37 = arith.constant 0 : index
    %44 = vector.load %arg2[%c128, %c0_37] : memref<896x128xbf16, #tpu.memory_space<vmem>>, vector<32x128xbf16>
    %cst_38 = arith.constant dense<0.000000e+00> : vector<128x128xf32>
    %45 = tpu.matmul %43, %44, %cst_38 {dimension_numbers = #tpu.dot_dimension_numbers<[1], [0], [0], [1], [0, 0, 1, 1], [], []>} : vector<128x32xbf16>, vector<32x128xbf16>, vector<128x128xf32> -> vector<128x128xf32>
    %46 = arith.addf %42, %45 : vector<128x128xf32>
    %c10 = arith.constant 10 : index
    %c0_39 = arith.constant 0 : index
    %47 = vector.load %arg10[%c10, %c0_39] : memref<160x32xbf16, #tpu.memory_space<vmem>>, vector<128x32xbf16>
    %c160 = arith.constant 160 : index
    %c0_40 = arith.constant 0 : index
    %48 = vector.load %arg2[%c160, %c0_40] : memref<896x128xbf16, #tpu.memory_space<vmem>>, vector<32x128xbf16>
    %cst_41 = arith.constant dense<0.000000e+00> : vector<128x128xf32>
    %49 = tpu.matmul %47, %48, %cst_41 {dimension_numbers = #tpu.dot_dimension_numbers<[1], [0], [0], [1], [0, 0, 1, 1], [], []>} : vector<128x32xbf16>, vector<32x128xbf16>, vector<128x128xf32> -> vector<128x128xf32>
    %50 = arith.addf %46, %49 : vector<128x128xf32>
    %c16 = arith.constant 16 : index
    %c0_42 = arith.constant 0 : index
    %51 = vector.load %arg10[%c16, %c0_42] : memref<160x32xbf16, #tpu.memory_space<vmem>>, vector<128x32xbf16>
    %c192 = arith.constant 192 : index
    %c0_43 = arith.constant 0 : index
    %52 = vector.load %arg2[%c192, %c0_43] : memref<896x128xbf16, #tpu.memory_space<vmem>>, vector<32x128xbf16>
    %cst_44 = arith.constant dense<0.000000e+00> : vector<128x128xf32>
    %53 = tpu.matmul %51, %52, %cst_44 {dimension_numbers = #tpu.dot_dimension_numbers<[1], [0], [0], [1], [0, 0, 1, 1], [], []>} : vector<128x32xbf16>, vector<32x128xbf16>, vector<128x128xf32> -> vector<128x128xf32>
    %54 = arith.addf %50, %53 : vector<128x128xf32>
    %c17 = arith.constant 17 : index
    %c0_45 = arith.constant 0 : index
    %55 = vector.load %arg10[%c17, %c0_45] : memref<160x32xbf16, #tpu.memory_space<vmem>>, vector<128x32xbf16>
    %c224 = arith.constant 224 : index
    %c0_46 = arith.constant 0 : index
    %56 = vector.load %arg2[%c224, %c0_46] : memref<896x128xbf16, #tpu.memory_space<vmem>>, vector<32x128xbf16>
    %cst_47 = arith.constant dense<0.000000e+00> : vector<128x128xf32>
    %57 = tpu.matmul %55, %56, %cst_47 {dimension_numbers = #tpu.dot_dimension_numbers<[1], [0], [0], [1], [0, 0, 1, 1], [], []>} : vector<128x32xbf16>, vector<32x128xbf16>, vector<128x128xf32> -> vector<128x128xf32>
    %58 = arith.addf %54, %57 : vector<128x128xf32>
    %c18 = arith.constant 18 : index
    %c0_48 = arith.constant 0 : index
    %59 = vector.load %arg10[%c18, %c0_48] : memref<160x32xbf16, #tpu.memory_space<vmem>>, vector<128x32xbf16>
    %c256 = arith.constant 256 : index
    %c0_49 = arith.constant 0 : index
    %60 = vector.load %arg2[%c256, %c0_49] : memref<896x128xbf16, #tpu.memory_space<vmem>>, vector<32x128xbf16>
    %cst_50 = arith.constant dense<0.000000e+00> : vector<128x128xf32>
    %61 = tpu.matmul %59, %60, %cst_50 {dimension_numbers = #tpu.dot_dimension_numbers<[1], [0], [0], [1], [0, 0, 1, 1], [], []>} : vector<128x32xbf16>, vector<32x128xbf16>, vector<128x128xf32> -> vector<128x128xf32>
    %62 = arith.addf %58, %61 : vector<128x128xf32>
    %63 = vector.broadcast %25 : vector<1x128xf32> to vector<128x128xf32>
    %64 = arith.addf %62, %63 : vector<128x128xf32>
    %cst_51 = arith.constant 0.000000e+00 : f32
    %65 = vector.broadcast %cst_51 : f32 to vector<128x128xf32>
    %66 = arith.maximumf %64, %65 : vector<128x128xf32>
    %67 = arith.truncf %66 : vector<128x128xf32> to vector<128x128xbf16>
    %c288 = arith.constant 288 : index
    %c0_52 = arith.constant 0 : index
    %68 = vector.load %arg2[%c288, %c0_52] : memref<896x128xbf16, #tpu.memory_space<vmem>>, vector<144x128xbf16>
    %cst_53 = arith.constant dense<0.000000e+00> : vector<144x128xf32>
    %69 = tpu.matmul %68, %67, %cst_53 {dimension_numbers = #tpu.dot_dimension_numbers<[1], [0], [0], [1], [0, 0, 1, 1], [], []>} : vector<144x128xbf16>, vector<128x128xbf16>, vector<144x128xf32> -> vector<144x128xf32>
    %70 = arith.truncf %69 : vector<144x128xf32> to vector<144x128xbf16>
    %c0_54 = arith.constant 0 : index
    %c0_55 = arith.constant 0 : index
    %71 = vector.load %arg11[%c0_54, %c0_55] : memref<144x128xbf16, #tpu.memory_space<vmem>>, vector<144x128xbf16>
    tpu.vector_store %arg11[%c0_54, %c0_55], %70 {strides = array<i32>} : memref<144x128xbf16, #tpu.memory_space<vmem>>, vector<144x128xbf16>,
    %c0_i32_56 = arith.constant 0 : i32
    %72 = tpu.memref_slice %arg13[%c0_i32_56] : memref<2x!tpu.dma_semaphore, #tpu.memory_space<semaphore_mem>> -> memref<1x!tpu.dma_semaphore, #tpu.memory_space<semaphore_mem>>
    %73 = tpu.memref_squeeze %72 : memref<1x!tpu.dma_semaphore, #tpu.memory_space<semaphore_mem>> -> memref<!tpu.dma_semaphore, #tpu.memory_space<semaphore_mem>>
    tpu.wait_dma2 semaphore(%73 : memref<!tpu.dma_semaphore, #tpu.memory_space<semaphore_mem>>) src(%arg4 : memref<512x256xbf16, #tpu.memory_space<any>>) dst(%arg7 : memref<512x256xbf16, #tpu.memory_space<vmem>>)
    %c10_57 = arith.constant 10 : index
    %c0_58 = arith.constant 0 : index
    %74 = vector.load %arg1[%c10_57, %c0_58] : memref<16x256xf32, #tpu.memory_space<vmem>>, vector<1x256xf32>
    %cst_59 = arith.constant 0.000000e+00 : f32
    %75 = vector.broadcast %cst_59 : f32 to vector<128x256xf32>
    %c0_60 = arith.constant 0 : index
    %c0_61 = arith.constant 0 : index
    %76 = vector.load %arg11[%c0_60, %c0_61] : memref<144x128xbf16, #tpu.memory_space<vmem>>, vector<128x128xbf16>
    %c0_62 = arith.constant 0 : index
    %c0_63 = arith.constant 0 : index
    %77 = vector.load %arg7[%c0_62, %c0_63] : memref<512x256xbf16, #tpu.memory_space<vmem>>, vector<128x256xbf16>
    %cst_64 = arith.constant dense<0.000000e+00> : vector<128x256xf32>
    %78 = tpu.matmul %76, %77, %cst_64 {dimension_numbers = #tpu.dot_dimension_numbers<[1], [0], [0], [1], [0, 0, 1, 1], [], []>} : vector<128x128xbf16>, vector<128x256xbf16>, vector<128x256xf32> -> vector<128x256xf32>
    %79 = arith.addf %75, %78 : vector<128x256xf32>
    %c1_65 = arith.constant 1 : index
    %c0_66 = arith.constant 0 : index
    %80 = vector.load %arg11[%c1_65, %c0_66] : memref<144x128xbf16, #tpu.memory_space<vmem>>, vector<128x128xbf16>
    %c128_67 = arith.constant 128 : index
    %c0_68 = arith.constant 0 : index
    %81 = vector.load %arg7[%c128_67, %c0_68] : memref<512x256xbf16, #tpu.memory_space<vmem>>, vector<128x256xbf16>
    %cst_69 = arith.constant dense<0.000000e+00> : vector<128x256xf32>
    %82 = tpu.matmul %80, %81, %cst_69 {dimension_numbers = #tpu.dot_dimension_numbers<[1], [0], [0], [1], [0, 0, 1, 1], [], []>} : vector<128x128xbf16>, vector<128x256xbf16>, vector<128x256xf32> -> vector<128x256xf32>
    %83 = arith.addf %79, %82 : vector<128x256xf32>
    %c8_70 = arith.constant 8 : index
    %c0_71 = arith.constant 0 : index
    %84 = vector.load %arg11[%c8_70, %c0_71] : memref<144x128xbf16, #tpu.memory_space<vmem>>, vector<128x128xbf16>
    %c256_72 = arith.constant 256 : index
    %c0_73 = arith.constant 0 : index
    %85 = vector.load %arg7[%c256_72, %c0_73] : memref<512x256xbf16, #tpu.memory_space<vmem>>, vector<128x256xbf16>
    %cst_74 = arith.constant dense<0.000000e+00> : vector<128x256xf32>
    %86 = tpu.matmul %84, %85, %cst_74 {dimension_numbers = #tpu.dot_dimension_numbers<[1], [0], [0], [1], [0, 0, 1, 1], [], []>} : vector<128x128xbf16>, vector<128x256xbf16>, vector<128x256xf32> -> vector<128x256xf32>
    %87 = arith.addf %83, %86 : vector<128x256xf32>
    %c9_75 = arith.constant 9 : index
    %c0_76 = arith.constant 0 : index
    %88 = vector.load %arg11[%c9_75, %c0_76] : memref<144x128xbf16, #tpu.memory_space<vmem>>, vector<128x128xbf16>
    %c384 = arith.constant 384 : index
    %c0_77 = arith.constant 0 : index
    %89 = vector.load %arg7[%c384, %c0_77] : memref<512x256xbf16, #tpu.memory_space<vmem>>, vector<128x256xbf16>
    %cst_78 = arith.constant dense<0.000000e+00> : vector<128x256xf32>
    %90 = tpu.matmul %88, %89, %cst_78 {dimension_numbers = #tpu.dot_dimension_numbers<[1], [0], [0], [1], [0, 0, 1, 1], [], []>} : vector<128x128xbf16>, vector<128x256xbf16>, vector<128x256xf32> -> vector<128x256xf32>
    %91 = arith.addf %87, %90 : vector<128x256xf32>
    %92 = vector.broadcast %74 : vector<1x256xf32> to vector<128x256xf32>
    %93 = arith.addf %91, %92 : vector<128x256xf32>
    %cst_79 = arith.constant 0.000000e+00 : f32
    %94 = vector.broadcast %cst_79 : f32 to vector<128x256xf32>
    %95 = arith.maximumf %93, %94 : vector<128x256xf32>
    %96 = arith.truncf %95 : vector<128x256xf32> to vector<128x256xbf16>
    %c0_80 = arith.constant 0 : index
    %c0_81 = arith.constant 0 : index
    %97 = vector.load %arg12[%c0_80, %c0_81] : memref<144x256xbf16, #tpu.memory_space<vmem>>, vector<128x256xbf16>
    tpu.vector_store %arg12[%c0_80, %c0_81], %96 {strides = array<i32>} : memref<144x256xbf16, #tpu.memory_space<vmem>>, vector<128x256xbf16>,
    %cst_82 = arith.constant 0.000000e+00 : bf16
    %98 = vector.broadcast %cst_82 : bf16 to vector<16x256xbf16>
    %c128_83 = arith.constant 128 : index
    %c0_84 = arith.constant 0 : index
    %99 = vector.load %arg12[%c128_83, %c0_84] : memref<144x256xbf16, #tpu.memory_space<vmem>>, vector<16x256xbf16>
    tpu.vector_store %arg12[%c128_83, %c0_84], %98 {strides = array<i32>} : memref<144x256xbf16, #tpu.memory_space<vmem>>, vector<16x256xbf16>,
    %c0_85 = arith.constant 0 : index
    %c0_86 = arith.constant 0 : index
    %100 = vector.load %arg12[%c0_85, %c0_86] : memref<144x256xbf16, #tpu.memory_space<vmem>>, vector<128x256xbf16>
    %c1_87 = arith.constant 1 : index
    %c0_88 = arith.constant 0 : index
    %101 = vector.load %arg12[%c1_87, %c0_88] : memref<144x256xbf16, #tpu.memory_space<vmem>>, vector<128x256xbf16>
    %102 = arith.maximumf %100, %101 : vector<128x256xbf16>
    %c8_89 = arith.constant 8 : index
    %c0_90 = arith.constant 0 : index
    %103 = vector.load %arg12[%c8_89, %c0_90] : memref<144x256xbf16, #tpu.memory_space<vmem>>, vector<128x256xbf16>
    %c9_91 = arith.constant 9 : index
    %c0_92 = arith.constant 0 : index
    %104 = vector.load %arg12[%c9_91, %c0_92] : memref<144x256xbf16, #tpu.memory_space<vmem>>, vector<128x256xbf16>
    %105 = arith.maximumf %103, %104 : vector<128x256xbf16>
    %106 = arith.maximumf %102, %105 : vector<128x256xbf16>
    %c432 = arith.constant 432 : index
    %c0_93 = arith.constant 0 : index
    %107 = vector.load %arg2[%c432, %c0_93] : memref<896x128xbf16, #tpu.memory_space<vmem>>, vector<80x128xbf16>
    %cst_94 = arith.constant dense<0.000000e+00> : vector<80x256xf32>
    %108 = tpu.matmul %107, %106, %cst_94 {dimension_numbers = #tpu.dot_dimension_numbers<[1], [0], [0], [1], [0, 0, 1, 1], [], []>} : vector<80x128xbf16>, vector<128x256xbf16>, vector<80x256xf32> -> vector<80x256xf32>
    %c1_i32_95 = arith.constant 1 : i32
    %109 = tpu.memref_slice %arg13[%c1_i32_95] : memref<2x!tpu.dma_semaphore, #tpu.memory_space<semaphore_mem>> -> memref<1x!tpu.dma_semaphore, #tpu.memory_space<semaphore_mem>>
    %110 = tpu.memref_squeeze %109 : memref<1x!tpu.dma_semaphore, #tpu.memory_space<semaphore_mem>> -> memref<!tpu.dma_semaphore, #tpu.memory_space<semaphore_mem>>
    tpu.wait_dma2 semaphore(%110 : memref<!tpu.dma_semaphore, #tpu.memory_space<semaphore_mem>>) src(%arg5 : memref<2304x256xbf16, #tpu.memory_space<any>>) dst(%arg8 : memref<2304x256xbf16, #tpu.memory_space<vmem>>)
    %c11 = arith.constant 11 : index
    %c0_96 = arith.constant 0 : index
    %111 = vector.load %arg1[%c11, %c0_96] : memref<16x256xf32, #tpu.memory_space<vmem>>, vector<1x256xf32>
    %cst_97 = arith.constant 0.000000e+00 : f32
    %112 = vector.broadcast %cst_97 : f32 to vector<8x256xf32>
    %113 = vector.extract_strided_slice %108 {offsets = [0, 0], sizes = [8, 256], strides = [1, 1]} : vector<80x256xf32> to vector<8x256xf32>
    %114 = arith.truncf %113 : vector<8x256xf32> to vector<8x256xbf16>
    %c0_98 = arith.constant 0 : index
    %c0_99 = arith.constant 0 : index
    %115 = vector.load %arg8[%c0_98, %c0_99] : memref<2304x256xbf16, #tpu.memory_space<vmem>>, vector<256x256xbf16>
    %cst_100 = arith.constant dense<0.000000e+00> : vector<8x256xf32>
    %116 = tpu.matmul %114, %115, %cst_100 {dimension_numbers = #tpu.dot_dimension_numbers<[1], [0], [0], [1], [0, 0, 1, 1], [], []>} : vector<8x256xbf16>, vector<256x256xbf16>, vector<8x256xf32> -> vector<8x256xf32>
    %117 = arith.addf %112, %116 : vector<8x256xf32>
    %118 = vector.extract_strided_slice %108 {offsets = [8, 0], sizes = [8, 256], strides = [1, 1]} : vector<80x256xf32> to vector<8x256xf32>
    %119 = arith.truncf %118 : vector<8x256xf32> to vector<8x256xbf16>
    %c256_101 = arith.constant 256 : index
    %c0_102 = arith.constant 0 : index
    %120 = vector.load %arg8[%c256_101, %c0_102] : memref<2304x256xbf16, #tpu.memory_space<vmem>>, vector<256x256xbf16>
    %cst_103 = arith.constant dense<0.000000e+00> : vector<8x256xf32>
    %121 = tpu.matmul %119, %120, %cst_103 {dimension_numbers = #tpu.dot_dimension_numbers<[1], [0], [0], [1], [0, 0, 1, 1], [], []>} : vector<8x256xbf16>, vector<256x256xbf16>, vector<8x256xf32> -> vector<8x256xf32>
    %122 = arith.addf %117, %121 : vector<8x256xf32>
    %123 = vector.extract_strided_slice %108 {offsets = [16, 0], sizes = [8, 256], strides = [1, 1]} : vector<80x256xf32> to vector<8x256xf32>
    %124 = arith.truncf %123 : vector<8x256xf32> to vector<8x256xbf16>
    %c512 = arith.constant 512 : index
    %c0_104 = arith.constant 0 : index
    %125 = vector.load %arg8[%c512, %c0_104] : memref<2304x256xbf16, #tpu.memory_space<vmem>>, vector<256x256xbf16>
    %cst_105 = arith.constant dense<0.000000e+00> : vector<8x256xf32>
    %126 = tpu.matmul %124, %125, %cst_105 {dimension_numbers = #tpu.dot_dimension_numbers<[1], [0], [0], [1], [0, 0, 1, 1], [], []>} : vector<8x256xbf16>, vector<256x256xbf16>, vector<8x256xf32> -> vector<8x256xf32>
    %127 = arith.addf %122, %126 : vector<8x256xf32>
    %128 = vector.extract_strided_slice %108 {offsets = [24, 0], sizes = [8, 256], strides = [1, 1]} : vector<80x256xf32> to vector<8x256xf32>
    %129 = arith.truncf %128 : vector<8x256xf32> to vector<8x256xbf16>
    %c768 = arith.constant 768 : index
    %c0_106 = arith.constant 0 : index
    %130 = vector.load %arg8[%c768, %c0_106] : memref<2304x256xbf16, #tpu.memory_space<vmem>>, vector<256x256xbf16>
    %cst_107 = arith.constant dense<0.000000e+00> : vector<8x256xf32>
    %131 = tpu.matmul %129, %130, %cst_107 {dimension_numbers = #tpu.dot_dimension_numbers<[1], [0], [0], [1], [0, 0, 1, 1], [], []>} : vector<8x256xbf16>, vector<256x256xbf16>, vector<8x256xf32> -> vector<8x256xf32>
    %132 = arith.addf %127, %131 : vector<8x256xf32>
    %133 = vector.extract_strided_slice %108 {offsets = [32, 0], sizes = [8, 256], strides = [1, 1]} : vector<80x256xf32> to vector<8x256xf32>
    %134 = arith.truncf %133 : vector<8x256xf32> to vector<8x256xbf16>
    %c1024 = arith.constant 1024 : index
    %c0_108 = arith.constant 0 : index
    %135 = vector.load %arg8[%c1024, %c0_108] : memref<2304x256xbf16, #tpu.memory_space<vmem>>, vector<256x256xbf16>
    %cst_109 = arith.constant dense<0.000000e+00> : vector<8x256xf32>
    %136 = tpu.matmul %134, %135, %cst_109 {dimension_numbers = #tpu.dot_dimension_numbers<[1], [0], [0], [1], [0, 0, 1, 1], [], []>} : vector<8x256xbf16>, vector<256x256xbf16>, vector<8x256xf32> -> vector<8x256xf32>
    %137 = arith.addf %132, %136 : vector<8x256xf32>
    %138 = vector.extract_strided_slice %108 {offsets = [40, 0], sizes = [8, 256], strides = [1, 1]} : vector<80x256xf32> to vector<8x256xf32>
    %139 = arith.truncf %138 : vector<8x256xf32> to vector<8x256xbf16>
    %c1280 = arith.constant 1280 : index
    %c0_110 = arith.constant 0 : index
    %140 = vector.load %arg8[%c1280, %c0_110] : memref<2304x256xbf16, #tpu.memory_space<vmem>>, vector<256x256xbf16>
    %cst_111 = arith.constant dense<0.000000e+00> : vector<8x256xf32>
    %141 = tpu.matmul %139, %140, %cst_111 {dimension_numbers = #tpu.dot_dimension_numbers<[1], [0], [0], [1], [0, 0, 1, 1], [], []>} : vector<8x256xbf16>, vector<256x256xbf16>, vector<8x256xf32> -> vector<8x256xf32>
    %142 = arith.addf %137, %141 : vector<8x256xf32>
    %143 = vector.extract_strided_slice %108 {offsets = [48, 0], sizes = [8, 256], strides = [1, 1]} : vector<80x256xf32> to vector<8x256xf32>
    %144 = arith.truncf %143 : vector<8x256xf32> to vector<8x256xbf16>
    %c1536 = arith.constant 1536 : index
    %c0_112 = arith.constant 0 : index
    %145 = vector.load %arg8[%c1536, %c0_112] : memref<2304x256xbf16, #tpu.memory_space<vmem>>, vector<256x256xbf16>
    %cst_113 = arith.constant dense<0.000000e+00> : vector<8x256xf32>
    %146 = tpu.matmul %144, %145, %cst_113 {dimension_numbers = #tpu.dot_dimension_numbers<[1], [0], [0], [1], [0, 0, 1, 1], [], []>} : vector<8x256xbf16>, vector<256x256xbf16>, vector<8x256xf32> -> vector<8x256xf32>
    %147 = arith.addf %142, %146 : vector<8x256xf32>
    %148 = vector.extract_strided_slice %108 {offsets = [56, 0], sizes = [8, 256], strides = [1, 1]} : vector<80x256xf32> to vector<8x256xf32>
    %149 = arith.truncf %148 : vector<8x256xf32> to vector<8x256xbf16>
    %c1792 = arith.constant 1792 : index
    %c0_114 = arith.constant 0 : index
    %150 = vector.load %arg8[%c1792, %c0_114] : memref<2304x256xbf16, #tpu.memory_space<vmem>>, vector<256x256xbf16>
    %cst_115 = arith.constant dense<0.000000e+00> : vector<8x256xf32>
    %151 = tpu.matmul %149, %150, %cst_115 {dimension_numbers = #tpu.dot_dimension_numbers<[1], [0], [0], [1], [0, 0, 1, 1], [], []>} : vector<8x256xbf16>, vector<256x256xbf16>, vector<8x256xf32> -> vector<8x256xf32>
    %152 = arith.addf %147, %151 : vector<8x256xf32>
    %153 = vector.extract_strided_slice %108 {offsets = [64, 0], sizes = [8, 256], strides = [1, 1]} : vector<80x256xf32> to vector<8x256xf32>
    %154 = arith.truncf %153 : vector<8x256xf32> to vector<8x256xbf16>
    %c2048 = arith.constant 2048 : index
    %c0_116 = arith.constant 0 : index
    %155 = vector.load %arg8[%c2048, %c0_116] : memref<2304x256xbf16, #tpu.memory_space<vmem>>, vector<256x256xbf16>
    %cst_117 = arith.constant dense<0.000000e+00> : vector<8x256xf32>
    %156 = tpu.matmul %154, %155, %cst_117 {dimension_numbers = #tpu.dot_dimension_numbers<[1], [0], [0], [1], [0, 0, 1, 1], [], []>} : vector<8x256xbf16>, vector<256x256xbf16>, vector<8x256xf32> -> vector<8x256xf32>
    %157 = arith.addf %152, %156 : vector<8x256xf32>
    %158 = vector.broadcast %111 : vector<1x256xf32> to vector<8x256xf32>
    %159 = arith.addf %157, %158 : vector<8x256xf32>
    %cst_118 = arith.constant 0.000000e+00 : f32
    %160 = vector.broadcast %cst_118 : f32 to vector<8x256xf32>
    %161 = arith.maximumf %159, %160 : vector<8x256xf32>
    %162 = arith.truncf %161 : vector<8x256xf32> to vector<8x256xbf16>
    %c12 = arith.constant 12 : index
    %c0_119 = arith.constant 0 : index
    %163 = vector.load %arg1[%c12, %c0_119] : memref<16x256xf32, #tpu.memory_space<vmem>>, vector<1x128xf32>
    %c512_120 = arith.constant 512 : index
    %c0_121 = arith.constant 0 : index
    %164 = vector.load %arg2[%c512_120, %c0_121] : memref<896x128xbf16, #tpu.memory_space<vmem>>, vector<256x128xbf16>
    %cst_122 = arith.constant dense<0.000000e+00> : vector<8x128xf32>
    %165 = tpu.matmul %162, %164, %cst_122 {dimension_numbers = #tpu.dot_dimension_numbers<[1], [0], [0], [1], [0, 0, 1, 1], [], []>} : vector<8x256xbf16>, vector<256x128xbf16>, vector<8x128xf32> -> vector<8x128xf32>
    %166 = vector.broadcast %163 : vector<1x128xf32> to vector<8x128xf32>
    %167 = arith.addf %165, %166 : vector<8x128xf32>
    %168 = math.absf %167 : vector<8x128xf32>
    %cst_123 = arith.constant 0.000000e+00 : f32
    %169 = vector.broadcast %cst_123 : f32 to vector<8x128xf32>
    %170 = arith.subf %169, %168 : vector<8x128xf32>
    %171 = math.exp %170 : vector<8x128xf32>
    %cst_124 = arith.constant 0.000000e+00 : f32
    %172 = vector.broadcast %cst_124 : f32 to vector<8x128xf32>
    %173 = arith.cmpf oge, %167, %172 : vector<8x128xf32>
    %cst_125 = arith.constant 1.000000e+00 : f32
    %174 = vector.broadcast %cst_125 : f32 to vector<8x128xf32>
    %175 = arith.addf %174, %171 : vector<8x128xf32>
    %cst_126 = arith.constant 1.000000e+00 : f32
    %176 = vector.broadcast %cst_126 : f32 to vector<8x128xf32>
    %177 = arith.divf %176, %175 : vector<8x128xf32>
    %cst_127 = arith.constant 1.000000e+00 : f32
    %178 = vector.broadcast %cst_127 : f32 to vector<8x128xf32>
    %179 = arith.addf %178, %171 : vector<8x128xf32>
    %180 = arith.divf %171, %179 : vector<8x128xf32>
    %181 = arith.select %173, %177, %180 : vector<8x128xi1>, vector<8x128xf32>
    %182 = arith.truncf %181 : vector<8x128xf32> to vector<8x128xbf16>
    %c13 = arith.constant 13 : index
    %c0_128 = arith.constant 0 : index
    %183 = vector.load %arg1[%c13, %c0_128] : memref<16x256xf32, #tpu.memory_space<vmem>>, vector<1x128xf32>
    %c768_129 = arith.constant 768 : index
    %c0_130 = arith.constant 0 : index
    %184 = vector.load %arg2[%c768_129, %c0_130] : memref<896x128xbf16, #tpu.memory_space<vmem>>, vector<128x128xbf16>
    %cst_131 = arith.constant dense<0.000000e+00> : vector<8x128xf32>
    %185 = tpu.matmul %182, %184, %cst_131 {dimension_numbers = #tpu.dot_dimension_numbers<[1], [0], [0], [1], [0, 0, 1, 1], [], []>} : vector<8x128xbf16>, vector<128x128xbf16>, vector<8x128xf32> -> vector<8x128xf32>
    %186 = vector.broadcast %183 : vector<1x128xf32> to vector<8x128xf32>
    %187 = arith.addf %185, %186 : vector<8x128xf32>
    %c0_132 = arith.constant 0 : index
    %c0_133 = arith.constant 0 : index
    %188 = vector.load %arg6[%c0_132, %c0_133] : memref<8x128xf32, #tpu.memory_space<vmem>>, vector<8x128xf32>
    tpu.vector_store %arg6[%c0_132, %c0_133], %187 {strides = array<i32>} : memref<8x128xf32, #tpu.memory_space<vmem>>, vector<8x128xf32>,
    return
  }
}

</mosaic_0001>

<llo_original>
// kernel: cnn_forward.1
$region0: #{cnn_forward.1}
  #allocation0 [shape = 'u32[]', space=smem, size = 0x4, offset = 0x4, fixed_abs, tag = 'smem constant byte address 0x4 - core index']
  #allocation1 [shape = 'u32[144,128]{1,0:T(1,128)}', space=vmem, size = 0x12000, scoped, tag = 'internal scratch']
  #allocation2 [shape = 'bf16[512,256]{1,0:T(8,128)(2,1)}', space=vmem, size = 0x40000, scoped, tag = 'scratch operand']
  #allocation3 [shape = 'bf16[2304,256]{1,0:T(8,128)(2,1)}', space=vmem, size = 0x120000, scoped, tag = 'scratch operand']
  #allocation4 [shape = 'bf16[416,32]{1,0:T(8,128)(2,1)}', space=vmem, size = 0x1a000, scoped, tag = 'scratch operand']
  #allocation5 [shape = 'bf16[160,32]{1,0:T(8,128)(2,1)}', space=vmem, size = 0xa000, scoped, tag = 'scratch operand']
  #allocation6 [shape = 'bf16[144,128]{1,0:T(8,128)(2,1)}', space=vmem, size = 0x9000, scoped, tag = 'scratch operand']
  #allocation7 [shape = 'bf16[144,256]{1,0:T(8,128)(2,1)}', space=vmem, size = 0x12000, scoped, tag = 'scratch operand']
  #allocation8 [shape = 's32[2]{0}', space=sflag, size = 0x8, scoped, tag = 'scratch operand']
  #allocation14 [shape = 's32[]', space=sflag, size = 0x4, offset = 0, fixed_abs, tag = 'sflag constant byte address 0x0 - dummy sync flag']
  #allocation15 [shape = 's32[]', space=sflag, size = 0x4, offset = 0, fixed_abs, tag = 'sflag constant byte address 0x0 - dummy sync flag']
  #allocation16 [shape = 'u32[]', space=smem, size = 0x4, offset = 0x44, fixed_abs, tag = 'smem constant byte address 0x44 - assertion arg 0']
  #allocation17 [shape = 'u32[]', space=smem, size = 0x4, offset = 0x48, fixed_abs, tag = 'smem constant byte address 0x48 - assertion arg 1']
  #allocation18 [shape = 's32[]', space=sflag, size = 0x4, offset = 0, fixed_abs, tag = 'sflag constant byte address 0x0 - dummy sync flag']
  #allocation19 [shape = 's32[]', space=sflag, size = 0x4, offset = 0, fixed_abs, tag = 'sflag constant byte address 0x0 - dummy sync flag']
  %s0 = inlined_call_operand.vmem [shape: f32[416,8], index: 0, kind: input, shape index: {}]
  %s1 = inlined_call_operand.hbm [shape: f32[16,256], index: 1, kind: input, shape index: {}]
  %s2 = inlined_call_operand.hbm [shape: bf16[896,128], index: 2, kind: input, shape index: {}]
  %s3 = inlined_call_operand.hbm [shape: bf16[160,400], index: 3, kind: input, shape index: {}]
  %s4 = inlined_call_operand.hbm [shape: bf16[512,256], index: 4, kind: input, shape index: {}]
  %s5 = inlined_call_operand.hbm [shape: bf16[2304,256], index: 5, kind: input, shape index: {}]
  %s6 = inlined_call_operand.vmem [shape: f32[8,128], index: 6, kind: output, shape index: {}]
  %s7 = sld [smem:[#allocation0]]
  $region46: #{cnn_forward.1} parent=0
    _
  %s9 = ssub.s32 1, %s7
  %s10 = scalar_select 0, %s9, %s7
  $region1: #{cnn_forward.1} parent=0
    #allocation9 [shape = 'u8[16384]{0}', space=vmem, size = 0x4000, scoped, tag = 'input window, operand 1, single buffered']
    #allocation10 [shape = 's32[1]{0}', space=sflag, size = 0x4, scoped, tag = 'scoped memory for cnn_forward.1']
    #allocation11 [shape = 'u8[229376]{0}', space=vmem, size = 0x38000, scoped, tag = 'input window, operand 2, single buffered']
    #allocation12 [shape = 's32[1]{0}', space=sflag, size = 0x4, scoped, tag = 'scoped memory for cnn_forward.1']
    #allocation13 [shape = 'u8[163840]{0}', space=vmem, size = 0x28000, scoped, tag = 'input window, operand 3, single buffered']
    %11 = vsyncpa [#allocation10], 0
    %12 = vsyncpa [#allocation12], 0
    // Predicated region
    $region2: #{cnn_forward.1} parent=1 // pred_check
      _
    $region3: #{cnn_forward.1} parent=1 // pred_check_branch
      %14 = sbr.rel (0) target = $region5
    $region4: #{cnn_forward.1} parent=1 // pred_region
      _
    $region5: #{cnn_forward.1} parent=1 // pred_fallthru
      _
    // Predicated region
    $region6: #{cnn_forward.1} parent=1 // pred_check
      _
    $region7: #{cnn_forward.1} parent=1 // pred_check_branch
      %16 = sbr.rel (0) target = $region9
    $region8: #{cnn_forward.1} parent=1 // pred_region
      %s18 = ssub.s32 512, 512
      %19 = vsyncadd [#allocation10], %s18
      %s20 = sshll.u32 [#allocation9], 4
      %s21 = int_to_ptr.vmem [resolvable:$true] %s20
      %26 = dma.hbm_to_vmem [thread:$0]  %s1, 512, %s21, [#allocation10], 256, 256, 16
    $region9: #{cnn_forward.1} parent=1 // pred_fallthru
      _
    // Predicated region
    $region10: #{cnn_forward.1} parent=1 // pred_check
      _
    $region11: #{cnn_forward.1} parent=1 // pred_check_branch
      %28 = sbr.rel (0) target = $region13
    $region12: #{cnn_forward.1} parent=1 // pred_region
      %s30 = ssub.s32 7168, 7168
      %31 = vsyncadd [#allocation12], %s30
      %s32 = sshll.u32 [#allocation11], 4
      %s33 = int_to_ptr.vmem [resolvable:$true] %s32
      %38 = dma.hbm_to_vmem [thread:$0]  %s2, 7168, %s33, [#allocation12], 64, 64, 4
    $region13: #{cnn_forward.1} parent=1 // pred_fallthru
      _
    // Predicated region
    $region14: #{cnn_forward.1} parent=1 // pred_check
      _
    $region15: #{cnn_forward.1} parent=1 // pred_check_branch
      %40 = sbr.rel (0) target = $region17
    $region16: #{cnn_forward.1} parent=1 // pred_region
      %s42 = ssub.s32 5120, 5120
      %43 = vsyncadd [#allocation12], %s42
      %s44 = sshll.u32 [#allocation13], 4
      %s45 = int_to_ptr.vmem [resolvable:$true] %s44
      %50 = dma.hbm_to_vmem [thread:$0]  %s3, 5120, %s45, [#allocation12], 256, 256, 16
    $region17: #{cnn_forward.1} parent=1 // pred_fallthru
      _
    // Predicated region
    $region18: #{cnn_forward.1} parent=1 // pred_check
      _
    $region19: #{cnn_forward.1} parent=1 // pred_check_branch
      %52 = sbr.rel (0) target = $region21
    $region20: #{cnn_forward.1} parent=1 // pred_region
      %53 = dma.done [#allocation10], 512
    $region21: #{cnn_forward.1} parent=1 // pred_fallthru
      _
    // Predicated region
    $region22: #{cnn_forward.1} parent=1 // pred_check
      _
    $region23: #{cnn_forward.1} parent=1 // pred_check_branch
      %55 = sbr.rel (0) target = $region25
    $region24: #{cnn_forward.1} parent=1 // pred_region
      %56 = dma.done [#allocation12], 7168
    $region25: #{cnn_forward.1} parent=1 // pred_fallthru
      _
    // Predicated region
    $region26: #{cnn_forward.1} parent=1 // pred_check
      _
    $region27: #{cnn_forward.1} parent=1 // pred_check_branch
      %58 = sbr.rel (0) target = $region29
    $region28: #{cnn_forward.1} parent=1 // pred_region
      %59 = dma.done [#allocation12], 5120
    $region29: #{cnn_forward.1} parent=1 // pred_fallthru
      _
    // Predicated region
    $region30: #{cnn_forward.1} parent=1 // pred_check
      _
    $region31: #{cnn_forward.1} parent=1 // pred_check_branch
      %62 = sbr.rel target = $region33
    $region32: #{cnn_forward.1} parent=1 // pred_region
      %63 = sst [smem:[#allocation16]] [#allocation15]
      %64 = sst [smem:[#allocation17]] [#allocation14]
    $region33: #{cnn_forward.1} parent=1 // pred_fallthru
      _
    %66 = shalt.err (0)
    %s68 = sshll.u32 [#allocation2], 4
    %s69 = int_to_ptr.vmem [resolvable:$true] %s68
    %71 = dma.hbm_to_vmem [thread:$0]  %s4, 8192, %s69, [#allocation8]
    %s72 = scalar_lea.sflag [#allocation8], 1
    // Predicated region
    $region34: #{cnn_forward.1} parent=1 // pred_check
      _
    $region35: #{cnn_forward.1} parent=1 // pred_check_branch
      %74 = sbr.rel target = $region37
    $region36: #{cnn_forward.1} parent=1 // pred_region
      %75 = sst [smem:[#allocation16]] [#allocation19]
      %76 = sst [smem:[#allocation17]] [#allocation18]
    $region37: #{cnn_forward.1} parent=1 // pred_fallthru
      _
    %78 = shalt.err (0)
    %s80 = sshll.u32 [#allocation3], 4
    %s81 = int_to_ptr.vmem [resolvable:$true] %s80
    %83 = dma.hbm_to_vmem [thread:$0]  %s5, 36864, %s81, %s72
    %v84 = vld [vmem:[#allocation9] sm:$0xff]
    %v85 = vld [vmem:[#allocation9 + $0x10] ss:$0 sm:$0xff]
    %v86 = vld [vmem:[%s0] sm:$0xff]
    %v87 = vld [vmem:[%s0 + $0x8] sm:$0xff]
    %v88 = vld [vmem:[%s0 + $0x10] sm:$0xff]
    %v89 = vld [vmem:[%s0 + $0x18] sm:$0xff]
    %v90 = vld [vmem:[%s0 + $0x20] sm:$0xff]
    %v91 = vld [vmem:[%s0 + $0x28] sm:$0xff]
    %v92 = vld [vmem:[%s0 + $0x30] sm:$0xff]
    %v93 = vld [vmem:[%s0 + $0x38] sm:$0xff]
    %v94 = vld [vmem:[%s0 + $0x40] sm:$0xff]
    %v95 = vld [vmem:[%s0 + $0x48] sm:$0xff]
    %v96 = vld [vmem:[%s0 + $0x50] sm:$0xff]
    %v97 = vld [vmem:[%s0 + $0x58] sm:$0xff]
    %v98 = vld [vmem:[%s0 + $0x60] sm:$0xff]
    %v99 = vld [vmem:[%s0 + $0x68] sm:$0xff]
    %v100 = vld [vmem:[%s0 + $0x70] sm:$0xff]
    %v101 = vld [vmem:[%s0 + $0x78] sm:$0xff]
    %v102 = vld [vmem:[%s0 + $0x80] sm:$0xff]
    %v103 = vld [vmem:[%s0 + $0x88] sm:$0xff]
    %v104 = vld [vmem:[%s0 + $0x90] sm:$0xff]
    %v105 = vld [vmem:[%s0 + $0x98] sm:$0xff]
    %v106 = vld [vmem:[%s0 + $0xa0] sm:$0xff]
    %v107 = vld [vmem:[%s0 + $0xa8] sm:$0xff]
    %v108 = vld [vmem:[%s0 + $0xb0] sm:$0xff]
    %v109 = vld [vmem:[%s0 + $0xb8] sm:$0xff]
    %v110 = vld [vmem:[%s0 + $0xc0] sm:$0xff]
    %v111 = vld [vmem:[%s0 + $0xc8] sm:$0xff]
    %v112 = vld [vmem:[%s0 + $0xd0] sm:$0xff]
    %v113 = vld [vmem:[%s0 + $0xd8] sm:$0xff]
    %v114 = vld [vmem:[%s0 + $0xe0] sm:$0xff]
    %v115 = vld [vmem:[%s0 + $0xe8] sm:$0xff]
    %v116 = vld [vmem:[%s0 + $0xf0] sm:$0xff]
    %v117 = vld [vmem:[%s0 + $0xf8] sm:$0xff]
    %v118 = vld [vmem:[%s0 + $0x100] sm:$0xff]
    %v119 = vld [vmem:[%s0 + $0x108] sm:$0xff]
    %v120 = vld [vmem:[%s0 + $0x110] sm:$0xff]
    %v121 = vld [vmem:[%s0 + $0x118] sm:$0xff]
    %v122 = vld [vmem:[%s0 + $0x120] sm:$0xff]
    %v123 = vld [vmem:[%s0 + $0x128] sm:$0xff]
    %v124 = vld [vmem:[%s0 + $0x130] sm:$0xff]
    %v125 = vld [vmem:[%s0 + $0x138] sm:$0xff]
    %v126 = vld [vmem:[%s0 + $0x140] sm:$0xff]
    %v127 = vld [vmem:[%s0 + $0x148] sm:$0xff]
    %v128 = vld [vmem:[%s0 + $0x150] sm:$0xff]
    %v129 = vld [vmem:[%s0 + $0x158] sm:$0xff]
    %v130 = vld [vmem:[%s0 + $0x160] sm:$0xff]
    %v131 = vld [vmem:[%s0 + $0x168] sm:$0xff]
    %v132 = vld [vmem:[%s0 + $0x170] sm:$0xff]
    %v133 = vld [vmem:[%s0 + $0x178] sm:$0xff]
    %v134 = vld [vmem:[%s0 + $0x180] sm:$0xff]
    %v135 = vld [vmem:[%s0 + $0x188] sm:$0xff]
    %v136 = vld [vmem:[%s0 + $0x190] sm:$0xff]
    %v137 = vld [vmem:[%s0 + $0x198] sm:$0xff]
    %vm138 = vcmask 64512
    %v140 = vsel %vm138, %v86, 0
    %v143 = vsel %vm138, %v87, 0
    %v146 = vsel %vm138, %v88, 0
    %v149 = vsel %vm138, %v89, 0
    %v152 = vsel %vm138, %v90, 0
    %v155 = vsel %vm138, %v91, 0
    %v158 = vsel %vm138, %v92, 0
    %v161 = vsel %vm138, %v93, 0
    %v164 = vsel %vm138, %v94, 0
    %v167 = vsel %vm138, %v95, 0
    %v170 = vsel %vm138, %v96, 0
    %v173 = vsel %vm138, %v97, 0
    %v176 = vsel %vm138, %v98, 0
    %v179 = vsel %vm138, %v99, 0
    %v182 = vsel %vm138, %v100, 0
    %v185 = vsel %vm138, %v101, 0
    %v188 = vsel %vm138, %v102, 0
    %v191 = vsel %vm138, %v103, 0
    %v194 = vsel %vm138, %v104, 0
    %v197 = vsel %vm138, %v105, 0
    %v200 = vsel %vm138, %v106, 0
    %v203 = vsel %vm138, %v107, 0
    %v206 = vsel %vm138, %v108, 0
    %v209 = vsel %vm138, %v109, 0
    %v212 = vsel %vm138, %v110, 0
    %v215 = vsel %vm138, %v111, 0
    %v218 = vsel %vm138, %v112, 0
    %v221 = vsel %vm138, %v113, 0
    %v224 = vsel %vm138, %v114, 0
    %v227 = vsel %vm138, %v115, 0
    %v230 = vsel %vm138, %v116, 0
    %v233 = vsel %vm138, %v117, 0
    %v236 = vsel %vm138, %v118, 0
    %v239 = vsel %vm138, %v119, 0
    %v242 = vsel %vm138, %v120, 0
    %v245 = vsel %vm138, %v121, 0
    %v248 = vsel %vm138, %v122, 0
    %v251 = vsel %vm138, %v123, 0
    %v254 = vsel %vm138, %v124, 0
    %v257 = vsel %vm138, %v125, 0
    %v260 = vsel %vm138, %v126, 0
    %v263 = vsel %vm138, %v127, 0
    %v266 = vsel %vm138, %v128, 0
    %v269 = vsel %vm138, %v129, 0
    %v272 = vsel %vm138, %v130, 0
    %v275 = vsel %vm138, %v131, 0
    %v278 = vsel %vm138, %v132, 0
    %v281 = vsel %vm138, %v133, 0
    %v284 = vsel %vm138, %v134, 0
    %v287 = vsel %vm138, %v135, 0
    %v290 = vsel %vm138, %v136, 0
    %v293 = vsel %vm138, %v137, 0
    %295 = vmatprep.subr.mxu0 0.0
    %296 = vmatpush1.msra.mxu0 0.0
    %297 = vmatprep.subr.mxu0 0.0
    %298 = vmatpush1.msra.mxu0 0.0
    %299 = vmatprep.subr.mxu0 0.0
    %300 = vmatpush1.msra.mxu0 0.0
    %301 = vmatprep.subr.mxu0 0.0
    %302 = vmatpush1.msra.mxu0 0.0
    %303 = vmatprep.subr.mxu0 0.0
    %304 = vmatpush1.msra.mxu0 0.0
    %305 = vmatprep.subr.mxu0 0.0
    %306 = vmatpush1.msra.mxu0 0.0
    %307 = vmatprep.subr.mxu0 0.0
    %308 = vmatpush1.msra.mxu0 0.0
    %309 = vmatprep.subr.mxu0 0.0
    %310 = vmatpush1.msra.mxu0 0.0
    %311 = vmatprep.subr.mxu0 0.0
    %312 = vmatpush1.msra.mxu0 0.0
    %313 = vmatprep.subr.mxu0 0.0
    %314 = vmatpush1.msra.mxu0 0.0
    %315 = vmatprep.subr.mxu0 0.0
    %316 = vmatpush1.msra.mxu0 0.0
    %317 = vmatprep.subr.mxu0 0.0
    %318 = vmatpush1.msra.mxu0 0.0
    %319 = vmatprep.subr.mxu0 0.0
    %320 = vmatpush1.msra.mxu0 0.0
    %321 = vmatprep.subr.mxu0 0.0
    %322 = vmatpush1.msra.mxu0 0.0
    %323 = vmatprep.subr.mxu0 0.0
    %324 = vmatpush1.msra.mxu0 0.0
    %325 = vmatprep.subr.mxu0 0.0
    %326 = vmatpush1.msra.mxu0 %v84
    %327 = vmatprep.subr.mxu0 0.0
    %328 = vmatpush2.msra.mxu0 0.0
    %329 = vmatprep.subr.mxu0 0.0
    %330 = vmatpush2.msra.mxu0 0.0
    %331 = vmatprep.subr.mxu0 0.0
    %332 = vmatpush2.msra.mxu0 0.0
    %333 = vmatprep.subr.mxu0 0.0
    %334 = vmatpush2.msra.mxu0 0.0
    %335 = vmatprep.subr.mxu0 0.0
    %336 = vmatpush2.msra.mxu0 0.0
    %337 = vmatprep.subr.mxu0 0.0
    %338 = vmatpush2.msra.mxu0 0.0
    %339 = vmatprep.subr.mxu0 0.0
    %340 = vmatpush2.msra.mxu0 0.0
    %341 = vmatprep.subr.mxu0 0.0
    %342 = vmatpush2.msra.mxu0 0.0
    %343 = vmatprep.subr.mxu0 0.0
    %344 = vmatpush2.msra.mxu0 0.0
    %345 = vmatprep.subr.mxu0 0.0
    %346 = vmatpush2.msra.mxu0 0.0
    %347 = vmatprep.subr.mxu0 0.0
    %348 = vmatpush2.msra.mxu0 0.0
    %349 = vmatprep.subr.mxu0 0.0
    %350 = vmatpush2.msra.mxu0 0.0
    %351 = vmatprep.subr.mxu0 0.0
    %352 = vmatpush2.msra.mxu0 0.0
    %353 = vmatprep.subr.mxu0 0.0
    %354 = vmatpush2.msra.mxu0 0.0
    %355 = vmatprep.subr.mxu0 0.0
    %356 = vmatpush2.msra.mxu0 0.0
    %357 = vmatprep.subr.mxu0 0.0
    %358 = vmatpush2.msra.mxu0 0.0
    %359 = vmatprep.mubr.f32.mxu0 0.0
    %360 = vmatmul.mubr.f32.gmra.mxu0 %v140
    %v361 = vpop.f32.mrf.mxu0
    %v362 = vadd.f32 %v85, %v361
    %v363 = vpop.f32.mrf.mxu0
    %364 = vmatprep.mubr.f32.mxu0 0.0
    %365 = vmatmul.mubr.f32.gmra.mxu0 %v143
    %v366 = vpop.f32.mrf.mxu0
    %v367 = vadd.f32 %v85, %v366
    %v368 = vpop.f32.mrf.mxu0
    %369 = vmatprep.mubr.f32.mxu0 0.0
    %370 = vmatmul.mubr.f32.gmra.mxu0 %v146
    %v371 = vpop.f32.mrf.mxu0
    %v372 = vadd.f32 %v85, %v371
    %v373 = vpop.f32.mrf.mxu0
    %374 = vmatprep.mubr.f32.mxu0 0.0
    %375 = vmatmul.mubr.f32.gmra.mxu0 %v149
    %v376 = vpop.f32.mrf.mxu0
    %v377 = vadd.f32 %v85, %v376
    %v378 = vpop.f32.mrf.mxu0
    %379 = vmatprep.mubr.f32.mxu0 0.0
    %380 = vmatmul.mubr.f32.gmra.mxu0 %v152
    %v381 = vpop.f32.mrf.mxu0
    %v382 = vadd.f32 %v85, %v381
    %v383 = vpop.f32.mrf.mxu0
    %384 = vmatprep.mubr.f32.mxu0 0.0
    %385 = vmatmul.mubr.f32.gmra.mxu0 %v155
    %v386 = vpop.f32.mrf.mxu0
    %v387 = vadd.f32 %v85, %v386
    %v388 = vpop.f32.mrf.mxu0
    %389 = vmatprep.mubr.f32.mxu0 0.0
    %390 = vmatmul.mubr.f32.gmra.mxu0 %v158
    %v391 = vpop.f32.mrf.mxu0
    %v392 = vadd.f32 %v85, %v391
    %v393 = vpop.f32.mrf.mxu0
    %394 = vmatprep.mubr.f32.mxu0 0.0
    %395 = vmatmul.mubr.f32.gmra.mxu0 %v161
    %v396 = vpop.f32.mrf.mxu0
    %v397 = vadd.f32 %v85, %v396
    %v398 = vpop.f32.mrf.mxu0
    %399 = vmatprep.mubr.f32.mxu0 0.0
    %400 = vmatmul.mubr.f32.gmra.mxu0 %v164
    %v401 = vpop.f32.mrf.mxu0
    %v402 = vadd.f32 %v85, %v401
    %v403 = vpop.f32.mrf.mxu0
    %404 = vmatprep.mubr.f32.mxu0 0.0
    %405 = vmatmul.mubr.f32.gmra.mxu0 %v167
    %v406 = vpop.f32.mrf.mxu0
    %v407 = vadd.f32 %v85, %v406
    %v408 = vpop.f32.mrf.mxu0
    %409 = vmatprep.mubr.f32.mxu0 0.0
    %410 = vmatmul.mubr.f32.gmra.mxu0 %v170
    %v411 = vpop.f32.mrf.mxu0
    %v412 = vadd.f32 %v85, %v411
    %v413 = vpop.f32.mrf.mxu0
    %414 = vmatprep.mubr.f32.mxu0 0.0
    %415 = vmatmul.mubr.f32.gmra.mxu0 %v173
    %v416 = vpop.f32.mrf.mxu0
    %v417 = vadd.f32 %v85, %v416
    %v418 = vpop.f32.mrf.mxu0
    %419 = vmatprep.mubr.f32.mxu0 0.0
    %420 = vmatmul.mubr.f32.gmra.mxu0 %v176
    %v421 = vpop.f32.mrf.mxu0
    %v422 = vadd.f32 %v85, %v421
    %v423 = vpop.f32.mrf.mxu0
    %424 = vmatprep.mubr.f32.mxu0 0.0
    %425 = vmatmul.mubr.f32.gmra.mxu0 %v179
    %v426 = vpop.f32.mrf.mxu0
    %v427 = vadd.f32 %v85, %v426
    %v428 = vpop.f32.mrf.mxu0
    %429 = vmatprep.mubr.f32.mxu0 0.0
    %430 = vmatmul.mubr.f32.gmra.mxu0 %v182
    %v431 = vpop.f32.mrf.mxu0
    %v432 = vadd.f32 %v85, %v431
    %v433 = vpop.f32.mrf.mxu0
    %434 = vmatprep.mubr.f32.mxu0 0.0
    %435 = vmatmul.mubr.f32.gmra.mxu0 %v185
    %v436 = vpop.f32.mrf.mxu0
    %v437 = vadd.f32 %v85, %v436
    %v438 = vpop.f32.mrf.mxu0
    %439 = vmatprep.mubr.f32.mxu0 0.0
    %440 = vmatmul.mubr.f32.gmra.mxu0 %v188
    %v441 = vpop.f32.mrf.mxu0
    %v442 = vadd.f32 %v85, %v441
    %v443 = vpop.f32.mrf.mxu0
    %444 = vmatprep.mubr.f32.mxu0 0.0
    %445 = vmatmul.mubr.f32.gmra.mxu0 %v191
    %v446 = vpop.f32.mrf.mxu0
    %v447 = vadd.f32 %v85, %v446
    %v448 = vpop.f32.mrf.mxu0
    %449 = vmatprep.mubr.f32.mxu0 0.0
    %450 = vmatmul.mubr.f32.gmra.mxu0 %v194
    %v451 = vpop.f32.mrf.mxu0
    %v452 = vadd.f32 %v85, %v451
    %v453 = vpop.f32.mrf.mxu0
    %454 = vmatprep.mubr.f32.mxu0 0.0
    %455 = vmatmul.mubr.f32.gmra.mxu0 %v197
    %v456 = vpop.f32.mrf.mxu0
    %v457 = vadd.f32 %v85, %v456
    %v458 = vpop.f32.mrf.mxu0
    %459 = vmatprep.mubr.f32.mxu0 0.0
    %460 = vmatmul.mubr.f32.gmra.mxu0 %v200
    %v461 = vpop.f32.mrf.mxu0
    %v462 = vadd.f32 %v85, %v461
    %v463 = vpop.f32.mrf.mxu0
    %464 = vmatprep.mubr.f32.mxu0 0.0
    %465 = vmatmul.mubr.f32.gmra.mxu0 %v203
    %v466 = vpop.f32.mrf.mxu0
    %v467 = vadd.f32 %v85, %v466
    %v468 = vpop.f32.mrf.mxu0
    %469 = vmatprep.mubr.f32.mxu0 0.0
    %470 = vmatmul.mubr.f32.gmra.mxu0 %v206
    %v471 = vpop.f32.mrf.mxu0
    %v472 = vadd.f32 %v85, %v471
    %v473 = vpop.f32.mrf.mxu0
    %474 = vmatprep.mubr.f32.mxu0 0.0
    %475 = vmatmul.mubr.f32.gmra.mxu0 %v209
    %v476 = vpop.f32.mrf.mxu0
    %v477 = vadd.f32 %v85, %v476
    %v478 = vpop.f32.mrf.mxu0
    %479 = vmatprep.mubr.f32.mxu0 0.0
    %480 = vmatmul.mubr.f32.gmra.mxu0 %v212
    %v481 = vpop.f32.mrf.mxu0
    %v482 = vadd.f32 %v85, %v481
    %v483 = vpop.f32.mrf.mxu0
    %484 = vmatprep.mubr.f32.mxu0 0.0
    %485 = vmatmul.mubr.f32.gmra.mxu0 %v215
    %v486 = vpop.f32.mrf.mxu0
    %v487 = vadd.f32 %v85, %v486
    %v488 = vpop.f32.mrf.mxu0
    %489 = vmatprep.mubr.f32.mxu0 0.0
    %490 = vmatmul.mubr.f32.gmra.mxu0 %v218
    %v491 = vpop.f32.mrf.mxu0
    %v492 = vadd.f32 %v85, %v491
    %v493 = vpop.f32.mrf.mxu0
    %494 = vmatprep.mubr.f32.mxu0 0.0
    %495 = vmatmul.mubr.f32.gmra.mxu0 %v221
    %v496 = vpop.f32.mrf.mxu0
    %v497 = vadd.f32 %v85, %v496
    %v498 = vpop.f32.mrf.mxu0
    %499 = vmatprep.mubr.f32.mxu0 0.0
    %500 = vmatmul.mubr.f32.gmra.mxu0 %v224
    %v501 = vpop.f32.mrf.mxu0
    %v502 = vadd.f32 %v85, %v501
    %v503 = vpop.f32.mrf.mxu0
    %504 = vmatprep.mubr.f32.mxu0 0.0
    %505 = vmatmul.mubr.f32.gmra.mxu0 %v227
    %v506 = vpop.f32.mrf.mxu0
    %v507 = vadd.f32 %v85, %v506
    %v508 = vpop.f32.mrf.mxu0
    %509 = vmatprep.mubr.f32.mxu0 0.0
    %510 = vmatmul.mubr.f32.gmra.mxu0 %v230
    %v511 = vpop.f32.mrf.mxu0
    %v512 = vadd.f32 %v85, %v511
    %v513 = vpop.f32.mrf.mxu0
    %514 = vmatprep.mubr.f32.mxu0 0.0
    %515 = vmatmul.mubr.f32.gmra.mxu0 %v233
    %v516 = vpop.f32.mrf.mxu0
    %v517 = vadd.f32 %v85, %v516
    %v518 = vpop.f32.mrf.mxu0
    %519 = vmatprep.mubr.f32.mxu0 0.0
    %520 = vmatmul.mubr.f32.gmra.mxu0 %v236
    %v521 = vpop.f32.mrf.mxu0
    %v522 = vadd.f32 %v85, %v521
    %v523 = vpop.f32.mrf.mxu0
    %524 = vmatprep.mubr.f32.mxu0 0.0
    %525 = vmatmul.mubr.f32.gmra.mxu0 %v239
    %v526 = vpop.f32.mrf.mxu0
    %v527 = vadd.f32 %v85, %v526
    %v528 = vpop.f32.mrf.mxu0
    %529 = vmatprep.mubr.f32.mxu0 0.0
    %530 = vmatmul.mubr.f32.gmra.mxu0 %v242
    %v531 = vpop.f32.mrf.mxu0
    %v532 = vadd.f32 %v85, %v531
    %v533 = vpop.f32.mrf.mxu0
    %534 = vmatprep.mubr.f32.mxu0 0.0
    %535 = vmatmul.mubr.f32.gmra.mxu0 %v245
    %v536 = vpop.f32.mrf.mxu0
    %v537 = vadd.f32 %v85, %v536
    %v538 = vpop.f32.mrf.mxu0
    %539 = vmatprep.mubr.f32.mxu0 0.0
    %540 = vmatmul.mubr.f32.gmra.mxu0 %v248
    %v541 = vpop.f32.mrf.mxu0
    %v542 = vadd.f32 %v85, %v541
    %v543 = vpop.f32.mrf.mxu0
    %544 = vmatprep.mubr.f32.mxu0 0.0
    %545 = vmatmul.mubr.f32.gmra.mxu0 %v251
    %v546 = vpop.f32.mrf.mxu0
    %v547 = vadd.f32 %v85, %v546
    %v548 = vpop.f32.mrf.mxu0
    %549 = vmatprep.mubr.f32.mxu0 0.0
    %550 = vmatmul.mubr.f32.gmra.mxu0 %v254
    %v551 = vpop.f32.mrf.mxu0
    %v552 = vadd.f32 %v85, %v551
    %v553 = vpop.f32.mrf.mxu0
    %554 = vmatprep.mubr.f32.mxu0 0.0
    %555 = vmatmul.mubr.f32.gmra.mxu0 %v257
    %v556 = vpop.f32.mrf.mxu0
    %v557 = vadd.f32 %v85, %v556
    %v558 = vpop.f32.mrf.mxu0
    %559 = vmatprep.mubr.f32.mxu0 0.0
    %560 = vmatmul.mubr.f32.gmra.mxu0 %v260
    %v561 = vpop.f32.mrf.mxu0
    %v562 = vadd.f32 %v85, %v561
    %v563 = vpop.f32.mrf.mxu0
    %564 = vmatprep.mubr.f32.mxu0 0.0
    %565 = vmatmul.mubr.f32.gmra.mxu0 %v263
    %v566 = vpop.f32.mrf.mxu0
    %v567 = vadd.f32 %v85, %v566
    %v568 = vpop.f32.mrf.mxu0
    %569 = vmatprep.mubr.f32.mxu0 0.0
    %570 = vmatmul.mubr.f32.gmra.mxu0 %v266
    %v571 = vpop.f32.mrf.mxu0
    %v572 = vadd.f32 %v85, %v571
    %v573 = vpop.f32.mrf.mxu0
    %574 = vmatprep.mubr.f32.mxu0 0.0
    %575 = vmatmul.mubr.f32.gmra.mxu0 %v269
    %v576 = vpop.f32.mrf.mxu0
    %v577 = vadd.f32 %v85, %v576
    %v578 = vpop.f32.mrf.mxu0
    %579 = vmatprep.mubr.f32.mxu0 0.0
    %580 = vmatmul.mubr.f32.gmra.mxu0 %v272
    %v581 = vpop.f32.mrf.mxu0
    %v582 = vadd.f32 %v85, %v581
    %v583 = vpop.f32.mrf.mxu0
    %584 = vmatprep.mubr.f32.mxu0 0.0
    %585 = vmatmul.mubr.f32.gmra.mxu0 %v275
    %v586 = vpop.f32.mrf.mxu0
    %v587 = vadd.f32 %v85, %v586
    %v588 = vpop.f32.mrf.mxu0
    %589 = vmatprep.mubr.f32.mxu0 0.0
    %590 = vmatmul.mubr.f32.gmra.mxu0 %v278
    %v591 = vpop.f32.mrf.mxu0
    %v592 = vadd.f32 %v85, %v591
    %v593 = vpop.f32.mrf.mxu0
    %594 = vmatprep.mubr.f32.mxu0 0.0
    %595 = vmatmul.mubr.f32.gmra.mxu0 %v281
    %v596 = vpop.f32.mrf.mxu0
    %v597 = vadd.f32 %v85, %v596
    %v598 = vpop.f32.mrf.mxu0
    %599 = vmatprep.mubr.f32.mxu0 0.0
    %600 = vmatmul.mubr.f32.gmra.mxu0 %v284
    %v601 = vpop.f32.mrf.mxu0
    %v602 = vadd.f32 %v85, %v601
    %v603 = vpop.f32.mrf.mxu0
    %604 = vmatprep.mubr.f32.mxu0 0.0
    %605 = vmatmul.mubr.f32.gmra.mxu0 %v287
    %v606 = vpop.f32.mrf.mxu0
    %v607 = vadd.f32 %v85, %v606
    %v608 = vpop.f32.mrf.mxu0
    %609 = vmatprep.mubr.f32.mxu0 0.0
    %610 = vmatmul.mubr.f32.gmra.mxu0 %v290
    %v611 = vpop.f32.mrf.mxu0
    %v612 = vadd.f32 %v85, %v611
    %v613 = vpop.f32.mrf.mxu0
    %614 = vmatprep.mubr.f32.mxu0 0.0
    %615 = vmatmul.mubr.f32.gmra.mxu0 %v293
    %v616 = vpop.f32.mrf.mxu0
    %v617 = vadd.f32 %v85, %v616
    %v618 = vpop.f32.mrf.mxu0
    %619 = vdwg.mxu0
    %v620 = vmax.f32 %v362, 0.0
    %v621 = vmax.f32 %v367, 0.0
    %v622 = vmax.f32 %v372, 0.0
    %v623 = vmax.f32 %v377, 0.0
    %v624 = vmax.f32 %v382, 0.0
    %v625 = vmax.f32 %v387, 0.0
    %v626 = vmax.f32 %v392, 0.0
    %v627 = vmax.f32 %v397, 0.0
    %v628 = vmax.f32 %v402, 0.0
    %v629 = vmax.f32 %v407, 0.0
    %v630 = vmax.f32 %v412, 0.0
    %v631 = vmax.f32 %v417, 0.0
    %v632 = vmax.f32 %v422, 0.0
    %v633 = vmax.f32 %v427, 0.0
    %v634 = vmax.f32 %v432, 0.0
    %v635 = vmax.f32 %v437, 0.0
    %v636 = vmax.f32 %v442, 0.0
    %v637 = vmax.f32 %v447, 0.0
    %v638 = vmax.f32 %v452, 0.0
    %v639 = vmax.f32 %v457, 0.0
    %v640 = vmax.f32 %v462, 0.0
    %v641 = vmax.f32 %v467, 0.0
    %v642 = vmax.f32 %v472, 0.0
    %v643 = vmax.f32 %v477, 0.0
    %v644 = vmax.f32 %v482, 0.0
    %v645 = vmax.f32 %v487, 0.0
    %v646 = vmax.f32 %v492, 0.0
    %v647 = vmax.f32 %v497, 0.0
    %v648 = vmax.f32 %v502, 0.0
    %v649 = vmax.f32 %v507, 0.0
    %v650 = vmax.f32 %v512, 0.0
    %v651 = vmax.f32 %v517, 0.0
    %v652 = vmax.f32 %v522, 0.0
    %v653 = vmax.f32 %v527, 0.0
    %v654 = vmax.f32 %v532, 0.0
    %v655 = vmax.f32 %v537, 0.0
    %v656 = vmax.f32 %v542, 0.0
    %v657 = vmax.f32 %v547, 0.0
    %v658 = vmax.f32 %v552, 0.0
    %v659 = vmax.f32 %v557, 0.0
    %v660 = vmax.f32 %v562, 0.0
    %v661 = vmax.f32 %v567, 0.0
    %v662 = vmax.f32 %v572, 0.0
    %v663 = vmax.f32 %v577, 0.0
    %v664 = vmax.f32 %v582, 0.0
    %v665 = vmax.f32 %v587, 0.0
    %v666 = vmax.f32 %v592, 0.0
    %v667 = vmax.f32 %v597, 0.0
    %v668 = vmax.f32 %v602, 0.0
    %v669 = vmax.f32 %v607, 0.0
    %v670 = vmax.f32 %v612, 0.0
    %v671 = vmax.f32 %v617, 0.0
    %v672 = vpack.c.bf16 %v621, %v620
    %v673 = vpack.c.bf16 %v623, %v622
    %v674 = vpack.c.bf16 %v625, %v624
    %v675 = vpack.c.bf16 %v627, %v626
    %v676 = vpack.c.bf16 %v629, %v628
    %v677 = vpack.c.bf16 %v631, %v630
    %v678 = vpack.c.bf16 %v633, %v632
    %v679 = vpack.c.bf16 %v635, %v634
    %v680 = vpack.c.bf16 %v637, %v636
    %v681 = vpack.c.bf16 %v639, %v638
    %v682 = vpack.c.bf16 %v641, %v640
    %v683 = vpack.c.bf16 %v643, %v642
    %v684 = vpack.c.bf16 %v645, %v644
    %v685 = vpack.c.bf16 %v647, %v646
    %v686 = vpack.c.bf16 %v649, %v648
    %v687 = vpack.c.bf16 %v651, %v650
    %v688 = vpack.c.bf16 %v653, %v652
    %v689 = vpack.c.bf16 %v655, %v654
    %v690 = vpack.c.bf16 %v657, %v656
    %v691 = vpack.c.bf16 %v659, %v658
    %v692 = vpack.c.bf16 %v661, %v660
    %v693 = vpack.c.bf16 %v663, %v662
    %v694 = vpack.c.bf16 %v665, %v664
    %v695 = vpack.c.bf16 %v667, %v666
    %v696 = vpack.c.bf16 %v669, %v668
    %v697 = vpack.c.bf16 %v671, %v670
    %v724 = vunpack.c.l.b16 %v672
    %v725 = vunpack.c.h.b16 %v672
    %v726 = vunpack.c.l.b16 %v673
    %v727 = vunpack.c.h.b16 %v673
    %v728 = vunpack.c.l.b16 %v674
    %v729 = vunpack.c.h.b16 %v674
    %v730 = vunpack.c.l.b16 %v675
    %v731 = vunpack.c.h.b16 %v675
    %v732 = vunpack.c.l.b16 %v676
    %v733 = vunpack.c.h.b16 %v676
    %v734 = vunpack.c.l.b16 %v677
    %v735 = vunpack.c.h.b16 %v677
    %v736 = vunpack.c.l.b16 %v678
    %v737 = vunpack.c.h.b16 %v678
    %v738 = vunpack.c.l.b16 %v679
    %v739 = vunpack.c.h.b16 %v679
    %v740 = vunpack.c.l.b16 %v680
    %v741 = vunpack.c.h.b16 %v680
    %v742 = vunpack.c.l.b16 %v681
    %v743 = vunpack.c.h.b16 %v681
    %v744 = vunpack.c.l.b16 %v682
    %v745 = vunpack.c.h.b16 %v682
    %v746 = vunpack.c.l.b16 %v683
    %v747 = vunpack.c.h.b16 %v683
    %v748 = vunpack.c.l.b16 %v684
    %v749 = vunpack.c.h.b16 %v684
    %v750 = vunpack.c.l.b16 %v685
    %v751 = vunpack.c.h.b16 %v685
    %v752 = vunpack.c.l.b16 %v686
    %v753 = vunpack.c.h.b16 %v686
    %v754 = vunpack.c.l.b16 %v687
    %v755 = vunpack.c.h.b16 %v687
    %v756 = vunpack.c.l.b16 %v688
    %v757 = vunpack.c.h.b16 %v688
    %v758 = vunpack.c.l.b16 %v689
    %v759 = vunpack.c.h.b16 %v689
    %v760 = vunpack.c.l.b16 %v690
    %v761 = vunpack.c.h.b16 %v690
    %v762 = vunpack.c.l.b16 %v691
    %v763 = vunpack.c.h.b16 %v691
    %v764 = vunpack.c.l.b16 %v692
    %v765 = vunpack.c.h.b16 %v692
    %v766 = vunpack.c.l.b16 %v693
    %v767 = vunpack.c.h.b16 %v693
    %v768 = vunpack.c.l.b16 %v694
    %v769 = vunpack.c.h.b16 %v694
    %v770 = vunpack.c.l.b16 %v695
    %v771 = vunpack.c.h.b16 %v695
    %v772 = vunpack.c.l.b16 %v696
    %v773 = vunpack.c.h.b16 %v696
    %v774 = vunpack.c.l.b16 %v697
    %v775 = vunpack.c.h.b16 %v697
    %v776 = vpack.c.b16 %v724, %v724
    %v777 = vpack.c.b16 %v725, %v725
    %v778 = vpack.c.b16 %v726, %v726
    %v779 = vpack.c.b16 %v727, %v727
    %v780 = vpack.c.b16 %v728, %v728
    %v781 = vpack.c.b16 %v729, %v729
    %v782 = vpack.c.b16 %v730, %v730
    %v783 = vpack.c.b16 %v731, %v731
    %v784 = vpack.c.b16 %v732, %v732
    %v785 = vpack.c.b16 %v733, %v733
    %v786 = vpack.c.b16 %v734, %v734
    %v787 = vpack.c.b16 %v735, %v735
    %v788 = vpack.c.b16 %v736, %v736
    %v789 = vpack.c.b16 %v737, %v737
    %v790 = vpack.c.b16 %v738, %v738
    %v791 = vpack.c.b16 %v739, %v739
    %v792 = vpack.c.b16 %v740, %v740
    %v793 = vpack.c.b16 %v741, %v741
    %v794 = vpack.c.b16 %v742, %v742
    %v795 = vpack.c.b16 %v743, %v743
    %v796 = vpack.c.b16 %v744, %v744
    %v797 = vpack.c.b16 %v745, %v745
    %v798 = vpack.c.b16 %v746, %v746
    %v799 = vpack.c.b16 %v747, %v747
    %v800 = vpack.c.b16 %v748, %v748
    %v801 = vpack.c.b16 %v749, %v749
    %v802 = vpack.c.b16 %v750, %v750
    %v803 = vpack.c.b16 %v751, %v751
    %v804 = vpack.c.b16 %v752, %v752
    %v805 = vpack.c.b16 %v753, %v753
    %v806 = vpack.c.b16 %v754, %v754
    %v807 = vpack.c.b16 %v755, %v755
    %v808 = vpack.c.b16 %v756, %v756
    %v809 = vpack.c.b16 %v757, %v757
    %v810 = vpack.c.b16 %v758, %v758
    %v811 = vpack.c.b16 %v759, %v759
    %v812 = vpack.c.b16 %v760, %v760
    %v813 = vpack.c.b16 %v761, %v761
    %v814 = vpack.c.b16 %v762, %v762
    %v815 = vpack.c.b16 %v763, %v763
    %v816 = vpack.c.b16 %v764, %v764
    %v817 = vpack.c.b16 %v765, %v765
    %v818 = vpack.c.b16 %v766, %v766
    %v819 = vpack.c.b16 %v767, %v767
    %v820 = vpack.c.b16 %v768, %v768
    %v821 = vpack.c.b16 %v769, %v769
    %v822 = vpack.c.b16 %v770, %v770
    %v823 = vpack.c.b16 %v771, %v771
    %v824 = vpack.c.b16 %v772, %v772
    %v825 = vpack.c.b16 %v773, %v773
    %v826 = vpack.c.b16 %v774, %v774
    %v827 = vpack.c.b16 %v775, %v775
    %vm880 = vcmask 257024
    %881 = vst.msk [vmem:[#allocation4] sm:$0xf] %vm880, %v776
    %882 = vst.msk [vmem:[#allocation4 + $0x4] sm:$0xf] %vm880, %v777
    %883 = vst.msk [vmem:[#allocation4 + $0x8] sm:$0xf] %vm880, %v778
    %884 = vst.msk [vmem:[#allocation4 + $0xc] sm:$0xf] %vm880, %v779
    %885 = vst.msk [vmem:[#allocation4 + $0x10] sm:$0xf] %vm880, %v780
    %886 = vst.msk [vmem:[#allocation4 + $0x14] sm:$0xf] %vm880, %v781
    %887 = vst.msk [vmem:[#allocation4 + $0x18] sm:$0xf] %vm880, %v782
    %888 = vst.msk [vmem:[#allocation4 + $0x1c] sm:$0xf] %vm880, %v783
    %889 = vst.msk [vmem:[#allocation4 + $0x20] sm:$0xf] %vm880, %v784
    %890 = vst.msk [vmem:[#allocation4 + $0x24] sm:$0xf] %vm880, %v785
    %891 = vst.msk [vmem:[#allocation4 + $0x28] sm:$0xf] %vm880, %v786
    %892 = vst.msk [vmem:[#allocation4 + $0x2c] sm:$0xf] %vm880, %v787
    %893 = vst.msk [vmem:[#allocation4 + $0x30] sm:$0xf] %vm880, %v788
    %894 = vst.msk [vmem:[#allocation4 + $0x34] sm:$0xf] %vm880, %v789
    %895 = vst.msk [vmem:[#allocation4 + $0x38] sm:$0xf] %vm880, %v790
    %896 = vst.msk [vmem:[#allocation4 + $0x3c] sm:$0xf] %vm880, %v791
    %897 = vst.msk [vmem:[#allocation4 + $0x40] sm:$0xf] %vm880, %v792
    %898 = vst.msk [vmem:[#allocation4 + $0x44] sm:$0xf] %vm880, %v793
    %899 = vst.msk [vmem:[#allocation4 + $0x48] sm:$0xf] %vm880, %v794
    %900 = vst.msk [vmem:[#allocation4 + $0x4c] sm:$0xf] %vm880, %v795
    %901 = vst.msk [vmem:[#allocation4 + $0x50] sm:$0xf] %vm880, %v796
    %902 = vst.msk [vmem:[#allocation4 + $0x54] sm:$0xf] %vm880, %v797
    %903 = vst.msk [vmem:[#allocation4 + $0x58] sm:$0xf] %vm880, %v798
    %904 = vst.msk [vmem:[#allocation4 + $0x5c] sm:$0xf] %vm880, %v799
    %905 = vst.msk [vmem:[#allocation4 + $0x60] sm:$0xf] %vm880, %v800
    %906 = vst.msk [vmem:[#allocation4 + $0x64] sm:$0xf] %vm880, %v801
    %907 = vst.msk [vmem:[#allocation4 + $0x68] sm:$0xf] %vm880, %v802
    %908 = vst.msk [vmem:[#allocation4 + $0x6c] sm:$0xf] %vm880, %v803
    %909 = vst.msk [vmem:[#allocation4 + $0x70] sm:$0xf] %vm880, %v804
    %910 = vst.msk [vmem:[#allocation4 + $0x74] sm:$0xf] %vm880, %v805
    %911 = vst.msk [vmem:[#allocation4 + $0x78] sm:$0xf] %vm880, %v806
    %912 = vst.msk [vmem:[#allocation4 + $0x7c] sm:$0xf] %vm880, %v807
    %913 = vst.msk [vmem:[#allocation4 + $0x80] sm:$0xf] %vm880, %v808
    %914 = vst.msk [vmem:[#allocation4 + $0x84] sm:$0xf] %vm880, %v809
    %915 = vst.msk [vmem:[#allocation4 + $0x88] sm:$0xf] %vm880, %v810
    %916 = vst.msk [vmem:[#allocation4 + $0x8c] sm:$0xf] %vm880, %v811
    %917 = vst.msk [vmem:[#allocation4 + $0x90] sm:$0xf] %vm880, %v812
    %918 = vst.msk [vmem:[#allocation4 + $0x94] sm:$0xf] %vm880, %v813
    %919 = vst.msk [vmem:[#allocation4 + $0x98] sm:$0xf] %vm880, %v814
    %920 = vst.msk [vmem:[#allocation4 + $0x9c] sm:$0xf] %vm880, %v815
    %921 = vst.msk [vmem:[#allocation4 + $0xa0] sm:$0xf] %vm880, %v816
    %922 = vst.msk [vmem:[#allocation4 + $0xa4] sm:$0xf] %vm880, %v817
    %923 = vst.msk [vmem:[#allocation4 + $0xa8] sm:$0xf] %vm880, %v818
    %924 = vst.msk [vmem:[#allocation4 + $0xac] sm:$0xf] %vm880, %v819
    %925 = vst.msk [vmem:[#allocation4 + $0xb0] sm:$0xf] %vm880, %v820
    %926 = vst.msk [vmem:[#allocation4 + $0xb4] sm:$0xf] %vm880, %v821
    %927 = vst.msk [vmem:[#allocation4 + $0xb8] sm:$0xf] %vm880, %v822
    %928 = vst.msk [vmem:[#allocation4 + $0xbc] sm:$0xf] %vm880, %v823
    %929 = vst.msk [vmem:[#allocation4 + $0xc0] sm:$0xf] %vm880, %v824
    %930 = vst.msk [vmem:[#allocation4 + $0xc4] sm:$0xf] %vm880, %v825
    %931 = vst.msk [vmem:[#allocation4 + $0xc8] sm:$0xf] %vm880, %v826
    %932 = vst.msk [vmem:[#allocation4 + $0xcc] sm:$0xf] %vm880, %v827
    %v933 = vld [vmem:[#allocation4] sm:$0xf]
    %v934 = vld [vmem:[#allocation4 + $0x4] sm:$0xf]
    %v935 = vld [vmem:[#allocation4 + $0x8] sm:$0xf]
    %v936 = vld [vmem:[#allocation4 + $0xc] sm:$0xf]
    %v937 = vld [vmem:[#allocation4 + $0x10] sm:$0xf]
    %v938 = vld [vmem:[#allocation4 + $0x14] sm:$0xf]
    %v939 = vld [vmem:[#allocation4 + $0x18] sm:$0xf]
    %v940 = vld [vmem:[#allocation4 + $0x1c] sm:$0xf]
    %v941 = vld [vmem:[#allocation4 + $0x20] sm:$0xf]
    %v942 = vld [vmem:[#allocation4 + $0x24] sm:$0xf]
    %v943 = vld [vmem:[#allocation4 + $0x28] sm:$0xf]
    %v944 = vld [vmem:[#allocation4 + $0x2c] sm:$0xf]
    %v945 = vld [vmem:[#allocation4 + $0x30] sm:$0xf]
    %v946 = vld [vmem:[#allocation4 + $0x34] sm:$0xf]
    %v947 = vld [vmem:[#allocation4 + $0x38] sm:$0xf]
    %v948 = vld [vmem:[#allocation4 + $0x3c] sm:$0xf]
    %v949 = vld [vmem:[#allocation4 + $0x40] sm:$0xf]
    %v950 = vld [vmem:[#allocation4 + $0x44] sm:$0xf]
    %v951 = vld [vmem:[#allocation4 + $0x48] sm:$0xf]
    %v952 = vld [vmem:[#allocation4 + $0x4c] sm:$0xf]
    %v953 = vld [vmem:[#allocation4 + $0x50] sm:$0xf]
    %v954 = vld [vmem:[#allocation4 + $0x54] sm:$0xf]
    %v955 = vld [vmem:[#allocation4 + $0x58] sm:$0xf]
    %v956 = vld [vmem:[#allocation4 + $0x5c] sm:$0xf]
    %v957 = vld [vmem:[#allocation4 + $0x60] sm:$0xf]
    %v958 = vld [vmem:[#allocation4 + $0x64] sm:$0xf]
    %v959 = vld [vmem:[#allocation4 + $0x68] sm:$0xf]
    %v960 = vld [vmem:[#allocation4 + $0x6c] sm:$0xf]
    %v961 = vld [vmem:[#allocation4 + $0x70] sm:$0xf]
    %v962 = vld [vmem:[#allocation4 + $0x74] sm:$0xf]
    %v963 = vld [vmem:[#allocation4 + $0x78] sm:$0xf]
    %v964 = vld [vmem:[#allocation4 + $0x7c] sm:$0xf]
    %v965 = vld [vmem:[#allocation4 + $0x80] sm:$0xf]
    %v966 = vld [vmem:[#allocation4 + $0x84] sm:$0xf]
    %v967 = vld [vmem:[#allocation4 + $0x88] sm:$0xf]
    %v968 = vld [vmem:[#allocation4 + $0x8c] sm:$0xf]
    %v969 = vld [vmem:[#allocation4 + $0x90] sm:$0xf]
    %v970 = vld [vmem:[#allocation4 + $0x94] sm:$0xf]
    %v971 = vld [vmem:[#allocation4 + $0x98] sm:$0xf]
    %v972 = vld [vmem:[#allocation4 + $0x9c] sm:$0xf]
    %v973 = vld [vmem:[#allocation4 + $0xa0] sm:$0xf]
    %v974 = vld [vmem:[#allocation4 + $0xa4] sm:$0xf]
    %v975 = vld [vmem:[#allocation4 + $0xa8] sm:$0xf]
    %v976 = vld [vmem:[#allocation4 + $0xac] sm:$0xf]
    %v977 = vld [vmem:[#allocation4 + $0xb0] sm:$0xf]
    %v978 = vld [vmem:[#allocation4 + $0xb4] sm:$0xf]
    %v979 = vld [vmem:[#allocation4 + $0xb8] sm:$0xf]
    %v980 = vld [vmem:[#allocation4 + $0xbc] sm:$0xf]
    %v981 = vld [vmem:[#allocation4 + $0xc0] sm:$0xf]
    %v982 = vld [vmem:[#allocation4 + $0xc4] sm:$0xf]
    %v983 = vld [vmem:[#allocation4 + $0xc8] sm:$0x1]
    %vm984 = vsmask.f32 3328
    %vm985 = vsmask.f32 7440
    %vm986 = vmor %vm984, %vm985
    %v988 = vshrl.u32 %v933, 16
    %v990 = vrot.slane %v988, 4
    %v991 = vshll.u32 %v933, 16
    %v993 = vrot.slane %v991, 5
    %v994 = vor.u32 %v990, %v993
    %v995 = vrot.slane %v994, 4
    %v997 = vshll.u32 %v934, 16
    %v999 = vrot.slane %v997, 5
    %v1000 = vsel %vm986, %v995, %v999
    %v1001 = vshrl.u32 %v934, 16
    %v1003 = vrot.slane %v1001, 4
    %v1004 = vor.u32 %v1003, %v999
    %v1005 = vrot.slane %v1004, 4
    %v1007 = vshll.u32 %v935, 16
    %v1009 = vrot.slane %v1007, 5
    %v1010 = vsel %vm986, %v1005, %v1009
    %v1011 = vshrl.u32 %v935, 16
    %v1013 = vrot.slane %v1011, 4
    %v1014 = vor.u32 %v1013, %v1009
    %v1015 = vrot.slane %v1014, 4
    %v1017 = vshll.u32 %v936, 16
    %v1019 = vrot.slane %v1017, 5
    %v1020 = vsel %vm986, %v1015, %v1019
    %v1021 = vshrl.u32 %v936, 16
    %v1023 = vrot.slane %v1021, 4
    %v1024 = vor.u32 %v1023, %v1019
    %v1025 = vrot.slane %v1024, 4
    %v1027 = vshll.u32 %v937, 16
    %v1029 = vrot.slane %v1027, 5
    %v1030 = vsel %vm986, %v1025, %v1029
    %v1031 = vshrl.u32 %v937, 16
    %v1033 = vrot.slane %v1031, 4
    %v1034 = vor.u32 %v1033, %v1029
    %v1035 = vrot.slane %v1034, 4
    %v1037 = vshll.u32 %v938, 16
    %v1039 = vrot.slane %v1037, 5
    %v1040 = vsel %vm986, %v1035, %v1039
    %v1041 = vshrl.u32 %v938, 16
    %v1043 = vrot.slane %v1041, 4
    %v1044 = vor.u32 %v1043, %v1039
    %v1045 = vrot.slane %v1044, 4
    %v1047 = vshll.u32 %v939, 16
    %v1049 = vrot.slane %v1047, 5
    %v1050 = vsel %vm986, %v1045, %v1049
    %v1051 = vshrl.u32 %v939, 16
    %v1053 = vrot.slane %v1051, 4
    %v1054 = vor.u32 %v1053, %v1049
    %v1055 = vrot.slane %v1054, 4
    %v1057 = vshll.u32 %v940, 16
    %v1059 = vrot.slane %v1057, 5
    %v1060 = vsel %vm986, %v1055, %v1059
    %v1061 = vshrl.u32 %v940, 16
    %v1063 = vrot.slane %v1061, 4
    %v1064 = vor.u32 %v1063, %v1059
    %v1065 = vrot.slane %v1064, 4
    %v1067 = vshll.u32 %v941, 16
    %v1069 = vrot.slane %v1067, 5
    %v1070 = vsel %vm986, %v1065, %v1069
    %v1071 = vshrl.u32 %v941, 16
    %v1073 = vrot.slane %v1071, 4
    %v1074 = vor.u32 %v1073, %v1069
    %v1075 = vrot.slane %v1074, 4
    %v1077 = vshll.u32 %v942, 16
    %v1079 = vrot.slane %v1077, 5
    %v1080 = vsel %vm986, %v1075, %v1079
    %v1081 = vshrl.u32 %v942, 16
    %v1083 = vrot.slane %v1081, 4
    %v1084 = vor.u32 %v1083, %v1079
    %v1085 = vrot.slane %v1084, 4
    %v1087 = vshll.u32 %v943, 16
    %v1089 = vrot.slane %v1087, 5
    %v1090 = vsel %vm986, %v1085, %v1089
    %v1091 = vshrl.u32 %v943, 16
    %v1093 = vrot.slane %v1091, 4
    %v1094 = vor.u32 %v1093, %v1089
    %v1095 = vrot.slane %v1094, 4
    %v1097 = vshll.u32 %v944, 16
    %v1099 = vrot.slane %v1097, 5
    %v1100 = vsel %vm986, %v1095, %v1099
    %v1101 = vshrl.u32 %v944, 16
    %v1103 = vrot.slane %v1101, 4
    %v1104 = vor.u32 %v1103, %v1099
    %v1105 = vrot.slane %v1104, 4
    %v1107 = vshll.u32 %v945, 16
    %v1109 = vrot.slane %v1107, 5
    %v1110 = vsel %vm986, %v1105, %v1109
    %v1111 = vshrl.u32 %v945, 16
    %v1113 = vrot.slane %v1111, 4
    %v1114 = vor.u32 %v1113, %v1109
    %v1115 = vrot.slane %v1114, 4
    %v1117 = vshll.u32 %v946, 16
    %v1119 = vrot.slane %v1117, 5
    %v1120 = vsel %vm986, %v1115, %v1119
    %v1121 = vshrl.u32 %v946, 16
    %v1123 = vrot.slane %v1121, 4
    %v1124 = vor.u32 %v1123, %v1119
    %v1125 = vrot.slane %v1124, 4
    %v1127 = vshll.u32 %v947, 16
    %v1129 = vrot.slane %v1127, 5
    %v1130 = vsel %vm986, %v1125, %v1129
    %v1131 = vshrl.u32 %v947, 16
    %v1133 = vrot.slane %v1131, 4
    %v1134 = vor.u32 %v1133, %v1129
    %v1135 = vrot.slane %v1134, 4
    %v1137 = vshll.u32 %v948, 16
    %v1139 = vrot.slane %v1137, 5
    %v1140 = vsel %vm986, %v1135, %v1139
    %v1141 = vshrl.u32 %v948, 16
    %v1143 = vrot.slane %v1141, 4
    %v1144 = vor.u32 %v1143, %v1139
    %v1145 = vrot.slane %v1144, 4
    %v1147 = vshll.u32 %v949, 16
    %v1149 = vrot.slane %v1147, 5
    %v1150 = vsel %vm986, %v1145, %v1149
    %v1151 = vshrl.u32 %v949, 16
    %v1153 = vrot.slane %v1151, 4
    %v1154 = vor.u32 %v1153, %v1149
    %v1155 = vrot.slane %v1154, 4
    %v1157 = vshll.u32 %v950, 16
    %v1159 = vrot.slane %v1157, 5
    %v1160 = vsel %vm986, %v1155, %v1159
    %v1161 = vshrl.u32 %v950, 16
    %v1163 = vrot.slane %v1161, 4
    %v1164 = vor.u32 %v1163, %v1159
    %v1165 = vrot.slane %v1164, 4
    %v1167 = vshll.u32 %v951, 16
    %v1169 = vrot.slane %v1167, 5
    %v1170 = vsel %vm986, %v1165, %v1169
    %v1171 = vshrl.u32 %v951, 16
    %v1173 = vrot.slane %v1171, 4
    %v1174 = vor.u32 %v1173, %v1169
    %v1175 = vrot.slane %v1174, 4
    %v1177 = vshll.u32 %v952, 16
    %v1179 = vrot.slane %v1177, 5
    %v1180 = vsel %vm986, %v1175, %v1179
    %v1181 = vshrl.u32 %v952, 16
    %v1183 = vrot.slane %v1181, 4
    %v1184 = vor.u32 %v1183, %v1179
    %v1185 = vrot.slane %v1184, 4
    %v1187 = vshll.u32 %v953, 16
    %v1189 = vrot.slane %v1187, 5
    %v1190 = vsel %vm986, %v1185, %v1189
    %v1191 = vshrl.u32 %v953, 16
    %v1193 = vrot.slane %v1191, 4
    %v1194 = vor.u32 %v1193, %v1189
    %v1195 = vrot.slane %v1194, 4
    %v1197 = vshll.u32 %v954, 16
    %v1199 = vrot.slane %v1197, 5
    %v1200 = vsel %vm986, %v1195, %v1199
    %v1201 = vshrl.u32 %v954, 16
    %v1203 = vrot.slane %v1201, 4
    %v1204 = vor.u32 %v1203, %v1199
    %v1205 = vrot.slane %v1204, 4
    %v1207 = vshll.u32 %v955, 16
    %v1209 = vrot.slane %v1207, 5
    %v1210 = vsel %vm986, %v1205, %v1209
    %v1211 = vshrl.u32 %v955, 16
    %v1213 = vrot.slane %v1211, 4
    %v1214 = vor.u32 %v1213, %v1209
    %v1215 = vrot.slane %v1214, 4
    %v1217 = vshll.u32 %v956, 16
    %v1219 = vrot.slane %v1217, 5
    %v1220 = vsel %vm986, %v1215, %v1219
    %v1221 = vshrl.u32 %v956, 16
    %v1223 = vrot.slane %v1221, 4
    %v1224 = vor.u32 %v1223, %v1219
    %v1225 = vrot.slane %v1224, 4
    %v1227 = vshll.u32 %v957, 16
    %v1229 = vrot.slane %v1227, 5
    %v1230 = vsel %vm986, %v1225, %v1229
    %v1231 = vshrl.u32 %v957, 16
    %v1233 = vrot.slane %v1231, 4
    %v1234 = vor.u32 %v1233, %v1229
    %v1235 = vrot.slane %v1234, 4
    %v1237 = vshll.u32 %v958, 16
    %v1239 = vrot.slane %v1237, 5
    %v1240 = vsel %vm986, %v1235, %v1239
    %v1241 = vshrl.u32 %v958, 16
    %v1243 = vrot.slane %v1241, 4
    %v1244 = vor.u32 %v1243, %v1239
    %v1245 = vrot.slane %v1244, 4
    %v1247 = vshll.u32 %v959, 16
    %v1249 = vrot.slane %v1247, 5
    %v1250 = vsel %vm986, %v1245, %v1249
    %v1251 = vshrl.u32 %v959, 16
    %v1253 = vrot.slane %v1251, 4
    %v1254 = vor.u32 %v1253, %v1249
    %v1255 = vrot.slane %v1254, 4
    %v1257 = vshll.u32 %v960, 16
    %v1259 = vrot.slane %v1257, 5
    %v1260 = vsel %vm986, %v1255, %v1259
    %v1261 = vshrl.u32 %v960, 16
    %v1263 = vrot.slane %v1261, 4
    %v1264 = vor.u32 %v1263, %v1259
    %v1265 = vrot.slane %v1264, 4
    %v1267 = vshll.u32 %v961, 16
    %v1269 = vrot.slane %v1267, 5
    %v1270 = vsel %vm986, %v1265, %v1269
    %v1271 = vshrl.u32 %v961, 16
    %v1273 = vrot.slane %v1271, 4
    %v1274 = vor.u32 %v1273, %v1269
    %v1275 = vrot.slane %v1274, 4
    %v1277 = vshll.u32 %v962, 16
    %v1279 = vrot.slane %v1277, 5
    %v1280 = vsel %vm986, %v1275, %v1279
    %v1281 = vshrl.u32 %v962, 16
    %v1283 = vrot.slane %v1281, 4
    %v1284 = vor.u32 %v1283, %v1279
    %v1285 = vrot.slane %v1284, 4
    %v1287 = vshll.u32 %v963, 16
    %v1289 = vrot.slane %v1287, 5
    %v1290 = vsel %vm986, %v1285, %v1289
    %v1291 = vshrl.u32 %v963, 16
    %v1293 = vrot.slane %v1291, 4
    %v1294 = vor.u32 %v1293, %v1289
    %v1295 = vrot.slane %v1294, 4
    %v1297 = vshll.u32 %v964, 16
    %v1299 = vrot.slane %v1297, 5
    %v1300 = vsel %vm986, %v1295, %v1299
    %v1301 = vshrl.u32 %v964, 16
    %v1303 = vrot.slane %v1301, 4
    %v1304 = vor.u32 %v1303, %v1299
    %v1305 = vrot.slane %v1304, 4
    %v1307 = vshll.u32 %v965, 16
    %v1309 = vrot.slane %v1307, 5
    %v1310 = vsel %vm986, %v1305, %v1309
    %v1311 = vshrl.u32 %v965, 16
    %v1313 = vrot.slane %v1311, 4
    %v1314 = vor.u32 %v1313, %v1309
    %v1315 = vrot.slane %v1314, 4
    %v1317 = vshll.u32 %v966, 16
    %v1319 = vrot.slane %v1317, 5
    %v1320 = vsel %vm986, %v1315, %v1319
    %v1321 = vshrl.u32 %v966, 16
    %v1323 = vrot.slane %v1321, 4
    %v1324 = vor.u32 %v1323, %v1319
    %v1325 = vrot.slane %v1324, 4
    %v1327 = vshll.u32 %v967, 16
    %v1329 = vrot.slane %v1327, 5
    %v1330 = vsel %vm986, %v1325, %v1329
    %v1331 = vshrl.u32 %v967, 16
    %v1333 = vrot.slane %v1331, 4
    %v1334 = vor.u32 %v1333, %v1329
    %v1335 = vrot.slane %v1334, 4
    %v1337 = vshll.u32 %v968, 16
    %v1339 = vrot.slane %v1337, 5
    %v1340 = vsel %vm986, %v1335, %v1339
    %v1341 = vshrl.u32 %v968, 16
    %v1343 = vrot.slane %v1341, 4
    %v1344 = vor.u32 %v1343, %v1339
    %v1345 = vrot.slane %v1344, 4
    %v1347 = vshll.u32 %v969, 16
    %v1349 = vrot.slane %v1347, 5
    %v1350 = vsel %vm986, %v1345, %v1349
    %v1351 = vshrl.u32 %v969, 16
    %v1353 = vrot.slane %v1351, 4
    %v1354 = vor.u32 %v1353, %v1349
    %v1355 = vrot.slane %v1354, 4
    %v1357 = vshll.u32 %v970, 16
    %v1359 = vrot.slane %v1357, 5
    %v1360 = vsel %vm986, %v1355, %v1359
    %v1361 = vshrl.u32 %v970, 16
    %v1363 = vrot.slane %v1361, 4
    %v1364 = vor.u32 %v1363, %v1359
    %v1365 = vrot.slane %v1364, 4
    %v1367 = vshll.u32 %v971, 16
    %v1369 = vrot.slane %v1367, 5
    %v1370 = vsel %vm986, %v1365, %v1369
    %v1371 = vshrl.u32 %v971, 16
    %v1373 = vrot.slane %v1371, 4
    %v1374 = vor.u32 %v1373, %v1369
    %v1375 = vrot.slane %v1374, 4
    %v1377 = vshll.u32 %v972, 16
    %v1379 = vrot.slane %v1377, 5
    %v1380 = vsel %vm986, %v1375, %v1379
    %v1381 = vshrl.u32 %v972, 16
    %v1383 = vrot.slane %v1381, 4
    %v1384 = vor.u32 %v1383, %v1379
    %v1385 = vrot.slane %v1384, 4
    %v1387 = vshll.u32 %v973, 16
    %v1389 = vrot.slane %v1387, 5
    %v1390 = vsel %vm986, %v1385, %v1389
    %v1391 = vshrl.u32 %v973, 16
    %v1393 = vrot.slane %v1391, 4
    %v1394 = vor.u32 %v1393, %v1389
    %v1395 = vrot.slane %v1394, 4
    %v1397 = vshll.u32 %v974, 16
    %v1399 = vrot.slane %v1397, 5
    %v1400 = vsel %vm986, %v1395, %v1399
    %v1401 = vshrl.u32 %v974, 16
    %v1403 = vrot.slane %v1401, 4
    %v1404 = vor.u32 %v1403, %v1399
    %v1405 = vrot.slane %v1404, 4
    %v1407 = vshll.u32 %v975, 16
    %v1409 = vrot.slane %v1407, 5
    %v1410 = vsel %vm986, %v1405, %v1409
    %v1411 = vshrl.u32 %v975, 16
    %v1413 = vrot.slane %v1411, 4
    %v1414 = vor.u32 %v1413, %v1409
    %v1415 = vrot.slane %v1414, 4
    %v1417 = vshll.u32 %v976, 16
    %v1419 = vrot.slane %v1417, 5
    %v1420 = vsel %vm986, %v1415, %v1419
    %v1421 = vshrl.u32 %v976, 16
    %v1423 = vrot.slane %v1421, 4
    %v1424 = vor.u32 %v1423, %v1419
    %v1425 = vrot.slane %v1424, 4
    %v1427 = vshll.u32 %v977, 16
    %v1429 = vrot.slane %v1427, 5
    %v1430 = vsel %vm986, %v1425, %v1429
    %v1431 = vshrl.u32 %v977, 16
    %v1433 = vrot.slane %v1431, 4
    %v1434 = vor.u32 %v1433, %v1429
    %v1435 = vrot.slane %v1434, 4
    %v1437 = vshll.u32 %v978, 16
    %v1439 = vrot.slane %v1437, 5
    %v1440 = vsel %vm986, %v1435, %v1439
    %v1441 = vshrl.u32 %v978, 16
    %v1443 = vrot.slane %v1441, 4
    %v1444 = vor.u32 %v1443, %v1439
    %v1445 = vrot.slane %v1444, 4
    %v1447 = vshll.u32 %v979, 16
    %v1449 = vrot.slane %v1447, 5
    %v1450 = vsel %vm986, %v1445, %v1449
    %v1451 = vshrl.u32 %v979, 16
    %v1453 = vrot.slane %v1451, 4
    %v1454 = vor.u32 %v1453, %v1449
    %v1455 = vrot.slane %v1454, 4
    %v1457 = vshll.u32 %v980, 16
    %v1459 = vrot.slane %v1457, 5
    %v1460 = vsel %vm986, %v1455, %v1459
    %v1461 = vshrl.u32 %v980, 16
    %v1463 = vrot.slane %v1461, 4
    %v1464 = vor.u32 %v1463, %v1459
    %v1465 = vrot.slane %v1464, 4
    %v1467 = vshll.u32 %v981, 16
    %v1469 = vrot.slane %v1467, 5
    %v1470 = vsel %vm986, %v1465, %v1469
    %v1471 = vshrl.u32 %v981, 16
    %v1473 = vrot.slane %v1471, 4
    %v1474 = vor.u32 %v1473, %v1469
    %v1475 = vrot.slane %v1474, 4
    %v1477 = vshll.u32 %v982, 16
    %v1479 = vrot.slane %v1477, 5
    %v1480 = vsel %vm986, %v1475, %v1479
    %v1481 = vshrl.u32 %v982, 16
    %v1483 = vrot.slane %v1481, 4
    %v1484 = vor.u32 %v1483, %v1479
    %v1485 = vrot.slane %v1484, 4
    %v1487 = vshll.u32 %v983, 16
    %v1489 = vrot.slane %v1487, 5
    %v1490 = vsel %vm986, %v1485, %v1489
    %v1541 = vmax.bf16 %v933, %v1000
    %v1542 = vmax.bf16 %v934, %v1010
    %v1543 = vmax.bf16 %v935, %v1020
    %v1544 = vmax.bf16 %v936, %v1030
    %v1545 = vmax.bf16 %v937, %v1040
    %v1546 = vmax.bf16 %v938, %v1050
    %v1547 = vmax.bf16 %v939, %v1060
    %v1548 = vmax.bf16 %v940, %v1070
    %v1549 = vmax.bf16 %v941, %v1080
    %v1550 = vmax.bf16 %v942, %v1090
    %v1551 = vmax.bf16 %v943, %v1100
    %v1552 = vmax.bf16 %v944, %v1110
    %v1553 = vmax.bf16 %v945, %v1120
    %v1554 = vmax.bf16 %v946, %v1130
    %v1555 = vmax.bf16 %v947, %v1140
    %v1556 = vmax.bf16 %v948, %v1150
    %v1557 = vmax.bf16 %v949, %v1160
    %v1558 = vmax.bf16 %v950, %v1170
    %v1559 = vmax.bf16 %v951, %v1180
    %v1560 = vmax.bf16 %v952, %v1190
    %v1561 = vmax.bf16 %v953, %v1200
    %v1562 = vmax.bf16 %v954, %v1210
    %v1563 = vmax.bf16 %v955, %v1220
    %v1564 = vmax.bf16 %v956, %v1230
    %v1565 = vmax.bf16 %v957, %v1240
    %v1566 = vmax.bf16 %v958, %v1250
    %v1567 = vmax.bf16 %v959, %v1260
    %v1568 = vmax.bf16 %v960, %v1270
    %v1569 = vmax.bf16 %v961, %v1280
    %v1570 = vmax.bf16 %v962, %v1290
    %v1571 = vmax.bf16 %v963, %v1300
    %v1572 = vmax.bf16 %v964, %v1310
    %v1573 = vmax.bf16 %v965, %v1320
    %v1574 = vmax.bf16 %v966, %v1330
    %v1575 = vmax.bf16 %v967, %v1340
    %v1576 = vmax.bf16 %v968, %v1350
    %v1577 = vmax.bf16 %v969, %v1360
    %v1578 = vmax.bf16 %v970, %v1370
    %v1579 = vmax.bf16 %v971, %v1380
    %v1580 = vmax.bf16 %v972, %v1390
    %v1581 = vmax.bf16 %v973, %v1400
    %v1582 = vmax.bf16 %v974, %v1410
    %v1583 = vmax.bf16 %v975, %v1420
    %v1584 = vmax.bf16 %v976, %v1430
    %v1585 = vmax.bf16 %v977, %v1440
    %v1586 = vmax.bf16 %v978, %v1450
    %v1587 = vmax.bf16 %v979, %v1460
    %v1588 = vmax.bf16 %v980, %v1470
    %v1589 = vmax.bf16 %v981, %v1480
    %v1590 = vmax.bf16 %v982, %v1490
    %v1591 = vld [vmem:[#allocation4 + $0x4] sm:$0x8]
    %v1592 = vld [vmem:[#allocation4 + $0xc8] sm:$0xf]
    %v1593 = vld [vmem:[#allocation4 + $0xcc] sm:$0x7]
    %v1594 = vld [vmem:[#allocation4 + $0xcc] sm:$0xf]
    %v1596 = vshrl.u32 %v1591, 16
    %v1598 = vrot.slane %v1596, 4
    %v1599 = vrot.slane %v1598, 4
    %v1600 = vsel %vm986, %v1599, %v1009
    %v1602 = vshll.u32 %v1592, 16
    %v1604 = vrot.slane %v1602, 5
    %v1605 = vsel %vm986, %v1485, %v1604
    %v1606 = vshrl.u32 %v1592, 16
    %v1608 = vrot.slane %v1606, 4
    %v1609 = vor.u32 %v1608, %v1604
    %v1610 = vrot.slane %v1609, 4
    %v1612 = vshll.u32 %v1594, 16
    %v1614 = vrot.slane %v1612, 5
    %v1615 = vsel %vm986, %v1610, %v1614
    %v1616 = vshrl.u32 %v1594, 16
    %v1618 = vrot.slane %v1616, 4
    %v1619 = vor.u32 %v1618, %v1614
    %v1620 = vrot.slane %v1619, 4
    %v1625 = vmax.bf16 %v1591, %v1600
    %v1626 = vmax.bf16 %v982, %v1605
    %v1627 = vmax.bf16 %v1592, %v1615
    %v1628 = vmax.bf16 %v1593, %v1620
    %vm1680 = vcmask 1040384
    %vm1681 = vcmask 1044484
    %vm1682 = vmor %vm1680, %vm1681
    %v1683 = vrot.slane %v1625, 7
    %v1684 = vrot.slane %v1683, 4
    %v1685 = vrot.slane %v1543, 7
    %v1686 = vsel %vm1682, %v1684, %v1685
    %v1687 = vrot.slane %v1685, 4
    %v1688 = vrot.slane %v1544, 7
    %v1689 = vsel %vm1682, %v1687, %v1688
    %v1690 = vrot.slane %v1688, 4
    %v1691 = vrot.slane %v1545, 7
    %v1692 = vsel %vm1682, %v1690, %v1691
    %v1693 = vrot.slane %v1691, 4
    %v1694 = vrot.slane %v1546, 7
    %v1695 = vsel %vm1682, %v1693, %v1694
    %v1696 = vrot.slane %v1694, 4
    %v1697 = vrot.slane %v1547, 7
    %v1698 = vsel %vm1682, %v1696, %v1697
    %v1699 = vrot.slane %v1697, 4
    %v1700 = vrot.slane %v1548, 7
    %v1701 = vsel %vm1682, %v1699, %v1700
    %v1702 = vrot.slane %v1700, 4
    %v1703 = vrot.slane %v1549, 7
    %v1704 = vsel %vm1682, %v1702, %v1703
    %v1705 = vrot.slane %v1703, 4
    %v1706 = vrot.slane %v1550, 7
    %v1707 = vsel %vm1682, %v1705, %v1706
    %v1708 = vrot.slane %v1706, 4
    %v1709 = vrot.slane %v1551, 7
    %v1710 = vsel %vm1682, %v1708, %v1709
    %v1711 = vrot.slane %v1709, 4
    %v1712 = vrot.slane %v1552, 7
    %v1713 = vsel %vm1682, %v1711, %v1712
    %v1714 = vrot.slane %v1712, 4
    %v1715 = vrot.slane %v1553, 7
    %v1716 = vsel %vm1682, %v1714, %v1715
    %v1717 = vrot.slane %v1715, 4
    %v1718 = vrot.slane %v1554, 7
    %v1719 = vsel %vm1682, %v1717, %v1718
    %v1720 = vrot.slane %v1718, 4
    %v1721 = vrot.slane %v1555, 7
    %v1722 = vsel %vm1682, %v1720, %v1721
    %v1723 = vrot.slane %v1721, 4
    %v1724 = vrot.slane %v1556, 7
    %v1725 = vsel %vm1682, %v1723, %v1724
    %v1726 = vrot.slane %v1724, 4
    %v1727 = vrot.slane %v1557, 7
    %v1728 = vsel %vm1682, %v1726, %v1727
    %v1729 = vrot.slane %v1727, 4
    %v1730 = vrot.slane %v1558, 7
    %v1731 = vsel %vm1682, %v1729, %v1730
    %v1732 = vrot.slane %v1730, 4
    %v1733 = vrot.slane %v1559, 7
    %v1734 = vsel %vm1682, %v1732, %v1733
    %v1735 = vrot.slane %v1733, 4
    %v1736 = vrot.slane %v1560, 7
    %v1737 = vsel %vm1682, %v1735, %v1736
    %v1738 = vrot.slane %v1736, 4
    %v1739 = vrot.slane %v1561, 7
    %v1740 = vsel %vm1682, %v1738, %v1739
    %v1741 = vrot.slane %v1739, 4
    %v1742 = vrot.slane %v1562, 7
    %v1743 = vsel %vm1682, %v1741, %v1742
    %v1744 = vrot.slane %v1742, 4
    %v1745 = vrot.slane %v1563, 7
    %v1746 = vsel %vm1682, %v1744, %v1745
    %v1747 = vrot.slane %v1745, 4
    %v1748 = vrot.slane %v1564, 7
    %v1749 = vsel %vm1682, %v1747, %v1748
    %v1750 = vrot.slane %v1748, 4
    %v1751 = vrot.slane %v1565, 7
    %v1752 = vsel %vm1682, %v1750, %v1751
    %v1753 = vrot.slane %v1751, 4
    %v1754 = vrot.slane %v1566, 7
    %v1755 = vsel %vm1682, %v1753, %v1754
    %v1756 = vrot.slane %v1754, 4
    %v1757 = vrot.slane %v1567, 7
    %v1758 = vsel %vm1682, %v1756, %v1757
    %v1759 = vrot.slane %v1757, 4
    %v1760 = vrot.slane %v1568, 7
    %v1761 = vsel %vm1682, %v1759, %v1760
    %v1762 = vrot.slane %v1760, 4
    %v1763 = vrot.slane %v1569, 7
    %v1764 = vsel %vm1682, %v1762, %v1763
    %v1765 = vrot.slane %v1763, 4
    %v1766 = vrot.slane %v1570, 7
    %v1767 = vsel %vm1682, %v1765, %v1766
    %v1768 = vrot.slane %v1766, 4
    %v1769 = vrot.slane %v1571, 7
    %v1770 = vsel %vm1682, %v1768, %v1769
    %v1771 = vrot.slane %v1769, 4
    %v1772 = vrot.slane %v1572, 7
    %v1773 = vsel %vm1682, %v1771, %v1772
    %v1774 = vrot.slane %v1772, 4
    %v1775 = vrot.slane %v1573, 7
    %v1776 = vsel %vm1682, %v1774, %v1775
    %v1777 = vrot.slane %v1775, 4
    %v1778 = vrot.slane %v1574, 7
    %v1779 = vsel %vm1682, %v1777, %v1778
    %v1780 = vrot.slane %v1778, 4
    %v1781 = vrot.slane %v1575, 7
    %v1782 = vsel %vm1682, %v1780, %v1781
    %v1783 = vrot.slane %v1781, 4
    %v1784 = vrot.slane %v1576, 7
    %v1785 = vsel %vm1682, %v1783, %v1784
    %v1786 = vrot.slane %v1784, 4
    %v1787 = vrot.slane %v1577, 7
    %v1788 = vsel %vm1682, %v1786, %v1787
    %v1789 = vrot.slane %v1787, 4
    %v1790 = vrot.slane %v1578, 7
    %v1791 = vsel %vm1682, %v1789, %v1790
    %v1792 = vrot.slane %v1790, 4
    %v1793 = vrot.slane %v1579, 7
    %v1794 = vsel %vm1682, %v1792, %v1793
    %v1795 = vrot.slane %v1793, 4
    %v1796 = vrot.slane %v1580, 7
    %v1797 = vsel %vm1682, %v1795, %v1796
    %v1798 = vrot.slane %v1796, 4
    %v1799 = vrot.slane %v1581, 7
    %v1800 = vsel %vm1682, %v1798, %v1799
    %v1801 = vrot.slane %v1799, 4
    %v1802 = vrot.slane %v1582, 7
    %v1803 = vsel %vm1682, %v1801, %v1802
    %v1804 = vrot.slane %v1802, 4
    %v1805 = vrot.slane %v1583, 7
    %v1806 = vsel %vm1682, %v1804, %v1805
    %v1807 = vrot.slane %v1805, 4
    %v1808 = vrot.slane %v1584, 7
    %v1809 = vsel %vm1682, %v1807, %v1808
    %v1810 = vrot.slane %v1808, 4
    %v1811 = vrot.slane %v1585, 7
    %v1812 = vsel %vm1682, %v1810, %v1811
    %v1813 = vrot.slane %v1811, 4
    %v1814 = vrot.slane %v1586, 7
    %v1815 = vsel %vm1682, %v1813, %v1814
    %v1816 = vrot.slane %v1814, 4
    %v1817 = vrot.slane %v1587, 7
    %v1818 = vsel %vm1682, %v1816, %v1817
    %v1819 = vrot.slane %v1817, 4
    %v1820 = vrot.slane %v1588, 7
    %v1821 = vsel %vm1682, %v1819, %v1820
    %v1822 = vrot.slane %v1820, 4
    %v1823 = vrot.slane %v1589, 7
    %v1824 = vsel %vm1682, %v1822, %v1823
    %v1825 = vrot.slane %v1823, 4
    %v1826 = vrot.slane %v1626, 7
    %v1827 = vsel %vm1682, %v1825, %v1826
    %v1828 = vrot.slane %v1826, 4
    %v1829 = vrot.slane %v1627, 7
    %v1830 = vsel %vm1682, %v1828, %v1829
    %v1831 = vrot.slane %v1829, 4
    %v1832 = vrot.slane %v1628, 7
    %v1833 = vsel %vm1682, %v1831, %v1832
    %v1884 = vmax.bf16 %v1541, %v1686
    %v1885 = vmax.bf16 %v1542, %v1689
    %v1886 = vmax.bf16 %v1543, %v1692
    %v1887 = vmax.bf16 %v1544, %v1695
    %v1888 = vmax.bf16 %v1545, %v1698
    %v1889 = vmax.bf16 %v1546, %v1701
    %v1890 = vmax.bf16 %v1547, %v1704
    %v1891 = vmax.bf16 %v1548, %v1707
    %v1892 = vmax.bf16 %v1549, %v1710
    %v1893 = vmax.bf16 %v1550, %v1713
    %v1894 = vmax.bf16 %v1551, %v1716
    %v1895 = vmax.bf16 %v1552, %v1719
    %v1896 = vmax.bf16 %v1553, %v1722
    %v1897 = vmax.bf16 %v1554, %v1725
    %v1898 = vmax.bf16 %v1555, %v1728
    %v1899 = vmax.bf16 %v1556, %v1731
    %v1900 = vmax.bf16 %v1557, %v1734
    %v1901 = vmax.bf16 %v1558, %v1737
    %v1902 = vmax.bf16 %v1559, %v1740
    %v1903 = vmax.bf16 %v1560, %v1743
    %v1904 = vmax.bf16 %v1561, %v1746
    %v1905 = vmax.bf16 %v1562, %v1749
    %v1906 = vmax.bf16 %v1563, %v1752
    %v1907 = vmax.bf16 %v1564, %v1755
    %v1908 = vmax.bf16 %v1565, %v1758
    %v1909 = vmax.bf16 %v1566, %v1761
    %v1910 = vmax.bf16 %v1567, %v1764
    %v1911 = vmax.bf16 %v1568, %v1767
    %v1912 = vmax.bf16 %v1569, %v1770
    %v1913 = vmax.bf16 %v1570, %v1773
    %v1914 = vmax.bf16 %v1571, %v1776
    %v1915 = vmax.bf16 %v1572, %v1779
    %v1916 = vmax.bf16 %v1573, %v1782
    %v1917 = vmax.bf16 %v1574, %v1785
    %v1918 = vmax.bf16 %v1575, %v1788
    %v1919 = vmax.bf16 %v1576, %v1791
    %v1920 = vmax.bf16 %v1577, %v1794
    %v1921 = vmax.bf16 %v1578, %v1797
    %v1922 = vmax.bf16 %v1579, %v1800
    %v1923 = vmax.bf16 %v1580, %v1803
    %v1924 = vmax.bf16 %v1581, %v1806
    %v1925 = vmax.bf16 %v1582, %v1809
    %v1926 = vmax.bf16 %v1583, %v1812
    %v1927 = vmax.bf16 %v1584, %v1815
    %v1928 = vmax.bf16 %v1585, %v1818
    %v1929 = vmax.bf16 %v1586, %v1821
    %v1930 = vmax.bf16 %v1587, %v1824
    %v1931 = vmax.bf16 %v1588, %v1827
    %v1932 = vmax.bf16 %v1589, %v1830
    %v1933 = vmax.bf16 %v1590, %v1833
    %v1934 = vld [vmem:[#allocation13] sm:$0xff]
    %v1935 = vld [vmem:[#allocation13 + $0x8] sm:$0xff]
    %v1936 = vld [vmem:[#allocation13 + $0x10] sm:$0xff]
    %v1937 = vld [vmem:[#allocation13 + $0x18] sm:$0xff]
    %v1938 = vld [vmem:[#allocation13 + $0x20] sm:$0xff]
    %v1939 = vld [vmem:[#allocation13 + $0x28] sm:$0xff]
    %v1940 = vld [vmem:[#allocation13 + $0x30] sm:$0xff]
    %v1941 = vld [vmem:[#allocation13 + $0x38] sm:$0xff]
    %v1942 = vld [vmem:[#allocation13 + $0x40] sm:$0xff]
    %v1943 = vld [vmem:[#allocation13 + $0x48] sm:$0xff]
    %v1944 = vld [vmem:[#allocation13 + $0x50] sm:$0xff]
    %v1945 = vld [vmem:[#allocation13 + $0x58] sm:$0xff]
    %v1946 = vld [vmem:[#allocation13 + $0x60] sm:$0xff]
    %v1947 = vld [vmem:[#allocation13 + $0x68] sm:$0xff]
    %v1948 = vld [vmem:[#allocation13 + $0x70] sm:$0xff]
    %v1949 = vld [vmem:[#allocation13 + $0x78] sm:$0xff]
    %v1950 = vld [vmem:[#allocation13 + $0x80] sm:$0xff]
    %v1951 = vld [vmem:[#allocation13 + $0x88] sm:$0xff]
    %v1952 = vld [vmem:[#allocation13 + $0x90] sm:$0xff]
    %v1953 = vld [vmem:[#allocation13 + $0x98] sm:$0xff]
    %v1954 = vld [vmem:[#allocation13 + $0xa0] sm:$0xff]
    %v1955 = vld [vmem:[#allocation13 + $0xa8] sm:$0xff]
    %v1956 = vld [vmem:[#allocation13 + $0xb0] sm:$0xff]
    %v1957 = vld [vmem:[#allocation13 + $0xb8] sm:$0xff]
    %v1958 = vld [vmem:[#allocation13 + $0xc0] sm:$0xff]
    %v1959 = vld [vmem:[#allocation13 + $0xc8] sm:$0xff]
    %v1960 = vld [vmem:[#allocation13 + $0xd0] sm:$0xff]
    %v1961 = vld [vmem:[#allocation13 + $0xd8] sm:$0xff]
    %v1962 = vld [vmem:[#allocation13 + $0xe0] sm:$0xff]
    %v1963 = vld [vmem:[#allocation13 + $0xe8] sm:$0xff]
    %v1964 = vld [vmem:[#allocation13 + $0xf0] sm:$0xff]
    %v1965 = vld [vmem:[#allocation13 + $0xf8] sm:$0xff]
    %v1966 = vld [vmem:[#allocation13 + $0x100] sm:$0xff]
    %v1967 = vld [vmem:[#allocation13 + $0x108] sm:$0xff]
    %v1968 = vld [vmem:[#allocation13 + $0x110] sm:$0xff]
    %v1969 = vld [vmem:[#allocation13 + $0x118] sm:$0xff]
    %v1970 = vld [vmem:[#allocation13 + $0x120] sm:$0xff]
    %v1971 = vld [vmem:[#allocation13 + $0x128] sm:$0xff]
    %v1972 = vld [vmem:[#allocation13 + $0x130] sm:$0xff]
    %v1973 = vld [vmem:[#allocation13 + $0x138] sm:$0xff]
    %v2014 = vunpack.c.l.b16 %v1934
    %v2015 = vunpack.c.h.b16 %v1934
    %v2016 = vunpack.c.l.b16 %v1935
    %v2017 = vunpack.c.h.b16 %v1935
    %v2018 = vunpack.c.l.b16 %v1936
    %v2019 = vunpack.c.h.b16 %v1936
    %v2020 = vunpack.c.l.b16 %v1937
    %v2021 = vunpack.c.h.b16 %v1937
    %v2022 = vunpack.c.l.b16 %v1938
    %v2023 = vunpack.c.h.b16 %v1938
    %v2024 = vunpack.c.l.b16 %v1939
    %v2025 = vunpack.c.h.b16 %v1939
    %v2026 = vunpack.c.l.b16 %v1940
    %v2027 = vunpack.c.h.b16 %v1940
    %v2028 = vunpack.c.l.b16 %v1941
    %v2029 = vunpack.c.h.b16 %v1941
    %v2030 = vunpack.c.l.b16 %v1942
    %v2031 = vunpack.c.h.b16 %v1942
    %v2032 = vunpack.c.l.b16 %v1943
    %v2033 = vunpack.c.h.b16 %v1943
    %v2034 = vunpack.c.l.b16 %v1944
    %v2035 = vunpack.c.h.b16 %v1944
    %v2036 = vunpack.c.l.b16 %v1945
    %v2037 = vunpack.c.h.b16 %v1945
    %v2038 = vunpack.c.l.b16 %v1946
    %v2039 = vunpack.c.h.b16 %v1946
    %v2040 = vunpack.c.l.b16 %v1947
    %v2041 = vunpack.c.h.b16 %v1947
    %v2042 = vunpack.c.l.b16 %v1948
    %v2043 = vunpack.c.h.b16 %v1948
    %v2044 = vunpack.c.l.b16 %v1949
    %v2045 = vunpack.c.h.b16 %v1949
    %v2046 = vunpack.c.l.b16 %v1950
    %v2047 = vunpack.c.h.b16 %v1950
    %v2048 = vunpack.c.l.b16 %v1951
    %v2049 = vunpack.c.h.b16 %v1951
    %v2050 = vunpack.c.l.b16 %v1952
    %v2051 = vunpack.c.h.b16 %v1952
    %v2052 = vunpack.c.l.b16 %v1953
    %v2053 = vunpack.c.h.b16 %v1953
    %v2054 = vunpack.c.l.b16 %v1954
    %v2055 = vunpack.c.h.b16 %v1954
    %v2056 = vunpack.c.l.b16 %v1955
    %v2057 = vunpack.c.h.b16 %v1955
    %v2058 = vunpack.c.l.b16 %v1956
    %v2059 = vunpack.c.h.b16 %v1956
    %v2060 = vunpack.c.l.b16 %v1957
    %v2061 = vunpack.c.h.b16 %v1957
    %v2062 = vunpack.c.l.b16 %v1958
    %v2063 = vunpack.c.h.b16 %v1958
    %v2064 = vunpack.c.l.b16 %v1959
    %v2065 = vunpack.c.h.b16 %v1959
    %v2066 = vunpack.c.l.b16 %v1960
    %v2067 = vunpack.c.h.b16 %v1960
    %v2068 = vunpack.c.l.b16 %v1961
    %v2069 = vunpack.c.h.b16 %v1961
    %v2070 = vunpack.c.l.b16 %v1962
    %v2071 = vunpack.c.h.b16 %v1962
    %v2072 = vunpack.c.l.b16 %v1963
    %v2073 = vunpack.c.h.b16 %v1963
    %v2074 = vunpack.c.l.b16 %v1964
    %v2075 = vunpack.c.h.b16 %v1964
    %v2076 = vunpack.c.l.b16 %v1965
    %v2077 = vunpack.c.h.b16 %v1965
    %v2078 = vunpack.c.l.b16 %v1966
    %v2079 = vunpack.c.h.b16 %v1966
    %v2080 = vunpack.c.l.b16 %v1967
    %v2081 = vunpack.c.h.b16 %v1967
    %v2082 = vunpack.c.l.b16 %v1968
    %v2083 = vunpack.c.h.b16 %v1968
    %v2084 = vunpack.c.l.b16 %v1969
    %v2085 = vunpack.c.h.b16 %v1969
    %v2086 = vunpack.c.l.b16 %v1970
    %v2087 = vunpack.c.h.b16 %v1970
    %v2088 = vunpack.c.l.b16 %v1971
    %v2089 = vunpack.c.h.b16 %v1971
    %v2090 = vunpack.c.l.b16 %v1972
    %v2091 = vunpack.c.h.b16 %v1972
    %v2092 = vunpack.c.l.b16 %v1973
    %v2093 = vunpack.c.h.b16 %v1973
    %v2094 = vpack.c.b16 %v2018, %v2014
    %v2095 = vpack.c.b16 %v2019, %v2015
    %v2096 = vpack.c.b16 %v2020, %v2016
    %v2097 = vpack.c.b16 %v2021, %v2017
    %v2098 = vpack.c.b16 %v2026, %v2022
    %v2099 = vpack.c.b16 %v2027, %v2023
    %v2100 = vpack.c.b16 %v2028, %v2024
    %v2101 = vpack.c.b16 %v2029, %v2025
    %v2102 = vpack.c.b16 %v2034, %v2030
    %v2103 = vpack.c.b16 %v2035, %v2031
    %v2104 = vpack.c.b16 %v2036, %v2032
    %v2105 = vpack.c.b16 %v2037, %v2033
    %v2106 = vpack.c.b16 %v2042, %v2038
    %v2107 = vpack.c.b16 %v2043, %v2039
    %v2108 = vpack.c.b16 %v2044, %v2040
    %v2109 = vpack.c.b16 %v2045, %v2041
    %v2110 = vpack.c.b16 %v2050, %v2046
    %v2111 = vpack.c.b16 %v2051, %v2047
    %v2112 = vpack.c.b16 %v2052, %v2048
    %v2113 = vpack.c.b16 %v2053, %v2049
    %v2114 = vpack.c.b16 %v2058, %v2054
    %v2115 = vpack.c.b16 %v2059, %v2055
    %v2116 = vpack.c.b16 %v2060, %v2056
    %v2117 = vpack.c.b16 %v2061, %v2057
    %v2118 = vpack.c.b16 %v2066, %v2062
    %v2119 = vpack.c.b16 %v2067, %v2063
    %v2120 = vpack.c.b16 %v2068, %v2064
    %v2121 = vpack.c.b16 %v2069, %v2065
    %v2122 = vpack.c.b16 %v2074, %v2070
    %v2123 = vpack.c.b16 %v2075, %v2071
    %v2124 = vpack.c.b16 %v2076, %v2072
    %v2125 = vpack.c.b16 %v2077, %v2073
    %v2126 = vpack.c.b16 %v2082, %v2078
    %v2127 = vpack.c.b16 %v2083, %v2079
    %v2128 = vpack.c.b16 %v2084, %v2080
    %v2129 = vpack.c.b16 %v2085, %v2081
    %v2130 = vpack.c.b16 %v2090, %v2086
    %v2131 = vpack.c.b16 %v2091, %v2087
    %v2132 = vpack.c.b16 %v2092, %v2088
    %v2133 = vpack.c.b16 %v2093, %v2089
    %v2214 = vunpack.c.l.b16 %v1884
    %v2215 = vunpack.c.l.b16 %v1885
    %v2216 = vunpack.c.l.b16 %v1886
    %v2217 = vunpack.c.l.b16 %v1887
    %v2218 = vunpack.c.l.b16 %v1888
    %v2219 = vunpack.c.l.b16 %v1889
    %v2220 = vunpack.c.l.b16 %v1890
    %v2221 = vunpack.c.l.b16 %v1891
    %v2222 = vunpack.c.l.b16 %v1892
    %v2223 = vunpack.c.l.b16 %v1893
    %v2224 = vunpack.c.l.b16 %v1894
    %v2225 = vunpack.c.l.b16 %v1895
    %v2226 = vunpack.c.l.b16 %v1896
    %v2227 = vunpack.c.l.b16 %v1897
    %v2228 = vunpack.c.l.b16 %v1898
    %v2229 = vunpack.c.l.b16 %v1899
    %v2230 = vunpack.c.l.b16 %v1900
    %v2231 = vunpack.c.l.b16 %v1901
    %v2232 = vunpack.c.l.b16 %v1902
    %v2233 = vunpack.c.l.b16 %v1903
    %v2234 = vunpack.c.l.b16 %v1904
    %v2235 = vunpack.c.l.b16 %v1905
    %v2236 = vunpack.c.l.b16 %v1906
    %v2237 = vunpack.c.l.b16 %v1907
    %v2238 = vunpack.c.l.b16 %v1908
    %v2239 = vunpack.c.l.b16 %v1909
    %v2240 = vunpack.c.l.b16 %v1910
    %v2241 = vunpack.c.l.b16 %v1911
    %v2242 = vunpack.c.l.b16 %v1912
    %v2243 = vunpack.c.l.b16 %v1913
    %v2244 = vunpack.c.l.b16 %v1914
    %v2245 = vunpack.c.l.b16 %v1915
    %v2246 = vunpack.c.l.b16 %v1916
    %v2247 = vunpack.c.l.b16 %v1917
    %v2248 = vunpack.c.l.b16 %v1918
    %v2249 = vunpack.c.l.b16 %v1919
    %v2250 = vunpack.c.l.b16 %v1920
    %v2251 = vunpack.c.l.b16 %v1921
    %v2252 = vunpack.c.l.b16 %v1922
    %v2253 = vunpack.c.l.b16 %v1923
    %v2254 = vunpack.c.l.b16 %v1924
    %v2255 = vunpack.c.l.b16 %v1925
    %v2256 = vunpack.c.l.b16 %v1926
    %v2257 = vunpack.c.l.b16 %v1927
    %v2258 = vunpack.c.l.b16 %v1928
    %v2259 = vunpack.c.l.b16 %v1929
    %v2260 = vunpack.c.l.b16 %v1930
    %v2261 = vunpack.c.l.b16 %v1931
    %v2262 = vunpack.c.l.b16 %v1932
    %v2263 = vunpack.c.l.b16 %v1933
    %v2264 = vpack.c.b16 %v2215, %v2214
    %v2265 = vpack.c.b16 %v2217, %v2216
    %v2266 = vpack.c.b16 %v2219, %v2218
    %v2267 = vpack.c.b16 %v2221, %v2220
    %v2268 = vpack.c.b16 %v2223, %v2222
    %v2269 = vpack.c.b16 %v2225, %v2224
    %v2270 = vpack.c.b16 %v2227, %v2226
    %v2271 = vpack.c.b16 %v2229, %v2228
    %v2272 = vpack.c.b16 %v2231, %v2230
    %v2273 = vpack.c.b16 %v2233, %v2232
    %v2274 = vpack.c.b16 %v2235, %v2234
    %v2275 = vpack.c.b16 %v2237, %v2236
    %v2276 = vpack.c.b16 %v2239, %v2238
    %v2277 = vpack.c.b16 %v2241, %v2240
    %v2278 = vpack.c.b16 %v2243, %v2242
    %v2279 = vpack.c.b16 %v2245, %v2244
    %v2280 = vpack.c.b16 %v2247, %v2246
    %v2281 = vpack.c.b16 %v2249, %v2248
    %v2282 = vpack.c.b16 %v2251, %v2250
    %v2283 = vpack.c.b16 %v2253, %v2252
    %v2284 = vpack.c.b16 %v2255, %v2254
    %v2285 = vpack.c.b16 %v2257, %v2256
    %v2286 = vpack.c.b16 %v2259, %v2258
    %v2287 = vpack.c.b16 %v2261, %v2260
    %v2288 = vpack.c.b16 %v2263, %v2262
    %vm2314 = vcmask 130048
    %v2316 = vsel %vm2314, %v2097, 0
    %v2319 = vsel %vm2314, %v2101, 0
    %v2322 = vsel %vm2314, %v2105, 0
    %v2325 = vsel %vm2314, %v2109, 0
    %v2328 = vsel %vm2314, %v2113, 0
    %v2331 = vsel %vm2314, %v2117, 0
    %v2334 = vsel %vm2314, %v2121, 0
    %v2337 = vsel %vm2314, %v2125, 0
    %v2340 = vsel %vm2314, %v2129, 0
    %v2343 = vsel %vm2314, %v2133, 0
    %2345 = vmatprep.subr.bf16.mxu0 0
    %2346 = vmatpush1.bf16.msra.mxu0 %v2271
    %2347 = vmatprep.subr.bf16.mxu0 0
    %2348 = vmatpush1.bf16.msra.mxu0 %v2270
    %2349 = vmatprep.subr.bf16.mxu0 0
    %2350 = vmatpush1.bf16.msra.mxu0 %v2269
    %2351 = vmatprep.subr.bf16.mxu0 0
    %2352 = vmatpush1.bf16.msra.mxu0 %v2268
    %2353 = vmatprep.subr.bf16.mxu0 0
    %2354 = vmatpush1.bf16.msra.mxu0 %v2267
    %2355 = vmatprep.subr.bf16.mxu0 0
    %2356 = vmatpush1.bf16.msra.mxu0 %v2266
    %2357 = vmatprep.subr.bf16.mxu0 0
    %2358 = vmatpush1.bf16.msra.mxu0 %v2265
    %2359 = vmatprep.subr.bf16.mxu0 0
    %2360 = vmatpush1.bf16.msra.mxu0 %v2264
    %2361 = vmatprep.subr.bf16.mxu0 0
    %2362 = vmatpush2.bf16.msra.mxu0 %v2279
    %2363 = vmatprep.subr.bf16.mxu0 0
    %2364 = vmatpush2.bf16.msra.mxu0 %v2278
    %2365 = vmatprep.subr.bf16.mxu0 0
    %2366 = vmatpush2.bf16.msra.mxu0 %v2277
    %2367 = vmatprep.subr.bf16.mxu0 0
    %2368 = vmatpush2.bf16.msra.mxu0 %v2276
    %2369 = vmatprep.subr.bf16.mxu0 0
    %2370 = vmatpush2.bf16.msra.mxu0 %v2275
    %2371 = vmatprep.subr.bf16.mxu0 0
    %2372 = vmatpush2.bf16.msra.mxu0 %v2274
    %2373 = vmatprep.subr.bf16.mxu0 0
    %2374 = vmatpush2.bf16.msra.mxu0 %v2273
    %2375 = vmatprep.subr.bf16.mxu0 0
    %2376 = vmatpush2.bf16.msra.mxu0 %v2272
    %2377 = vmatprep.mubr.bf16.mxu0 %v2095
    %2378 = vmatmul.mubr.bf16.gmra.mxu0 %v2094
    %v2379 = vpop.f32.mrf.mxu0
    %v2380 = vadd.f32 0.0, %v2379
    %v2381 = vpop.f32.mrf.mxu0
    %v2382 = vpop.f32.mrf.mxu0
    %v2383 = vadd.f32 0.0, %v2382
    %v2384 = vpop.f32.mrf.mxu0
    %2385 = vmatprep.mubr.bf16.mxu0 %v2099
    %2386 = vmatmul.mubr.bf16.gmra.mxu0 %v2098
    %v2387 = vpop.f32.mrf.mxu0
    %v2388 = vadd.f32 0.0, %v2387
    %v2389 = vpop.f32.mrf.mxu0
    %v2390 = vpop.f32.mrf.mxu0
    %v2391 = vadd.f32 0.0, %v2390
    %v2392 = vpop.f32.mrf.mxu0
    %2393 = vmatprep.mubr.bf16.mxu0 %v2103
    %2394 = vmatmul.mubr.bf16.gmra.mxu0 %v2102
    %v2395 = vpop.f32.mrf.mxu0
    %v2396 = vadd.f32 0.0, %v2395
    %v2397 = vpop.f32.mrf.mxu0
    %v2398 = vpop.f32.mrf.mxu0
    %v2399 = vadd.f32 0.0, %v2398
    %v2400 = vpop.f32.mrf.mxu0
    %2401 = vmatprep.mubr.bf16.mxu0 %v2107
    %2402 = vmatmul.mubr.bf16.gmra.mxu0 %v2106
    %v2403 = vpop.f32.mrf.mxu0
    %v2404 = vadd.f32 0.0, %v2403
    %v2405 = vpop.f32.mrf.mxu0
    %v2406 = vpop.f32.mrf.mxu0
    %v2407 = vadd.f32 0.0, %v2406
    %v2408 = vpop.f32.mrf.mxu0
    %2409 = vmatprep.mubr.bf16.mxu0 %v2111
    %2410 = vmatmul.mubr.bf16.gmra.mxu0 %v2110
    %v2411 = vpop.f32.mrf.mxu0
    %v2412 = vadd.f32 0.0, %v2411
    %v2413 = vpop.f32.mrf.mxu0
    %v2414 = vpop.f32.mrf.mxu0
    %v2415 = vadd.f32 0.0, %v2414
    %v2416 = vpop.f32.mrf.mxu0
    %2417 = vmatprep.mubr.bf16.mxu0 %v2115
    %2418 = vmatmul.mubr.bf16.gmra.mxu0 %v2114
    %v2419 = vpop.f32.mrf.mxu0
    %v2420 = vadd.f32 0.0, %v2419
    %v2421 = vpop.f32.mrf.mxu0
    %v2422 = vpop.f32.mrf.mxu0
    %v2423 = vadd.f32 0.0, %v2422
    %v2424 = vpop.f32.mrf.mxu0
    %2425 = vmatprep.mubr.bf16.mxu0 %v2119
    %2426 = vmatmul.mubr.bf16.gmra.mxu0 %v2118
    %v2427 = vpop.f32.mrf.mxu0
    %v2428 = vadd.f32 0.0, %v2427
    %v2429 = vpop.f32.mrf.mxu0
    %v2430 = vpop.f32.mrf.mxu0
    %v2431 = vadd.f32 0.0, %v2430
    %v2432 = vpop.f32.mrf.mxu0
    %2433 = vmatprep.mubr.bf16.mxu0 %v2123
    %2434 = vmatmul.mubr.bf16.gmra.mxu0 %v2122
    %v2435 = vpop.f32.mrf.mxu0
    %v2436 = vadd.f32 0.0, %v2435
    %v2437 = vpop.f32.mrf.mxu0
    %v2438 = vpop.f32.mrf.mxu0
    %v2439 = vadd.f32 0.0, %v2438
    %v2440 = vpop.f32.mrf.mxu0
    %2441 = vmatprep.mubr.bf16.mxu0 %v2127
    %2442 = vmatmul.mubr.bf16.gmra.mxu0 %v2126
    %v2443 = vpop.f32.mrf.mxu0
    %v2444 = vadd.f32 0.0, %v2443
    %v2445 = vpop.f32.mrf.mxu0
    %v2446 = vpop.f32.mrf.mxu0
    %v2447 = vadd.f32 0.0, %v2446
    %v2448 = vpop.f32.mrf.mxu0
    %2449 = vmatprep.mubr.bf16.mxu0 %v2131
    %2450 = vmatmul.mubr.bf16.gmra.mxu0 %v2130
    %v2451 = vpop.f32.mrf.mxu0
    %v2452 = vadd.f32 0.0, %v2451
    %v2453 = vpop.f32.mrf.mxu0
    %v2454 = vpop.f32.mrf.mxu0
    %v2455 = vadd.f32 0.0, %v2454
    %v2456 = vpop.f32.mrf.mxu0
    %2457 = vdwg.mxu0
    %2458 = vmatprep.subr.bf16.mxu0 0
    %2459 = vmatpush1.bf16.msra.mxu0 %v2287
    %2460 = vmatprep.subr.bf16.mxu0 0
    %2461 = vmatpush1.bf16.msra.mxu0 %v2286
    %2462 = vmatprep.subr.bf16.mxu0 0
    %2463 = vmatpush1.bf16.msra.mxu0 %v2285
    %2464 = vmatprep.subr.bf16.mxu0 0
    %2465 = vmatpush1.bf16.msra.mxu0 %v2284
    %2466 = vmatprep.subr.bf16.mxu0 0
    %2467 = vmatpush1.bf16.msra.mxu0 %v2283
    %2468 = vmatprep.subr.bf16.mxu0 0
    %2469 = vmatpush1.bf16.msra.mxu0 %v2282
    %2470 = vmatprep.subr.bf16.mxu0 0
    %2471 = vmatpush1.bf16.msra.mxu0 %v2281
    %2472 = vmatprep.subr.bf16.mxu0 0
    %2473 = vmatpush1.bf16.msra.mxu0 %v2280
    %2474 = vmatprep.subr.bf16.mxu0 0
    %2475 = vmatpush2.bf16.msra.mxu0 0
    %2476 = vmatprep.subr.bf16.mxu0 0
    %2477 = vmatpush2.bf16.msra.mxu0 0
    %2478 = vmatprep.subr.bf16.mxu0 0
    %2479 = vmatpush2.bf16.msra.mxu0 0
    %2480 = vmatprep.subr.bf16.mxu0 0
    %2481 = vmatpush2.bf16.msra.mxu0 0
    %2482 = vmatprep.subr.bf16.mxu0 0
    %2483 = vmatpush2.bf16.msra.mxu0 0
    %2484 = vmatprep.subr.bf16.mxu0 0
    %2485 = vmatpush2.bf16.msra.mxu0 0
    %2486 = vmatprep.subr.bf16.mxu0 0
    %2487 = vmatpush2.bf16.msra.mxu0 0
    %2488 = vmatprep.subr.bf16.mxu0 0
    %2489 = vmatpush2.bf16.msra.mxu0 %v2288
    %2490 = vmatprep.mubr.bf16.mxu0 %v2316
    %2491 = vmatmul.mubr.bf16.gmra.mxu0 %v2096
    %v2492 = vpop.f32.mrf.mxu0
    %v2493 = vadd.f32 %v2380, %v2492
    %v2494 = vpop.f32.mrf.mxu0
    %v2495 = vpop.f32.mrf.mxu0
    %v2496 = vadd.f32 %v2383, %v2495
    %v2497 = vpop.f32.mrf.mxu0
    %2498 = vmatprep.mubr.bf16.mxu0 %v2319
    %2499 = vmatmul.mubr.bf16.gmra.mxu0 %v2100
    %v2500 = vpop.f32.mrf.mxu0
    %v2501 = vadd.f32 %v2388, %v2500
    %v2502 = vpop.f32.mrf.mxu0
    %v2503 = vpop.f32.mrf.mxu0
    %v2504 = vadd.f32 %v2391, %v2503
    %v2505 = vpop.f32.mrf.mxu0
    %2506 = vmatprep.mubr.bf16.mxu0 %v2322
    %2507 = vmatmul.mubr.bf16.gmra.mxu0 %v2104
    %v2508 = vpop.f32.mrf.mxu0
    %v2509 = vadd.f32 %v2396, %v2508
    %v2510 = vpop.f32.mrf.mxu0
    %v2511 = vpop.f32.mrf.mxu0
    %v2512 = vadd.f32 %v2399, %v2511
    %v2513 = vpop.f32.mrf.mxu0
    %2514 = vmatprep.mubr.bf16.mxu0 %v2325
    %2515 = vmatmul.mubr.bf16.gmra.mxu0 %v2108
    %v2516 = vpop.f32.mrf.mxu0
    %v2517 = vadd.f32 %v2404, %v2516
    %v2518 = vpop.f32.mrf.mxu0
    %v2519 = vpop.f32.mrf.mxu0
    %v2520 = vadd.f32 %v2407, %v2519
    %v2521 = vpop.f32.mrf.mxu0
    %2522 = vmatprep.mubr.bf16.mxu0 %v2328
    %2523 = vmatmul.mubr.bf16.gmra.mxu0 %v2112
    %v2524 = vpop.f32.mrf.mxu0
    %v2525 = vadd.f32 %v2412, %v2524
    %v2526 = vpop.f32.mrf.mxu0
    %v2527 = vpop.f32.mrf.mxu0
    %v2528 = vadd.f32 %v2415, %v2527
    %v2529 = vpop.f32.mrf.mxu0
    %2530 = vmatprep.mubr.bf16.mxu0 %v2331
    %2531 = vmatmul.mubr.bf16.gmra.mxu0 %v2116
    %v2532 = vpop.f32.mrf.mxu0
    %v2533 = vadd.f32 %v2420, %v2532
    %v2534 = vpop.f32.mrf.mxu0
    %v2535 = vpop.f32.mrf.mxu0
    %v2536 = vadd.f32 %v2423, %v2535
    %v2537 = vpop.f32.mrf.mxu0
    %2538 = vmatprep.mubr.bf16.mxu0 %v2334
    %2539 = vmatmul.mubr.bf16.gmra.mxu0 %v2120
    %v2540 = vpop.f32.mrf.mxu0
    %v2541 = vadd.f32 %v2428, %v2540
    %v2542 = vpop.f32.mrf.mxu0
    %v2543 = vpop.f32.mrf.mxu0
    %v2544 = vadd.f32 %v2431, %v2543
    %v2545 = vpop.f32.mrf.mxu0
    %2546 = vmatprep.mubr.bf16.mxu0 %v2337
    %2547 = vmatmul.mubr.bf16.gmra.mxu0 %v2124
    %v2548 = vpop.f32.mrf.mxu0
    %v2549 = vadd.f32 %v2436, %v2548
    %v2550 = vpop.f32.mrf.mxu0
    %v2551 = vpop.f32.mrf.mxu0
    %v2552 = vadd.f32 %v2439, %v2551
    %v2553 = vpop.f32.mrf.mxu0
    %2554 = vmatprep.mubr.bf16.mxu0 %v2340
    %2555 = vmatmul.mubr.bf16.gmra.mxu0 %v2128
    %v2556 = vpop.f32.mrf.mxu0
    %v2557 = vadd.f32 %v2444, %v2556
    %v2558 = vpop.f32.mrf.mxu0
    %v2559 = vpop.f32.mrf.mxu0
    %v2560 = vadd.f32 %v2447, %v2559
    %v2561 = vpop.f32.mrf.mxu0
    %2562 = vmatprep.mubr.bf16.mxu0 %v2343
    %2563 = vmatmul.mubr.bf16.gmra.mxu0 %v2132
    %v2564 = vpop.f32.mrf.mxu0
    %v2565 = vadd.f32 %v2452, %v2564
    %v2566 = vpop.f32.mrf.mxu0
    %v2567 = vpop.f32.mrf.mxu0
    %v2568 = vadd.f32 %v2455, %v2567
    %v2569 = vpop.f32.mrf.mxu0
    %2570 = vdwg.mxu0
    %v2571 = vpack.c.bf16 %v2496, %v2493
    %v2572 = vpack.c.bf16 %v2504, %v2501
    %v2573 = vpack.c.bf16 %v2512, %v2509
    %v2574 = vpack.c.bf16 %v2520, %v2517
    %v2575 = vpack.c.bf16 %v2528, %v2525
    %v2576 = vpack.c.bf16 %v2536, %v2533
    %v2577 = vpack.c.bf16 %v2544, %v2541
    %v2578 = vpack.c.bf16 %v2552, %v2549
    %v2579 = vpack.c.bf16 %v2560, %v2557
    %v2580 = vpack.c.bf16 %v2568, %v2565
    %v2591 = vunpack.c.l.b16 %v2571
    %v2592 = vunpack.c.h.b16 %v2571
    %v2593 = vunpack.c.l.b16 %v2572
    %v2594 = vunpack.c.h.b16 %v2572
    %v2595 = vunpack.c.l.b16 %v2573
    %v2596 = vunpack.c.h.b16 %v2573
    %v2597 = vunpack.c.l.b16 %v2574
    %v2598 = vunpack.c.h.b16 %v2574
    %v2599 = vunpack.c.l.b16 %v2575
    %v2600 = vunpack.c.h.b16 %v2575
    %v2601 = vunpack.c.l.b16 %v2576
    %v2602 = vunpack.c.h.b16 %v2576
    %v2603 = vunpack.c.l.b16 %v2577
    %v2604 = vunpack.c.h.b16 %v2577
    %v2605 = vunpack.c.l.b16 %v2578
    %v2606 = vunpack.c.h.b16 %v2578
    %v2607 = vunpack.c.l.b16 %v2579
    %v2608 = vunpack.c.h.b16 %v2579
    %v2609 = vunpack.c.l.b16 %v2580
    %v2610 = vunpack.c.h.b16 %v2580
    %v2611 = vpack.c.b16 %v2591, %v2591
    %v2612 = vpack.c.b16 %v2592, %v2592
    %v2613 = vpack.c.b16 %v2593, %v2593
    %v2614 = vpack.c.b16 %v2594, %v2594
    %v2615 = vpack.c.b16 %v2595, %v2595
    %v2616 = vpack.c.b16 %v2596, %v2596
    %v2617 = vpack.c.b16 %v2597, %v2597
    %v2618 = vpack.c.b16 %v2598, %v2598
    %v2619 = vpack.c.b16 %v2599, %v2599
    %v2620 = vpack.c.b16 %v2600, %v2600
    %v2621 = vpack.c.b16 %v2601, %v2601
    %v2622 = vpack.c.b16 %v2602, %v2602
    %v2623 = vpack.c.b16 %v2603, %v2603
    %v2624 = vpack.c.b16 %v2604, %v2604
    %v2625 = vpack.c.b16 %v2605, %v2605
    %v2626 = vpack.c.b16 %v2606, %v2606
    %v2627 = vpack.c.b16 %v2607, %v2607
    %v2628 = vpack.c.b16 %v2608, %v2608
    %v2629 = vpack.c.b16 %v2609, %v2609
    %v2630 = vpack.c.b16 %v2610, %v2610
    %2651 = vst.msk [vmem:[#allocation5] sm:$0xf] %vm880, %v2611
    %2652 = vst.msk [vmem:[#allocation5 + $0x4] sm:$0xf] %vm880, %v2612
    %2653 = vst.msk [vmem:[#allocation5 + $0x8] sm:$0xf] %vm880, %v2613
    %2654 = vst.msk [vmem:[#allocation5 + $0xc] sm:$0xf] %vm880, %v2614
    %2655 = vst.msk [vmem:[#allocation5 + $0x10] sm:$0xf] %vm880, %v2615
    %2656 = vst.msk [vmem:[#allocation5 + $0x14] sm:$0xf] %vm880, %v2616
    %2657 = vst.msk [vmem:[#allocation5 + $0x18] sm:$0xf] %vm880, %v2617
    %2658 = vst.msk [vmem:[#allocation5 + $0x1c] sm:$0xf] %vm880, %v2618
    %2659 = vst.msk [vmem:[#allocation5 + $0x20] sm:$0xf] %vm880, %v2619
    %2660 = vst.msk [vmem:[#allocation5 + $0x24] sm:$0xf] %vm880, %v2620
    %2661 = vst.msk [vmem:[#allocation5 + $0x28] sm:$0xf] %vm880, %v2621
    %2662 = vst.msk [vmem:[#allocation5 + $0x2c] sm:$0xf] %vm880, %v2622
    %2663 = vst.msk [vmem:[#allocation5 + $0x30] sm:$0xf] %vm880, %v2623
    %2664 = vst.msk [vmem:[#allocation5 + $0x34] sm:$0xf] %vm880, %v2624
    %2665 = vst.msk [vmem:[#allocation5 + $0x38] sm:$0xf] %vm880, %v2625
    %2666 = vst.msk [vmem:[#allocation5 + $0x3c] sm:$0xf] %vm880, %v2626
    %2667 = vst.msk [vmem:[#allocation5 + $0x40] sm:$0xf] %vm880, %v2627
    %2668 = vst.msk [vmem:[#allocation5 + $0x44] sm:$0xf] %vm880, %v2628
    %2669 = vst.msk [vmem:[#allocation5 + $0x48] sm:$0xf] %vm880, %v2629
    %2670 = vst.msk [vmem:[#allocation5 + $0x4c] sm:$0xf] %vm880, %v2630
    %v2671 = vld [vmem:[#allocation9 + $0x11] ss:$0 sm:$0xff]
    %v2672 = vld [vmem:[#allocation5] sm:$0xf]
    %v2673 = vld [vmem:[#allocation5 + $0x4] sm:$0xf]
    %v2674 = vld [vmem:[#allocation5 + $0x8] sm:$0xf]
    %v2675 = vld [vmem:[#allocation5 + $0xc] sm:$0xf]
    %v2676 = vld [vmem:[#allocation5 + $0x10] sm:$0xf]
    %v2677 = vld [vmem:[#allocation5 + $0x14] sm:$0xf]
    %v2678 = vld [vmem:[#allocation5 + $0x18] sm:$0xf]
    %v2679 = vld [vmem:[#allocation5 + $0x1c] sm:$0xf]
    %v2680 = vld [vmem:[#allocation5 + $0x20] sm:$0xf]
    %v2681 = vld [vmem:[#allocation5 + $0x24] sm:$0xf]
    %v2682 = vld [vmem:[#allocation5 + $0x28] sm:$0xf]
    %v2683 = vld [vmem:[#allocation5 + $0x2c] sm:$0xf]
    %v2684 = vld [vmem:[#allocation5 + $0x30] sm:$0xf]
    %v2685 = vld [vmem:[#allocation5 + $0x34] sm:$0xf]
    %v2686 = vld [vmem:[#allocation5 + $0x38] sm:$0xf]
    %v2687 = vld [vmem:[#allocation5 + $0x3c] sm:$0xf]
    %v2688 = vld [vmem:[#allocation11] sm:$0xf]
    %v2689 = vld [vmem:[#allocation11 + $0x4] sm:$0xf]
    %v2690 = vld [vmem:[#allocation11 + $0x8] sm:$0xf]
    %v2691 = vld [vmem:[#allocation11 + $0xc] sm:$0xf]
    %v2692 = vld [vmem:[#allocation5 + $0x40] sm:$0x1]
    %v2693 = vld [vmem:[#allocation11 + $0x10] sm:$0xf]
    %v2694 = vld [vmem:[#allocation11 + $0x14] sm:$0xf]
    %v2695 = vld [vmem:[#allocation11 + $0x18] sm:$0xf]
    %v2696 = vld [vmem:[#allocation11 + $0x1c] sm:$0xf]
    %v2714 = vunpack.c.l.b16 %v2672
    %v2715 = vunpack.c.l.b16 %v2673
    %v2716 = vunpack.c.l.b16 %v2674
    %v2717 = vunpack.c.l.b16 %v2675
    %v2718 = vunpack.c.l.b16 %v2676
    %v2719 = vunpack.c.l.b16 %v2677
    %v2720 = vunpack.c.l.b16 %v2678
    %v2721 = vunpack.c.l.b16 %v2679
    %v2722 = vunpack.c.l.b16 %v2680
    %v2723 = vunpack.c.l.b16 %v2681
    %v2724 = vunpack.c.l.b16 %v2682
    %v2725 = vunpack.c.l.b16 %v2683
    %v2726 = vunpack.c.l.b16 %v2684
    %v2727 = vunpack.c.l.b16 %v2685
    %v2728 = vunpack.c.l.b16 %v2686
    %v2729 = vunpack.c.l.b16 %v2687
    %v2730 = vunpack.c.l.b16 %v2692
    %v2731 = vpack.c.b16 %v2715, %v2714
    %v2732 = vpack.c.b16 %v2717, %v2716
    %v2733 = vpack.c.b16 %v2719, %v2718
    %v2734 = vpack.c.b16 %v2721, %v2720
    %v2735 = vpack.c.b16 %v2723, %v2722
    %v2736 = vpack.c.b16 %v2725, %v2724
    %v2737 = vpack.c.b16 %v2727, %v2726
    %v2738 = vpack.c.b16 %v2729, %v2728
    %v2739 = vpack.c.b16 %v2730, %v2730
    %vm2740 = vsmask.f32 7424
    %v2742 = vshrl.u32 %v2731, 16
    %v2744 = vshll.u32 %v2731, 16
    %v2746 = vrot.slane %v2744, 1
    %v2747 = vor.u32 %v2742, %v2746
    %v2749 = vshll.u32 %v2732, 16
    %v2751 = vrot.slane %v2749, 1
    %v2752 = vsel %vm2740, %v2747, %v2751
    %v2753 = vshrl.u32 %v2732, 16
    %v2755 = vor.u32 %v2753, %v2751
    %v2757 = vshll.u32 %v2733, 16
    %v2759 = vrot.slane %v2757, 1
    %v2760 = vsel %vm2740, %v2755, %v2759
    %v2761 = vshrl.u32 %v2733, 16
    %v2763 = vor.u32 %v2761, %v2759
    %v2765 = vshll.u32 %v2734, 16
    %v2767 = vrot.slane %v2765, 1
    %v2768 = vsel %vm2740, %v2763, %v2767
    %v2769 = vshrl.u32 %v2734, 16
    %v2771 = vor.u32 %v2769, %v2767
    %v2773 = vshll.u32 %v2735, 16
    %v2775 = vrot.slane %v2773, 1
    %v2776 = vsel %vm2740, %v2771, %v2775
    %v2777 = vshrl.u32 %v2735, 16
    %v2779 = vor.u32 %v2777, %v2775
    %v2781 = vshll.u32 %v2736, 16
    %v2783 = vrot.slane %v2781, 1
    %v2784 = vsel %vm2740, %v2779, %v2783
    %v2785 = vshrl.u32 %v2736, 16
    %v2787 = vor.u32 %v2785, %v2783
    %v2789 = vshll.u32 %v2737, 16
    %v2791 = vrot.slane %v2789, 1
    %v2792 = vsel %vm2740, %v2787, %v2791
    %v2793 = vshrl.u32 %v2737, 16
    %v2795 = vor.u32 %v2793, %v2791
    %v2797 = vshll.u32 %v2738, 16
    %v2799 = vrot.slane %v2797, 1
    %v2800 = vsel %vm2740, %v2795, %v2799
    %v2801 = vshrl.u32 %v2738, 16
    %v2803 = vor.u32 %v2801, %v2799
    %v2805 = vshll.u32 %v2739, 16
    %v2807 = vrot.slane %v2805, 1
    %v2808 = vsel %vm2740, %v2803, %v2807
    %v2813 = vunpack.c.l.b16 %v2693
    %v2814 = vunpack.c.l.b16 %v2694
    %v2815 = vunpack.c.l.b16 %v2695
    %v2816 = vunpack.c.l.b16 %v2696
    %v2817 = vpack.c.b16 %v2814, %v2813
    %v2818 = vpack.c.b16 %v2816, %v2815
    %vm2821 = vcmask 261120
    %v2823 = vsel %vm2821, %v2752, 0
    %v2826 = vsel %vm2821, %v2760, 0
    %v2829 = vsel %vm2821, %v2768, 0
    %v2832 = vsel %vm2821, %v2776, 0
    %v2835 = vsel %vm2821, %v2784, 0
    %v2838 = vsel %vm2821, %v2792, 0
    %v2841 = vsel %vm2821, %v2800, 0
    %v2844 = vsel %vm2821, %v2808, 0
    %2846 = vmatprep.subr.bf16.mxu0 0
    %2847 = vmatpush1.bf16.msra.mxu0 0
    %2848 = vmatprep.subr.bf16.mxu0 0
    %2849 = vmatpush1.bf16.msra.mxu0 0
    %2850 = vmatprep.subr.bf16.mxu0 0
    %2851 = vmatpush1.bf16.msra.mxu0 0
    %2852 = vmatprep.subr.bf16.mxu0 0
    %2853 = vmatpush1.bf16.msra.mxu0 0
    %2854 = vmatprep.subr.bf16.mxu0 0
    %2855 = vmatpush1.bf16.msra.mxu0 0
    %2856 = vmatprep.subr.bf16.mxu0 0
    %2857 = vmatpush1.bf16.msra.mxu0 0
    %2858 = vmatprep.subr.bf16.mxu0 0
    %2859 = vmatpush1.bf16.msra.mxu0 %v2818
    %2860 = vmatprep.subr.bf16.mxu0 0
    %2861 = vmatpush1.bf16.msra.mxu0 %v2817
    %2862 = vmatprep.subr.bf16.mxu0 0
    %2863 = vmatpush2.bf16.msra.mxu0 0
    %2864 = vmatprep.subr.bf16.mxu0 0
    %2865 = vmatpush2.bf16.msra.mxu0 0
    %2866 = vmatprep.subr.bf16.mxu0 0
    %2867 = vmatpush2.bf16.msra.mxu0 0
    %2868 = vmatprep.subr.bf16.mxu0 0
    %2869 = vmatpush2.bf16.msra.mxu0 0
    %2870 = vmatprep.subr.bf16.mxu0 0
    %2871 = vmatpush2.bf16.msra.mxu0 0
    %2872 = vmatprep.subr.bf16.mxu0 0
    %2873 = vmatpush2.bf16.msra.mxu0 0
    %2874 = vmatprep.subr.bf16.mxu0 0
    %2875 = vmatpush2.bf16.msra.mxu0 0
    %2876 = vmatprep.subr.bf16.mxu0 0
    %2877 = vmatpush2.bf16.msra.mxu0 0
    %2878 = vmatprep.mubr.bf16.mxu0 0
    %2879 = vmatmul.mubr.bf16.gmra.mxu0 %v2823
    %v2880 = vpop.f32.mrf.mxu0
    %v2881 = vadd.f32 0.0, %v2880
    %v2882 = vpop.f32.mrf.mxu0
    %v2883 = vpop.f32.mrf.mxu0
    %v2884 = vadd.f32 0.0, %v2883
    %v2885 = vpop.f32.mrf.mxu0
    %2886 = vmatprep.mubr.bf16.mxu0 0
    %2887 = vmatmul.mubr.bf16.gmra.mxu0 %v2826
    %v2888 = vpop.f32.mrf.mxu0
    %v2889 = vadd.f32 0.0, %v2888
    %v2890 = vpop.f32.mrf.mxu0
    %v2891 = vpop.f32.mrf.mxu0
    %v2892 = vadd.f32 0.0, %v2891
    %v2893 = vpop.f32.mrf.mxu0
    %2894 = vmatprep.mubr.bf16.mxu0 0
    %2895 = vmatmul.mubr.bf16.gmra.mxu0 %v2829
    %v2896 = vpop.f32.mrf.mxu0
    %v2897 = vadd.f32 0.0, %v2896
    %v2898 = vpop.f32.mrf.mxu0
    %v2899 = vpop.f32.mrf.mxu0
    %v2900 = vadd.f32 0.0, %v2899
    %v2901 = vpop.f32.mrf.mxu0
    %2902 = vmatprep.mubr.bf16.mxu0 0
    %2903 = vmatmul.mubr.bf16.gmra.mxu0 %v2832
    %v2904 = vpop.f32.mrf.mxu0
    %v2905 = vadd.f32 0.0, %v2904
    %v2906 = vpop.f32.mrf.mxu0
    %v2907 = vpop.f32.mrf.mxu0
    %v2908 = vadd.f32 0.0, %v2907
    %v2909 = vpop.f32.mrf.mxu0
    %2910 = vmatprep.mubr.bf16.mxu0 0
    %2911 = vmatmul.mubr.bf16.gmra.mxu0 %v2835
    %v2912 = vpop.f32.mrf.mxu0
    %v2913 = vadd.f32 0.0, %v2912
    %v2914 = vpop.f32.mrf.mxu0
    %v2915 = vpop.f32.mrf.mxu0
    %v2916 = vadd.f32 0.0, %v2915
    %v2917 = vpop.f32.mrf.mxu0
    %2918 = vmatprep.mubr.bf16.mxu0 0
    %2919 = vmatmul.mubr.bf16.gmra.mxu0 %v2838
    %v2920 = vpop.f32.mrf.mxu0
    %v2921 = vadd.f32 0.0, %v2920
    %v2922 = vpop.f32.mrf.mxu0
    %v2923 = vpop.f32.mrf.mxu0
    %v2924 = vadd.f32 0.0, %v2923
    %v2925 = vpop.f32.mrf.mxu0
    %2926 = vmatprep.mubr.bf16.mxu0 0
    %2927 = vmatmul.mubr.bf16.gmra.mxu0 %v2841
    %v2928 = vpop.f32.mrf.mxu0
    %v2929 = vadd.f32 0.0, %v2928
    %v2930 = vpop.f32.mrf.mxu0
    %v2931 = vpop.f32.mrf.mxu0
    %v2932 = vadd.f32 0.0, %v2931
    %v2933 = vpop.f32.mrf.mxu0
    %2934 = vmatprep.mubr.bf16.mxu0 0
    %2935 = vmatmul.mubr.bf16.gmra.mxu0 %v2844
    %v2936 = vpop.f32.mrf.mxu0
    %v2937 = vadd.f32 0.0, %v2936
    %v2938 = vpop.f32.mrf.mxu0
    %v2939 = vpop.f32.mrf.mxu0
    %v2940 = vadd.f32 0.0, %v2939
    %v2941 = vpop.f32.mrf.mxu0
    %2942 = vdwg.mxu0
    %v2947 = vunpack.c.l.b16 %v2688
    %v2948 = vunpack.c.l.b16 %v2689
    %v2949 = vunpack.c.l.b16 %v2690
    %v2950 = vunpack.c.l.b16 %v2691
    %v2951 = vpack.c.b16 %v2948, %v2947
    %v2952 = vpack.c.b16 %v2950, %v2949
    %v2955 = vsel %vm2821, %v2731, 0
    %v2957 = vsel %vm2821, %v2732, 0
    %v2959 = vsel %vm2821, %v2733, 0
    %v2961 = vsel %vm2821, %v2734, 0
    %v2963 = vsel %vm2821, %v2735, 0
    %v2965 = vsel %vm2821, %v2736, 0
    %v2967 = vsel %vm2821, %v2737, 0
    %v2969 = vsel %vm2821, %v2738, 0
    %2971 = vmatprep.subr.bf16.mxu0 0
    %2972 = vmatpush1.bf16.msra.mxu0 0
    %2973 = vmatprep.subr.bf16.mxu0 0
    %2974 = vmatpush1.bf16.msra.mxu0 0
    %2975 = vmatprep.subr.bf16.mxu0 0
    %2976 = vmatpush1.bf16.msra.mxu0 0
    %2977 = vmatprep.subr.bf16.mxu0 0
    %2978 = vmatpush1.bf16.msra.mxu0 0
    %2979 = vmatprep.subr.bf16.mxu0 0
    %2980 = vmatpush1.bf16.msra.mxu0 0
    %2981 = vmatprep.subr.bf16.mxu0 0
    %2982 = vmatpush1.bf16.msra.mxu0 0
    %2983 = vmatprep.subr.bf16.mxu0 0
    %2984 = vmatpush1.bf16.msra.mxu0 %v2952
    %2985 = vmatprep.subr.bf16.mxu0 0
    %2986 = vmatpush1.bf16.msra.mxu0 %v2951
    %2987 = vmatprep.subr.bf16.mxu0 0
    %2988 = vmatpush2.bf16.msra.mxu0 0
    %2989 = vmatprep.subr.bf16.mxu0 0
    %2990 = vmatpush2.bf16.msra.mxu0 0
    %2991 = vmatprep.subr.bf16.mxu0 0
    %2992 = vmatpush2.bf16.msra.mxu0 0
    %2993 = vmatprep.subr.bf16.mxu0 0
    %2994 = vmatpush2.bf16.msra.mxu0 0
    %2995 = vmatprep.subr.bf16.mxu0 0
    %2996 = vmatpush2.bf16.msra.mxu0 0
    %2997 = vmatprep.subr.bf16.mxu0 0
    %2998 = vmatpush2.bf16.msra.mxu0 0
    %2999 = vmatprep.subr.bf16.mxu0 0
    %3000 = vmatpush2.bf16.msra.mxu0 0
    %3001 = vmatprep.subr.bf16.mxu0 0
    %3002 = vmatpush2.bf16.msra.mxu0 0
    %3003 = vmatprep.mubr.bf16.mxu0 0
    %3004 = vmatmul.mubr.bf16.gmra.mxu0 %v2955
    %v3005 = vpop.f32.mrf.mxu0
    %v3006 = vadd.f32 %v2881, %v3005
    %v3007 = vpop.f32.mrf.mxu0
    %v3008 = vpop.f32.mrf.mxu0
    %v3009 = vadd.f32 %v2884, %v3008
    %v3010 = vpop.f32.mrf.mxu0
    %3011 = vmatprep.mubr.bf16.mxu0 0
    %3012 = vmatmul.mubr.bf16.gmra.mxu0 %v2957
    %v3013 = vpop.f32.mrf.mxu0
    %v3014 = vadd.f32 %v2889, %v3013
    %v3015 = vpop.f32.mrf.mxu0
    %v3016 = vpop.f32.mrf.mxu0
    %v3017 = vadd.f32 %v2892, %v3016
    %v3018 = vpop.f32.mrf.mxu0
    %3019 = vmatprep.mubr.bf16.mxu0 0
    %3020 = vmatmul.mubr.bf16.gmra.mxu0 %v2959
    %v3021 = vpop.f32.mrf.mxu0
    %v3022 = vadd.f32 %v2897, %v3021
    %v3023 = vpop.f32.mrf.mxu0
    %v3024 = vpop.f32.mrf.mxu0
    %v3025 = vadd.f32 %v2900, %v3024
    %v3026 = vpop.f32.mrf.mxu0
    %3027 = vmatprep.mubr.bf16.mxu0 0
    %3028 = vmatmul.mubr.bf16.gmra.mxu0 %v2961
    %v3029 = vpop.f32.mrf.mxu0
    %v3030 = vadd.f32 %v2905, %v3029
    %v3031 = vpop.f32.mrf.mxu0
    %v3032 = vpop.f32.mrf.mxu0
    %v3033 = vadd.f32 %v2908, %v3032
    %v3034 = vpop.f32.mrf.mxu0
    %3035 = vmatprep.mubr.bf16.mxu0 0
    %3036 = vmatmul.mubr.bf16.gmra.mxu0 %v2963
    %v3037 = vpop.f32.mrf.mxu0
    %v3038 = vadd.f32 %v2913, %v3037
    %v3039 = vpop.f32.mrf.mxu0
    %v3040 = vpop.f32.mrf.mxu0
    %v3041 = vadd.f32 %v2916, %v3040
    %v3042 = vpop.f32.mrf.mxu0
    %3043 = vmatprep.mubr.bf16.mxu0 0
    %3044 = vmatmul.mubr.bf16.gmra.mxu0 %v2965
    %v3045 = vpop.f32.mrf.mxu0
    %v3046 = vadd.f32 %v2921, %v3045
    %v3047 = vpop.f32.mrf.mxu0
    %v3048 = vpop.f32.mrf.mxu0
    %v3049 = vadd.f32 %v2924, %v3048
    %v3050 = vpop.f32.mrf.mxu0
    %3051 = vmatprep.mubr.bf16.mxu0 0
    %3052 = vmatmul.mubr.bf16.gmra.mxu0 %v2967
    %v3053 = vpop.f32.mrf.mxu0
    %v3054 = vadd.f32 %v2929, %v3053
    %v3055 = vpop.f32.mrf.mxu0
    %v3056 = vpop.f32.mrf.mxu0
    %v3057 = vadd.f32 %v2932, %v3056
    %v3058 = vpop.f32.mrf.mxu0
    %3059 = vmatprep.mubr.bf16.mxu0 0
    %3060 = vmatmul.mubr.bf16.gmra.mxu0 %v2969
    %v3061 = vpop.f32.mrf.mxu0
    %v3062 = vadd.f32 %v2937, %v3061
    %v3063 = vpop.f32.mrf.mxu0
    %v3064 = vpop.f32.mrf.mxu0
    %v3065 = vadd.f32 %v2940, %v3064
    %v3066 = vpop.f32.mrf.mxu0
    %3067 = vdwg.mxu0
    %v3068 = vld [vmem:[#allocation5] sm:$0xe]
    %v3069 = vld [vmem:[#allocation11 + $0x20] sm:$0xf]
    %v3070 = vld [vmem:[#allocation11 + $0x24] sm:$0xf]
    %v3071 = vld [vmem:[#allocation11 + $0x28] sm:$0xf]
    %v3072 = vld [vmem:[#allocation11 + $0x2c] sm:$0xf]
    %v3074 = vunpack.c.l.b16 %v3068
    %v3075 = vpack.c.b16 %v2715, %v3074
    %vm3076 = vcmask 1046528
    %v3077 = vrot.slane %v3075, 1
    %v3078 = vrot.slane %v2732, 1
    %v3079 = vsel %vm3076, %v3077, %v3078
    %v3080 = vrot.slane %v2733, 1
    %v3081 = vsel %vm3076, %v3078, %v3080
    %v3082 = vrot.slane %v2734, 1
    %v3083 = vsel %vm3076, %v3080, %v3082
    %v3084 = vrot.slane %v2735, 1
    %v3085 = vsel %vm3076, %v3082, %v3084
    %v3086 = vrot.slane %v2736, 1
    %v3087 = vsel %vm3076, %v3084, %v3086
    %v3088 = vrot.slane %v2737, 1
    %v3089 = vsel %vm3076, %v3086, %v3088
    %v3090 = vrot.slane %v2738, 1
    %v3091 = vsel %vm3076, %v3088, %v3090
    %v3092 = vrot.slane %v2739, 1
    %v3093 = vsel %vm3076, %v3090, %v3092
    %v3098 = vunpack.c.l.b16 %v3069
    %v3099 = vunpack.c.l.b16 %v3070
    %v3100 = vunpack.c.l.b16 %v3071
    %v3101 = vunpack.c.l.b16 %v3072
    %v3102 = vpack.c.b16 %v3099, %v3098
    %v3103 = vpack.c.b16 %v3101, %v3100
    %v3107 = vsel %vm2821, %v3079, 0
    %v3110 = vsel %vm2821, %v3081, 0
    %v3113 = vsel %vm2821, %v3083, 0
    %v3116 = vsel %vm2821, %v3085, 0
    %v3119 = vsel %vm2821, %v3087, 0
    %v3122 = vsel %vm2821, %v3089, 0
    %v3125 = vsel %vm2821, %v3091, 0
    %v3128 = vsel %vm2821, %v3093, 0
    %3130 = vmatprep.subr.bf16.mxu0 0
    %3131 = vmatpush1.bf16.msra.mxu0 0
    %3132 = vmatprep.subr.bf16.mxu0 0
    %3133 = vmatpush1.bf16.msra.mxu0 0
    %3134 = vmatprep.subr.bf16.mxu0 0
    %3135 = vmatpush1.bf16.msra.mxu0 0
    %3136 = vmatprep.subr.bf16.mxu0 0
    %3137 = vmatpush1.bf16.msra.mxu0 0
    %3138 = vmatprep.subr.bf16.mxu0 0
    %3139 = vmatpush1.bf16.msra.mxu0 0
    %3140 = vmatprep.subr.bf16.mxu0 0
    %3141 = vmatpush1.bf16.msra.mxu0 0
    %3142 = vmatprep.subr.bf16.mxu0 0
    %3143 = vmatpush1.bf16.msra.mxu0 %v3103
    %3144 = vmatprep.subr.bf16.mxu0 0
    %3145 = vmatpush1.bf16.msra.mxu0 %v3102
    %3146 = vmatprep.subr.bf16.mxu0 0
    %3147 = vmatpush2.bf16.msra.mxu0 0
    %3148 = vmatprep.subr.bf16.mxu0 0
    %3149 = vmatpush2.bf16.msra.mxu0 0
    %3150 = vmatprep.subr.bf16.mxu0 0
    %3151 = vmatpush2.bf16.msra.mxu0 0
    %3152 = vmatprep.subr.bf16.mxu0 0
    %3153 = vmatpush2.bf16.msra.mxu0 0
    %3154 = vmatprep.subr.bf16.mxu0 0
    %3155 = vmatpush2.bf16.msra.mxu0 0
    %3156 = vmatprep.subr.bf16.mxu0 0
    %3157 = vmatpush2.bf16.msra.mxu0 0
    %3158 = vmatprep.subr.bf16.mxu0 0
    %3159 = vmatpush2.bf16.msra.mxu0 0
    %3160 = vmatprep.subr.bf16.mxu0 0
    %3161 = vmatpush2.bf16.msra.mxu0 0
    %3162 = vmatprep.mubr.bf16.mxu0 0
    %3163 = vmatmul.mubr.bf16.gmra.mxu0 %v3107
    %v3164 = vpop.f32.mrf.mxu0
    %v3165 = vadd.f32 0.0, %v3164
    %v3166 = vpop.f32.mrf.mxu0
    %v3167 = vpop.f32.mrf.mxu0
    %v3168 = vadd.f32 0.0, %v3167
    %v3169 = vpop.f32.mrf.mxu0
    %3170 = vmatprep.mubr.bf16.mxu0 0
    %3171 = vmatmul.mubr.bf16.gmra.mxu0 %v3110
    %v3172 = vpop.f32.mrf.mxu0
    %v3173 = vadd.f32 0.0, %v3172
    %v3174 = vpop.f32.mrf.mxu0
    %v3175 = vpop.f32.mrf.mxu0
    %v3176 = vadd.f32 0.0, %v3175
    %v3177 = vpop.f32.mrf.mxu0
    %3178 = vmatprep.mubr.bf16.mxu0 0
    %3179 = vmatmul.mubr.bf16.gmra.mxu0 %v3113
    %v3180 = vpop.f32.mrf.mxu0
    %v3181 = vadd.f32 0.0, %v3180
    %v3182 = vpop.f32.mrf.mxu0
    %v3183 = vpop.f32.mrf.mxu0
    %v3184 = vadd.f32 0.0, %v3183
    %v3185 = vpop.f32.mrf.mxu0
    %3186 = vmatprep.mubr.bf16.mxu0 0
    %3187 = vmatmul.mubr.bf16.gmra.mxu0 %v3116
    %v3188 = vpop.f32.mrf.mxu0
    %v3189 = vadd.f32 0.0, %v3188
    %v3190 = vpop.f32.mrf.mxu0
    %v3191 = vpop.f32.mrf.mxu0
    %v3192 = vadd.f32 0.0, %v3191
    %v3193 = vpop.f32.mrf.mxu0
    %3194 = vmatprep.mubr.bf16.mxu0 0
    %3195 = vmatmul.mubr.bf16.gmra.mxu0 %v3119
    %v3196 = vpop.f32.mrf.mxu0
    %v3197 = vadd.f32 0.0, %v3196
    %v3198 = vpop.f32.mrf.mxu0
    %v3199 = vpop.f32.mrf.mxu0
    %v3200 = vadd.f32 0.0, %v3199
    %v3201 = vpop.f32.mrf.mxu0
    %3202 = vmatprep.mubr.bf16.mxu0 0
    %3203 = vmatmul.mubr.bf16.gmra.mxu0 %v3122
    %v3204 = vpop.f32.mrf.mxu0
    %v3205 = vadd.f32 0.0, %v3204
    %v3206 = vpop.f32.mrf.mxu0
    %v3207 = vpop.f32.mrf.mxu0
    %v3208 = vadd.f32 0.0, %v3207
    %v3209 = vpop.f32.mrf.mxu0
    %3210 = vmatprep.mubr.bf16.mxu0 0
    %3211 = vmatmul.mubr.bf16.gmra.mxu0 %v3125
    %v3212 = vpop.f32.mrf.mxu0
    %v3213 = vadd.f32 0.0, %v3212
    %v3214 = vpop.f32.mrf.mxu0
    %v3215 = vpop.f32.mrf.mxu0
    %v3216 = vadd.f32 0.0, %v3215
    %v3217 = vpop.f32.mrf.mxu0
    %3218 = vmatprep.mubr.bf16.mxu0 0
    %3219 = vmatmul.mubr.bf16.gmra.mxu0 %v3128
    %v3220 = vpop.f32.mrf.mxu0
    %v3221 = vadd.f32 0.0, %v3220
    %v3222 = vpop.f32.mrf.mxu0
    %v3223 = vpop.f32.mrf.mxu0
    %v3224 = vadd.f32 0.0, %v3223
    %v3225 = vpop.f32.mrf.mxu0
    %3226 = vdwg.mxu0
    %v3227 = vadd.f32 %v3006, %v3165
    %v3228 = vadd.f32 %v3009, %v3168
    %v3229 = vadd.f32 %v3014, %v3173
    %v3230 = vadd.f32 %v3017, %v3176
    %v3231 = vadd.f32 %v3022, %v3181
    %v3232 = vadd.f32 %v3025, %v3184
    %v3233 = vadd.f32 %v3030, %v3189
    %v3234 = vadd.f32 %v3033, %v3192
    %v3235 = vadd.f32 %v3038, %v3197
    %v3236 = vadd.f32 %v3041, %v3200
    %v3237 = vadd.f32 %v3046, %v3205
    %v3238 = vadd.f32 %v3049, %v3208
    %v3239 = vadd.f32 %v3054, %v3213
    %v3240 = vadd.f32 %v3057, %v3216
    %v3241 = vadd.f32 %v3062, %v3221
    %v3242 = vadd.f32 %v3065, %v3224
    %v3243 = vld [vmem:[#allocation5 + $0x40] sm:$0xf]
    %v3244 = vld [vmem:[#allocation11 + $0x30] sm:$0xf]
    %v3245 = vld [vmem:[#allocation11 + $0x34] sm:$0xf]
    %v3246 = vld [vmem:[#allocation11 + $0x38] sm:$0xf]
    %v3247 = vld [vmem:[#allocation11 + $0x3c] sm:$0xf]
    %v3249 = vunpack.c.l.b16 %v3243
    %v3250 = vpack.c.b16 %v2716, %v2715
    %v3251 = vpack.c.b16 %v2718, %v2717
    %v3252 = vpack.c.b16 %v2720, %v2719
    %v3253 = vpack.c.b16 %v2722, %v2721
    %v3254 = vpack.c.b16 %v2724, %v2723
    %v3255 = vpack.c.b16 %v2726, %v2725
    %v3256 = vpack.c.b16 %v2728, %v2727
    %v3257 = vpack.c.b16 %v3249, %v2729
    %v3262 = vunpack.c.l.b16 %v3244
    %v3263 = vunpack.c.l.b16 %v3245
    %v3264 = vunpack.c.l.b16 %v3246
    %v3265 = vunpack.c.l.b16 %v3247
    %v3266 = vpack.c.b16 %v3263, %v3262
    %v3267 = vpack.c.b16 %v3265, %v3264
    %v3271 = vsel %vm2821, %v3250, 0
    %v3274 = vsel %vm2821, %v3251, 0
    %v3277 = vsel %vm2821, %v3252, 0
    %v3280 = vsel %vm2821, %v3253, 0
    %v3283 = vsel %vm2821, %v3254, 0
    %v3286 = vsel %vm2821, %v3255, 0
    %v3289 = vsel %vm2821, %v3256, 0
    %v3292 = vsel %vm2821, %v3257, 0
    %3294 = vmatprep.subr.bf16.mxu0 0
    %3295 = vmatpush1.bf16.msra.mxu0 0
    %3296 = vmatprep.subr.bf16.mxu0 0
    %3297 = vmatpush1.bf16.msra.mxu0 0
    %3298 = vmatprep.subr.bf16.mxu0 0
    %3299 = vmatpush1.bf16.msra.mxu0 0
    %3300 = vmatprep.subr.bf16.mxu0 0
    %3301 = vmatpush1.bf16.msra.mxu0 0
    %3302 = vmatprep.subr.bf16.mxu0 0
    %3303 = vmatpush1.bf16.msra.mxu0 0
    %3304 = vmatprep.subr.bf16.mxu0 0
    %3305 = vmatpush1.bf16.msra.mxu0 0
    %3306 = vmatprep.subr.bf16.mxu0 0
    %3307 = vmatpush1.bf16.msra.mxu0 %v3267
    %3308 = vmatprep.subr.bf16.mxu0 0
    %3309 = vmatpush1.bf16.msra.mxu0 %v3266
    %3310 = vmatprep.subr.bf16.mxu0 0
    %3311 = vmatpush2.bf16.msra.mxu0 0
    %3312 = vmatprep.subr.bf16.mxu0 0
    %3313 = vmatpush2.bf16.msra.mxu0 0
    %3314 = vmatprep.subr.bf16.mxu0 0
    %3315 = vmatpush2.bf16.msra.mxu0 0
    %3316 = vmatprep.subr.bf16.mxu0 0
    %3317 = vmatpush2.bf16.msra.mxu0 0
    %3318 = vmatprep.subr.bf16.mxu0 0
    %3319 = vmatpush2.bf16.msra.mxu0 0
    %3320 = vmatprep.subr.bf16.mxu0 0
    %3321 = vmatpush2.bf16.msra.mxu0 0
    %3322 = vmatprep.subr.bf16.mxu0 0
    %3323 = vmatpush2.bf16.msra.mxu0 0
    %3324 = vmatprep.subr.bf16.mxu0 0
    %3325 = vmatpush2.bf16.msra.mxu0 0
    %3326 = vmatprep.mubr.bf16.mxu0 0
    %3327 = vmatmul.mubr.bf16.gmra.mxu0 %v3271
    %v3328 = vpop.f32.mrf.mxu0
    %v3329 = vadd.f32 0.0, %v3328
    %v3330 = vpop.f32.mrf.mxu0
    %v3331 = vpop.f32.mrf.mxu0
    %v3332 = vadd.f32 0.0, %v3331
    %v3333 = vpop.f32.mrf.mxu0
    %3334 = vmatprep.mubr.bf16.mxu0 0
    %3335 = vmatmul.mubr.bf16.gmra.mxu0 %v3274
    %v3336 = vpop.f32.mrf.mxu0
    %v3337 = vadd.f32 0.0, %v3336
    %v3338 = vpop.f32.mrf.mxu0
    %v3339 = vpop.f32.mrf.mxu0
    %v3340 = vadd.f32 0.0, %v3339
    %v3341 = vpop.f32.mrf.mxu0
    %3342 = vmatprep.mubr.bf16.mxu0 0
    %3343 = vmatmul.mubr.bf16.gmra.mxu0 %v3277
    %v3344 = vpop.f32.mrf.mxu0
    %v3345 = vadd.f32 0.0, %v3344
    %v3346 = vpop.f32.mrf.mxu0
    %v3347 = vpop.f32.mrf.mxu0
    %v3348 = vadd.f32 0.0, %v3347
    %v3349 = vpop.f32.mrf.mxu0
    %3350 = vmatprep.mubr.bf16.mxu0 0
    %3351 = vmatmul.mubr.bf16.gmra.mxu0 %v3280
    %v3352 = vpop.f32.mrf.mxu0
    %v3353 = vadd.f32 0.0, %v3352
    %v3354 = vpop.f32.mrf.mxu0
    %v3355 = vpop.f32.mrf.mxu0
    %v3356 = vadd.f32 0.0, %v3355
    %v3357 = vpop.f32.mrf.mxu0
    %3358 = vmatprep.mubr.bf16.mxu0 0
    %3359 = vmatmul.mubr.bf16.gmra.mxu0 %v3283
    %v3360 = vpop.f32.mrf.mxu0
    %v3361 = vadd.f32 0.0, %v3360
    %v3362 = vpop.f32.mrf.mxu0
    %v3363 = vpop.f32.mrf.mxu0
    %v3364 = vadd.f32 0.0, %v3363
    %v3365 = vpop.f32.mrf.mxu0
    %3366 = vmatprep.mubr.bf16.mxu0 0
    %3367 = vmatmul.mubr.bf16.gmra.mxu0 %v3286
    %v3368 = vpop.f32.mrf.mxu0
    %v3369 = vadd.f32 0.0, %v3368
    %v3370 = vpop.f32.mrf.mxu0
    %v3371 = vpop.f32.mrf.mxu0
    %v3372 = vadd.f32 0.0, %v3371
    %v3373 = vpop.f32.mrf.mxu0
    %3374 = vmatprep.mubr.bf16.mxu0 0
    %3375 = vmatmul.mubr.bf16.gmra.mxu0 %v3289
    %v3376 = vpop.f32.mrf.mxu0
    %v3377 = vadd.f32 0.0, %v3376
    %v3378 = vpop.f32.mrf.mxu0
    %v3379 = vpop.f32.mrf.mxu0
    %v3380 = vadd.f32 0.0, %v3379
    %v3381 = vpop.f32.mrf.mxu0
    %3382 = vmatprep.mubr.bf16.mxu0 0
    %3383 = vmatmul.mubr.bf16.gmra.mxu0 %v3292
    %v3384 = vpop.f32.mrf.mxu0
    %v3385 = vadd.f32 0.0, %v3384
    %v3386 = vpop.f32.mrf.mxu0
    %v3387 = vpop.f32.mrf.mxu0
    %v3388 = vadd.f32 0.0, %v3387
    %v3389 = vpop.f32.mrf.mxu0
    %3390 = vdwg.mxu0
    %v3391 = vadd.f32 %v3227, %v3329
    %v3392 = vadd.f32 %v3228, %v3332
    %v3393 = vadd.f32 %v3229, %v3337
    %v3394 = vadd.f32 %v3230, %v3340
    %v3395 = vadd.f32 %v3231, %v3345
    %v3396 = vadd.f32 %v3232, %v3348
    %v3397 = vadd.f32 %v3233, %v3353
    %v3398 = vadd.f32 %v3234, %v3356
    %v3399 = vadd.f32 %v3235, %v3361
    %v3400 = vadd.f32 %v3236, %v3364
    %v3401 = vadd.f32 %v3237, %v3369
    %v3402 = vadd.f32 %v3238, %v3372
    %v3403 = vadd.f32 %v3239, %v3377
    %v3404 = vadd.f32 %v3240, %v3380
    %v3405 = vadd.f32 %v3241, %v3385
    %v3406 = vadd.f32 %v3242, %v3388
    %v3407 = vld [vmem:[#allocation5 + $0x4] sm:$0xf]
    %v3408 = vld [vmem:[#allocation5 + $0x8] sm:$0xf]
    %v3409 = vld [vmem:[#allocation5 + $0xc] sm:$0xf]
    %v3410 = vld [vmem:[#allocation5 + $0x10] sm:$0xf]
    %v3411 = vld [vmem:[#allocation5 + $0x14] sm:$0xf]
    %v3412 = vld [vmem:[#allocation5 + $0x18] sm:$0xf]
    %v3413 = vld [vmem:[#allocation5 + $0x1c] sm:$0xf]
    %v3414 = vld [vmem:[#allocation5 + $0x20] sm:$0xf]
    %v3415 = vld [vmem:[#allocation5 + $0x24] sm:$0xf]
    %v3416 = vld [vmem:[#allocation5 + $0x28] sm:$0xf]
    %v3417 = vld [vmem:[#allocation5 + $0x2c] sm:$0xf]
    %v3418 = vld [vmem:[#allocation5 + $0x30] sm:$0xf]
    %v3419 = vld [vmem:[#allocation5 + $0x34] sm:$0xf]
    %v3420 = vld [vmem:[#allocation5 + $0x38] sm:$0xf]
    %v3421 = vld [vmem:[#allocation5 + $0x3c] sm:$0xf]
    %v3422 = vld [vmem:[#allocation5 + $0x40] sm:$0xf]
    %v3423 = vld [vmem:[#allocation5 + $0x44] sm:$0x1]
    %v3424 = vld [vmem:[#allocation11 + $0x40] sm:$0xf]
    %v3425 = vld [vmem:[#allocation11 + $0x44] sm:$0xf]
    %v3426 = vld [vmem:[#allocation11 + $0x48] sm:$0xf]
    %v3427 = vld [vmem:[#allocation11 + $0x4c] sm:$0xf]
    %v3445 = vunpack.c.l.b16 %v3407
    %v3446 = vunpack.c.l.b16 %v3408
    %v3447 = vunpack.c.l.b16 %v3409
    %v3448 = vunpack.c.l.b16 %v3410
    %v3449 = vunpack.c.l.b16 %v3411
    %v3450 = vunpack.c.l.b16 %v3412
    %v3451 = vunpack.c.l.b16 %v3413
    %v3452 = vunpack.c.l.b16 %v3414
    %v3453 = vunpack.c.l.b16 %v3415
    %v3454 = vunpack.c.l.b16 %v3416
    %v3455 = vunpack.c.l.b16 %v3417
    %v3456 = vunpack.c.l.b16 %v3418
    %v3457 = vunpack.c.l.b16 %v3419
    %v3458 = vunpack.c.l.b16 %v3420
    %v3459 = vunpack.c.l.b16 %v3421
    %v3460 = vunpack.c.l.b16 %v3422
    %v3461 = vunpack.c.l.b16 %v3423
    %v3462 = vpack.c.b16 %v3446, %v3445
    %v3463 = vpack.c.b16 %v3448, %v3447
    %v3464 = vpack.c.b16 %v3450, %v3449
    %v3465 = vpack.c.b16 %v3452, %v3451
    %v3466 = vpack.c.b16 %v3454, %v3453
    %v3467 = vpack.c.b16 %v3456, %v3455
    %v3468 = vpack.c.b16 %v3458, %v3457
    %v3469 = vpack.c.b16 %v3460, %v3459
    %v3470 = vpack.c.b16 %v3461, %v3461
    %v3472 = vshrl.u32 %v3462, 16
    %v3474 = vshll.u32 %v3462, 16
    %v3476 = vrot.slane %v3474, 1
    %v3477 = vor.u32 %v3472, %v3476
    %v3479 = vshll.u32 %v3463, 16
    %v3481 = vrot.slane %v3479, 1
    %v3482 = vsel %vm2740, %v3477, %v3481
    %v3483 = vshrl.u32 %v3463, 16
    %v3485 = vor.u32 %v3483, %v3481
    %v3487 = vshll.u32 %v3464, 16
    %v3489 = vrot.slane %v3487, 1
    %v3490 = vsel %vm2740, %v3485, %v3489
    %v3491 = vshrl.u32 %v3464, 16
    %v3493 = vor.u32 %v3491, %v3489
    %v3495 = vshll.u32 %v3465, 16
    %v3497 = vrot.slane %v3495, 1
    %v3498 = vsel %vm2740, %v3493, %v3497
    %v3499 = vshrl.u32 %v3465, 16
    %v3501 = vor.u32 %v3499, %v3497
    %v3503 = vshll.u32 %v3466, 16
    %v3505 = vrot.slane %v3503, 1
    %v3506 = vsel %vm2740, %v3501, %v3505
    %v3507 = vshrl.u32 %v3466, 16
    %v3509 = vor.u32 %v3507, %v3505
    %v3511 = vshll.u32 %v3467, 16
    %v3513 = vrot.slane %v3511, 1
    %v3514 = vsel %vm2740, %v3509, %v3513
    %v3515 = vshrl.u32 %v3467, 16
    %v3517 = vor.u32 %v3515, %v3513
    %v3519 = vshll.u32 %v3468, 16
    %v3521 = vrot.slane %v3519, 1
    %v3522 = vsel %vm2740, %v3517, %v3521
    %v3523 = vshrl.u32 %v3468, 16
    %v3525 = vor.u32 %v3523, %v3521
    %v3527 = vshll.u32 %v3469, 16
    %v3529 = vrot.slane %v3527, 1
    %v3530 = vsel %vm2740, %v3525, %v3529
    %v3531 = vshrl.u32 %v3469, 16
    %v3533 = vor.u32 %v3531, %v3529
    %v3535 = vshll.u32 %v3470, 16
    %v3537 = vrot.slane %v3535, 1
    %v3538 = vsel %vm2740, %v3533, %v3537
    %v3543 = vunpack.c.l.b16 %v3424
    %v3544 = vunpack.c.l.b16 %v3425
    %v3545 = vunpack.c.l.b16 %v3426
    %v3546 = vunpack.c.l.b16 %v3427
    %v3547 = vpack.c.b16 %v3544, %v3543
    %v3548 = vpack.c.b16 %v3546, %v3545
    %v3552 = vsel %vm2821, %v3482, 0
    %v3555 = vsel %vm2821, %v3490, 0
    %v3558 = vsel %vm2821, %v3498, 0
    %v3561 = vsel %vm2821, %v3506, 0
    %v3564 = vsel %vm2821, %v3514, 0
    %v3567 = vsel %vm2821, %v3522, 0
    %v3570 = vsel %vm2821, %v3530, 0
    %v3573 = vsel %vm2821, %v3538, 0
    %3575 = vmatprep.subr.bf16.mxu0 0
    %3576 = vmatpush1.bf16.msra.mxu0 0
    %3577 = vmatprep.subr.bf16.mxu0 0
    %3578 = vmatpush1.bf16.msra.mxu0 0
    %3579 = vmatprep.subr.bf16.mxu0 0
    %3580 = vmatpush1.bf16.msra.mxu0 0
    %3581 = vmatprep.subr.bf16.mxu0 0
    %3582 = vmatpush1.bf16.msra.mxu0 0
    %3583 = vmatprep.subr.bf16.mxu0 0
    %3584 = vmatpush1.bf16.msra.mxu0 0
    %3585 = vmatprep.subr.bf16.mxu0 0
    %3586 = vmatpush1.bf16.msra.mxu0 0
    %3587 = vmatprep.subr.bf16.mxu0 0
    %3588 = vmatpush1.bf16.msra.mxu0 %v3548
    %3589 = vmatprep.subr.bf16.mxu0 0
    %3590 = vmatpush1.bf16.msra.mxu0 %v3547
    %3591 = vmatprep.subr.bf16.mxu0 0
    %3592 = vmatpush2.bf16.msra.mxu0 0
    %3593 = vmatprep.subr.bf16.mxu0 0
    %3594 = vmatpush2.bf16.msra.mxu0 0
    %3595 = vmatprep.subr.bf16.mxu0 0
    %3596 = vmatpush2.bf16.msra.mxu0 0
    %3597 = vmatprep.subr.bf16.mxu0 0
    %3598 = vmatpush2.bf16.msra.mxu0 0
    %3599 = vmatprep.subr.bf16.mxu0 0
    %3600 = vmatpush2.bf16.msra.mxu0 0
    %3601 = vmatprep.subr.bf16.mxu0 0
    %3602 = vmatpush2.bf16.msra.mxu0 0
    %3603 = vmatprep.subr.bf16.mxu0 0
    %3604 = vmatpush2.bf16.msra.mxu0 0
    %3605 = vmatprep.subr.bf16.mxu0 0
    %3606 = vmatpush2.bf16.msra.mxu0 0
    %3607 = vmatprep.mubr.bf16.mxu0 0
    %3608 = vmatmul.mubr.bf16.gmra.mxu0 %v3552
    %v3609 = vpop.f32.mrf.mxu0
    %v3610 = vadd.f32 0.0, %v3609
    %v3611 = vpop.f32.mrf.mxu0
    %v3612 = vpop.f32.mrf.mxu0
    %v3613 = vadd.f32 0.0, %v3612
    %v3614 = vpop.f32.mrf.mxu0
    %3615 = vmatprep.mubr.bf16.mxu0 0
    %3616 = vmatmul.mubr.bf16.gmra.mxu0 %v3555
    %v3617 = vpop.f32.mrf.mxu0
    %v3618 = vadd.f32 0.0, %v3617
    %v3619 = vpop.f32.mrf.mxu0
    %v3620 = vpop.f32.mrf.mxu0
    %v3621 = vadd.f32 0.0, %v3620
    %v3622 = vpop.f32.mrf.mxu0
    %3623 = vmatprep.mubr.bf16.mxu0 0
    %3624 = vmatmul.mubr.bf16.gmra.mxu0 %v3558
    %v3625 = vpop.f32.mrf.mxu0
    %v3626 = vadd.f32 0.0, %v3625
    %v3627 = vpop.f32.mrf.mxu0
    %v3628 = vpop.f32.mrf.mxu0
    %v3629 = vadd.f32 0.0, %v3628
    %v3630 = vpop.f32.mrf.mxu0
    %3631 = vmatprep.mubr.bf16.mxu0 0
    %3632 = vmatmul.mubr.bf16.gmra.mxu0 %v3561
    %v3633 = vpop.f32.mrf.mxu0
    %v3634 = vadd.f32 0.0, %v3633
    %v3635 = vpop.f32.mrf.mxu0
    %v3636 = vpop.f32.mrf.mxu0
    %v3637 = vadd.f32 0.0, %v3636
    %v3638 = vpop.f32.mrf.mxu0
    %3639 = vmatprep.mubr.bf16.mxu0 0
    %3640 = vmatmul.mubr.bf16.gmra.mxu0 %v3564
    %v3641 = vpop.f32.mrf.mxu0
    %v3642 = vadd.f32 0.0, %v3641
    %v3643 = vpop.f32.mrf.mxu0
    %v3644 = vpop.f32.mrf.mxu0
    %v3645 = vadd.f32 0.0, %v3644
    %v3646 = vpop.f32.mrf.mxu0
    %3647 = vmatprep.mubr.bf16.mxu0 0
    %3648 = vmatmul.mubr.bf16.gmra.mxu0 %v3567
    %v3649 = vpop.f32.mrf.mxu0
    %v3650 = vadd.f32 0.0, %v3649
    %v3651 = vpop.f32.mrf.mxu0
    %v3652 = vpop.f32.mrf.mxu0
    %v3653 = vadd.f32 0.0, %v3652
    %v3654 = vpop.f32.mrf.mxu0
    %3655 = vmatprep.mubr.bf16.mxu0 0
    %3656 = vmatmul.mubr.bf16.gmra.mxu0 %v3570
    %v3657 = vpop.f32.mrf.mxu0
    %v3658 = vadd.f32 0.0, %v3657
    %v3659 = vpop.f32.mrf.mxu0
    %v3660 = vpop.f32.mrf.mxu0
    %v3661 = vadd.f32 0.0, %v3660
    %v3662 = vpop.f32.mrf.mxu0
    %3663 = vmatprep.mubr.bf16.mxu0 0
    %3664 = vmatmul.mubr.bf16.gmra.mxu0 %v3573
    %v3665 = vpop.f32.mrf.mxu0
    %v3666 = vadd.f32 0.0, %v3665
    %v3667 = vpop.f32.mrf.mxu0
    %v3668 = vpop.f32.mrf.mxu0
    %v3669 = vadd.f32 0.0, %v3668
    %v3670 = vpop.f32.mrf.mxu0
    %3671 = vdwg.mxu0
    %v3672 = vadd.f32 %v3391, %v3610
    %v3673 = vadd.f32 %v3392, %v3613
    %v3674 = vadd.f32 %v3393, %v3618
    %v3675 = vadd.f32 %v3394, %v3621
    %v3676 = vadd.f32 %v3395, %v3626
    %v3677 = vadd.f32 %v3396, %v3629
    %v3678 = vadd.f32 %v3397, %v3634
    %v3679 = vadd.f32 %v3398, %v3637
    %v3680 = vadd.f32 %v3399, %v3642
    %v3681 = vadd.f32 %v3400, %v3645
    %v3682 = vadd.f32 %v3401, %v3650
    %v3683 = vadd.f32 %v3402, %v3653
    %v3684 = vadd.f32 %v3403, %v3658
    %v3685 = vadd.f32 %v3404, %v3661
    %v3686 = vadd.f32 %v3405, %v3666
    %v3687 = vadd.f32 %v3406, %v3669
    %v3688 = vld [vmem:[#allocation5 + $0x4] sm:$0xe]
    %v3689 = vld [vmem:[#allocation11 + $0x50] sm:$0xf]
    %v3690 = vld [vmem:[#allocation11 + $0x54] sm:$0xf]
    %v3691 = vld [vmem:[#allocation11 + $0x58] sm:$0xf]
    %v3692 = vld [vmem:[#allocation11 + $0x5c] sm:$0xf]
    %v3694 = vunpack.c.l.b16 %v3688
    %v3695 = vpack.c.b16 %v3446, %v3694
    %v3696 = vrot.slane %v3695, 1
    %v3697 = vrot.slane %v3463, 1
    %v3698 = vsel %vm3076, %v3696, %v3697
    %v3699 = vrot.slane %v3464, 1
    %v3700 = vsel %vm3076, %v3697, %v3699
    %v3701 = vrot.slane %v3465, 1
    %v3702 = vsel %vm3076, %v3699, %v3701
    %v3703 = vrot.slane %v3466, 1
    %v3704 = vsel %vm3076, %v3701, %v3703
    %v3705 = vrot.slane %v3467, 1
    %v3706 = vsel %vm3076, %v3703, %v3705
    %v3707 = vrot.slane %v3468, 1
    %v3708 = vsel %vm3076, %v3705, %v3707
    %v3709 = vrot.slane %v3469, 1
    %v3710 = vsel %vm3076, %v3707, %v3709
    %v3711 = vrot.slane %v3470, 1
    %v3712 = vsel %vm3076, %v3709, %v3711
    %v3717 = vunpack.c.l.b16 %v3689
    %v3718 = vunpack.c.l.b16 %v3690
    %v3719 = vunpack.c.l.b16 %v3691
    %v3720 = vunpack.c.l.b16 %v3692
    %v3721 = vpack.c.b16 %v3718, %v3717
    %v3722 = vpack.c.b16 %v3720, %v3719
    %v3726 = vsel %vm2821, %v3698, 0
    %v3729 = vsel %vm2821, %v3700, 0
    %v3732 = vsel %vm2821, %v3702, 0
    %v3735 = vsel %vm2821, %v3704, 0
    %v3738 = vsel %vm2821, %v3706, 0
    %v3741 = vsel %vm2821, %v3708, 0
    %v3744 = vsel %vm2821, %v3710, 0
    %v3747 = vsel %vm2821, %v3712, 0
    %3749 = vmatprep.subr.bf16.mxu0 0
    %3750 = vmatpush1.bf16.msra.mxu0 0
    %3751 = vmatprep.subr.bf16.mxu0 0
    %3752 = vmatpush1.bf16.msra.mxu0 0
    %3753 = vmatprep.subr.bf16.mxu0 0
    %3754 = vmatpush1.bf16.msra.mxu0 0
    %3755 = vmatprep.subr.bf16.mxu0 0
    %3756 = vmatpush1.bf16.msra.mxu0 0
    %3757 = vmatprep.subr.bf16.mxu0 0
    %3758 = vmatpush1.bf16.msra.mxu0 0
    %3759 = vmatprep.subr.bf16.mxu0 0
    %3760 = vmatpush1.bf16.msra.mxu0 0
    %3761 = vmatprep.subr.bf16.mxu0 0
    %3762 = vmatpush1.bf16.msra.mxu0 %v3722
    %3763 = vmatprep.subr.bf16.mxu0 0
    %3764 = vmatpush1.bf16.msra.mxu0 %v3721
    %3765 = vmatprep.subr.bf16.mxu0 0
    %3766 = vmatpush2.bf16.msra.mxu0 0
    %3767 = vmatprep.subr.bf16.mxu0 0
    %3768 = vmatpush2.bf16.msra.mxu0 0
    %3769 = vmatprep.subr.bf16.mxu0 0
    %3770 = vmatpush2.bf16.msra.mxu0 0
    %3771 = vmatprep.subr.bf16.mxu0 0
    %3772 = vmatpush2.bf16.msra.mxu0 0
    %3773 = vmatprep.subr.bf16.mxu0 0
    %3774 = vmatpush2.bf16.msra.mxu0 0
    %3775 = vmatprep.subr.bf16.mxu0 0
    %3776 = vmatpush2.bf16.msra.mxu0 0
    %3777 = vmatprep.subr.bf16.mxu0 0
    %3778 = vmatpush2.bf16.msra.mxu0 0
    %3779 = vmatprep.subr.bf16.mxu0 0
    %3780 = vmatpush2.bf16.msra.mxu0 0
    %3781 = vmatprep.mubr.bf16.mxu0 0
    %3782 = vmatmul.mubr.bf16.gmra.mxu0 %v3726
    %v3783 = vpop.f32.mrf.mxu0
    %v3784 = vadd.f32 0.0, %v3783
    %v3785 = vpop.f32.mrf.mxu0
    %v3786 = vpop.f32.mrf.mxu0
    %v3787 = vadd.f32 0.0, %v3786
    %v3788 = vpop.f32.mrf.mxu0
    %3789 = vmatprep.mubr.bf16.mxu0 0
    %3790 = vmatmul.mubr.bf16.gmra.mxu0 %v3729
    %v3791 = vpop.f32.mrf.mxu0
    %v3792 = vadd.f32 0.0, %v3791
    %v3793 = vpop.f32.mrf.mxu0
    %v3794 = vpop.f32.mrf.mxu0
    %v3795 = vadd.f32 0.0, %v3794
    %v3796 = vpop.f32.mrf.mxu0
    %3797 = vmatprep.mubr.bf16.mxu0 0
    %3798 = vmatmul.mubr.bf16.gmra.mxu0 %v3732
    %v3799 = vpop.f32.mrf.mxu0
    %v3800 = vadd.f32 0.0, %v3799
    %v3801 = vpop.f32.mrf.mxu0
    %v3802 = vpop.f32.mrf.mxu0
    %v3803 = vadd.f32 0.0, %v3802
    %v3804 = vpop.f32.mrf.mxu0
    %3805 = vmatprep.mubr.bf16.mxu0 0
    %3806 = vmatmul.mubr.bf16.gmra.mxu0 %v3735
    %v3807 = vpop.f32.mrf.mxu0
    %v3808 = vadd.f32 0.0, %v3807
    %v3809 = vpop.f32.mrf.mxu0
    %v3810 = vpop.f32.mrf.mxu0
    %v3811 = vadd.f32 0.0, %v3810
    %v3812 = vpop.f32.mrf.mxu0
    %3813 = vmatprep.mubr.bf16.mxu0 0
    %3814 = vmatmul.mubr.bf16.gmra.mxu0 %v3738
    %v3815 = vpop.f32.mrf.mxu0
    %v3816 = vadd.f32 0.0, %v3815
    %v3817 = vpop.f32.mrf.mxu0
    %v3818 = vpop.f32.mrf.mxu0
    %v3819 = vadd.f32 0.0, %v3818
    %v3820 = vpop.f32.mrf.mxu0
    %3821 = vmatprep.mubr.bf16.mxu0 0
    %3822 = vmatmul.mubr.bf16.gmra.mxu0 %v3741
    %v3823 = vpop.f32.mrf.mxu0
    %v3824 = vadd.f32 0.0, %v3823
    %v3825 = vpop.f32.mrf.mxu0
    %v3826 = vpop.f32.mrf.mxu0
    %v3827 = vadd.f32 0.0, %v3826
    %v3828 = vpop.f32.mrf.mxu0
    %3829 = vmatprep.mubr.bf16.mxu0 0
    %3830 = vmatmul.mubr.bf16.gmra.mxu0 %v3744
    %v3831 = vpop.f32.mrf.mxu0
    %v3832 = vadd.f32 0.0, %v3831
    %v3833 = vpop.f32.mrf.mxu0
    %v3834 = vpop.f32.mrf.mxu0
    %v3835 = vadd.f32 0.0, %v3834
    %v3836 = vpop.f32.mrf.mxu0
    %3837 = vmatprep.mubr.bf16.mxu0 0
    %3838 = vmatmul.mubr.bf16.gmra.mxu0 %v3747
    %v3839 = vpop.f32.mrf.mxu0
    %v3840 = vadd.f32 0.0, %v3839
    %v3841 = vpop.f32.mrf.mxu0
    %v3842 = vpop.f32.mrf.mxu0
    %v3843 = vadd.f32 0.0, %v3842
    %v3844 = vpop.f32.mrf.mxu0
    %3845 = vdwg.mxu0
    %v3846 = vadd.f32 %v3672, %v3784
    %v3847 = vadd.f32 %v3673, %v3787
    %v3848 = vadd.f32 %v3674, %v3792
    %v3849 = vadd.f32 %v3675, %v3795
    %v3850 = vadd.f32 %v3676, %v3800
    %v3851 = vadd.f32 %v3677, %v3803
    %v3852 = vadd.f32 %v3678, %v3808
    %v3853 = vadd.f32 %v3679, %v3811
    %v3854 = vadd.f32 %v3680, %v3816
    %v3855 = vadd.f32 %v3681, %v3819
    %v3856 = vadd.f32 %v3682, %v3824
    %v3857 = vadd.f32 %v3683, %v3827
    %v3858 = vadd.f32 %v3684, %v3832
    %v3859 = vadd.f32 %v3685, %v3835
    %v3860 = vadd.f32 %v3686, %v3840
    %v3861 = vadd.f32 %v3687, %v3843
    %v3862 = vld [vmem:[#allocation5 + $0x44] sm:$0xf]
    %v3863 = vld [vmem:[#allocation11 + $0x60] sm:$0xf]
    %v3864 = vld [vmem:[#allocation11 + $0x64] sm:$0xf]
    %v3865 = vld [vmem:[#allocation11 + $0x68] sm:$0xf]
    %v3866 = vld [vmem:[#allocation11 + $0x6c] sm:$0xf]
    %v3868 = vunpack.c.l.b16 %v3862
    %v3869 = vpack.c.b16 %v3447, %v3446
    %v3870 = vpack.c.b16 %v3449, %v3448
    %v3871 = vpack.c.b16 %v3451, %v3450
    %v3872 = vpack.c.b16 %v3453, %v3452
    %v3873 = vpack.c.b16 %v3455, %v3454
    %v3874 = vpack.c.b16 %v3457, %v3456
    %v3875 = vpack.c.b16 %v3459, %v3458
    %v3876 = vpack.c.b16 %v3868, %v3460
    %v3881 = vunpack.c.l.b16 %v3863
    %v3882 = vunpack.c.l.b16 %v3864
    %v3883 = vunpack.c.l.b16 %v3865
    %v3884 = vunpack.c.l.b16 %v3866
    %v3885 = vpack.c.b16 %v3882, %v3881
    %v3886 = vpack.c.b16 %v3884, %v3883
    %v3890 = vsel %vm2821, %v3869, 0
    %v3893 = vsel %vm2821, %v3870, 0
    %v3896 = vsel %vm2821, %v3871, 0
    %v3899 = vsel %vm2821, %v3872, 0
    %v3902 = vsel %vm2821, %v3873, 0
    %v3905 = vsel %vm2821, %v3874, 0
    %v3908 = vsel %vm2821, %v3875, 0
    %v3911 = vsel %vm2821, %v3876, 0
    %3913 = vmatprep.subr.bf16.mxu0 0
    %3914 = vmatpush1.bf16.msra.mxu0 0
    %3915 = vmatprep.subr.bf16.mxu0 0
    %3916 = vmatpush1.bf16.msra.mxu0 0
    %3917 = vmatprep.subr.bf16.mxu0 0
    %3918 = vmatpush1.bf16.msra.mxu0 0
    %3919 = vmatprep.subr.bf16.mxu0 0
    %3920 = vmatpush1.bf16.msra.mxu0 0
    %3921 = vmatprep.subr.bf16.mxu0 0
    %3922 = vmatpush1.bf16.msra.mxu0 0
    %3923 = vmatprep.subr.bf16.mxu0 0
    %3924 = vmatpush1.bf16.msra.mxu0 0
    %3925 = vmatprep.subr.bf16.mxu0 0
    %3926 = vmatpush1.bf16.msra.mxu0 %v3886
    %3927 = vmatprep.subr.bf16.mxu0 0
    %3928 = vmatpush1.bf16.msra.mxu0 %v3885
    %3929 = vmatprep.subr.bf16.mxu0 0
    %3930 = vmatpush2.bf16.msra.mxu0 0
    %3931 = vmatprep.subr.bf16.mxu0 0
    %3932 = vmatpush2.bf16.msra.mxu0 0
    %3933 = vmatprep.subr.bf16.mxu0 0
    %3934 = vmatpush2.bf16.msra.mxu0 0
    %3935 = vmatprep.subr.bf16.mxu0 0
    %3936 = vmatpush2.bf16.msra.mxu0 0
    %3937 = vmatprep.subr.bf16.mxu0 0
    %3938 = vmatpush2.bf16.msra.mxu0 0
    %3939 = vmatprep.subr.bf16.mxu0 0
    %3940 = vmatpush2.bf16.msra.mxu0 0
    %3941 = vmatprep.subr.bf16.mxu0 0
    %3942 = vmatpush2.bf16.msra.mxu0 0
    %3943 = vmatprep.subr.bf16.mxu0 0
    %3944 = vmatpush2.bf16.msra.mxu0 0
    %3945 = vmatprep.mubr.bf16.mxu0 0
    %3946 = vmatmul.mubr.bf16.gmra.mxu0 %v3890
    %v3947 = vpop.f32.mrf.mxu0
    %v3948 = vadd.f32 0.0, %v3947
    %v3949 = vpop.f32.mrf.mxu0
    %v3950 = vpop.f32.mrf.mxu0
    %v3951 = vadd.f32 0.0, %v3950
    %v3952 = vpop.f32.mrf.mxu0
    %3953 = vmatprep.mubr.bf16.mxu0 0
    %3954 = vmatmul.mubr.bf16.gmra.mxu0 %v3893
    %v3955 = vpop.f32.mrf.mxu0
    %v3956 = vadd.f32 0.0, %v3955
    %v3957 = vpop.f32.mrf.mxu0
    %v3958 = vpop.f32.mrf.mxu0
    %v3959 = vadd.f32 0.0, %v3958
    %v3960 = vpop.f32.mrf.mxu0
    %3961 = vmatprep.mubr.bf16.mxu0 0
    %3962 = vmatmul.mubr.bf16.gmra.mxu0 %v3896
    %v3963 = vpop.f32.mrf.mxu0
    %v3964 = vadd.f32 0.0, %v3963
    %v3965 = vpop.f32.mrf.mxu0
    %v3966 = vpop.f32.mrf.mxu0
    %v3967 = vadd.f32 0.0, %v3966
    %v3968 = vpop.f32.mrf.mxu0
    %3969 = vmatprep.mubr.bf16.mxu0 0
    %3970 = vmatmul.mubr.bf16.gmra.mxu0 %v3899
    %v3971 = vpop.f32.mrf.mxu0
    %v3972 = vadd.f32 0.0, %v3971
    %v3973 = vpop.f32.mrf.mxu0
    %v3974 = vpop.f32.mrf.mxu0
    %v3975 = vadd.f32 0.0, %v3974
    %v3976 = vpop.f32.mrf.mxu0
    %3977 = vmatprep.mubr.bf16.mxu0 0
    %3978 = vmatmul.mubr.bf16.gmra.mxu0 %v3902
    %v3979 = vpop.f32.mrf.mxu0
    %v3980 = vadd.f32 0.0, %v3979
    %v3981 = vpop.f32.mrf.mxu0
    %v3982 = vpop.f32.mrf.mxu0
    %v3983 = vadd.f32 0.0, %v3982
    %v3984 = vpop.f32.mrf.mxu0
    %3985 = vmatprep.mubr.bf16.mxu0 0
    %3986 = vmatmul.mubr.bf16.gmra.mxu0 %v3905
    %v3987 = vpop.f32.mrf.mxu0
    %v3988 = vadd.f32 0.0, %v3987
    %v3989 = vpop.f32.mrf.mxu0
    %v3990 = vpop.f32.mrf.mxu0
    %v3991 = vadd.f32 0.0, %v3990
    %v3992 = vpop.f32.mrf.mxu0
    %3993 = vmatprep.mubr.bf16.mxu0 0
    %3994 = vmatmul.mubr.bf16.gmra.mxu0 %v3908
    %v3995 = vpop.f32.mrf.mxu0
    %v3996 = vadd.f32 0.0, %v3995
    %v3997 = vpop.f32.mrf.mxu0
    %v3998 = vpop.f32.mrf.mxu0
    %v3999 = vadd.f32 0.0, %v3998
    %v4000 = vpop.f32.mrf.mxu0
    %4001 = vmatprep.mubr.bf16.mxu0 0
    %4002 = vmatmul.mubr.bf16.gmra.mxu0 %v3911
    %v4003 = vpop.f32.mrf.mxu0
    %v4004 = vadd.f32 0.0, %v4003
    %v4005 = vpop.f32.mrf.mxu0
    %v4006 = vpop.f32.mrf.mxu0
    %v4007 = vadd.f32 0.0, %v4006
    %v4008 = vpop.f32.mrf.mxu0
    %4009 = vdwg.mxu0
    %v4010 = vadd.f32 %v3846, %v3948
    %v4011 = vadd.f32 %v3847, %v3951
    %v4012 = vadd.f32 %v3848, %v3956
    %v4013 = vadd.f32 %v3849, %v3959
    %v4014 = vadd.f32 %v3850, %v3964
    %v4015 = vadd.f32 %v3851, %v3967
    %v4016 = vadd.f32 %v3852, %v3972
    %v4017 = vadd.f32 %v3853, %v3975
    %v4018 = vadd.f32 %v3854, %v3980
    %v4019 = vadd.f32 %v3855, %v3983
    %v4020 = vadd.f32 %v3856, %v3988
    %v4021 = vadd.f32 %v3857, %v3991
    %v4022 = vadd.f32 %v3858, %v3996
    %v4023 = vadd.f32 %v3859, %v3999
    %v4024 = vadd.f32 %v3860, %v4004
    %v4025 = vadd.f32 %v3861, %v4007
    %v4026 = vld [vmem:[#allocation5 + $0x8] sm:$0xf]
    %v4027 = vld [vmem:[#allocation5 + $0xc] sm:$0xf]
    %v4028 = vld [vmem:[#allocation5 + $0x10] sm:$0xf]
    %v4029 = vld [vmem:[#allocation5 + $0x14] sm:$0xf]
    %v4030 = vld [vmem:[#allocation5 + $0x18] sm:$0xf]
    %v4031 = vld [vmem:[#allocation5 + $0x1c] sm:$0xf]
    %v4032 = vld [vmem:[#allocation5 + $0x20] sm:$0xf]
    %v4033 = vld [vmem:[#allocation5 + $0x24] sm:$0xf]
    %v4034 = vld [vmem:[#allocation5 + $0x28] sm:$0xf]
    %v4035 = vld [vmem:[#allocation5 + $0x2c] sm:$0xf]
    %v4036 = vld [vmem:[#allocation5 + $0x30] sm:$0xf]
    %v4037 = vld [vmem:[#allocation5 + $0x34] sm:$0xf]
    %v4038 = vld [vmem:[#allocation5 + $0x38] sm:$0xf]
    %v4039 = vld [vmem:[#allocation5 + $0x3c] sm:$0xf]
    %v4040 = vld [vmem:[#allocation5 + $0x40] sm:$0xf]
    %v4041 = vld [vmem:[#allocation5 + $0x44] sm:$0xf]
    %v4042 = vld [vmem:[#allocation5 + $0x48] sm:$0x1]
    %v4043 = vld [vmem:[#allocation11 + $0x70] sm:$0xf]
    %v4044 = vld [vmem:[#allocation11 + $0x74] sm:$0xf]
    %v4045 = vld [vmem:[#allocation11 + $0x78] sm:$0xf]
    %v4046 = vld [vmem:[#allocation11 + $0x7c] sm:$0xf]
    %v4064 = vunpack.c.l.b16 %v4026
    %v4065 = vunpack.c.l.b16 %v4027
    %v4066 = vunpack.c.l.b16 %v4028
    %v4067 = vunpack.c.l.b16 %v4029
    %v4068 = vunpack.c.l.b16 %v4030
    %v4069 = vunpack.c.l.b16 %v4031
    %v4070 = vunpack.c.l.b16 %v4032
    %v4071 = vunpack.c.l.b16 %v4033
    %v4072 = vunpack.c.l.b16 %v4034
    %v4073 = vunpack.c.l.b16 %v4035
    %v4074 = vunpack.c.l.b16 %v4036
    %v4075 = vunpack.c.l.b16 %v4037
    %v4076 = vunpack.c.l.b16 %v4038
    %v4077 = vunpack.c.l.b16 %v4039
    %v4078 = vunpack.c.l.b16 %v4040
    %v4079 = vunpack.c.l.b16 %v4041
    %v4080 = vunpack.c.l.b16 %v4042
    %v4081 = vpack.c.b16 %v4065, %v4064
    %v4082 = vpack.c.b16 %v4067, %v4066
    %v4083 = vpack.c.b16 %v4069, %v4068
    %v4084 = vpack.c.b16 %v4071, %v4070
    %v4085 = vpack.c.b16 %v4073, %v4072
    %v4086 = vpack.c.b16 %v4075, %v4074
    %v4087 = vpack.c.b16 %v4077, %v4076
    %v4088 = vpack.c.b16 %v4079, %v4078
    %v4089 = vpack.c.b16 %v4080, %v4080
    %v4091 = vshrl.u32 %v4081, 16
    %v4093 = vshll.u32 %v4081, 16
    %v4095 = vrot.slane %v4093, 1
    %v4096 = vor.u32 %v4091, %v4095
    %v4098 = vshll.u32 %v4082, 16
    %v4100 = vrot.slane %v4098, 1
    %v4101 = vsel %vm2740, %v4096, %v4100
    %v4102 = vshrl.u32 %v4082, 16
    %v4104 = vor.u32 %v4102, %v4100
    %v4106 = vshll.u32 %v4083, 16
    %v4108 = vrot.slane %v4106, 1
    %v4109 = vsel %vm2740, %v4104, %v4108
    %v4110 = vshrl.u32 %v4083, 16
    %v4112 = vor.u32 %v4110, %v4108
    %v4114 = vshll.u32 %v4084, 16
    %v4116 = vrot.slane %v4114, 1
    %v4117 = vsel %vm2740, %v4112, %v4116
    %v4118 = vshrl.u32 %v4084, 16
    %v4120 = vor.u32 %v4118, %v4116
    %v4122 = vshll.u32 %v4085, 16
    %v4124 = vrot.slane %v4122, 1
    %v4125 = vsel %vm2740, %v4120, %v4124
    %v4126 = vshrl.u32 %v4085, 16
    %v4128 = vor.u32 %v4126, %v4124
    %v4130 = vshll.u32 %v4086, 16
    %v4132 = vrot.slane %v4130, 1
    %v4133 = vsel %vm2740, %v4128, %v4132
    %v4134 = vshrl.u32 %v4086, 16
    %v4136 = vor.u32 %v4134, %v4132
    %v4138 = vshll.u32 %v4087, 16
    %v4140 = vrot.slane %v4138, 1
    %v4141 = vsel %vm2740, %v4136, %v4140
    %v4142 = vshrl.u32 %v4087, 16
    %v4144 = vor.u32 %v4142, %v4140
    %v4146 = vshll.u32 %v4088, 16
    %v4148 = vrot.slane %v4146, 1
    %v4149 = vsel %vm2740, %v4144, %v4148
    %v4150 = vshrl.u32 %v4088, 16
    %v4152 = vor.u32 %v4150, %v4148
    %v4154 = vshll.u32 %v4089, 16
    %v4156 = vrot.slane %v4154, 1
    %v4157 = vsel %vm2740, %v4152, %v4156
    %v4162 = vunpack.c.l.b16 %v4043
    %v4163 = vunpack.c.l.b16 %v4044
    %v4164 = vunpack.c.l.b16 %v4045
    %v4165 = vunpack.c.l.b16 %v4046
    %v4166 = vpack.c.b16 %v4163, %v4162
    %v4167 = vpack.c.b16 %v4165, %v4164
    %v4171 = vsel %vm2821, %v4101, 0
    %v4174 = vsel %vm2821, %v4109, 0
    %v4177 = vsel %vm2821, %v4117, 0
    %v4180 = vsel %vm2821, %v4125, 0
    %v4183 = vsel %vm2821, %v4133, 0
    %v4186 = vsel %vm2821, %v4141, 0
    %v4189 = vsel %vm2821, %v4149, 0
    %v4192 = vsel %vm2821, %v4157, 0
    %4194 = vmatprep.subr.bf16.mxu0 0
    %4195 = vmatpush1.bf16.msra.mxu0 0
    %4196 = vmatprep.subr.bf16.mxu0 0
    %4197 = vmatpush1.bf16.msra.mxu0 0
    %4198 = vmatprep.subr.bf16.mxu0 0
    %4199 = vmatpush1.bf16.msra.mxu0 0
    %4200 = vmatprep.subr.bf16.mxu0 0
    %4201 = vmatpush1.bf16.msra.mxu0 0
    %4202 = vmatprep.subr.bf16.mxu0 0
    %4203 = vmatpush1.bf16.msra.mxu0 0
    %4204 = vmatprep.subr.bf16.mxu0 0
    %4205 = vmatpush1.bf16.msra.mxu0 0
    %4206 = vmatprep.subr.bf16.mxu0 0
    %4207 = vmatpush1.bf16.msra.mxu0 %v4167
    %4208 = vmatprep.subr.bf16.mxu0 0
    %4209 = vmatpush1.bf16.msra.mxu0 %v4166
    %4210 = vmatprep.subr.bf16.mxu0 0
    %4211 = vmatpush2.bf16.msra.mxu0 0
    %4212 = vmatprep.subr.bf16.mxu0 0
    %4213 = vmatpush2.bf16.msra.mxu0 0
    %4214 = vmatprep.subr.bf16.mxu0 0
    %4215 = vmatpush2.bf16.msra.mxu0 0
    %4216 = vmatprep.subr.bf16.mxu0 0
    %4217 = vmatpush2.bf16.msra.mxu0 0
    %4218 = vmatprep.subr.bf16.mxu0 0
    %4219 = vmatpush2.bf16.msra.mxu0 0
    %4220 = vmatprep.subr.bf16.mxu0 0
    %4221 = vmatpush2.bf16.msra.mxu0 0
    %4222 = vmatprep.subr.bf16.mxu0 0
    %4223 = vmatpush2.bf16.msra.mxu0 0
    %4224 = vmatprep.subr.bf16.mxu0 0
    %4225 = vmatpush2.bf16.msra.mxu0 0
    %4226 = vmatprep.mubr.bf16.mxu0 0
    %4227 = vmatmul.mubr.bf16.gmra.mxu0 %v4171
    %v4228 = vpop.f32.mrf.mxu0
    %v4229 = vadd.f32 0.0, %v4228
    %v4230 = vpop.f32.mrf.mxu0
    %v4231 = vpop.f32.mrf.mxu0
    %v4232 = vadd.f32 0.0, %v4231
    %v4233 = vpop.f32.mrf.mxu0
    %4234 = vmatprep.mubr.bf16.mxu0 0
    %4235 = vmatmul.mubr.bf16.gmra.mxu0 %v4174
    %v4236 = vpop.f32.mrf.mxu0
    %v4237 = vadd.f32 0.0, %v4236
    %v4238 = vpop.f32.mrf.mxu0
    %v4239 = vpop.f32.mrf.mxu0
    %v4240 = vadd.f32 0.0, %v4239
    %v4241 = vpop.f32.mrf.mxu0
    %4242 = vmatprep.mubr.bf16.mxu0 0
    %4243 = vmatmul.mubr.bf16.gmra.mxu0 %v4177
    %v4244 = vpop.f32.mrf.mxu0
    %v4245 = vadd.f32 0.0, %v4244
    %v4246 = vpop.f32.mrf.mxu0
    %v4247 = vpop.f32.mrf.mxu0
    %v4248 = vadd.f32 0.0, %v4247
    %v4249 = vpop.f32.mrf.mxu0
    %4250 = vmatprep.mubr.bf16.mxu0 0
    %4251 = vmatmul.mubr.bf16.gmra.mxu0 %v4180
    %v4252 = vpop.f32.mrf.mxu0
    %v4253 = vadd.f32 0.0, %v4252
    %v4254 = vpop.f32.mrf.mxu0
    %v4255 = vpop.f32.mrf.mxu0
    %v4256 = vadd.f32 0.0, %v4255
    %v4257 = vpop.f32.mrf.mxu0
    %4258 = vmatprep.mubr.bf16.mxu0 0
    %4259 = vmatmul.mubr.bf16.gmra.mxu0 %v4183
    %v4260 = vpop.f32.mrf.mxu0
    %v4261 = vadd.f32 0.0, %v4260
    %v4262 = vpop.f32.mrf.mxu0
    %v4263 = vpop.f32.mrf.mxu0
    %v4264 = vadd.f32 0.0, %v4263
    %v4265 = vpop.f32.mrf.mxu0
    %4266 = vmatprep.mubr.bf16.mxu0 0
    %4267 = vmatmul.mubr.bf16.gmra.mxu0 %v4186
    %v4268 = vpop.f32.mrf.mxu0
    %v4269 = vadd.f32 0.0, %v4268
    %v4270 = vpop.f32.mrf.mxu0
    %v4271 = vpop.f32.mrf.mxu0
    %v4272 = vadd.f32 0.0, %v4271
    %v4273 = vpop.f32.mrf.mxu0
    %4274 = vmatprep.mubr.bf16.mxu0 0
    %4275 = vmatmul.mubr.bf16.gmra.mxu0 %v4189
    %v4276 = vpop.f32.mrf.mxu0
    %v4277 = vadd.f32 0.0, %v4276
    %v4278 = vpop.f32.mrf.mxu0
    %v4279 = vpop.f32.mrf.mxu0
    %v4280 = vadd.f32 0.0, %v4279
    %v4281 = vpop.f32.mrf.mxu0
    %4282 = vmatprep.mubr.bf16.mxu0 0
    %4283 = vmatmul.mubr.bf16.gmra.mxu0 %v4192
    %v4284 = vpop.f32.mrf.mxu0
    %v4285 = vadd.f32 0.0, %v4284
    %v4286 = vpop.f32.mrf.mxu0
    %v4287 = vpop.f32.mrf.mxu0
    %v4288 = vadd.f32 0.0, %v4287
    %v4289 = vpop.f32.mrf.mxu0
    %4290 = vdwg.mxu0
    %v4291 = vadd.f32 %v4010, %v4229
    %v4292 = vadd.f32 %v4011, %v4232
    %v4293 = vadd.f32 %v4012, %v4237
    %v4294 = vadd.f32 %v4013, %v4240
    %v4295 = vadd.f32 %v4014, %v4245
    %v4296 = vadd.f32 %v4015, %v4248
    %v4297 = vadd.f32 %v4016, %v4253
    %v4298 = vadd.f32 %v4017, %v4256
    %v4299 = vadd.f32 %v4018, %v4261
    %v4300 = vadd.f32 %v4019, %v4264
    %v4301 = vadd.f32 %v4020, %v4269
    %v4302 = vadd.f32 %v4021, %v4272
    %v4303 = vadd.f32 %v4022, %v4277
    %v4304 = vadd.f32 %v4023, %v4280
    %v4305 = vadd.f32 %v4024, %v4285
    %v4306 = vadd.f32 %v4025, %v4288
    %v4307 = vld [vmem:[#allocation5 + $0x8] sm:$0xe]
    %v4308 = vld [vmem:[#allocation11 + $0x80] sm:$0xf]
    %v4309 = vld [vmem:[#allocation11 + $0x84] sm:$0xf]
    %v4310 = vld [vmem:[#allocation11 + $0x88] sm:$0xf]
    %v4311 = vld [vmem:[#allocation11 + $0x8c] sm:$0xf]
    %v4313 = vunpack.c.l.b16 %v4307
    %v4314 = vpack.c.b16 %v4065, %v4313
    %v4315 = vrot.slane %v4314, 1
    %v4316 = vrot.slane %v4082, 1
    %v4317 = vsel %vm3076, %v4315, %v4316
    %v4318 = vrot.slane %v4083, 1
    %v4319 = vsel %vm3076, %v4316, %v4318
    %v4320 = vrot.slane %v4084, 1
    %v4321 = vsel %vm3076, %v4318, %v4320
    %v4322 = vrot.slane %v4085, 1
    %v4323 = vsel %vm3076, %v4320, %v4322
    %v4324 = vrot.slane %v4086, 1
    %v4325 = vsel %vm3076, %v4322, %v4324
    %v4326 = vrot.slane %v4087, 1
    %v4327 = vsel %vm3076, %v4324, %v4326
    %v4328 = vrot.slane %v4088, 1
    %v4329 = vsel %vm3076, %v4326, %v4328
    %v4330 = vrot.slane %v4089, 1
    %v4331 = vsel %vm3076, %v4328, %v4330
    %v4336 = vunpack.c.l.b16 %v4308
    %v4337 = vunpack.c.l.b16 %v4309
    %v4338 = vunpack.c.l.b16 %v4310
    %v4339 = vunpack.c.l.b16 %v4311
    %v4340 = vpack.c.b16 %v4337, %v4336
    %v4341 = vpack.c.b16 %v4339, %v4338
    %v4345 = vsel %vm2821, %v4317, 0
    %v4348 = vsel %vm2821, %v4319, 0
    %v4351 = vsel %vm2821, %v4321, 0
    %v4354 = vsel %vm2821, %v4323, 0
    %v4357 = vsel %vm2821, %v4325, 0
    %v4360 = vsel %vm2821, %v4327, 0
    %v4363 = vsel %vm2821, %v4329, 0
    %v4366 = vsel %vm2821, %v4331, 0
    %4368 = vmatprep.subr.bf16.mxu0 0
    %4369 = vmatpush1.bf16.msra.mxu0 0
    %4370 = vmatprep.subr.bf16.mxu0 0
    %4371 = vmatpush1.bf16.msra.mxu0 0
    %4372 = vmatprep.subr.bf16.mxu0 0
    %4373 = vmatpush1.bf16.msra.mxu0 0
    %4374 = vmatprep.subr.bf16.mxu0 0
    %4375 = vmatpush1.bf16.msra.mxu0 0
    %4376 = vmatprep.subr.bf16.mxu0 0
    %4377 = vmatpush1.bf16.msra.mxu0 0
    %4378 = vmatprep.subr.bf16.mxu0 0
    %4379 = vmatpush1.bf16.msra.mxu0 0
    %4380 = vmatprep.subr.bf16.mxu0 0
    %4381 = vmatpush1.bf16.msra.mxu0 %v4341
    %4382 = vmatprep.subr.bf16.mxu0 0
    %4383 = vmatpush1.bf16.msra.mxu0 %v4340
    %4384 = vmatprep.subr.bf16.mxu0 0
    %4385 = vmatpush2.bf16.msra.mxu0 0
    %4386 = vmatprep.subr.bf16.mxu0 0
    %4387 = vmatpush2.bf16.msra.mxu0 0
    %4388 = vmatprep.subr.bf16.mxu0 0
    %4389 = vmatpush2.bf16.msra.mxu0 0
    %4390 = vmatprep.subr.bf16.mxu0 0
    %4391 = vmatpush2.bf16.msra.mxu0 0
    %4392 = vmatprep.subr.bf16.mxu0 0
    %4393 = vmatpush2.bf16.msra.mxu0 0
    %4394 = vmatprep.subr.bf16.mxu0 0
    %4395 = vmatpush2.bf16.msra.mxu0 0
    %4396 = vmatprep.subr.bf16.mxu0 0
    %4397 = vmatpush2.bf16.msra.mxu0 0
    %4398 = vmatprep.subr.bf16.mxu0 0
    %4399 = vmatpush2.bf16.msra.mxu0 0
    %4400 = vmatprep.mubr.bf16.mxu0 0
    %4401 = vmatmul.mubr.bf16.gmra.mxu0 %v4345
    %v4402 = vpop.f32.mrf.mxu0
    %v4403 = vadd.f32 0.0, %v4402
    %v4404 = vpop.f32.mrf.mxu0
    %v4405 = vpop.f32.mrf.mxu0
    %v4406 = vadd.f32 0.0, %v4405
    %v4407 = vpop.f32.mrf.mxu0
    %4408 = vmatprep.mubr.bf16.mxu0 0
    %4409 = vmatmul.mubr.bf16.gmra.mxu0 %v4348
    %v4410 = vpop.f32.mrf.mxu0
    %v4411 = vadd.f32 0.0, %v4410
    %v4412 = vpop.f32.mrf.mxu0
    %v4413 = vpop.f32.mrf.mxu0
    %v4414 = vadd.f32 0.0, %v4413
    %v4415 = vpop.f32.mrf.mxu0
    %4416 = vmatprep.mubr.bf16.mxu0 0
    %4417 = vmatmul.mubr.bf16.gmra.mxu0 %v4351
    %v4418 = vpop.f32.mrf.mxu0
    %v4419 = vadd.f32 0.0, %v4418
    %v4420 = vpop.f32.mrf.mxu0
    %v4421 = vpop.f32.mrf.mxu0
    %v4422 = vadd.f32 0.0, %v4421
    %v4423 = vpop.f32.mrf.mxu0
    %4424 = vmatprep.mubr.bf16.mxu0 0
    %4425 = vmatmul.mubr.bf16.gmra.mxu0 %v4354
    %v4426 = vpop.f32.mrf.mxu0
    %v4427 = vadd.f32 0.0, %v4426
    %v4428 = vpop.f32.mrf.mxu0
    %v4429 = vpop.f32.mrf.mxu0
    %v4430 = vadd.f32 0.0, %v4429
    %v4431 = vpop.f32.mrf.mxu0
    %4432 = vmatprep.mubr.bf16.mxu0 0
    %4433 = vmatmul.mubr.bf16.gmra.mxu0 %v4357
    %v4434 = vpop.f32.mrf.mxu0
    %v4435 = vadd.f32 0.0, %v4434
    %v4436 = vpop.f32.mrf.mxu0
    %v4437 = vpop.f32.mrf.mxu0
    %v4438 = vadd.f32 0.0, %v4437
    %v4439 = vpop.f32.mrf.mxu0
    %4440 = vmatprep.mubr.bf16.mxu0 0
    %4441 = vmatmul.mubr.bf16.gmra.mxu0 %v4360
    %v4442 = vpop.f32.mrf.mxu0
    %v4443 = vadd.f32 0.0, %v4442
    %v4444 = vpop.f32.mrf.mxu0
    %v4445 = vpop.f32.mrf.mxu0
    %v4446 = vadd.f32 0.0, %v4445
    %v4447 = vpop.f32.mrf.mxu0
    %4448 = vmatprep.mubr.bf16.mxu0 0
    %4449 = vmatmul.mubr.bf16.gmra.mxu0 %v4363
    %v4450 = vpop.f32.mrf.mxu0
    %v4451 = vadd.f32 0.0, %v4450
    %v4452 = vpop.f32.mrf.mxu0
    %v4453 = vpop.f32.mrf.mxu0
    %v4454 = vadd.f32 0.0, %v4453
    %v4455 = vpop.f32.mrf.mxu0
    %4456 = vmatprep.mubr.bf16.mxu0 0
    %4457 = vmatmul.mubr.bf16.gmra.mxu0 %v4366
    %v4458 = vpop.f32.mrf.mxu0
    %v4459 = vadd.f32 0.0, %v4458
    %v4460 = vpop.f32.mrf.mxu0
    %v4461 = vpop.f32.mrf.mxu0
    %v4462 = vadd.f32 0.0, %v4461
    %v4463 = vpop.f32.mrf.mxu0
    %4464 = vdwg.mxu0
    %v4465 = vadd.f32 %v4291, %v4403
    %v4466 = vadd.f32 %v4292, %v4406
    %v4467 = vadd.f32 %v4293, %v4411
    %v4468 = vadd.f32 %v4294, %v4414
    %v4469 = vadd.f32 %v4295, %v4419
    %v4470 = vadd.f32 %v4296, %v4422
    %v4471 = vadd.f32 %v4297, %v4427
    %v4472 = vadd.f32 %v4298, %v4430
    %v4473 = vadd.f32 %v4299, %v4435
    %v4474 = vadd.f32 %v4300, %v4438
    %v4475 = vadd.f32 %v4301, %v4443
    %v4476 = vadd.f32 %v4302, %v4446
    %v4477 = vadd.f32 %v4303, %v4451
    %v4478 = vadd.f32 %v4304, %v4454
    %v4479 = vadd.f32 %v4305, %v4459
    %v4480 = vadd.f32 %v4306, %v4462
    %v4481 = vadd.f32 %v4465, %v2671
    %v4482 = vadd.f32 %v4466, %v2671
    %v4483 = vadd.f32 %v4467, %v2671
    %v4484 = vadd.f32 %v4468, %v2671
    %v4485 = vadd.f32 %v4469, %v2671
    %v4486 = vadd.f32 %v4470, %v2671
    %v4487 = vadd.f32 %v4471, %v2671
    %v4488 = vadd.f32 %v4472, %v2671
    %v4489 = vadd.f32 %v4473, %v2671
    %v4490 = vadd.f32 %v4474, %v2671
    %v4491 = vadd.f32 %v4475, %v2671
    %v4492 = vadd.f32 %v4476, %v2671
    %v4493 = vadd.f32 %v4477, %v2671
    %v4494 = vadd.f32 %v4478, %v2671
    %v4495 = vadd.f32 %v4479, %v2671
    %v4496 = vadd.f32 %v4480, %v2671
    %v4497 = vmax.f32 %v4481, 0.0
    %v4498 = vmax.f32 %v4482, 0.0
    %v4499 = vmax.f32 %v4483, 0.0
    %v4500 = vmax.f32 %v4484, 0.0
    %v4501 = vmax.f32 %v4485, 0.0
    %v4502 = vmax.f32 %v4486, 0.0
    %v4503 = vmax.f32 %v4487, 0.0
    %v4504 = vmax.f32 %v4488, 0.0
    %v4505 = vmax.f32 %v4489, 0.0
    %v4506 = vmax.f32 %v4490, 0.0
    %v4507 = vmax.f32 %v4491, 0.0
    %v4508 = vmax.f32 %v4492, 0.0
    %v4509 = vmax.f32 %v4493, 0.0
    %v4510 = vmax.f32 %v4494, 0.0
    %v4511 = vmax.f32 %v4495, 0.0
    %v4512 = vmax.f32 %v4496, 0.0
    %v4513 = vpack.c.bf16 %v4498, %v4497
    %v4514 = vpack.c.bf16 %v4500, %v4499
    %v4515 = vpack.c.bf16 %v4502, %v4501
    %v4516 = vpack.c.bf16 %v4504, %v4503
    %v4517 = vpack.c.bf16 %v4506, %v4505
    %v4518 = vpack.c.bf16 %v4508, %v4507
    %v4519 = vpack.c.bf16 %v4510, %v4509
    %v4520 = vpack.c.bf16 %v4512, %v4511
    %v4521 = vld [vmem:[#allocation11 + $0x90] sm:$0xf]
    %v4522 = vld [vmem:[#allocation11 + $0x94] sm:$0xf]
    %v4523 = vld [vmem:[#allocation11 + $0x98] sm:$0xf]
    %v4524 = vld [vmem:[#allocation11 + $0x9c] sm:$0xf]
    %v4525 = vld [vmem:[#allocation11 + $0xa0] sm:$0xf]
    %v4526 = vld [vmem:[#allocation11 + $0xa4] sm:$0xf]
    %v4527 = vld [vmem:[#allocation11 + $0xa8] sm:$0xf]
    %v4528 = vld [vmem:[#allocation11 + $0xac] sm:$0xf]
    %v4529 = vld [vmem:[#allocation11 + $0xb0] sm:$0xf]
    %v4530 = vld [vmem:[#allocation11 + $0xb4] sm:$0xf]
    %v4531 = vld [vmem:[#allocation11 + $0xb8] sm:$0xf]
    %v4532 = vld [vmem:[#allocation11 + $0xbc] sm:$0xf]
    %v4533 = vld [vmem:[#allocation11 + $0xc0] sm:$0xf]
    %v4534 = vld [vmem:[#allocation11 + $0xc4] sm:$0xf]
    %v4535 = vld [vmem:[#allocation11 + $0xc8] sm:$0xf]
    %v4536 = vld [vmem:[#allocation11 + $0xcc] sm:$0xf]
    %v4537 = vld [vmem:[#allocation11 + $0xd0] sm:$0xf]
    %v4538 = vld [vmem:[#allocation11 + $0xd4] sm:$0xf]
    %v4557 = vunpack.c.l.b16 %v4521
    %v4558 = vunpack.c.l.b16 %v4522
    %v4559 = vunpack.c.l.b16 %v4523
    %v4560 = vunpack.c.l.b16 %v4524
    %v4561 = vunpack.c.l.b16 %v4525
    %v4562 = vunpack.c.l.b16 %v4526
    %v4563 = vunpack.c.l.b16 %v4527
    %v4564 = vunpack.c.l.b16 %v4528
    %v4565 = vunpack.c.l.b16 %v4529
    %v4566 = vunpack.c.l.b16 %v4530
    %v4567 = vunpack.c.l.b16 %v4531
    %v4568 = vunpack.c.l.b16 %v4532
    %v4569 = vunpack.c.l.b16 %v4533
    %v4570 = vunpack.c.l.b16 %v4534
    %v4571 = vunpack.c.l.b16 %v4535
    %v4572 = vunpack.c.l.b16 %v4536
    %v4573 = vunpack.c.l.b16 %v4537
    %v4574 = vunpack.c.l.b16 %v4538
    %v4575 = vpack.c.b16 %v4558, %v4557
    %v4576 = vpack.c.b16 %v4560, %v4559
    %v4577 = vpack.c.b16 %v4562, %v4561
    %v4578 = vpack.c.b16 %v4564, %v4563
    %v4579 = vpack.c.b16 %v4566, %v4565
    %v4580 = vpack.c.b16 %v4568, %v4567
    %v4581 = vpack.c.b16 %v4570, %v4569
    %v4582 = vpack.c.b16 %v4572, %v4571
    %v4583 = vpack.c.b16 %v4574, %v4573
    %4593 = vmatprep.subr.bf16.mxu0 0
    %4594 = vmatpush1.bf16.msra.mxu0 %v4520
    %4595 = vmatprep.subr.bf16.mxu0 0
    %4596 = vmatpush1.bf16.msra.mxu0 %v4519
    %4597 = vmatprep.subr.bf16.mxu0 0
    %4598 = vmatpush1.bf16.msra.mxu0 %v4518
    %4599 = vmatprep.subr.bf16.mxu0 0
    %4600 = vmatpush1.bf16.msra.mxu0 %v4517
    %4601 = vmatprep.subr.bf16.mxu0 0
    %4602 = vmatpush1.bf16.msra.mxu0 %v4516
    %4603 = vmatprep.subr.bf16.mxu0 0
    %4604 = vmatpush1.bf16.msra.mxu0 %v4515
    %4605 = vmatprep.subr.bf16.mxu0 0
    %4606 = vmatpush1.bf16.msra.mxu0 %v4514
    %4607 = vmatprep.subr.bf16.mxu0 0
    %4608 = vmatpush1.bf16.msra.mxu0 %v4513
    %4609 = vmatprep.subr.bf16.mxu0 0
    %4610 = vmatpush2.bf16.msra.mxu0 0
    %4611 = vmatprep.subr.bf16.mxu0 0
    %4612 = vmatpush2.bf16.msra.mxu0 0
    %4613 = vmatprep.subr.bf16.mxu0 0
    %4614 = vmatpush2.bf16.msra.mxu0 0
    %4615 = vmatprep.subr.bf16.mxu0 0
    %4616 = vmatpush2.bf16.msra.mxu0 0
    %4617 = vmatprep.subr.bf16.mxu0 0
    %4618 = vmatpush2.bf16.msra.mxu0 0
    %4619 = vmatprep.subr.bf16.mxu0 0
    %4620 = vmatpush2.bf16.msra.mxu0 0
    %4621 = vmatprep.subr.bf16.mxu0 0
    %4622 = vmatpush2.bf16.msra.mxu0 0
    %4623 = vmatprep.subr.bf16.mxu0 0
    %4624 = vmatpush2.bf16.msra.mxu0 0
    %4625 = vmatprep.mubr.bf16.mxu0 0
    %4626 = vmatmul.mubr.bf16.gmra.mxu0 %v4575
    %v4627 = vpop.f32.mrf.mxu0
    %v4628 = vadd.f32 0.0, %v4627
    %v4629 = vpop.f32.mrf.mxu0
    %v4630 = vpop.f32.mrf.mxu0
    %v4631 = vadd.f32 0.0, %v4630
    %v4632 = vpop.f32.mrf.mxu0
    %4633 = vmatprep.mubr.bf16.mxu0 0
    %4634 = vmatmul.mubr.bf16.gmra.mxu0 %v4576
    %v4635 = vpop.f32.mrf.mxu0
    %v4636 = vadd.f32 0.0, %v4635
    %v4637 = vpop.f32.mrf.mxu0
    %v4638 = vpop.f32.mrf.mxu0
    %v4639 = vadd.f32 0.0, %v4638
    %v4640 = vpop.f32.mrf.mxu0
    %4641 = vmatprep.mubr.bf16.mxu0 0
    %4642 = vmatmul.mubr.bf16.gmra.mxu0 %v4577
    %v4643 = vpop.f32.mrf.mxu0
    %v4644 = vadd.f32 0.0, %v4643
    %v4645 = vpop.f32.mrf.mxu0
    %v4646 = vpop.f32.mrf.mxu0
    %v4647 = vadd.f32 0.0, %v4646
    %v4648 = vpop.f32.mrf.mxu0
    %4649 = vmatprep.mubr.bf16.mxu0 0
    %4650 = vmatmul.mubr.bf16.gmra.mxu0 %v4578
    %v4651 = vpop.f32.mrf.mxu0
    %v4652 = vadd.f32 0.0, %v4651
    %v4653 = vpop.f32.mrf.mxu0
    %v4654 = vpop.f32.mrf.mxu0
    %v4655 = vadd.f32 0.0, %v4654
    %v4656 = vpop.f32.mrf.mxu0
    %4657 = vmatprep.mubr.bf16.mxu0 0
    %4658 = vmatmul.mubr.bf16.gmra.mxu0 %v4579
    %v4659 = vpop.f32.mrf.mxu0
    %v4660 = vadd.f32 0.0, %v4659
    %v4661 = vpop.f32.mrf.mxu0
    %v4662 = vpop.f32.mrf.mxu0
    %v4663 = vadd.f32 0.0, %v4662
    %v4664 = vpop.f32.mrf.mxu0
    %4665 = vmatprep.mubr.bf16.mxu0 0
    %4666 = vmatmul.mubr.bf16.gmra.mxu0 %v4580
    %v4667 = vpop.f32.mrf.mxu0
    %v4668 = vadd.f32 0.0, %v4667
    %v4669 = vpop.f32.mrf.mxu0
    %v4670 = vpop.f32.mrf.mxu0
    %v4671 = vadd.f32 0.0, %v4670
    %v4672 = vpop.f32.mrf.mxu0
    %4673 = vmatprep.mubr.bf16.mxu0 0
    %4674 = vmatmul.mubr.bf16.gmra.mxu0 %v4581
    %v4675 = vpop.f32.mrf.mxu0
    %v4676 = vadd.f32 0.0, %v4675
    %v4677 = vpop.f32.mrf.mxu0
    %v4678 = vpop.f32.mrf.mxu0
    %v4679 = vadd.f32 0.0, %v4678
    %v4680 = vpop.f32.mrf.mxu0
    %4681 = vmatprep.mubr.bf16.mxu0 0
    %4682 = vmatmul.mubr.bf16.gmra.mxu0 %v4582
    %v4683 = vpop.f32.mrf.mxu0
    %v4684 = vadd.f32 0.0, %v4683
    %v4685 = vpop.f32.mrf.mxu0
    %v4686 = vpop.f32.mrf.mxu0
    %v4687 = vadd.f32 0.0, %v4686
    %v4688 = vpop.f32.mrf.mxu0
    %4689 = vmatprep.mubr.bf16.mxu0 0
    %4690 = vmatmul.mubr.bf16.gmra.mxu0 %v4583
    %v4691 = vpop.f32.mrf.mxu0
    %v4692 = vadd.f32 0.0, %v4691
    %v4693 = vpop.f32.mrf.mxu0
    %v4694 = vpop.f32.mrf.mxu0
    %v4695 = vadd.f32 0.0, %v4694
    %v4696 = vpop.f32.mrf.mxu0
    %4697 = vdwg.mxu0
    %v4698 = vpack.c.bf16 %v4631, %v4628
    %v4699 = vpack.c.bf16 %v4639, %v4636
    %v4700 = vpack.c.bf16 %v4647, %v4644
    %v4701 = vpack.c.bf16 %v4655, %v4652
    %v4702 = vpack.c.bf16 %v4663, %v4660
    %v4703 = vpack.c.bf16 %v4671, %v4668
    %v4704 = vpack.c.bf16 %v4679, %v4676
    %v4705 = vpack.c.bf16 %v4687, %v4684
    %v4706 = vpack.c.bf16 %v4695, %v4692
    %v4716 = vunpack.c.l.b16 %v4698
    %v4717 = vunpack.c.h.b16 %v4698
    %v4718 = vunpack.c.l.b16 %v4699
    %v4719 = vunpack.c.h.b16 %v4699
    %v4720 = vunpack.c.l.b16 %v4700
    %v4721 = vunpack.c.h.b16 %v4700
    %v4722 = vunpack.c.l.b16 %v4701
    %v4723 = vunpack.c.h.b16 %v4701
    %v4724 = vunpack.c.l.b16 %v4702
    %v4725 = vunpack.c.h.b16 %v4702
    %v4726 = vunpack.c.l.b16 %v4703
    %v4727 = vunpack.c.h.b16 %v4703
    %v4728 = vunpack.c.l.b16 %v4704
    %v4729 = vunpack.c.h.b16 %v4704
    %v4730 = vunpack.c.l.b16 %v4705
    %v4731 = vunpack.c.h.b16 %v4705
    %v4732 = vunpack.c.l.b16 %v4706
    %v4733 = vunpack.c.h.b16 %v4706
    %v4734 = vpack.c.b16 %v4716, %v4716
    %v4735 = vpack.c.b16 %v4717, %v4717
    %v4736 = vpack.c.b16 %v4718, %v4718
    %v4737 = vpack.c.b16 %v4719, %v4719
    %v4738 = vpack.c.b16 %v4720, %v4720
    %v4739 = vpack.c.b16 %v4721, %v4721
    %v4740 = vpack.c.b16 %v4722, %v4722
    %v4741 = vpack.c.b16 %v4723, %v4723
    %v4742 = vpack.c.b16 %v4724, %v4724
    %v4743 = vpack.c.b16 %v4725, %v4725
    %v4744 = vpack.c.b16 %v4726, %v4726
    %v4745 = vpack.c.b16 %v4727, %v4727
    %v4746 = vpack.c.b16 %v4728, %v4728
    %v4747 = vpack.c.b16 %v4729, %v4729
    %v4748 = vpack.c.b16 %v4730, %v4730
    %v4749 = vpack.c.b16 %v4731, %v4731
    %v4750 = vpack.c.b16 %v4732, %v4732
    %v4751 = vpack.c.b16 %v4733, %v4733
    %4770 = vst [vmem:[#allocation6] sm:$0xf] %v4734
    %4771 = vst [vmem:[#allocation6 + $0x4] sm:$0xf] %v4735
    %4772 = vst [vmem:[#allocation6 + $0x8] sm:$0xf] %v4736
    %4773 = vst [vmem:[#allocation6 + $0xc] sm:$0xf] %v4737
    %4774 = vst [vmem:[#allocation6 + $0x10] sm:$0xf] %v4738
    %4775 = vst [vmem:[#allocation6 + $0x14] sm:$0xf] %v4739
    %4776 = vst [vmem:[#allocation6 + $0x18] sm:$0xf] %v4740
    %4777 = vst [vmem:[#allocation6 + $0x1c] sm:$0xf] %v4741
    %4778 = vst [vmem:[#allocation6 + $0x20] sm:$0xf] %v4742
    %4779 = vst [vmem:[#allocation6 + $0x24] sm:$0xf] %v4743
    %4780 = vst [vmem:[#allocation6 + $0x28] sm:$0xf] %v4744
    %4781 = vst [vmem:[#allocation6 + $0x2c] sm:$0xf] %v4745
    %4782 = vst [vmem:[#allocation6 + $0x30] sm:$0xf] %v4746
    %4783 = vst [vmem:[#allocation6 + $0x34] sm:$0xf] %v4747
    %4784 = vst [vmem:[#allocation6 + $0x38] sm:$0xf] %v4748
    %4785 = vst [vmem:[#allocation6 + $0x3c] sm:$0xf] %v4749
    %4786 = vst [vmem:[#allocation6 + $0x40] sm:$0xf] %v4750
    %4787 = vst [vmem:[#allocation6 + $0x44] sm:$0xf] %v4751
    %s4788 = smul.u32 4, 64
    %s4789 = smul.u32 %s4788, 2
    %s4790 = sshll.u32 %s4789, 4
    %4791 = dma.done [#allocation8], %s4790
    %s4792 = scalar_lea.vmem [#allocation9], 18
    %v4793 = vld [vmem:[%s4792] ss:$8 sm:$0x3]
    %v4794 = vld [vmem:[#allocation6] sm:$0xf]
    %v4795 = vld [vmem:[#allocation6 + $0x4] sm:$0xf]
    %v4796 = vld [vmem:[#allocation6 + $0x8] sm:$0xf]
    %v4797 = vld [vmem:[#allocation6 + $0xc] sm:$0xf]
    %v4798 = vld [vmem:[#allocation6 + $0x10] sm:$0xf]
    %v4799 = vld [vmem:[#allocation6 + $0x14] sm:$0xf]
    %v4800 = vld [vmem:[#allocation6 + $0x18] sm:$0xf]
    %v4801 = vld [vmem:[#allocation6 + $0x1c] sm:$0xf]
    %v4802 = vld [vmem:[#allocation6 + $0x20] sm:$0xf]
    %v4803 = vld [vmem:[#allocation6 + $0x24] sm:$0xf]
    %v4804 = vld [vmem:[#allocation6 + $0x28] sm:$0xf]
    %v4805 = vld [vmem:[#allocation6 + $0x2c] sm:$0xf]
    %v4806 = vld [vmem:[#allocation6 + $0x30] sm:$0xf]
    %v4807 = vld [vmem:[#allocation6 + $0x34] sm:$0xf]
    %v4808 = vld [vmem:[#allocation6 + $0x38] sm:$0xf]
    %v4809 = vld [vmem:[#allocation6 + $0x3c] sm:$0xf]
    %v4810 = vld [vmem:[#allocation2] sm:$0xff]
    %v4811 = vld [vmem:[#allocation2 + $0x8] sm:$0xff]
    %v4812 = vld [vmem:[#allocation2 + $0x10] sm:$0xff]
    %v4813 = vld [vmem:[#allocation2 + $0x18] sm:$0xff]
    %v4814 = vld [vmem:[#allocation2 + $0x20] sm:$0xff]
    %v4815 = vld [vmem:[#allocation2 + $0x28] sm:$0xff]
    %v4816 = vld [vmem:[#allocation2 + $0x30] sm:$0xff]
    %v4817 = vld [vmem:[#allocation2 + $0x38] sm:$0xff]
    %v4818 = vld [vmem:[#allocation2 + $0x40] sm:$0xff]
    %v4819 = vld [vmem:[#allocation2 + $0x48] sm:$0xff]
    %v4820 = vld [vmem:[#allocation2 + $0x50] sm:$0xff]
    %v4821 = vld [vmem:[#allocation2 + $0x58] sm:$0xff]
    %v4822 = vld [vmem:[#allocation2 + $0x60] sm:$0xff]
    %v4823 = vld [vmem:[#allocation2 + $0x68] sm:$0xff]
    %v4824 = vld [vmem:[#allocation2 + $0x70] sm:$0xff]
    %v4825 = vld [vmem:[#allocation2 + $0x78] sm:$0xff]
    %v4826 = vld [vmem:[#allocation6 + $0x40] sm:$0x1]
    %v4827 = vld [vmem:[#allocation2 + $0x80] sm:$0xff]
    %v4828 = vld [vmem:[#allocation2 + $0x88] sm:$0xff]
    %v4829 = vld [vmem:[#allocation2 + $0x90] sm:$0xff]
    %v4830 = vld [vmem:[#allocation2 + $0x98] sm:$0xff]
    %v4831 = vld [vmem:[#allocation2 + $0xa0] sm:$0xff]
    %v4832 = vld [vmem:[#allocation2 + $0xa8] sm:$0xff]
    %v4833 = vld [vmem:[#allocation2 + $0xb0] sm:$0xff]
    %v4834 = vld [vmem:[#allocation2 + $0xb8] sm:$0xff]
    %v4835 = vld [vmem:[#allocation2 + $0xc0] sm:$0xff]
    %v4836 = vld [vmem:[#allocation2 + $0xc8] sm:$0xff]
    %v4837 = vld [vmem:[#allocation2 + $0xd0] sm:$0xff]
    %v4838 = vld [vmem:[#allocation2 + $0xd8] sm:$0xff]
    %v4839 = vld [vmem:[#allocation2 + $0xe0] sm:$0xff]
    %v4840 = vld [vmem:[#allocation2 + $0xe8] sm:$0xff]
    %v4841 = vld [vmem:[#allocation2 + $0xf0] sm:$0xff]
    %v4842 = vld [vmem:[#allocation2 + $0xf8] sm:$0xff]
    %v4860 = vunpack.c.l.b16 %v4794
    %v4861 = vunpack.c.l.b16 %v4795
    %v4862 = vunpack.c.l.b16 %v4796
    %v4863 = vunpack.c.l.b16 %v4797
    %v4864 = vunpack.c.l.b16 %v4798
    %v4865 = vunpack.c.l.b16 %v4799
    %v4866 = vunpack.c.l.b16 %v4800
    %v4867 = vunpack.c.l.b16 %v4801
    %v4868 = vunpack.c.l.b16 %v4802
    %v4869 = vunpack.c.l.b16 %v4803
    %v4870 = vunpack.c.l.b16 %v4804
    %v4871 = vunpack.c.l.b16 %v4805
    %v4872 = vunpack.c.l.b16 %v4806
    %v4873 = vunpack.c.l.b16 %v4807
    %v4874 = vunpack.c.l.b16 %v4808
    %v4875 = vunpack.c.l.b16 %v4809
    %v4876 = vunpack.c.l.b16 %v4826
    %v4877 = vpack.c.b16 %v4861, %v4860
    %v4878 = vpack.c.b16 %v4863, %v4862
    %v4879 = vpack.c.b16 %v4865, %v4864
    %v4880 = vpack.c.b16 %v4867, %v4866
    %v4881 = vpack.c.b16 %v4869, %v4868
    %v4882 = vpack.c.b16 %v4871, %v4870
    %v4883 = vpack.c.b16 %v4873, %v4872
    %v4884 = vpack.c.b16 %v4875, %v4874
    %v4885 = vpack.c.b16 %v4876, %v4876
    %v4887 = vshrl.u32 %v4877, 16
    %v4889 = vshll.u32 %v4877, 16
    %v4891 = vrot.slane %v4889, 1
    %v4892 = vor.u32 %v4887, %v4891
    %v4894 = vshll.u32 %v4878, 16
    %v4896 = vrot.slane %v4894, 1
    %v4897 = vsel %vm2740, %v4892, %v4896
    %v4898 = vshrl.u32 %v4878, 16
    %v4900 = vor.u32 %v4898, %v4896
    %v4902 = vshll.u32 %v4879, 16
    %v4904 = vrot.slane %v4902, 1
    %v4905 = vsel %vm2740, %v4900, %v4904
    %v4906 = vshrl.u32 %v4879, 16
    %v4908 = vor.u32 %v4906, %v4904
    %v4910 = vshll.u32 %v4880, 16
    %v4912 = vrot.slane %v4910, 1
    %v4913 = vsel %vm2740, %v4908, %v4912
    %v4914 = vshrl.u32 %v4880, 16
    %v4916 = vor.u32 %v4914, %v4912
    %v4918 = vshll.u32 %v4881, 16
    %v4920 = vrot.slane %v4918, 1
    %v4921 = vsel %vm2740, %v4916, %v4920
    %v4922 = vshrl.u32 %v4881, 16
    %v4924 = vor.u32 %v4922, %v4920
    %v4926 = vshll.u32 %v4882, 16
    %v4928 = vrot.slane %v4926, 1
    %v4929 = vsel %vm2740, %v4924, %v4928
    %v4930 = vshrl.u32 %v4882, 16
    %v4932 = vor.u32 %v4930, %v4928
    %v4934 = vshll.u32 %v4883, 16
    %v4936 = vrot.slane %v4934, 1
    %v4937 = vsel %vm2740, %v4932, %v4936
    %v4938 = vshrl.u32 %v4883, 16
    %v4940 = vor.u32 %v4938, %v4936
    %v4942 = vshll.u32 %v4884, 16
    %v4944 = vrot.slane %v4942, 1
    %v4945 = vsel %vm2740, %v4940, %v4944
    %v4946 = vshrl.u32 %v4884, 16
    %v4948 = vor.u32 %v4946, %v4944
    %v4950 = vshll.u32 %v4885, 16
    %v4952 = vrot.slane %v4950, 1
    %v4953 = vsel %vm2740, %v4948, %v4952
    %v4978 = vunpack.c.l.b16 %v4827
    %v4979 = vunpack.c.h.b16 %v4827
    %v4980 = vunpack.c.l.b16 %v4828
    %v4981 = vunpack.c.h.b16 %v4828
    %v4982 = vunpack.c.l.b16 %v4829
    %v4983 = vunpack.c.h.b16 %v4829
    %v4984 = vunpack.c.l.b16 %v4830
    %v4985 = vunpack.c.h.b16 %v4830
    %v4986 = vunpack.c.l.b16 %v4831
    %v4987 = vunpack.c.h.b16 %v4831
    %v4988 = vunpack.c.l.b16 %v4832
    %v4989 = vunpack.c.h.b16 %v4832
    %v4990 = vunpack.c.l.b16 %v4833
    %v4991 = vunpack.c.h.b16 %v4833
    %v4992 = vunpack.c.l.b16 %v4834
    %v4993 = vunpack.c.h.b16 %v4834
    %v4994 = vunpack.c.l.b16 %v4835
    %v4995 = vunpack.c.h.b16 %v4835
    %v4996 = vunpack.c.l.b16 %v4836
    %v4997 = vunpack.c.h.b16 %v4836
    %v4998 = vunpack.c.l.b16 %v4837
    %v4999 = vunpack.c.h.b16 %v4837
    %v5000 = vunpack.c.l.b16 %v4838
    %v5001 = vunpack.c.h.b16 %v4838
    %v5002 = vunpack.c.l.b16 %v4839
    %v5003 = vunpack.c.h.b16 %v4839
    %v5004 = vunpack.c.l.b16 %v4840
    %v5005 = vunpack.c.h.b16 %v4840
    %v5006 = vunpack.c.l.b16 %v4841
    %v5007 = vunpack.c.h.b16 %v4841
    %v5008 = vunpack.c.l.b16 %v4842
    %v5009 = vunpack.c.h.b16 %v4842
    %v5010 = vpack.c.b16 %v4980, %v4978
    %v5011 = vpack.c.b16 %v4981, %v4979
    %v5012 = vpack.c.b16 %v4984, %v4982
    %v5013 = vpack.c.b16 %v4985, %v4983
    %v5014 = vpack.c.b16 %v4988, %v4986
    %v5015 = vpack.c.b16 %v4989, %v4987
    %v5016 = vpack.c.b16 %v4992, %v4990
    %v5017 = vpack.c.b16 %v4993, %v4991
    %v5018 = vpack.c.b16 %v4996, %v4994
    %v5019 = vpack.c.b16 %v4997, %v4995
    %v5020 = vpack.c.b16 %v5000, %v4998
    %v5021 = vpack.c.b16 %v5001, %v4999
    %v5022 = vpack.c.b16 %v5004, %v5002
    %v5023 = vpack.c.b16 %v5005, %v5003
    %v5024 = vpack.c.b16 %v5008, %v5006
    %v5025 = vpack.c.b16 %v5009, %v5007
    %5042 = vmatprep.subr.bf16.mxu0 %v5025
    %5043 = vmatpush1.bf16.msra.mxu0 %v5024
    %5044 = vmatprep.subr.bf16.mxu0 %v5023
    %5045 = vmatpush1.bf16.msra.mxu0 %v5022
    %5046 = vmatprep.subr.bf16.mxu0 %v5021
    %5047 = vmatpush1.bf16.msra.mxu0 %v5020
    %5048 = vmatprep.subr.bf16.mxu0 %v5019
    %5049 = vmatpush1.bf16.msra.mxu0 %v5018
    %5050 = vmatprep.subr.bf16.mxu0 %v5017
    %5051 = vmatpush1.bf16.msra.mxu0 %v5016
    %5052 = vmatprep.subr.bf16.mxu0 %v5015
    %5053 = vmatpush1.bf16.msra.mxu0 %v5014
    %5054 = vmatprep.subr.bf16.mxu0 %v5013
    %5055 = vmatpush1.bf16.msra.mxu0 %v5012
    %5056 = vmatprep.subr.bf16.mxu0 %v5011
    %5057 = vmatpush1.bf16.msra.mxu0 %v5010
    %5058 = vmatprep.subr.bf16.mxu0 0
    %5059 = vmatpush2.bf16.msra.mxu0 0
    %5060 = vmatprep.subr.bf16.mxu0 0
    %5061 = vmatpush2.bf16.msra.mxu0 0
    %5062 = vmatprep.subr.bf16.mxu0 0
    %5063 = vmatpush2.bf16.msra.mxu0 0
    %5064 = vmatprep.subr.bf16.mxu0 0
    %5065 = vmatpush2.bf16.msra.mxu0 0
    %5066 = vmatprep.subr.bf16.mxu0 0
    %5067 = vmatpush2.bf16.msra.mxu0 0
    %5068 = vmatprep.subr.bf16.mxu0 0
    %5069 = vmatpush2.bf16.msra.mxu0 0
    %5070 = vmatprep.subr.bf16.mxu0 0
    %5071 = vmatpush2.bf16.msra.mxu0 0
    %5072 = vmatprep.subr.bf16.mxu0 0
    %5073 = vmatpush2.bf16.msra.mxu0 0
    %5074 = vmatprep.mubr.bf16.mxu0 0
    %5075 = vmatmul.mubr.bf16.gmra.mxu0 %v4897
    %v5076 = vpop.f32.mrf.mxu0
    %v5077 = vadd.f32 0.0, %v5076
    %v5078 = vpop.f32.mrf.mxu0
    %v5079 = vadd.f32 0.0, %v5078
    %v5080 = vpop.f32.mrf.mxu0
    %v5081 = vadd.f32 0.0, %v5080
    %v5082 = vpop.f32.mrf.mxu0
    %v5083 = vadd.f32 0.0, %v5082
    %5084 = vmatprep.mubr.bf16.mxu0 0
    %5085 = vmatmul.mubr.bf16.gmra.mxu0 %v4905
    %v5086 = vpop.f32.mrf.mxu0
    %v5087 = vadd.f32 0.0, %v5086
    %v5088 = vpop.f32.mrf.mxu0
    %v5089 = vadd.f32 0.0, %v5088
    %v5090 = vpop.f32.mrf.mxu0
    %v5091 = vadd.f32 0.0, %v5090
    %v5092 = vpop.f32.mrf.mxu0
    %v5093 = vadd.f32 0.0, %v5092
    %5094 = vmatprep.mubr.bf16.mxu0 0
    %5095 = vmatmul.mubr.bf16.gmra.mxu0 %v4913
    %v5096 = vpop.f32.mrf.mxu0
    %v5097 = vadd.f32 0.0, %v5096
    %v5098 = vpop.f32.mrf.mxu0
    %v5099 = vadd.f32 0.0, %v5098
    %v5100 = vpop.f32.mrf.mxu0
    %v5101 = vadd.f32 0.0, %v5100
    %v5102 = vpop.f32.mrf.mxu0
    %v5103 = vadd.f32 0.0, %v5102
    %5104 = vmatprep.mubr.bf16.mxu0 0
    %5105 = vmatmul.mubr.bf16.gmra.mxu0 %v4921
    %v5106 = vpop.f32.mrf.mxu0
    %v5107 = vadd.f32 0.0, %v5106
    %v5108 = vpop.f32.mrf.mxu0
    %v5109 = vadd.f32 0.0, %v5108
    %v5110 = vpop.f32.mrf.mxu0
    %v5111 = vadd.f32 0.0, %v5110
    %v5112 = vpop.f32.mrf.mxu0
    %v5113 = vadd.f32 0.0, %v5112
    %5114 = vmatprep.mubr.bf16.mxu0 0
    %5115 = vmatmul.mubr.bf16.gmra.mxu0 %v4929
    %v5116 = vpop.f32.mrf.mxu0
    %v5117 = vadd.f32 0.0, %v5116
    %v5118 = vpop.f32.mrf.mxu0
    %v5119 = vadd.f32 0.0, %v5118
    %v5120 = vpop.f32.mrf.mxu0
    %v5121 = vadd.f32 0.0, %v5120
    %v5122 = vpop.f32.mrf.mxu0
    %v5123 = vadd.f32 0.0, %v5122
    %5124 = vmatprep.mubr.bf16.mxu0 0
    %5125 = vmatmul.mubr.bf16.gmra.mxu0 %v4937
    %v5126 = vpop.f32.mrf.mxu0
    %v5127 = vadd.f32 0.0, %v5126
    %v5128 = vpop.f32.mrf.mxu0
    %v5129 = vadd.f32 0.0, %v5128
    %v5130 = vpop.f32.mrf.mxu0
    %v5131 = vadd.f32 0.0, %v5130
    %v5132 = vpop.f32.mrf.mxu0
    %v5133 = vadd.f32 0.0, %v5132
    %5134 = vmatprep.mubr.bf16.mxu0 0
    %5135 = vmatmul.mubr.bf16.gmra.mxu0 %v4945
    %v5136 = vpop.f32.mrf.mxu0
    %v5137 = vadd.f32 0.0, %v5136
    %v5138 = vpop.f32.mrf.mxu0
    %v5139 = vadd.f32 0.0, %v5138
    %v5140 = vpop.f32.mrf.mxu0
    %v5141 = vadd.f32 0.0, %v5140
    %v5142 = vpop.f32.mrf.mxu0
    %v5143 = vadd.f32 0.0, %v5142
    %5144 = vmatprep.mubr.bf16.mxu0 0
    %5145 = vmatmul.mubr.bf16.gmra.mxu0 %v4953
    %v5146 = vpop.f32.mrf.mxu0
    %v5147 = vadd.f32 0.0, %v5146
    %v5148 = vpop.f32.mrf.mxu0
    %v5149 = vadd.f32 0.0, %v5148
    %v5150 = vpop.f32.mrf.mxu0
    %v5151 = vadd.f32 0.0, %v5150
    %v5152 = vpop.f32.mrf.mxu0
    %v5153 = vadd.f32 0.0, %v5152
    %5154 = vdwg.mxu0
    %v5179 = vunpack.c.l.b16 %v4810
    %v5180 = vunpack.c.h.b16 %v4810
    %v5181 = vunpack.c.l.b16 %v4811
    %v5182 = vunpack.c.h.b16 %v4811
    %v5183 = vunpack.c.l.b16 %v4812
    %v5184 = vunpack.c.h.b16 %v4812
    %v5185 = vunpack.c.l.b16 %v4813
    %v5186 = vunpack.c.h.b16 %v4813
    %v5187 = vunpack.c.l.b16 %v4814
    %v5188 = vunpack.c.h.b16 %v4814
    %v5189 = vunpack.c.l.b16 %v4815
    %v5190 = vunpack.c.h.b16 %v4815
    %v5191 = vunpack.c.l.b16 %v4816
    %v5192 = vunpack.c.h.b16 %v4816
    %v5193 = vunpack.c.l.b16 %v4817
    %v5194 = vunpack.c.h.b16 %v4817
    %v5195 = vunpack.c.l.b16 %v4818
    %v5196 = vunpack.c.h.b16 %v4818
    %v5197 = vunpack.c.l.b16 %v4819
    %v5198 = vunpack.c.h.b16 %v4819
    %v5199 = vunpack.c.l.b16 %v4820
    %v5200 = vunpack.c.h.b16 %v4820
    %v5201 = vunpack.c.l.b16 %v4821
    %v5202 = vunpack.c.h.b16 %v4821
    %v5203 = vunpack.c.l.b16 %v4822
    %v5204 = vunpack.c.h.b16 %v4822
    %v5205 = vunpack.c.l.b16 %v4823
    %v5206 = vunpack.c.h.b16 %v4823
    %v5207 = vunpack.c.l.b16 %v4824
    %v5208 = vunpack.c.h.b16 %v4824
    %v5209 = vunpack.c.l.b16 %v4825
    %v5210 = vunpack.c.h.b16 %v4825
    %v5211 = vpack.c.b16 %v5181, %v5179
    %v5212 = vpack.c.b16 %v5182, %v5180
    %v5213 = vpack.c.b16 %v5185, %v5183
    %v5214 = vpack.c.b16 %v5186, %v5184
    %v5215 = vpack.c.b16 %v5189, %v5187
    %v5216 = vpack.c.b16 %v5190, %v5188
    %v5217 = vpack.c.b16 %v5193, %v5191
    %v5218 = vpack.c.b16 %v5194, %v5192
    %v5219 = vpack.c.b16 %v5197, %v5195
    %v5220 = vpack.c.b16 %v5198, %v5196
    %v5221 = vpack.c.b16 %v5201, %v5199
    %v5222 = vpack.c.b16 %v5202, %v5200
    %v5223 = vpack.c.b16 %v5205, %v5203
    %v5224 = vpack.c.b16 %v5206, %v5204
    %v5225 = vpack.c.b16 %v5209, %v5207
    %v5226 = vpack.c.b16 %v5210, %v5208
    %5243 = vmatprep.subr.bf16.mxu0 %v5226
    %5244 = vmatpush1.bf16.msra.mxu0 %v5225
    %5245 = vmatprep.subr.bf16.mxu0 %v5224
    %5246 = vmatpush1.bf16.msra.mxu0 %v5223
    %5247 = vmatprep.subr.bf16.mxu0 %v5222
    %5248 = vmatpush1.bf16.msra.mxu0 %v5221
    %5249 = vmatprep.subr.bf16.mxu0 %v5220
    %5250 = vmatpush1.bf16.msra.mxu0 %v5219
    %5251 = vmatprep.subr.bf16.mxu0 %v5218
    %5252 = vmatpush1.bf16.msra.mxu0 %v5217
    %5253 = vmatprep.subr.bf16.mxu0 %v5216
    %5254 = vmatpush1.bf16.msra.mxu0 %v5215
    %5255 = vmatprep.subr.bf16.mxu0 %v5214
    %5256 = vmatpush1.bf16.msra.mxu0 %v5213
    %5257 = vmatprep.subr.bf16.mxu0 %v5212
    %5258 = vmatpush1.bf16.msra.mxu0 %v5211
    %5259 = vmatprep.subr.bf16.mxu0 0
    %5260 = vmatpush2.bf16.msra.mxu0 0
    %5261 = vmatprep.subr.bf16.mxu0 0
    %5262 = vmatpush2.bf16.msra.mxu0 0
    %5263 = vmatprep.subr.bf16.mxu0 0
    %5264 = vmatpush2.bf16.msra.mxu0 0
    %5265 = vmatprep.subr.bf16.mxu0 0
    %5266 = vmatpush2.bf16.msra.mxu0 0
    %5267 = vmatprep.subr.bf16.mxu0 0
    %5268 = vmatpush2.bf16.msra.mxu0 0
    %5269 = vmatprep.subr.bf16.mxu0 0
    %5270 = vmatpush2.bf16.msra.mxu0 0
    %5271 = vmatprep.subr.bf16.mxu0 0
    %5272 = vmatpush2.bf16.msra.mxu0 0
    %5273 = vmatprep.subr.bf16.mxu0 0
    %5274 = vmatpush2.bf16.msra.mxu0 0
    %5275 = vmatprep.mubr.bf16.mxu0 0
    %5276 = vmatmul.mubr.bf16.gmra.mxu0 %v4877
    %v5277 = vpop.f32.mrf.mxu0
    %v5278 = vadd.f32 %v5077, %v5277
    %v5279 = vpop.f32.mrf.mxu0
    %v5280 = vadd.f32 %v5079, %v5279
    %v5281 = vpop.f32.mrf.mxu0
    %v5282 = vadd.f32 %v5081, %v5281
    %v5283 = vpop.f32.mrf.mxu0
    %v5284 = vadd.f32 %v5083, %v5283
    %5285 = vmatprep.mubr.bf16.mxu0 0
    %5286 = vmatmul.mubr.bf16.gmra.mxu0 %v4878
    %v5287 = vpop.f32.mrf.mxu0
    %v5288 = vadd.f32 %v5087, %v5287
    %v5289 = vpop.f32.mrf.mxu0
    %v5290 = vadd.f32 %v5089, %v5289
    %v5291 = vpop.f32.mrf.mxu0
    %v5292 = vadd.f32 %v5091, %v5291
    %v5293 = vpop.f32.mrf.mxu0
    %v5294 = vadd.f32 %v5093, %v5293
    %5295 = vmatprep.mubr.bf16.mxu0 0
    %5296 = vmatmul.mubr.bf16.gmra.mxu0 %v4879
    %v5297 = vpop.f32.mrf.mxu0
    %v5298 = vadd.f32 %v5097, %v5297
    %v5299 = vpop.f32.mrf.mxu0
    %v5300 = vadd.f32 %v5099, %v5299
    %v5301 = vpop.f32.mrf.mxu0
    %v5302 = vadd.f32 %v5101, %v5301
    %v5303 = vpop.f32.mrf.mxu0
    %v5304 = vadd.f32 %v5103, %v5303
    %5305 = vmatprep.mubr.bf16.mxu0 0
    %5306 = vmatmul.mubr.bf16.gmra.mxu0 %v4880
    %v5307 = vpop.f32.mrf.mxu0
    %v5308 = vadd.f32 %v5107, %v5307
    %v5309 = vpop.f32.mrf.mxu0
    %v5310 = vadd.f32 %v5109, %v5309
    %v5311 = vpop.f32.mrf.mxu0
    %v5312 = vadd.f32 %v5111, %v5311
    %v5313 = vpop.f32.mrf.mxu0
    %v5314 = vadd.f32 %v5113, %v5313
    %5315 = vmatprep.mubr.bf16.mxu0 0
    %5316 = vmatmul.mubr.bf16.gmra.mxu0 %v4881
    %v5317 = vpop.f32.mrf.mxu0
    %v5318 = vadd.f32 %v5117, %v5317
    %v5319 = vpop.f32.mrf.mxu0
    %v5320 = vadd.f32 %v5119, %v5319
    %v5321 = vpop.f32.mrf.mxu0
    %v5322 = vadd.f32 %v5121, %v5321
    %v5323 = vpop.f32.mrf.mxu0
    %v5324 = vadd.f32 %v5123, %v5323
    %5325 = vmatprep.mubr.bf16.mxu0 0
    %5326 = vmatmul.mubr.bf16.gmra.mxu0 %v4882
    %v5327 = vpop.f32.mrf.mxu0
    %v5328 = vadd.f32 %v5127, %v5327
    %v5329 = vpop.f32.mrf.mxu0
    %v5330 = vadd.f32 %v5129, %v5329
    %v5331 = vpop.f32.mrf.mxu0
    %v5332 = vadd.f32 %v5131, %v5331
    %v5333 = vpop.f32.mrf.mxu0
    %v5334 = vadd.f32 %v5133, %v5333
    %5335 = vmatprep.mubr.bf16.mxu0 0
    %5336 = vmatmul.mubr.bf16.gmra.mxu0 %v4883
    %v5337 = vpop.f32.mrf.mxu0
    %v5338 = vadd.f32 %v5137, %v5337
    %v5339 = vpop.f32.mrf.mxu0
    %v5340 = vadd.f32 %v5139, %v5339
    %v5341 = vpop.f32.mrf.mxu0
    %v5342 = vadd.f32 %v5141, %v5341
    %v5343 = vpop.f32.mrf.mxu0
    %v5344 = vadd.f32 %v5143, %v5343
    %5345 = vmatprep.mubr.bf16.mxu0 0
    %5346 = vmatmul.mubr.bf16.gmra.mxu0 %v4884
    %v5347 = vpop.f32.mrf.mxu0
    %v5348 = vadd.f32 %v5147, %v5347
    %v5349 = vpop.f32.mrf.mxu0
    %v5350 = vadd.f32 %v5149, %v5349
    %v5351 = vpop.f32.mrf.mxu0
    %v5352 = vadd.f32 %v5151, %v5351
    %v5353 = vpop.f32.mrf.mxu0
    %v5354 = vadd.f32 %v5153, %v5353
    %5355 = vdwg.mxu0
    %v5356 = vld [vmem:[#allocation6 + $0x40] sm:$0xf]
    %v5357 = vld [vmem:[#allocation2 + $0x100] sm:$0xff]
    %v5358 = vld [vmem:[#allocation2 + $0x108] sm:$0xff]
    %v5359 = vld [vmem:[#allocation2 + $0x110] sm:$0xff]
    %v5360 = vld [vmem:[#allocation2 + $0x118] sm:$0xff]
    %v5361 = vld [vmem:[#allocation2 + $0x120] sm:$0xff]
    %v5362 = vld [vmem:[#allocation2 + $0x128] sm:$0xff]
    %v5363 = vld [vmem:[#allocation2 + $0x130] sm:$0xff]
    %v5364 = vld [vmem:[#allocation2 + $0x138] sm:$0xff]
    %v5365 = vld [vmem:[#allocation2 + $0x140] sm:$0xff]
    %v5366 = vld [vmem:[#allocation2 + $0x148] sm:$0xff]
    %v5367 = vld [vmem:[#allocation2 + $0x150] sm:$0xff]
    %v5368 = vld [vmem:[#allocation2 + $0x158] sm:$0xff]
    %v5369 = vld [vmem:[#allocation2 + $0x160] sm:$0xff]
    %v5370 = vld [vmem:[#allocation2 + $0x168] sm:$0xff]
    %v5371 = vld [vmem:[#allocation2 + $0x170] sm:$0xff]
    %v5372 = vld [vmem:[#allocation2 + $0x178] sm:$0xff]
    %v5374 = vunpack.c.l.b16 %v5356
    %v5375 = vpack.c.b16 %v4862, %v4861
    %v5376 = vpack.c.b16 %v4864, %v4863
    %v5377 = vpack.c.b16 %v4866, %v4865
    %v5378 = vpack.c.b16 %v4868, %v4867
    %v5379 = vpack.c.b16 %v4870, %v4869
    %v5380 = vpack.c.b16 %v4872, %v4871
    %v5381 = vpack.c.b16 %v4874, %v4873
    %v5382 = vpack.c.b16 %v5374, %v4875
    %v5407 = vunpack.c.l.b16 %v5357
    %v5408 = vunpack.c.h.b16 %v5357
    %v5409 = vunpack.c.l.b16 %v5358
    %v5410 = vunpack.c.h.b16 %v5358
    %v5411 = vunpack.c.l.b16 %v5359
    %v5412 = vunpack.c.h.b16 %v5359
    %v5413 = vunpack.c.l.b16 %v5360
    %v5414 = vunpack.c.h.b16 %v5360
    %v5415 = vunpack.c.l.b16 %v5361
    %v5416 = vunpack.c.h.b16 %v5361
    %v5417 = vunpack.c.l.b16 %v5362
    %v5418 = vunpack.c.h.b16 %v5362
    %v5419 = vunpack.c.l.b16 %v5363
    %v5420 = vunpack.c.h.b16 %v5363
    %v5421 = vunpack.c.l.b16 %v5364
    %v5422 = vunpack.c.h.b16 %v5364
    %v5423 = vunpack.c.l.b16 %v5365
    %v5424 = vunpack.c.h.b16 %v5365
    %v5425 = vunpack.c.l.b16 %v5366
    %v5426 = vunpack.c.h.b16 %v5366
    %v5427 = vunpack.c.l.b16 %v5367
    %v5428 = vunpack.c.h.b16 %v5367
    %v5429 = vunpack.c.l.b16 %v5368
    %v5430 = vunpack.c.h.b16 %v5368
    %v5431 = vunpack.c.l.b16 %v5369
    %v5432 = vunpack.c.h.b16 %v5369
    %v5433 = vunpack.c.l.b16 %v5370
    %v5434 = vunpack.c.h.b16 %v5370
    %v5435 = vunpack.c.l.b16 %v5371
    %v5436 = vunpack.c.h.b16 %v5371
    %v5437 = vunpack.c.l.b16 %v5372
    %v5438 = vunpack.c.h.b16 %v5372
    %v5439 = vpack.c.b16 %v5409, %v5407
    %v5440 = vpack.c.b16 %v5410, %v5408
    %v5441 = vpack.c.b16 %v5413, %v5411
    %v5442 = vpack.c.b16 %v5414, %v5412
    %v5443 = vpack.c.b16 %v5417, %v5415
    %v5444 = vpack.c.b16 %v5418, %v5416
    %v5445 = vpack.c.b16 %v5421, %v5419
    %v5446 = vpack.c.b16 %v5422, %v5420
    %v5447 = vpack.c.b16 %v5425, %v5423
    %v5448 = vpack.c.b16 %v5426, %v5424
    %v5449 = vpack.c.b16 %v5429, %v5427
    %v5450 = vpack.c.b16 %v5430, %v5428
    %v5451 = vpack.c.b16 %v5433, %v5431
    %v5452 = vpack.c.b16 %v5434, %v5432
    %v5453 = vpack.c.b16 %v5437, %v5435
    %v5454 = vpack.c.b16 %v5438, %v5436
    %5471 = vmatprep.subr.bf16.mxu0 %v5454
    %5472 = vmatpush1.bf16.msra.mxu0 %v5453
    %5473 = vmatprep.subr.bf16.mxu0 %v5452
    %5474 = vmatpush1.bf16.msra.mxu0 %v5451
    %5475 = vmatprep.subr.bf16.mxu0 %v5450
    %5476 = vmatpush1.bf16.msra.mxu0 %v5449
    %5477 = vmatprep.subr.bf16.mxu0 %v5448
    %5478 = vmatpush1.bf16.msra.mxu0 %v5447
    %5479 = vmatprep.subr.bf16.mxu0 %v5446
    %5480 = vmatpush1.bf16.msra.mxu0 %v5445
    %5481 = vmatprep.subr.bf16.mxu0 %v5444
    %5482 = vmatpush1.bf16.msra.mxu0 %v5443
    %5483 = vmatprep.subr.bf16.mxu0 %v5442
    %5484 = vmatpush1.bf16.msra.mxu0 %v5441
    %5485 = vmatprep.subr.bf16.mxu0 %v5440
    %5486 = vmatpush1.bf16.msra.mxu0 %v5439
    %5487 = vmatprep.subr.bf16.mxu0 0
    %5488 = vmatpush2.bf16.msra.mxu0 0
    %5489 = vmatprep.subr.bf16.mxu0 0
    %5490 = vmatpush2.bf16.msra.mxu0 0
    %5491 = vmatprep.subr.bf16.mxu0 0
    %5492 = vmatpush2.bf16.msra.mxu0 0
    %5493 = vmatprep.subr.bf16.mxu0 0
    %5494 = vmatpush2.bf16.msra.mxu0 0
    %5495 = vmatprep.subr.bf16.mxu0 0
    %5496 = vmatpush2.bf16.msra.mxu0 0
    %5497 = vmatprep.subr.bf16.mxu0 0
    %5498 = vmatpush2.bf16.msra.mxu0 0
    %5499 = vmatprep.subr.bf16.mxu0 0
    %5500 = vmatpush2.bf16.msra.mxu0 0
    %5501 = vmatprep.subr.bf16.mxu0 0
    %5502 = vmatpush2.bf16.msra.mxu0 0
    %5503 = vmatprep.mubr.bf16.mxu0 0
    %5504 = vmatmul.mubr.bf16.gmra.mxu0 %v5375
    %v5505 = vpop.f32.mrf.mxu0
    %v5506 = vadd.f32 0.0, %v5505
    %v5507 = vpop.f32.mrf.mxu0
    %v5508 = vadd.f32 0.0, %v5507
    %v5509 = vpop.f32.mrf.mxu0
    %v5510 = vadd.f32 0.0, %v5509
    %v5511 = vpop.f32.mrf.mxu0
    %v5512 = vadd.f32 0.0, %v5511
    %5513 = vmatprep.mubr.bf16.mxu0 0
    %5514 = vmatmul.mubr.bf16.gmra.mxu0 %v5376
    %v5515 = vpop.f32.mrf.mxu0
    %v5516 = vadd.f32 0.0, %v5515
    %v5517 = vpop.f32.mrf.mxu0
    %v5518 = vadd.f32 0.0, %v5517
    %v5519 = vpop.f32.mrf.mxu0
    %v5520 = vadd.f32 0.0, %v5519
    %v5521 = vpop.f32.mrf.mxu0
    %v5522 = vadd.f32 0.0, %v5521
    %5523 = vmatprep.mubr.bf16.mxu0 0
    %5524 = vmatmul.mubr.bf16.gmra.mxu0 %v5377
    %v5525 = vpop.f32.mrf.mxu0
    %v5526 = vadd.f32 0.0, %v5525
    %v5527 = vpop.f32.mrf.mxu0
    %v5528 = vadd.f32 0.0, %v5527
    %v5529 = vpop.f32.mrf.mxu0
    %v5530 = vadd.f32 0.0, %v5529
    %v5531 = vpop.f32.mrf.mxu0
    %v5532 = vadd.f32 0.0, %v5531
    %5533 = vmatprep.mubr.bf16.mxu0 0
    %5534 = vmatmul.mubr.bf16.gmra.mxu0 %v5378
    %v5535 = vpop.f32.mrf.mxu0
    %v5536 = vadd.f32 0.0, %v5535
    %v5537 = vpop.f32.mrf.mxu0
    %v5538 = vadd.f32 0.0, %v5537
    %v5539 = vpop.f32.mrf.mxu0
    %v5540 = vadd.f32 0.0, %v5539
    %v5541 = vpop.f32.mrf.mxu0
    %v5542 = vadd.f32 0.0, %v5541
    %5543 = vmatprep.mubr.bf16.mxu0 0
    %5544 = vmatmul.mubr.bf16.gmra.mxu0 %v5379
    %v5545 = vpop.f32.mrf.mxu0
    %v5546 = vadd.f32 0.0, %v5545
    %v5547 = vpop.f32.mrf.mxu0
    %v5548 = vadd.f32 0.0, %v5547
    %v5549 = vpop.f32.mrf.mxu0
    %v5550 = vadd.f32 0.0, %v5549
    %v5551 = vpop.f32.mrf.mxu0
    %v5552 = vadd.f32 0.0, %v5551
    %5553 = vmatprep.mubr.bf16.mxu0 0
    %5554 = vmatmul.mubr.bf16.gmra.mxu0 %v5380
    %v5555 = vpop.f32.mrf.mxu0
    %v5556 = vadd.f32 0.0, %v5555
    %v5557 = vpop.f32.mrf.mxu0
    %v5558 = vadd.f32 0.0, %v5557
    %v5559 = vpop.f32.mrf.mxu0
    %v5560 = vadd.f32 0.0, %v5559
    %v5561 = vpop.f32.mrf.mxu0
    %v5562 = vadd.f32 0.0, %v5561
    %5563 = vmatprep.mubr.bf16.mxu0 0
    %5564 = vmatmul.mubr.bf16.gmra.mxu0 %v5381
    %v5565 = vpop.f32.mrf.mxu0
    %v5566 = vadd.f32 0.0, %v5565
    %v5567 = vpop.f32.mrf.mxu0
    %v5568 = vadd.f32 0.0, %v5567
    %v5569 = vpop.f32.mrf.mxu0
    %v5570 = vadd.f32 0.0, %v5569
    %v5571 = vpop.f32.mrf.mxu0
    %v5572 = vadd.f32 0.0, %v5571
    %5573 = vmatprep.mubr.bf16.mxu0 0
    %5574 = vmatmul.mubr.bf16.gmra.mxu0 %v5382
    %v5575 = vpop.f32.mrf.mxu0
    %v5576 = vadd.f32 0.0, %v5575
    %v5577 = vpop.f32.mrf.mxu0
    %v5578 = vadd.f32 0.0, %v5577
    %v5579 = vpop.f32.mrf.mxu0
    %v5580 = vadd.f32 0.0, %v5579
    %v5581 = vpop.f32.mrf.mxu0
    %v5582 = vadd.f32 0.0, %v5581
    %5583 = vdwg.mxu0
    %v5584 = vadd.f32 %v5278, %v5506
    %v5585 = vadd.f32 %v5280, %v5508
    %v5586 = vadd.f32 %v5282, %v5510
    %v5587 = vadd.f32 %v5284, %v5512
    %v5588 = vadd.f32 %v5288, %v5516
    %v5589 = vadd.f32 %v5290, %v5518
    %v5590 = vadd.f32 %v5292, %v5520
    %v5591 = vadd.f32 %v5294, %v5522
    %v5592 = vadd.f32 %v5298, %v5526
    %v5593 = vadd.f32 %v5300, %v5528
    %v5594 = vadd.f32 %v5302, %v5530
    %v5595 = vadd.f32 %v5304, %v5532
    %v5596 = vadd.f32 %v5308, %v5536
    %v5597 = vadd.f32 %v5310, %v5538
    %v5598 = vadd.f32 %v5312, %v5540
    %v5599 = vadd.f32 %v5314, %v5542
    %v5600 = vadd.f32 %v5318, %v5546
    %v5601 = vadd.f32 %v5320, %v5548
    %v5602 = vadd.f32 %v5322, %v5550
    %v5603 = vadd.f32 %v5324, %v5552
    %v5604 = vadd.f32 %v5328, %v5556
    %v5605 = vadd.f32 %v5330, %v5558
    %v5606 = vadd.f32 %v5332, %v5560
    %v5607 = vadd.f32 %v5334, %v5562
    %v5608 = vadd.f32 %v5338, %v5566
    %v5609 = vadd.f32 %v5340, %v5568
    %v5610 = vadd.f32 %v5342, %v5570
    %v5611 = vadd.f32 %v5344, %v5572
    %v5612 = vadd.f32 %v5348, %v5576
    %v5613 = vadd.f32 %v5350, %v5578
    %v5614 = vadd.f32 %v5352, %v5580
    %v5615 = vadd.f32 %v5354, %v5582
    %v5616 = vld [vmem:[#allocation6 + $0x4] sm:$0xf]
    %v5617 = vld [vmem:[#allocation6 + $0x8] sm:$0xf]
    %v5618 = vld [vmem:[#allocation6 + $0xc] sm:$0xf]
    %v5619 = vld [vmem:[#allocation6 + $0x10] sm:$0xf]
    %v5620 = vld [vmem:[#allocation6 + $0x14] sm:$0xf]
    %v5621 = vld [vmem:[#allocation6 + $0x18] sm:$0xf]
    %v5622 = vld [vmem:[#allocation6 + $0x1c] sm:$0xf]
    %v5623 = vld [vmem:[#allocation6 + $0x20] sm:$0xf]
    %v5624 = vld [vmem:[#allocation6 + $0x24] sm:$0xf]
    %v5625 = vld [vmem:[#allocation6 + $0x28] sm:$0xf]
    %v5626 = vld [vmem:[#allocation6 + $0x2c] sm:$0xf]
    %v5627 = vld [vmem:[#allocation6 + $0x30] sm:$0xf]
    %v5628 = vld [vmem:[#allocation6 + $0x34] sm:$0xf]
    %v5629 = vld [vmem:[#allocation6 + $0x38] sm:$0xf]
    %v5630 = vld [vmem:[#allocation6 + $0x3c] sm:$0xf]
    %v5631 = vld [vmem:[#allocation6 + $0x40] sm:$0xf]
    %v5632 = vld [vmem:[#allocation6 + $0x44] sm:$0x1]
    %v5633 = vld [vmem:[#allocation2 + $0x180] sm:$0xff]
    %v5634 = vld [vmem:[#allocation2 + $0x188] sm:$0xff]
    %v5635 = vld [vmem:[#allocation2 + $0x190] sm:$0xff]
    %v5636 = vld [vmem:[#allocation2 + $0x198] sm:$0xff]
    %v5637 = vld [vmem:[#allocation2 + $0x1a0] sm:$0xff]
    %v5638 = vld [vmem:[#allocation2 + $0x1a8] sm:$0xff]
    %v5639 = vld [vmem:[#allocation2 + $0x1b0] sm:$0xff]
    %v5640 = vld [vmem:[#allocation2 + $0x1b8] sm:$0xff]
    %v5641 = vld [vmem:[#allocation2 + $0x1c0] sm:$0xff]
    %v5642 = vld [vmem:[#allocation2 + $0x1c8] sm:$0xff]
    %v5643 = vld [vmem:[#allocation2 + $0x1d0] sm:$0xff]
    %v5644 = vld [vmem:[#allocation2 + $0x1d8] sm:$0xff]
    %v5645 = vld [vmem:[#allocation2 + $0x1e0] sm:$0xff]
    %v5646 = vld [vmem:[#allocation2 + $0x1e8] sm:$0xff]
    %v5647 = vld [vmem:[#allocation2 + $0x1f0] sm:$0xff]
    %v5648 = vld [vmem:[#allocation2 + $0x1f8] sm:$0xff]
    %v5666 = vunpack.c.l.b16 %v5616
    %v5667 = vunpack.c.l.b16 %v5617
    %v5668 = vunpack.c.l.b16 %v5618
    %v5669 = vunpack.c.l.b16 %v5619
    %v5670 = vunpack.c.l.b16 %v5620
    %v5671 = vunpack.c.l.b16 %v5621
    %v5672 = vunpack.c.l.b16 %v5622
    %v5673 = vunpack.c.l.b16 %v5623
    %v5674 = vunpack.c.l.b16 %v5624
    %v5675 = vunpack.c.l.b16 %v5625
    %v5676 = vunpack.c.l.b16 %v5626
    %v5677 = vunpack.c.l.b16 %v5627
    %v5678 = vunpack.c.l.b16 %v5628
    %v5679 = vunpack.c.l.b16 %v5629
    %v5680 = vunpack.c.l.b16 %v5630
    %v5681 = vunpack.c.l.b16 %v5631
    %v5682 = vunpack.c.l.b16 %v5632
    %v5683 = vpack.c.b16 %v5667, %v5666
    %v5684 = vpack.c.b16 %v5669, %v5668
    %v5685 = vpack.c.b16 %v5671, %v5670
    %v5686 = vpack.c.b16 %v5673, %v5672
    %v5687 = vpack.c.b16 %v5675, %v5674
    %v5688 = vpack.c.b16 %v5677, %v5676
    %v5689 = vpack.c.b16 %v5679, %v5678
    %v5690 = vpack.c.b16 %v5681, %v5680
    %v5691 = vpack.c.b16 %v5682, %v5682
    %v5693 = vshrl.u32 %v5683, 16
    %v5695 = vshll.u32 %v5683, 16
    %v5697 = vrot.slane %v5695, 1
    %v5698 = vor.u32 %v5693, %v5697
    %v5700 = vshll.u32 %v5684, 16
    %v5702 = vrot.slane %v5700, 1
    %v5703 = vsel %vm2740, %v5698, %v5702
    %v5704 = vshrl.u32 %v5684, 16
    %v5706 = vor.u32 %v5704, %v5702
    %v5708 = vshll.u32 %v5685, 16
    %v5710 = vrot.slane %v5708, 1
    %v5711 = vsel %vm2740, %v5706, %v5710
    %v5712 = vshrl.u32 %v5685, 16
    %v5714 = vor.u32 %v5712, %v5710
    %v5716 = vshll.u32 %v5686, 16
    %v5718 = vrot.slane %v5716, 1
    %v5719 = vsel %vm2740, %v5714, %v5718
    %v5720 = vshrl.u32 %v5686, 16
    %v5722 = vor.u32 %v5720, %v5718
    %v5724 = vshll.u32 %v5687, 16
    %v5726 = vrot.slane %v5724, 1
    %v5727 = vsel %vm2740, %v5722, %v5726
    %v5728 = vshrl.u32 %v5687, 16
    %v5730 = vor.u32 %v5728, %v5726
    %v5732 = vshll.u32 %v5688, 16
    %v5734 = vrot.slane %v5732, 1
    %v5735 = vsel %vm2740, %v5730, %v5734
    %v5736 = vshrl.u32 %v5688, 16
    %v5738 = vor.u32 %v5736, %v5734
    %v5740 = vshll.u32 %v5689, 16
    %v5742 = vrot.slane %v5740, 1
    %v5743 = vsel %vm2740, %v5738, %v5742
    %v5744 = vshrl.u32 %v5689, 16
    %v5746 = vor.u32 %v5744, %v5742
    %v5748 = vshll.u32 %v5690, 16
    %v5750 = vrot.slane %v5748, 1
    %v5751 = vsel %vm2740, %v5746, %v5750
    %v5752 = vshrl.u32 %v5690, 16
    %v5754 = vor.u32 %v5752, %v5750
    %v5756 = vshll.u32 %v5691, 16
    %v5758 = vrot.slane %v5756, 1
    %v5759 = vsel %vm2740, %v5754, %v5758
    %v5784 = vunpack.c.l.b16 %v5633
    %v5785 = vunpack.c.h.b16 %v5633
    %v5786 = vunpack.c.l.b16 %v5634
    %v5787 = vunpack.c.h.b16 %v5634
    %v5788 = vunpack.c.l.b16 %v5635
    %v5789 = vunpack.c.h.b16 %v5635
    %v5790 = vunpack.c.l.b16 %v5636
    %v5791 = vunpack.c.h.b16 %v5636
    %v5792 = vunpack.c.l.b16 %v5637
    %v5793 = vunpack.c.h.b16 %v5637
    %v5794 = vunpack.c.l.b16 %v5638
    %v5795 = vunpack.c.h.b16 %v5638
    %v5796 = vunpack.c.l.b16 %v5639
    %v5797 = vunpack.c.h.b16 %v5639
    %v5798 = vunpack.c.l.b16 %v5640
    %v5799 = vunpack.c.h.b16 %v5640
    %v5800 = vunpack.c.l.b16 %v5641
    %v5801 = vunpack.c.h.b16 %v5641
    %v5802 = vunpack.c.l.b16 %v5642
    %v5803 = vunpack.c.h.b16 %v5642
    %v5804 = vunpack.c.l.b16 %v5643
    %v5805 = vunpack.c.h.b16 %v5643
    %v5806 = vunpack.c.l.b16 %v5644
    %v5807 = vunpack.c.h.b16 %v5644
    %v5808 = vunpack.c.l.b16 %v5645
    %v5809 = vunpack.c.h.b16 %v5645
    %v5810 = vunpack.c.l.b16 %v5646
    %v5811 = vunpack.c.h.b16 %v5646
    %v5812 = vunpack.c.l.b16 %v5647
    %v5813 = vunpack.c.h.b16 %v5647
    %v5814 = vunpack.c.l.b16 %v5648
    %v5815 = vunpack.c.h.b16 %v5648
    %v5816 = vpack.c.b16 %v5786, %v5784
    %v5817 = vpack.c.b16 %v5787, %v5785
    %v5818 = vpack.c.b16 %v5790, %v5788
    %v5819 = vpack.c.b16 %v5791, %v5789
    %v5820 = vpack.c.b16 %v5794, %v5792
    %v5821 = vpack.c.b16 %v5795, %v5793
    %v5822 = vpack.c.b16 %v5798, %v5796
    %v5823 = vpack.c.b16 %v5799, %v5797
    %v5824 = vpack.c.b16 %v5802, %v5800
    %v5825 = vpack.c.b16 %v5803, %v5801
    %v5826 = vpack.c.b16 %v5806, %v5804
    %v5827 = vpack.c.b16 %v5807, %v5805
    %v5828 = vpack.c.b16 %v5810, %v5808
    %v5829 = vpack.c.b16 %v5811, %v5809
    %v5830 = vpack.c.b16 %v5814, %v5812
    %v5831 = vpack.c.b16 %v5815, %v5813
    %5848 = vmatprep.subr.bf16.mxu0 %v5831
    %5849 = vmatpush1.bf16.msra.mxu0 %v5830
    %5850 = vmatprep.subr.bf16.mxu0 %v5829
    %5851 = vmatpush1.bf16.msra.mxu0 %v5828
    %5852 = vmatprep.subr.bf16.mxu0 %v5827
    %5853 = vmatpush1.bf16.msra.mxu0 %v5826
    %5854 = vmatprep.subr.bf16.mxu0 %v5825
    %5855 = vmatpush1.bf16.msra.mxu0 %v5824
    %5856 = vmatprep.subr.bf16.mxu0 %v5823
    %5857 = vmatpush1.bf16.msra.mxu0 %v5822
    %5858 = vmatprep.subr.bf16.mxu0 %v5821
    %5859 = vmatpush1.bf16.msra.mxu0 %v5820
    %5860 = vmatprep.subr.bf16.mxu0 %v5819
    %5861 = vmatpush1.bf16.msra.mxu0 %v5818
    %5862 = vmatprep.subr.bf16.mxu0 %v5817
    %5863 = vmatpush1.bf16.msra.mxu0 %v5816
    %5864 = vmatprep.subr.bf16.mxu0 0
    %5865 = vmatpush2.bf16.msra.mxu0 0
    %5866 = vmatprep.subr.bf16.mxu0 0
    %5867 = vmatpush2.bf16.msra.mxu0 0
    %5868 = vmatprep.subr.bf16.mxu0 0
    %5869 = vmatpush2.bf16.msra.mxu0 0
    %5870 = vmatprep.subr.bf16.mxu0 0
    %5871 = vmatpush2.bf16.msra.mxu0 0
    %5872 = vmatprep.subr.bf16.mxu0 0
    %5873 = vmatpush2.bf16.msra.mxu0 0
    %5874 = vmatprep.subr.bf16.mxu0 0
    %5875 = vmatpush2.bf16.msra.mxu0 0
    %5876 = vmatprep.subr.bf16.mxu0 0
    %5877 = vmatpush2.bf16.msra.mxu0 0
    %5878 = vmatprep.subr.bf16.mxu0 0
    %5879 = vmatpush2.bf16.msra.mxu0 0
    %5880 = vmatprep.mubr.bf16.mxu0 0
    %5881 = vmatmul.mubr.bf16.gmra.mxu0 %v5703
    %v5882 = vpop.f32.mrf.mxu0
    %v5883 = vadd.f32 0.0, %v5882
    %v5884 = vpop.f32.mrf.mxu0
    %v5885 = vadd.f32 0.0, %v5884
    %v5886 = vpop.f32.mrf.mxu0
    %v5887 = vadd.f32 0.0, %v5886
    %v5888 = vpop.f32.mrf.mxu0
    %v5889 = vadd.f32 0.0, %v5888
    %5890 = vmatprep.mubr.bf16.mxu0 0
    %5891 = vmatmul.mubr.bf16.gmra.mxu0 %v5711
    %v5892 = vpop.f32.mrf.mxu0
    %v5893 = vadd.f32 0.0, %v5892
    %v5894 = vpop.f32.mrf.mxu0
    %v5895 = vadd.f32 0.0, %v5894
    %v5896 = vpop.f32.mrf.mxu0
    %v5897 = vadd.f32 0.0, %v5896
    %v5898 = vpop.f32.mrf.mxu0
    %v5899 = vadd.f32 0.0, %v5898
    %5900 = vmatprep.mubr.bf16.mxu0 0
    %5901 = vmatmul.mubr.bf16.gmra.mxu0 %v5719
    %v5902 = vpop.f32.mrf.mxu0
    %v5903 = vadd.f32 0.0, %v5902
    %v5904 = vpop.f32.mrf.mxu0
    %v5905 = vadd.f32 0.0, %v5904
    %v5906 = vpop.f32.mrf.mxu0
    %v5907 = vadd.f32 0.0, %v5906
    %v5908 = vpop.f32.mrf.mxu0
    %v5909 = vadd.f32 0.0, %v5908
    %5910 = vmatprep.mubr.bf16.mxu0 0
    %5911 = vmatmul.mubr.bf16.gmra.mxu0 %v5727
    %v5912 = vpop.f32.mrf.mxu0
    %v5913 = vadd.f32 0.0, %v5912
    %v5914 = vpop.f32.mrf.mxu0
    %v5915 = vadd.f32 0.0, %v5914
    %v5916 = vpop.f32.mrf.mxu0
    %v5917 = vadd.f32 0.0, %v5916
    %v5918 = vpop.f32.mrf.mxu0
    %v5919 = vadd.f32 0.0, %v5918
    %5920 = vmatprep.mubr.bf16.mxu0 0
    %5921 = vmatmul.mubr.bf16.gmra.mxu0 %v5735
    %v5922 = vpop.f32.mrf.mxu0
    %v5923 = vadd.f32 0.0, %v5922
    %v5924 = vpop.f32.mrf.mxu0
    %v5925 = vadd.f32 0.0, %v5924
    %v5926 = vpop.f32.mrf.mxu0
    %v5927 = vadd.f32 0.0, %v5926
    %v5928 = vpop.f32.mrf.mxu0
    %v5929 = vadd.f32 0.0, %v5928
    %5930 = vmatprep.mubr.bf16.mxu0 0
    %5931 = vmatmul.mubr.bf16.gmra.mxu0 %v5743
    %v5932 = vpop.f32.mrf.mxu0
    %v5933 = vadd.f32 0.0, %v5932
    %v5934 = vpop.f32.mrf.mxu0
    %v5935 = vadd.f32 0.0, %v5934
    %v5936 = vpop.f32.mrf.mxu0
    %v5937 = vadd.f32 0.0, %v5936
    %v5938 = vpop.f32.mrf.mxu0
    %v5939 = vadd.f32 0.0, %v5938
    %5940 = vmatprep.mubr.bf16.mxu0 0
    %5941 = vmatmul.mubr.bf16.gmra.mxu0 %v5751
    %v5942 = vpop.f32.mrf.mxu0
    %v5943 = vadd.f32 0.0, %v5942
    %v5944 = vpop.f32.mrf.mxu0
    %v5945 = vadd.f32 0.0, %v5944
    %v5946 = vpop.f32.mrf.mxu0
    %v5947 = vadd.f32 0.0, %v5946
    %v5948 = vpop.f32.mrf.mxu0
    %v5949 = vadd.f32 0.0, %v5948
    %5950 = vmatprep.mubr.bf16.mxu0 0
    %5951 = vmatmul.mubr.bf16.gmra.mxu0 %v5759
    %v5952 = vpop.f32.mrf.mxu0
    %v5953 = vadd.f32 0.0, %v5952
    %v5954 = vpop.f32.mrf.mxu0
    %v5955 = vadd.f32 0.0, %v5954
    %v5956 = vpop.f32.mrf.mxu0
    %v5957 = vadd.f32 0.0, %v5956
    %v5958 = vpop.f32.mrf.mxu0
    %v5959 = vadd.f32 0.0, %v5958
    %5960 = vdwg.mxu0
    %v5961 = vadd.f32 %v5584, %v5883
    %v5962 = vadd.f32 %v5585, %v5885
    %v5963 = vadd.f32 %v5586, %v5887
    %v5964 = vadd.f32 %v5587, %v5889
    %v5965 = vadd.f32 %v5588, %v5893
    %v5966 = vadd.f32 %v5589, %v5895
    %v5967 = vadd.f32 %v5590, %v5897
    %v5968 = vadd.f32 %v5591, %v5899
    %v5969 = vadd.f32 %v5592, %v5903
    %v5970 = vadd.f32 %v5593, %v5905
    %v5971 = vadd.f32 %v5594, %v5907
    %v5972 = vadd.f32 %v5595, %v5909
    %v5973 = vadd.f32 %v5596, %v5913
    %v5974 = vadd.f32 %v5597, %v5915
    %v5975 = vadd.f32 %v5598, %v5917
    %v5976 = vadd.f32 %v5599, %v5919
    %v5977 = vadd.f32 %v5600, %v5923
    %v5978 = vadd.f32 %v5601, %v5925
    %v5979 = vadd.f32 %v5602, %v5927
    %v5980 = vadd.f32 %v5603, %v5929
    %v5981 = vadd.f32 %v5604, %v5933
    %v5982 = vadd.f32 %v5605, %v5935
    %v5983 = vadd.f32 %v5606, %v5937
    %v5984 = vadd.f32 %v5607, %v5939
    %v5985 = vadd.f32 %v5608, %v5943
    %v5986 = vadd.f32 %v5609, %v5945
    %v5987 = vadd.f32 %v5610, %v5947
    %v5988 = vadd.f32 %v5611, %v5949
    %v5989 = vadd.f32 %v5612, %v5953
    %v5990 = vadd.f32 %v5613, %v5955
    %v5991 = vadd.f32 %v5614, %v5957
    %v5992 = vadd.f32 %v5615, %v5959
    %v5994 = vlaneseq
    %v5995 = vshrl.u32 %v5994, 7
    %v5996 = vsub.s32 0, %v5995
    %v5997 = vrot.slane %v4793, %v5996
    %v5998 = vlaneseq
    %v5999 = vshrl.u32 %v5998, 7
    %v6000 = vsub.s32 1, %v5999
    %v6001 = vrot.slane %v4793, %v6000
    %v6004 = vadd.f32 %v5961, %v5997
    %v6005 = vadd.f32 %v5962, %v6001
    %v6006 = vadd.f32 %v5963, %v5997
    %v6007 = vadd.f32 %v5964, %v6001
    %v6008 = vadd.f32 %v5965, %v5997
    %v6009 = vadd.f32 %v5966, %v6001
    %v6010 = vadd.f32 %v5967, %v5997
    %v6011 = vadd.f32 %v5968, %v6001
    %v6012 = vadd.f32 %v5969, %v5997
    %v6013 = vadd.f32 %v5970, %v6001
    %v6014 = vadd.f32 %v5971, %v5997
    %v6015 = vadd.f32 %v5972, %v6001
    %v6016 = vadd.f32 %v5973, %v5997
    %v6017 = vadd.f32 %v5974, %v6001
    %v6018 = vadd.f32 %v5975, %v5997
    %v6019 = vadd.f32 %v5976, %v6001
    %v6020 = vadd.f32 %v5977, %v5997
    %v6021 = vadd.f32 %v5978, %v6001
    %v6022 = vadd.f32 %v5979, %v5997
    %v6023 = vadd.f32 %v5980, %v6001
    %v6024 = vadd.f32 %v5981, %v5997
    %v6025 = vadd.f32 %v5982, %v6001
    %v6026 = vadd.f32 %v5983, %v5997
    %v6027 = vadd.f32 %v5984, %v6001
    %v6028 = vadd.f32 %v5985, %v5997
    %v6029 = vadd.f32 %v5986, %v6001
    %v6030 = vadd.f32 %v5987, %v5997
    %v6031 = vadd.f32 %v5988, %v6001
    %v6032 = vadd.f32 %v5989, %v5997
    %v6033 = vadd.f32 %v5990, %v6001
    %v6034 = vadd.f32 %v5991, %v5997
    %v6035 = vadd.f32 %v5992, %v6001
    %v6036 = vmax.f32 %v6004, 0.0
    %v6037 = vmax.f32 %v6005, 0.0
    %v6038 = vmax.f32 %v6006, 0.0
    %v6039 = vmax.f32 %v6007, 0.0
    %v6040 = vmax.f32 %v6008, 0.0
    %v6041 = vmax.f32 %v6009, 0.0
    %v6042 = vmax.f32 %v6010, 0.0
    %v6043 = vmax.f32 %v6011, 0.0
    %v6044 = vmax.f32 %v6012, 0.0
    %v6045 = vmax.f32 %v6013, 0.0
    %v6046 = vmax.f32 %v6014, 0.0
    %v6047 = vmax.f32 %v6015, 0.0
    %v6048 = vmax.f32 %v6016, 0.0
    %v6049 = vmax.f32 %v6017, 0.0
    %v6050 = vmax.f32 %v6018, 0.0
    %v6051 = vmax.f32 %v6019, 0.0
    %v6052 = vmax.f32 %v6020, 0.0
    %v6053 = vmax.f32 %v6021, 0.0
    %v6054 = vmax.f32 %v6022, 0.0
    %v6055 = vmax.f32 %v6023, 0.0
    %v6056 = vmax.f32 %v6024, 0.0
    %v6057 = vmax.f32 %v6025, 0.0
    %v6058 = vmax.f32 %v6026, 0.0
    %v6059 = vmax.f32 %v6027, 0.0
    %v6060 = vmax.f32 %v6028, 0.0
    %v6061 = vmax.f32 %v6029, 0.0
    %v6062 = vmax.f32 %v6030, 0.0
    %v6063 = vmax.f32 %v6031, 0.0
    %v6064 = vmax.f32 %v6032, 0.0
    %v6065 = vmax.f32 %v6033, 0.0
    %v6066 = vmax.f32 %v6034, 0.0
    %v6067 = vmax.f32 %v6035, 0.0
    %v6068 = vpack.c.bf16 %v6038, %v6036
    %v6069 = vpack.c.bf16 %v6039, %v6037
    %v6070 = vpack.c.bf16 %v6042, %v6040
    %v6071 = vpack.c.bf16 %v6043, %v6041
    %v6072 = vpack.c.bf16 %v6046, %v6044
    %v6073 = vpack.c.bf16 %v6047, %v6045
    %v6074 = vpack.c.bf16 %v6050, %v6048
    %v6075 = vpack.c.bf16 %v6051, %v6049
    %v6076 = vpack.c.bf16 %v6054, %v6052
    %v6077 = vpack.c.bf16 %v6055, %v6053
    %v6078 = vpack.c.bf16 %v6058, %v6056
    %v6079 = vpack.c.bf16 %v6059, %v6057
    %v6080 = vpack.c.bf16 %v6062, %v6060
    %v6081 = vpack.c.bf16 %v6063, %v6061
    %v6082 = vpack.c.bf16 %v6066, %v6064
    %v6083 = vpack.c.bf16 %v6067, %v6065
    %v6100 = vunpack.c.l.b16 %v6068
    %v6101 = vunpack.c.l.b16 %v6069
    %v6102 = vunpack.c.h.b16 %v6068
    %v6103 = vunpack.c.h.b16 %v6069
    %v6104 = vunpack.c.l.b16 %v6070
    %v6105 = vunpack.c.l.b16 %v6071
    %v6106 = vunpack.c.h.b16 %v6070
    %v6107 = vunpack.c.h.b16 %v6071
    %v6108 = vunpack.c.l.b16 %v6072
    %v6109 = vunpack.c.l.b16 %v6073
    %v6110 = vunpack.c.h.b16 %v6072
    %v6111 = vunpack.c.h.b16 %v6073
    %v6112 = vunpack.c.l.b16 %v6074
    %v6113 = vunpack.c.l.b16 %v6075
    %v6114 = vunpack.c.h.b16 %v6074
    %v6115 = vunpack.c.h.b16 %v6075
    %v6116 = vunpack.c.l.b16 %v6076
    %v6117 = vunpack.c.l.b16 %v6077
    %v6118 = vunpack.c.h.b16 %v6076
    %v6119 = vunpack.c.h.b16 %v6077
    %v6120 = vunpack.c.l.b16 %v6078
    %v6121 = vunpack.c.l.b16 %v6079
    %v6122 = vunpack.c.h.b16 %v6078
    %v6123 = vunpack.c.h.b16 %v6079
    %v6124 = vunpack.c.l.b16 %v6080
    %v6125 = vunpack.c.l.b16 %v6081
    %v6126 = vunpack.c.h.b16 %v6080
    %v6127 = vunpack.c.h.b16 %v6081
    %v6128 = vunpack.c.l.b16 %v6082
    %v6129 = vunpack.c.l.b16 %v6083
    %v6130 = vunpack.c.h.b16 %v6082
    %v6131 = vunpack.c.h.b16 %v6083
    %v6132 = vpack.c.b16 %v6101, %v6100
    %v6133 = vpack.c.b16 %v6103, %v6102
    %v6134 = vpack.c.b16 %v6105, %v6104
    %v6135 = vpack.c.b16 %v6107, %v6106
    %v6136 = vpack.c.b16 %v6109, %v6108
    %v6137 = vpack.c.b16 %v6111, %v6110
    %v6138 = vpack.c.b16 %v6113, %v6112
    %v6139 = vpack.c.b16 %v6115, %v6114
    %v6140 = vpack.c.b16 %v6117, %v6116
    %v6141 = vpack.c.b16 %v6119, %v6118
    %v6142 = vpack.c.b16 %v6121, %v6120
    %v6143 = vpack.c.b16 %v6123, %v6122
    %v6144 = vpack.c.b16 %v6125, %v6124
    %v6145 = vpack.c.b16 %v6127, %v6126
    %v6146 = vpack.c.b16 %v6129, %v6128
    %v6147 = vpack.c.b16 %v6131, %v6130
    %6164 = vst [vmem:[#allocation7] sm:$0xff] %v6132
    %6165 = vst [vmem:[#allocation7 + $0x8] sm:$0xff] %v6133
    %6166 = vst [vmem:[#allocation7 + $0x10] sm:$0xff] %v6134
    %6167 = vst [vmem:[#allocation7 + $0x18] sm:$0xff] %v6135
    %6168 = vst [vmem:[#allocation7 + $0x20] sm:$0xff] %v6136
    %6169 = vst [vmem:[#allocation7 + $0x28] sm:$0xff] %v6137
    %6170 = vst [vmem:[#allocation7 + $0x30] sm:$0xff] %v6138
    %6171 = vst [vmem:[#allocation7 + $0x38] sm:$0xff] %v6139
    %6172 = vst [vmem:[#allocation7 + $0x40] sm:$0xff] %v6140
    %6173 = vst [vmem:[#allocation7 + $0x48] sm:$0xff] %v6141
    %6174 = vst [vmem:[#allocation7 + $0x50] sm:$0xff] %v6142
    %6175 = vst [vmem:[#allocation7 + $0x58] sm:$0xff] %v6143
    %6176 = vst [vmem:[#allocation7 + $0x60] sm:$0xff] %v6144
    %6177 = vst [vmem:[#allocation7 + $0x68] sm:$0xff] %v6145
    %6178 = vst [vmem:[#allocation7 + $0x70] sm:$0xff] %v6146
    %6179 = vst [vmem:[#allocation7 + $0x78] sm:$0xff] %v6147
    %6180 = vst [vmem:[#allocation7 + $0x80] sm:$0xff] 0
    %6181 = vst [vmem:[#allocation7 + $0x88] sm:$0xff] 0
    %v6182 = vld [vmem:[#allocation7] sm:$0xff]
    %v6183 = vld [vmem:[#allocation7 + $0x8] sm:$0xff]
    %v6184 = vld [vmem:[#allocation7 + $0x10] sm:$0xff]
    %v6185 = vld [vmem:[#allocation7 + $0x18] sm:$0xff]
    %v6186 = vld [vmem:[#allocation7 + $0x20] sm:$0xff]
    %v6187 = vld [vmem:[#allocation7 + $0x28] sm:$0xff]
    %v6188 = vld [vmem:[#allocation7 + $0x30] sm:$0xff]
    %v6189 = vld [vmem:[#allocation7 + $0x38] sm:$0xff]
    %v6190 = vld [vmem:[#allocation7 + $0x40] sm:$0xff]
    %v6191 = vld [vmem:[#allocation7 + $0x48] sm:$0xff]
    %v6192 = vld [vmem:[#allocation7 + $0x50] sm:$0xff]
    %v6193 = vld [vmem:[#allocation7 + $0x58] sm:$0xff]
    %v6194 = vld [vmem:[#allocation7 + $0x60] sm:$0xff]
    %v6195 = vld [vmem:[#allocation7 + $0x68] sm:$0xff]
    %v6196 = vld [vmem:[#allocation7 + $0x70] sm:$0xff]
    %v6197 = vld [vmem:[#allocation7 + $0x78] sm:$0xff]
    %v6198 = vld [vmem:[#allocation7 + $0x80] sm:$0x11]
    %v6200 = vshrl.u32 %v6182, 16
    %v6202 = vrot.slane %v6200, 4
    %v6203 = vshll.u32 %v6182, 16
    %v6205 = vrot.slane %v6203, 5
    %v6206 = vor.u32 %v6202, %v6205
    %v6207 = vrot.slane %v6206, 4
    %v6209 = vshll.u32 %v6183, 16
    %v6211 = vrot.slane %v6209, 5
    %v6212 = vsel %vm986, %v6207, %v6211
    %v6213 = vshrl.u32 %v6183, 16
    %v6215 = vrot.slane %v6213, 4
    %v6216 = vor.u32 %v6215, %v6211
    %v6217 = vrot.slane %v6216, 4
    %v6219 = vshll.u32 %v6184, 16
    %v6221 = vrot.slane %v6219, 5
    %v6222 = vsel %vm986, %v6217, %v6221
    %v6223 = vshrl.u32 %v6184, 16
    %v6225 = vrot.slane %v6223, 4
    %v6226 = vor.u32 %v6225, %v6221
    %v6227 = vrot.slane %v6226, 4
    %v6229 = vshll.u32 %v6185, 16
    %v6231 = vrot.slane %v6229, 5
    %v6232 = vsel %vm986, %v6227, %v6231
    %v6233 = vshrl.u32 %v6185, 16
    %v6235 = vrot.slane %v6233, 4
    %v6236 = vor.u32 %v6235, %v6231
    %v6237 = vrot.slane %v6236, 4
    %v6239 = vshll.u32 %v6186, 16
    %v6241 = vrot.slane %v6239, 5
    %v6242 = vsel %vm986, %v6237, %v6241
    %v6243 = vshrl.u32 %v6186, 16
    %v6245 = vrot.slane %v6243, 4
    %v6246 = vor.u32 %v6245, %v6241
    %v6247 = vrot.slane %v6246, 4
    %v6249 = vshll.u32 %v6187, 16
    %v6251 = vrot.slane %v6249, 5
    %v6252 = vsel %vm986, %v6247, %v6251
    %v6253 = vshrl.u32 %v6187, 16
    %v6255 = vrot.slane %v6253, 4
    %v6256 = vor.u32 %v6255, %v6251
    %v6257 = vrot.slane %v6256, 4
    %v6259 = vshll.u32 %v6188, 16
    %v6261 = vrot.slane %v6259, 5
    %v6262 = vsel %vm986, %v6257, %v6261
    %v6263 = vshrl.u32 %v6188, 16
    %v6265 = vrot.slane %v6263, 4
    %v6266 = vor.u32 %v6265, %v6261
    %v6267 = vrot.slane %v6266, 4
    %v6269 = vshll.u32 %v6189, 16
    %v6271 = vrot.slane %v6269, 5
    %v6272 = vsel %vm986, %v6267, %v6271
    %v6273 = vshrl.u32 %v6189, 16
    %v6275 = vrot.slane %v6273, 4
    %v6276 = vor.u32 %v6275, %v6271
    %v6277 = vrot.slane %v6276, 4
    %v6279 = vshll.u32 %v6190, 16
    %v6281 = vrot.slane %v6279, 5
    %v6282 = vsel %vm986, %v6277, %v6281
    %v6283 = vshrl.u32 %v6190, 16
    %v6285 = vrot.slane %v6283, 4
    %v6286 = vor.u32 %v6285, %v6281
    %v6287 = vrot.slane %v6286, 4
    %v6289 = vshll.u32 %v6191, 16
    %v6291 = vrot.slane %v6289, 5
    %v6292 = vsel %vm986, %v6287, %v6291
    %v6293 = vshrl.u32 %v6191, 16
    %v6295 = vrot.slane %v6293, 4
    %v6296 = vor.u32 %v6295, %v6291
    %v6297 = vrot.slane %v6296, 4
    %v6299 = vshll.u32 %v6192, 16
    %v6301 = vrot.slane %v6299, 5
    %v6302 = vsel %vm986, %v6297, %v6301
    %v6303 = vshrl.u32 %v6192, 16
    %v6305 = vrot.slane %v6303, 4
    %v6306 = vor.u32 %v6305, %v6301
    %v6307 = vrot.slane %v6306, 4
    %v6309 = vshll.u32 %v6193, 16
    %v6311 = vrot.slane %v6309, 5
    %v6312 = vsel %vm986, %v6307, %v6311
    %v6313 = vshrl.u32 %v6193, 16
    %v6315 = vrot.slane %v6313, 4
    %v6316 = vor.u32 %v6315, %v6311
    %v6317 = vrot.slane %v6316, 4
    %v6319 = vshll.u32 %v6194, 16
    %v6321 = vrot.slane %v6319, 5
    %v6322 = vsel %vm986, %v6317, %v6321
    %v6323 = vshrl.u32 %v6194, 16
    %v6325 = vrot.slane %v6323, 4
    %v6326 = vor.u32 %v6325, %v6321
    %v6327 = vrot.slane %v6326, 4
    %v6329 = vshll.u32 %v6195, 16
    %v6331 = vrot.slane %v6329, 5
    %v6332 = vsel %vm986, %v6327, %v6331
    %v6333 = vshrl.u32 %v6195, 16
    %v6335 = vrot.slane %v6333, 4
    %v6336 = vor.u32 %v6335, %v6331
    %v6337 = vrot.slane %v6336, 4
    %v6339 = vshll.u32 %v6196, 16
    %v6341 = vrot.slane %v6339, 5
    %v6342 = vsel %vm986, %v6337, %v6341
    %v6343 = vshrl.u32 %v6196, 16
    %v6345 = vrot.slane %v6343, 4
    %v6346 = vor.u32 %v6345, %v6341
    %v6347 = vrot.slane %v6346, 4
    %v6349 = vshll.u32 %v6197, 16
    %v6351 = vrot.slane %v6349, 5
    %v6352 = vsel %vm986, %v6347, %v6351
    %v6353 = vshrl.u32 %v6197, 16
    %v6355 = vrot.slane %v6353, 4
    %v6356 = vor.u32 %v6355, %v6351
    %v6357 = vrot.slane %v6356, 4
    %v6359 = vshll.u32 %v6198, 16
    %v6361 = vrot.slane %v6359, 5
    %v6362 = vsel %vm986, %v6357, %v6361
    %v6379 = vmax.bf16 %v6182, %v6212
    %v6380 = vmax.bf16 %v6183, %v6222
    %v6381 = vmax.bf16 %v6184, %v6232
    %v6382 = vmax.bf16 %v6185, %v6242
    %v6383 = vmax.bf16 %v6186, %v6252
    %v6384 = vmax.bf16 %v6187, %v6262
    %v6385 = vmax.bf16 %v6188, %v6272
    %v6386 = vmax.bf16 %v6189, %v6282
    %v6387 = vmax.bf16 %v6190, %v6292
    %v6388 = vmax.bf16 %v6191, %v6302
    %v6389 = vmax.bf16 %v6192, %v6312
    %v6390 = vmax.bf16 %v6193, %v6322
    %v6391 = vmax.bf16 %v6194, %v6332
    %v6392 = vmax.bf16 %v6195, %v6342
    %v6393 = vmax.bf16 %v6196, %v6352
    %v6394 = vmax.bf16 %v6197, %v6362
    %v6395 = vld [vmem:[#allocation7 + $0x80] sm:$0xff]
    %v6396 = vld [vmem:[#allocation7 + $0x8] sm:$0xff]
    %v6397 = vld [vmem:[#allocation7 + $0x10] sm:$0xff]
    %v6398 = vld [vmem:[#allocation7 + $0x18] sm:$0xff]
    %v6399 = vld [vmem:[#allocation7 + $0x20] sm:$0xff]
    %v6400 = vld [vmem:[#allocation7 + $0x28] sm:$0xff]
    %v6401 = vld [vmem:[#allocation7 + $0x30] sm:$0xff]
    %v6402 = vld [vmem:[#allocation7 + $0x38] sm:$0xff]
    %v6403 = vld [vmem:[#allocation7 + $0x40] sm:$0xff]
    %v6404 = vld [vmem:[#allocation7 + $0x48] sm:$0xff]
    %v6405 = vld [vmem:[#allocation7 + $0x50] sm:$0xff]
    %v6406 = vld [vmem:[#allocation7 + $0x58] sm:$0xff]
    %v6407 = vld [vmem:[#allocation7 + $0x60] sm:$0xff]
    %v6408 = vld [vmem:[#allocation7 + $0x68] sm:$0xff]
    %v6409 = vld [vmem:[#allocation7 + $0x70] sm:$0xff]
    %v6410 = vld [vmem:[#allocation7 + $0x78] sm:$0xff]
    %v6411 = vld [vmem:[#allocation7 + $0x80] sm:$0xff]
    %v6412 = vld [vmem:[#allocation7 + $0x88] sm:$0x11]
    %v6414 = vshrl.u32 %v6396, 16
    %v6416 = vrot.slane %v6414, 4
    %v6417 = vshll.u32 %v6396, 16
    %v6419 = vrot.slane %v6417, 5
    %v6420 = vor.u32 %v6416, %v6419
    %v6421 = vrot.slane %v6420, 4
    %v6423 = vshll.u32 %v6397, 16
    %v6425 = vrot.slane %v6423, 5
    %v6426 = vsel %vm986, %v6421, %v6425
    %v6427 = vshrl.u32 %v6397, 16
    %v6429 = vrot.slane %v6427, 4
    %v6430 = vor.u32 %v6429, %v6425
    %v6431 = vrot.slane %v6430, 4
    %v6433 = vshll.u32 %v6398, 16
    %v6435 = vrot.slane %v6433, 5
    %v6436 = vsel %vm986, %v6431, %v6435
    %v6437 = vshrl.u32 %v6398, 16
    %v6439 = vrot.slane %v6437, 4
    %v6440 = vor.u32 %v6439, %v6435
    %v6441 = vrot.slane %v6440, 4
    %v6443 = vshll.u32 %v6399, 16
    %v6445 = vrot.slane %v6443, 5
    %v6446 = vsel %vm986, %v6441, %v6445
    %v6447 = vshrl.u32 %v6399, 16
    %v6449 = vrot.slane %v6447, 4
    %v6450 = vor.u32 %v6449, %v6445
    %v6451 = vrot.slane %v6450, 4
    %v6453 = vshll.u32 %v6400, 16
    %v6455 = vrot.slane %v6453, 5
    %v6456 = vsel %vm986, %v6451, %v6455
    %v6457 = vshrl.u32 %v6400, 16
    %v6459 = vrot.slane %v6457, 4
    %v6460 = vor.u32 %v6459, %v6455
    %v6461 = vrot.slane %v6460, 4
    %v6463 = vshll.u32 %v6401, 16
    %v6465 = vrot.slane %v6463, 5
    %v6466 = vsel %vm986, %v6461, %v6465
    %v6467 = vshrl.u32 %v6401, 16
    %v6469 = vrot.slane %v6467, 4
    %v6470 = vor.u32 %v6469, %v6465
    %v6471 = vrot.slane %v6470, 4
    %v6473 = vshll.u32 %v6402, 16
    %v6475 = vrot.slane %v6473, 5
    %v6476 = vsel %vm986, %v6471, %v6475
    %v6477 = vshrl.u32 %v6402, 16
    %v6479 = vrot.slane %v6477, 4
    %v6480 = vor.u32 %v6479, %v6475
    %v6481 = vrot.slane %v6480, 4
    %v6483 = vshll.u32 %v6403, 16
    %v6485 = vrot.slane %v6483, 5
    %v6486 = vsel %vm986, %v6481, %v6485
    %v6487 = vshrl.u32 %v6403, 16
    %v6489 = vrot.slane %v6487, 4
    %v6490 = vor.u32 %v6489, %v6485
    %v6491 = vrot.slane %v6490, 4
    %v6493 = vshll.u32 %v6404, 16
    %v6495 = vrot.slane %v6493, 5
    %v6496 = vsel %vm986, %v6491, %v6495
    %v6497 = vshrl.u32 %v6404, 16
    %v6499 = vrot.slane %v6497, 4
    %v6500 = vor.u32 %v6499, %v6495
    %v6501 = vrot.slane %v6500, 4
    %v6503 = vshll.u32 %v6405, 16
    %v6505 = vrot.slane %v6503, 5
    %v6506 = vsel %vm986, %v6501, %v6505
    %v6507 = vshrl.u32 %v6405, 16
    %v6509 = vrot.slane %v6507, 4
    %v6510 = vor.u32 %v6509, %v6505
    %v6511 = vrot.slane %v6510, 4
    %v6513 = vshll.u32 %v6406, 16
    %v6515 = vrot.slane %v6513, 5
    %v6516 = vsel %vm986, %v6511, %v6515
    %v6517 = vshrl.u32 %v6406, 16
    %v6519 = vrot.slane %v6517, 4
    %v6520 = vor.u32 %v6519, %v6515
    %v6521 = vrot.slane %v6520, 4
    %v6523 = vshll.u32 %v6407, 16
    %v6525 = vrot.slane %v6523, 5
    %v6526 = vsel %vm986, %v6521, %v6525
    %v6527 = vshrl.u32 %v6407, 16
    %v6529 = vrot.slane %v6527, 4
    %v6530 = vor.u32 %v6529, %v6525
    %v6531 = vrot.slane %v6530, 4
    %v6533 = vshll.u32 %v6408, 16
    %v6535 = vrot.slane %v6533, 5
    %v6536 = vsel %vm986, %v6531, %v6535
    %v6537 = vshrl.u32 %v6408, 16
    %v6539 = vrot.slane %v6537, 4
    %v6540 = vor.u32 %v6539, %v6535
    %v6541 = vrot.slane %v6540, 4
    %v6543 = vshll.u32 %v6409, 16
    %v6545 = vrot.slane %v6543, 5
    %v6546 = vsel %vm986, %v6541, %v6545
    %v6547 = vshrl.u32 %v6409, 16
    %v6549 = vrot.slane %v6547, 4
    %v6550 = vor.u32 %v6549, %v6545
    %v6551 = vrot.slane %v6550, 4
    %v6553 = vshll.u32 %v6410, 16
    %v6555 = vrot.slane %v6553, 5
    %v6556 = vsel %vm986, %v6551, %v6555
    %v6557 = vshrl.u32 %v6410, 16
    %v6559 = vrot.slane %v6557, 4
    %v6560 = vor.u32 %v6559, %v6555
    %v6561 = vrot.slane %v6560, 4
    %v6563 = vshll.u32 %v6411, 16
    %v6565 = vrot.slane %v6563, 5
    %v6566 = vsel %vm986, %v6561, %v6565
    %v6567 = vshrl.u32 %v6411, 16
    %v6569 = vrot.slane %v6567, 4
    %v6570 = vor.u32 %v6569, %v6565
    %v6571 = vrot.slane %v6570, 4
    %v6573 = vshll.u32 %v6412, 16
    %v6575 = vrot.slane %v6573, 5
    %v6576 = vsel %vm986, %v6571, %v6575
    %v6593 = vmax.bf16 %v6183, %v6426
    %v6594 = vmax.bf16 %v6184, %v6436
    %v6595 = vmax.bf16 %v6185, %v6446
    %v6596 = vmax.bf16 %v6186, %v6456
    %v6597 = vmax.bf16 %v6187, %v6466
    %v6598 = vmax.bf16 %v6188, %v6476
    %v6599 = vmax.bf16 %v6189, %v6486
    %v6600 = vmax.bf16 %v6190, %v6496
    %v6601 = vmax.bf16 %v6191, %v6506
    %v6602 = vmax.bf16 %v6192, %v6516
    %v6603 = vmax.bf16 %v6193, %v6526
    %v6604 = vmax.bf16 %v6194, %v6536
    %v6605 = vmax.bf16 %v6195, %v6546
    %v6606 = vmax.bf16 %v6196, %v6556
    %v6607 = vmax.bf16 %v6197, %v6566
    %v6608 = vmax.bf16 %v6395, %v6576
    %v6609 = vmax.bf16 %v6379, %v6593
    %v6610 = vmax.bf16 %v6380, %v6594
    %v6611 = vmax.bf16 %v6381, %v6595
    %v6612 = vmax.bf16 %v6382, %v6596
    %v6613 = vmax.bf16 %v6383, %v6597
    %v6614 = vmax.bf16 %v6384, %v6598
    %v6615 = vmax.bf16 %v6385, %v6599
    %v6616 = vmax.bf16 %v6386, %v6600
    %v6617 = vmax.bf16 %v6387, %v6601
    %v6618 = vmax.bf16 %v6388, %v6602
    %v6619 = vmax.bf16 %v6389, %v6603
    %v6620 = vmax.bf16 %v6390, %v6604
    %v6621 = vmax.bf16 %v6391, %v6605
    %v6622 = vmax.bf16 %v6392, %v6606
    %v6623 = vmax.bf16 %v6393, %v6607
    %v6624 = vmax.bf16 %v6394, %v6608
    %v6625 = vld [vmem:[#allocation11 + $0xd8] sm:$0xf]
    %v6626 = vld [vmem:[#allocation11 + $0xdc] sm:$0xf]
    %v6627 = vld [vmem:[#allocation11 + $0xe0] sm:$0xf]
    %v6628 = vld [vmem:[#allocation11 + $0xe4] sm:$0xf]
    %v6629 = vld [vmem:[#allocation11 + $0xe8] sm:$0xf]
    %v6630 = vld [vmem:[#allocation11 + $0xec] sm:$0xf]
    %v6631 = vld [vmem:[#allocation11 + $0xf0] sm:$0xf]
    %v6632 = vld [vmem:[#allocation11 + $0xf4] sm:$0xf]
    %v6633 = vld [vmem:[#allocation11 + $0xf8] sm:$0xf]
    %v6634 = vld [vmem:[#allocation11 + $0xfc] sm:$0xf]
    %v6645 = vunpack.c.l.b16 %v6625
    %v6646 = vunpack.c.l.b16 %v6626
    %v6647 = vunpack.c.l.b16 %v6627
    %v6648 = vunpack.c.l.b16 %v6628
    %v6649 = vunpack.c.l.b16 %v6629
    %v6650 = vunpack.c.l.b16 %v6630
    %v6651 = vunpack.c.l.b16 %v6631
    %v6652 = vunpack.c.l.b16 %v6632
    %v6653 = vunpack.c.l.b16 %v6633
    %v6654 = vunpack.c.l.b16 %v6634
    %v6655 = vpack.c.b16 %v6646, %v6645
    %v6656 = vpack.c.b16 %v6648, %v6647
    %v6657 = vpack.c.b16 %v6650, %v6649
    %v6658 = vpack.c.b16 %v6652, %v6651
    %v6659 = vpack.c.b16 %v6654, %v6653
    %v6681 = vunpack.c.l.b16 %v6609
    %v6682 = vunpack.c.h.b16 %v6609
    %v6683 = vunpack.c.l.b16 %v6610
    %v6684 = vunpack.c.h.b16 %v6610
    %v6685 = vunpack.c.l.b16 %v6611
    %v6686 = vunpack.c.h.b16 %v6611
    %v6687 = vunpack.c.l.b16 %v6612
    %v6688 = vunpack.c.h.b16 %v6612
    %v6689 = vunpack.c.l.b16 %v6613
    %v6690 = vunpack.c.h.b16 %v6613
    %v6691 = vunpack.c.l.b16 %v6614
    %v6692 = vunpack.c.h.b16 %v6614
    %v6693 = vunpack.c.l.b16 %v6615
    %v6694 = vunpack.c.h.b16 %v6615
    %v6695 = vunpack.c.l.b16 %v6616
    %v6696 = vunpack.c.h.b16 %v6616
    %v6697 = vunpack.c.l.b16 %v6617
    %v6698 = vunpack.c.h.b16 %v6617
    %v6699 = vunpack.c.l.b16 %v6618
    %v6700 = vunpack.c.h.b16 %v6618
    %v6701 = vunpack.c.l.b16 %v6619
    %v6702 = vunpack.c.h.b16 %v6619
    %v6703 = vunpack.c.l.b16 %v6620
    %v6704 = vunpack.c.h.b16 %v6620
    %v6705 = vunpack.c.l.b16 %v6621
    %v6706 = vunpack.c.h.b16 %v6621
    %v6707 = vunpack.c.l.b16 %v6622
    %v6708 = vunpack.c.h.b16 %v6622
    %v6709 = vunpack.c.l.b16 %v6623
    %v6710 = vunpack.c.h.b16 %v6623
    %v6711 = vunpack.c.l.b16 %v6624
    %v6712 = vunpack.c.h.b16 %v6624
    %v6713 = vpack.c.b16 %v6683, %v6681
    %v6714 = vpack.c.b16 %v6684, %v6682
    %v6715 = vpack.c.b16 %v6687, %v6685
    %v6716 = vpack.c.b16 %v6688, %v6686
    %v6717 = vpack.c.b16 %v6691, %v6689
    %v6718 = vpack.c.b16 %v6692, %v6690
    %v6719 = vpack.c.b16 %v6695, %v6693
    %v6720 = vpack.c.b16 %v6696, %v6694
    %v6721 = vpack.c.b16 %v6699, %v6697
    %v6722 = vpack.c.b16 %v6700, %v6698
    %v6723 = vpack.c.b16 %v6703, %v6701
    %v6724 = vpack.c.b16 %v6704, %v6702
    %v6725 = vpack.c.b16 %v6707, %v6705
    %v6726 = vpack.c.b16 %v6708, %v6706
    %v6727 = vpack.c.b16 %v6711, %v6709
    %v6728 = vpack.c.b16 %v6712, %v6710
    %6745 = vmatprep.subr.bf16.mxu0 %v6728
    %6746 = vmatpush1.bf16.msra.mxu0 %v6727
    %6747 = vmatprep.subr.bf16.mxu0 %v6726
    %6748 = vmatpush1.bf16.msra.mxu0 %v6725
    %6749 = vmatprep.subr.bf16.mxu0 %v6724
    %6750 = vmatpush1.bf16.msra.mxu0 %v6723
    %6751 = vmatprep.subr.bf16.mxu0 %v6722
    %6752 = vmatpush1.bf16.msra.mxu0 %v6721
    %6753 = vmatprep.subr.bf16.mxu0 %v6720
    %6754 = vmatpush1.bf16.msra.mxu0 %v6719
    %6755 = vmatprep.subr.bf16.mxu0 %v6718
    %6756 = vmatpush1.bf16.msra.mxu0 %v6717
    %6757 = vmatprep.subr.bf16.mxu0 %v6716
    %6758 = vmatpush1.bf16.msra.mxu0 %v6715
    %6759 = vmatprep.subr.bf16.mxu0 %v6714
    %6760 = vmatpush1.bf16.msra.mxu0 %v6713
    %6761 = vmatprep.subr.bf16.mxu0 0
    %6762 = vmatpush2.bf16.msra.mxu0 0
    %6763 = vmatprep.subr.bf16.mxu0 0
    %6764 = vmatpush2.bf16.msra.mxu0 0
    %6765 = vmatprep.subr.bf16.mxu0 0
    %6766 = vmatpush2.bf16.msra.mxu0 0
    %6767 = vmatprep.subr.bf16.mxu0 0
    %6768 = vmatpush2.bf16.msra.mxu0 0
    %6769 = vmatprep.subr.bf16.mxu0 0
    %6770 = vmatpush2.bf16.msra.mxu0 0
    %6771 = vmatprep.subr.bf16.mxu0 0
    %6772 = vmatpush2.bf16.msra.mxu0 0
    %6773 = vmatprep.subr.bf16.mxu0 0
    %6774 = vmatpush2.bf16.msra.mxu0 0
    %6775 = vmatprep.subr.bf16.mxu0 0
    %6776 = vmatpush2.bf16.msra.mxu0 0
    %6777 = vmatprep.mubr.bf16.mxu0 0
    %6778 = vmatmul.mubr.bf16.gmra.mxu0 %v6655
    %v6779 = vpop.f32.mrf.mxu0
    %v6780 = vadd.f32 0.0, %v6779
    %v6781 = vpop.f32.mrf.mxu0
    %v6782 = vadd.f32 0.0, %v6781
    %v6783 = vpop.f32.mrf.mxu0
    %v6784 = vadd.f32 0.0, %v6783
    %v6785 = vpop.f32.mrf.mxu0
    %v6786 = vadd.f32 0.0, %v6785
    %6787 = vmatprep.mubr.bf16.mxu0 0
    %6788 = vmatmul.mubr.bf16.gmra.mxu0 %v6656
    %v6789 = vpop.f32.mrf.mxu0
    %v6790 = vadd.f32 0.0, %v6789
    %v6791 = vpop.f32.mrf.mxu0
    %v6792 = vadd.f32 0.0, %v6791
    %v6793 = vpop.f32.mrf.mxu0
    %v6794 = vadd.f32 0.0, %v6793
    %v6795 = vpop.f32.mrf.mxu0
    %v6796 = vadd.f32 0.0, %v6795
    %6797 = vmatprep.mubr.bf16.mxu0 0
    %6798 = vmatmul.mubr.bf16.gmra.mxu0 %v6657
    %v6799 = vpop.f32.mrf.mxu0
    %v6800 = vadd.f32 0.0, %v6799
    %v6801 = vpop.f32.mrf.mxu0
    %v6802 = vadd.f32 0.0, %v6801
    %v6803 = vpop.f32.mrf.mxu0
    %v6804 = vadd.f32 0.0, %v6803
    %v6805 = vpop.f32.mrf.mxu0
    %v6806 = vadd.f32 0.0, %v6805
    %6807 = vmatprep.mubr.bf16.mxu0 0
    %6808 = vmatmul.mubr.bf16.gmra.mxu0 %v6658
    %v6809 = vpop.f32.mrf.mxu0
    %v6810 = vadd.f32 0.0, %v6809
    %v6811 = vpop.f32.mrf.mxu0
    %v6812 = vadd.f32 0.0, %v6811
    %v6813 = vpop.f32.mrf.mxu0
    %v6814 = vadd.f32 0.0, %v6813
    %v6815 = vpop.f32.mrf.mxu0
    %v6816 = vadd.f32 0.0, %v6815
    %6817 = vmatprep.mubr.bf16.mxu0 0
    %6818 = vmatmul.mubr.bf16.gmra.mxu0 %v6659
    %v6819 = vpop.f32.mrf.mxu0
    %v6820 = vadd.f32 0.0, %v6819
    %v6821 = vpop.f32.mrf.mxu0
    %v6822 = vadd.f32 0.0, %v6821
    %v6823 = vpop.f32.mrf.mxu0
    %v6824 = vpop.f32.mrf.mxu0
    %6825 = vdwg.mxu0
    %s6826 = smul.u32 4, 288
    %s6827 = smul.u32 %s6826, 2
    %s6828 = sshll.u32 %s6827, 4
    %6829 = dma.done %s72, %s6828
    %s6830 = scalar_lea.vmem [#allocation9], 19
    %v6831 = vld [vmem:[%s6830] ss:$8 sm:$0x3]
    %v6832 = vpack.c.bf16 %v6780, %v6780
    %v6833 = vpack.c.bf16 %v6782, %v6782
    %v6834 = vld [vmem:[#allocation3] sm:$0xff]
    %v6835 = vld [vmem:[#allocation3 + $0x8] sm:$0xff]
    %v6836 = vld [vmem:[#allocation3 + $0x10] sm:$0xff]
    %v6837 = vld [vmem:[#allocation3 + $0x18] sm:$0xff]
    %v6838 = vld [vmem:[#allocation3 + $0x20] sm:$0xff]
    %v6839 = vld [vmem:[#allocation3 + $0x28] sm:$0xff]
    %v6840 = vld [vmem:[#allocation3 + $0x30] sm:$0xff]
    %v6841 = vld [vmem:[#allocation3 + $0x38] sm:$0xff]
    %v6842 = vld [vmem:[#allocation3 + $0x40] sm:$0xff]
    %v6843 = vld [vmem:[#allocation3 + $0x48] sm:$0xff]
    %v6844 = vld [vmem:[#allocation3 + $0x50] sm:$0xff]
    %v6845 = vld [vmem:[#allocation3 + $0x58] sm:$0xff]
    %v6846 = vld [vmem:[#allocation3 + $0x60] sm:$0xff]
    %v6847 = vld [vmem:[#allocation3 + $0x68] sm:$0xff]
    %v6848 = vld [vmem:[#allocation3 + $0x70] sm:$0xff]
    %v6849 = vld [vmem:[#allocation3 + $0x78] sm:$0xff]
    %v6850 = vld [vmem:[#allocation3 + $0x80] sm:$0xff]
    %v6851 = vld [vmem:[#allocation3 + $0x88] sm:$0xff]
    %v6852 = vld [vmem:[#allocation3 + $0x90] sm:$0xff]
    %v6853 = vld [vmem:[#allocation3 + $0x98] sm:$0xff]
    %v6854 = vld [vmem:[#allocation3 + $0xa0] sm:$0xff]
    %v6855 = vld [vmem:[#allocation3 + $0xa8] sm:$0xff]
    %v6856 = vld [vmem:[#allocation3 + $0xb0] sm:$0xff]
    %v6857 = vld [vmem:[#allocation3 + $0xb8] sm:$0xff]
    %v6858 = vld [vmem:[#allocation3 + $0xc0] sm:$0xff]
    %v6859 = vld [vmem:[#allocation3 + $0xc8] sm:$0xff]
    %v6860 = vld [vmem:[#allocation3 + $0xd0] sm:$0xff]
    %v6861 = vld [vmem:[#allocation3 + $0xd8] sm:$0xff]
    %v6862 = vld [vmem:[#allocation3 + $0xe0] sm:$0xff]
    %v6863 = vld [vmem:[#allocation3 + $0xe8] sm:$0xff]
    %v6864 = vld [vmem:[#allocation3 + $0xf0] sm:$0xff]
    %v6865 = vld [vmem:[#allocation3 + $0xf8] sm:$0xff]
    %v6866 = vpack.c.bf16 %v6784, %v6784
    %v6867 = vpack.c.bf16 %v6786, %v6786
    %v6868 = vld [vmem:[#allocation3 + $0x100] sm:$0xff]
    %v6869 = vld [vmem:[#allocation3 + $0x108] sm:$0xff]
    %v6870 = vld [vmem:[#allocation3 + $0x110] sm:$0xff]
    %v6871 = vld [vmem:[#allocation3 + $0x118] sm:$0xff]
    %v6872 = vld [vmem:[#allocation3 + $0x120] sm:$0xff]
    %v6873 = vld [vmem:[#allocation3 + $0x128] sm:$0xff]
    %v6874 = vld [vmem:[#allocation3 + $0x130] sm:$0xff]
    %v6875 = vld [vmem:[#allocation3 + $0x138] sm:$0xff]
    %v6876 = vld [vmem:[#allocation3 + $0x140] sm:$0xff]
    %v6877 = vld [vmem:[#allocation3 + $0x148] sm:$0xff]
    %v6878 = vld [vmem:[#allocation3 + $0x150] sm:$0xff]
    %v6879 = vld [vmem:[#allocation3 + $0x158] sm:$0xff]
    %v6880 = vld [vmem:[#allocation3 + $0x160] sm:$0xff]
    %v6881 = vld [vmem:[#allocation3 + $0x168] sm:$0xff]
    %v6882 = vld [vmem:[#allocation3 + $0x170] sm:$0xff]
    %v6883 = vld [vmem:[#allocation3 + $0x178] sm:$0xff]
    %v6884 = vld [vmem:[#allocation3 + $0x180] sm:$0xff]
    %v6885 = vld [vmem:[#allocation3 + $0x188] sm:$0xff]
    %v6886 = vld [vmem:[#allocation3 + $0x190] sm:$0xff]
    %v6887 = vld [vmem:[#allocation3 + $0x198] sm:$0xff]
    %v6888 = vld [vmem:[#allocation3 + $0x1a0] sm:$0xff]
    %v6889 = vld [vmem:[#allocation3 + $0x1a8] sm:$0xff]
    %v6890 = vld [vmem:[#allocation3 + $0x1b0] sm:$0xff]
    %v6891 = vld [vmem:[#allocation3 + $0x1b8] sm:$0xff]
    %v6892 = vld [vmem:[#allocation3 + $0x1c0] sm:$0xff]
    %v6893 = vld [vmem:[#allocation3 + $0x1c8] sm:$0xff]
    %v6894 = vld [vmem:[#allocation3 + $0x1d0] sm:$0xff]
    %v6895 = vld [vmem:[#allocation3 + $0x1d8] sm:$0xff]
    %v6896 = vld [vmem:[#allocation3 + $0x1e0] sm:$0xff]
    %v6897 = vld [vmem:[#allocation3 + $0x1e8] sm:$0xff]
    %v6898 = vld [vmem:[#allocation3 + $0x1f0] sm:$0xff]
    %v6899 = vld [vmem:[#allocation3 + $0x1f8] sm:$0xff]
    %v6932 = vunpack.c.l.b16 %v6868
    %v6933 = vunpack.c.h.b16 %v6868
    %v6934 = vunpack.c.l.b16 %v6869
    %v6935 = vunpack.c.h.b16 %v6869
    %v6936 = vunpack.c.l.b16 %v6870
    %v6937 = vunpack.c.h.b16 %v6870
    %v6938 = vunpack.c.l.b16 %v6871
    %v6939 = vunpack.c.h.b16 %v6871
    %v6940 = vunpack.c.l.b16 %v6872
    %v6941 = vunpack.c.h.b16 %v6872
    %v6942 = vunpack.c.l.b16 %v6873
    %v6943 = vunpack.c.h.b16 %v6873
    %v6944 = vunpack.c.l.b16 %v6874
    %v6945 = vunpack.c.h.b16 %v6874
    %v6946 = vunpack.c.l.b16 %v6875
    %v6947 = vunpack.c.h.b16 %v6875
    %v6948 = vunpack.c.l.b16 %v6876
    %v6949 = vunpack.c.h.b16 %v6876
    %v6950 = vunpack.c.l.b16 %v6877
    %v6951 = vunpack.c.h.b16 %v6877
    %v6952 = vunpack.c.l.b16 %v6878
    %v6953 = vunpack.c.h.b16 %v6878
    %v6954 = vunpack.c.l.b16 %v6879
    %v6955 = vunpack.c.h.b16 %v6879
    %v6956 = vunpack.c.l.b16 %v6880
    %v6957 = vunpack.c.h.b16 %v6880
    %v6958 = vunpack.c.l.b16 %v6881
    %v6959 = vunpack.c.h.b16 %v6881
    %v6960 = vunpack.c.l.b16 %v6882
    %v6961 = vunpack.c.h.b16 %v6882
    %v6962 = vunpack.c.l.b16 %v6883
    %v6963 = vunpack.c.h.b16 %v6883
    %v6964 = vunpack.c.l.b16 %v6884
    %v6965 = vunpack.c.h.b16 %v6884
    %v6966 = vunpack.c.l.b16 %v6885
    %v6967 = vunpack.c.h.b16 %v6885
    %v6968 = vunpack.c.l.b16 %v6886
    %v6969 = vunpack.c.h.b16 %v6886
    %v6970 = vunpack.c.l.b16 %v6887
    %v6971 = vunpack.c.h.b16 %v6887
    %v6972 = vunpack.c.l.b16 %v6888
    %v6973 = vunpack.c.h.b16 %v6888
    %v6974 = vunpack.c.l.b16 %v6889
    %v6975 = vunpack.c.h.b16 %v6889
    %v6976 = vunpack.c.l.b16 %v6890
    %v6977 = vunpack.c.h.b16 %v6890
    %v6978 = vunpack.c.l.b16 %v6891
    %v6979 = vunpack.c.h.b16 %v6891
    %v6980 = vunpack.c.l.b16 %v6892
    %v6981 = vunpack.c.h.b16 %v6892
    %v6982 = vunpack.c.l.b16 %v6893
    %v6983 = vunpack.c.h.b16 %v6893
    %v6984 = vunpack.c.l.b16 %v6894
    %v6985 = vunpack.c.h.b16 %v6894
    %v6986 = vunpack.c.l.b16 %v6895
    %v6987 = vunpack.c.h.b16 %v6895
    %v6988 = vunpack.c.l.b16 %v6896
    %v6989 = vunpack.c.h.b16 %v6896
    %v6990 = vunpack.c.l.b16 %v6897
    %v6991 = vunpack.c.h.b16 %v6897
    %v6992 = vunpack.c.l.b16 %v6898
    %v6993 = vunpack.c.h.b16 %v6898
    %v6994 = vunpack.c.l.b16 %v6899
    %v6995 = vunpack.c.h.b16 %v6899
    %v6996 = vpack.c.b16 %v6934, %v6932
    %v6997 = vpack.c.b16 %v6935, %v6933
    %v6998 = vpack.c.b16 %v6938, %v6936
    %v6999 = vpack.c.b16 %v6939, %v6937
    %v7000 = vpack.c.b16 %v6942, %v6940
    %v7001 = vpack.c.b16 %v6943, %v6941
    %v7002 = vpack.c.b16 %v6946, %v6944
    %v7003 = vpack.c.b16 %v6947, %v6945
    %v7004 = vpack.c.b16 %v6950, %v6948
    %v7005 = vpack.c.b16 %v6951, %v6949
    %v7006 = vpack.c.b16 %v6954, %v6952
    %v7007 = vpack.c.b16 %v6955, %v6953
    %v7008 = vpack.c.b16 %v6958, %v6956
    %v7009 = vpack.c.b16 %v6959, %v6957
    %v7010 = vpack.c.b16 %v6962, %v6960
    %v7011 = vpack.c.b16 %v6963, %v6961
    %v7012 = vpack.c.b16 %v6966, %v6964
    %v7013 = vpack.c.b16 %v6967, %v6965
    %v7014 = vpack.c.b16 %v6970, %v6968
    %v7015 = vpack.c.b16 %v6971, %v6969
    %v7016 = vpack.c.b16 %v6974, %v6972
    %v7017 = vpack.c.b16 %v6975, %v6973
    %v7018 = vpack.c.b16 %v6978, %v6976
    %v7019 = vpack.c.b16 %v6979, %v6977
    %v7020 = vpack.c.b16 %v6982, %v6980
    %v7021 = vpack.c.b16 %v6983, %v6981
    %v7022 = vpack.c.b16 %v6986, %v6984
    %v7023 = vpack.c.b16 %v6987, %v6985
    %v7024 = vpack.c.b16 %v6990, %v6988
    %v7025 = vpack.c.b16 %v6991, %v6989
    %v7026 = vpack.c.b16 %v6994, %v6992
    %v7027 = vpack.c.b16 %v6995, %v6993
    %7060 = vmatprep.subr.bf16.mxu0 %v7011
    %7061 = vmatpush1.bf16.msra.mxu0 %v7010
    %7062 = vmatprep.subr.bf16.mxu0 %v7009
    %7063 = vmatpush1.bf16.msra.mxu0 %v7008
    %7064 = vmatprep.subr.bf16.mxu0 %v7007
    %7065 = vmatpush1.bf16.msra.mxu0 %v7006
    %7066 = vmatprep.subr.bf16.mxu0 %v7005
    %7067 = vmatpush1.bf16.msra.mxu0 %v7004
    %7068 = vmatprep.subr.bf16.mxu0 %v7003
    %7069 = vmatpush1.bf16.msra.mxu0 %v7002
    %7070 = vmatprep.subr.bf16.mxu0 %v7001
    %7071 = vmatpush1.bf16.msra.mxu0 %v7000
    %7072 = vmatprep.subr.bf16.mxu0 %v6999
    %7073 = vmatpush1.bf16.msra.mxu0 %v6998
    %7074 = vmatprep.subr.bf16.mxu0 %v6997
    %7075 = vmatpush1.bf16.msra.mxu0 %v6996
    %7076 = vmatprep.subr.bf16.mxu0 %v7027
    %7077 = vmatpush2.bf16.msra.mxu0 %v7026
    %7078 = vmatprep.subr.bf16.mxu0 %v7025
    %7079 = vmatpush2.bf16.msra.mxu0 %v7024
    %7080 = vmatprep.subr.bf16.mxu0 %v7023
    %7081 = vmatpush2.bf16.msra.mxu0 %v7022
    %7082 = vmatprep.subr.bf16.mxu0 %v7021
    %7083 = vmatpush2.bf16.msra.mxu0 %v7020
    %7084 = vmatprep.subr.bf16.mxu0 %v7019
    %7085 = vmatpush2.bf16.msra.mxu0 %v7018
    %7086 = vmatprep.subr.bf16.mxu0 %v7017
    %7087 = vmatpush2.bf16.msra.mxu0 %v7016
    %7088 = vmatprep.subr.bf16.mxu0 %v7015
    %7089 = vmatpush2.bf16.msra.mxu0 %v7014
    %7090 = vmatprep.subr.bf16.mxu0 %v7013
    %7091 = vmatpush2.bf16.msra.mxu0 %v7012
    %7092 = vmatprep.mubr.bf16.mxu0 %v6867
    %7093 = vmatmul.mubr.bf16.gmra.mxu0 %v6866
    %v7094 = vpop.f32.mrf.mxu0
    %v7095 = vadd.f32 0.0, %v7094
    %v7096 = vpop.f32.mrf.mxu0
    %v7097 = vadd.f32 0.0, %v7096
    %v7098 = vpop.f32.mrf.mxu0
    %v7099 = vpop.f32.mrf.mxu0
    %7100 = vdwg.mxu0
    %v7133 = vunpack.c.l.b16 %v6834
    %v7134 = vunpack.c.h.b16 %v6834
    %v7135 = vunpack.c.l.b16 %v6835
    %v7136 = vunpack.c.h.b16 %v6835
    %v7137 = vunpack.c.l.b16 %v6836
    %v7138 = vunpack.c.h.b16 %v6836
    %v7139 = vunpack.c.l.b16 %v6837
    %v7140 = vunpack.c.h.b16 %v6837
    %v7141 = vunpack.c.l.b16 %v6838
    %v7142 = vunpack.c.h.b16 %v6838
    %v7143 = vunpack.c.l.b16 %v6839
    %v7144 = vunpack.c.h.b16 %v6839
    %v7145 = vunpack.c.l.b16 %v6840
    %v7146 = vunpack.c.h.b16 %v6840
    %v7147 = vunpack.c.l.b16 %v6841
    %v7148 = vunpack.c.h.b16 %v6841
    %v7149 = vunpack.c.l.b16 %v6842
    %v7150 = vunpack.c.h.b16 %v6842
    %v7151 = vunpack.c.l.b16 %v6843
    %v7152 = vunpack.c.h.b16 %v6843
    %v7153 = vunpack.c.l.b16 %v6844
    %v7154 = vunpack.c.h.b16 %v6844
    %v7155 = vunpack.c.l.b16 %v6845
    %v7156 = vunpack.c.h.b16 %v6845
    %v7157 = vunpack.c.l.b16 %v6846
    %v7158 = vunpack.c.h.b16 %v6846
    %v7159 = vunpack.c.l.b16 %v6847
    %v7160 = vunpack.c.h.b16 %v6847
    %v7161 = vunpack.c.l.b16 %v6848
    %v7162 = vunpack.c.h.b16 %v6848
    %v7163 = vunpack.c.l.b16 %v6849
    %v7164 = vunpack.c.h.b16 %v6849
    %v7165 = vunpack.c.l.b16 %v6850
    %v7166 = vunpack.c.h.b16 %v6850
    %v7167 = vunpack.c.l.b16 %v6851
    %v7168 = vunpack.c.h.b16 %v6851
    %v7169 = vunpack.c.l.b16 %v6852
    %v7170 = vunpack.c.h.b16 %v6852
    %v7171 = vunpack.c.l.b16 %v6853
    %v7172 = vunpack.c.h.b16 %v6853
    %v7173 = vunpack.c.l.b16 %v6854
    %v7174 = vunpack.c.h.b16 %v6854
    %v7175 = vunpack.c.l.b16 %v6855
    %v7176 = vunpack.c.h.b16 %v6855
    %v7177 = vunpack.c.l.b16 %v6856
    %v7178 = vunpack.c.h.b16 %v6856
    %v7179 = vunpack.c.l.b16 %v6857
    %v7180 = vunpack.c.h.b16 %v6857
    %v7181 = vunpack.c.l.b16 %v6858
    %v7182 = vunpack.c.h.b16 %v6858
    %v7183 = vunpack.c.l.b16 %v6859
    %v7184 = vunpack.c.h.b16 %v6859
    %v7185 = vunpack.c.l.b16 %v6860
    %v7186 = vunpack.c.h.b16 %v6860
    %v7187 = vunpack.c.l.b16 %v6861
    %v7188 = vunpack.c.h.b16 %v6861
    %v7189 = vunpack.c.l.b16 %v6862
    %v7190 = vunpack.c.h.b16 %v6862
    %v7191 = vunpack.c.l.b16 %v6863
    %v7192 = vunpack.c.h.b16 %v6863
    %v7193 = vunpack.c.l.b16 %v6864
    %v7194 = vunpack.c.h.b16 %v6864
    %v7195 = vunpack.c.l.b16 %v6865
    %v7196 = vunpack.c.h.b16 %v6865
    %v7197 = vpack.c.b16 %v7135, %v7133
    %v7198 = vpack.c.b16 %v7136, %v7134
    %v7199 = vpack.c.b16 %v7139, %v7137
    %v7200 = vpack.c.b16 %v7140, %v7138
    %v7201 = vpack.c.b16 %v7143, %v7141
    %v7202 = vpack.c.b16 %v7144, %v7142
    %v7203 = vpack.c.b16 %v7147, %v7145
    %v7204 = vpack.c.b16 %v7148, %v7146
    %v7205 = vpack.c.b16 %v7151, %v7149
    %v7206 = vpack.c.b16 %v7152, %v7150
    %v7207 = vpack.c.b16 %v7155, %v7153
    %v7208 = vpack.c.b16 %v7156, %v7154
    %v7209 = vpack.c.b16 %v7159, %v7157
    %v7210 = vpack.c.b16 %v7160, %v7158
    %v7211 = vpack.c.b16 %v7163, %v7161
    %v7212 = vpack.c.b16 %v7164, %v7162
    %v7213 = vpack.c.b16 %v7167, %v7165
    %v7214 = vpack.c.b16 %v7168, %v7166
    %v7215 = vpack.c.b16 %v7171, %v7169
    %v7216 = vpack.c.b16 %v7172, %v7170
    %v7217 = vpack.c.b16 %v7175, %v7173
    %v7218 = vpack.c.b16 %v7176, %v7174
    %v7219 = vpack.c.b16 %v7179, %v7177
    %v7220 = vpack.c.b16 %v7180, %v7178
    %v7221 = vpack.c.b16 %v7183, %v7181
    %v7222 = vpack.c.b16 %v7184, %v7182
    %v7223 = vpack.c.b16 %v7187, %v7185
    %v7224 = vpack.c.b16 %v7188, %v7186
    %v7225 = vpack.c.b16 %v7191, %v7189
    %v7226 = vpack.c.b16 %v7192, %v7190
    %v7227 = vpack.c.b16 %v7195, %v7193
    %v7228 = vpack.c.b16 %v7196, %v7194
    %7261 = vmatprep.subr.bf16.mxu0 %v7212
    %7262 = vmatpush1.bf16.msra.mxu0 %v7211
    %7263 = vmatprep.subr.bf16.mxu0 %v7210
    %7264 = vmatpush1.bf16.msra.mxu0 %v7209
    %7265 = vmatprep.subr.bf16.mxu0 %v7208
    %7266 = vmatpush1.bf16.msra.mxu0 %v7207
    %7267 = vmatprep.subr.bf16.mxu0 %v7206
    %7268 = vmatpush1.bf16.msra.mxu0 %v7205
    %7269 = vmatprep.subr.bf16.mxu0 %v7204
    %7270 = vmatpush1.bf16.msra.mxu0 %v7203
    %7271 = vmatprep.subr.bf16.mxu0 %v7202
    %7272 = vmatpush1.bf16.msra.mxu0 %v7201
    %7273 = vmatprep.subr.bf16.mxu0 %v7200
    %7274 = vmatpush1.bf16.msra.mxu0 %v7199
    %7275 = vmatprep.subr.bf16.mxu0 %v7198
    %7276 = vmatpush1.bf16.msra.mxu0 %v7197
    %7277 = vmatprep.subr.bf16.mxu0 %v7228
    %7278 = vmatpush2.bf16.msra.mxu0 %v7227
    %7279 = vmatprep.subr.bf16.mxu0 %v7226
    %7280 = vmatpush2.bf16.msra.mxu0 %v7225
    %7281 = vmatprep.subr.bf16.mxu0 %v7224
    %7282 = vmatpush2.bf16.msra.mxu0 %v7223
    %7283 = vmatprep.subr.bf16.mxu0 %v7222
    %7284 = vmatpush2.bf16.msra.mxu0 %v7221
    %7285 = vmatprep.subr.bf16.mxu0 %v7220
    %7286 = vmatpush2.bf16.msra.mxu0 %v7219
    %7287 = vmatprep.subr.bf16.mxu0 %v7218
    %7288 = vmatpush2.bf16.msra.mxu0 %v7217
    %7289 = vmatprep.subr.bf16.mxu0 %v7216
    %7290 = vmatpush2.bf16.msra.mxu0 %v7215
    %7291 = vmatprep.subr.bf16.mxu0 %v7214
    %7292 = vmatpush2.bf16.msra.mxu0 %v7213
    %7293 = vmatprep.mubr.bf16.mxu0 %v6833
    %7294 = vmatmul.mubr.bf16.gmra.mxu0 %v6832
    %v7295 = vpop.f32.mrf.mxu0
    %v7296 = vadd.f32 %v7095, %v7295
    %v7297 = vpop.f32.mrf.mxu0
    %v7298 = vadd.f32 %v7097, %v7297
    %v7299 = vpop.f32.mrf.mxu0
    %v7300 = vpop.f32.mrf.mxu0
    %7301 = vdwg.mxu0
    %v7302 = vpack.c.bf16 %v6790, %v6790
    %v7303 = vpack.c.bf16 %v6792, %v6792
    %v7304 = vld [vmem:[#allocation3 + $0x200] sm:$0xff]
    %v7305 = vld [vmem:[#allocation3 + $0x208] sm:$0xff]
    %v7306 = vld [vmem:[#allocation3 + $0x210] sm:$0xff]
    %v7307 = vld [vmem:[#allocation3 + $0x218] sm:$0xff]
    %v7308 = vld [vmem:[#allocation3 + $0x220] sm:$0xff]
    %v7309 = vld [vmem:[#allocation3 + $0x228] sm:$0xff]
    %v7310 = vld [vmem:[#allocation3 + $0x230] sm:$0xff]
    %v7311 = vld [vmem:[#allocation3 + $0x238] sm:$0xff]
    %v7312 = vld [vmem:[#allocation3 + $0x240] sm:$0xff]
    %v7313 = vld [vmem:[#allocation3 + $0x248] sm:$0xff]
    %v7314 = vld [vmem:[#allocation3 + $0x250] sm:$0xff]
    %v7315 = vld [vmem:[#allocation3 + $0x258] sm:$0xff]
    %v7316 = vld [vmem:[#allocation3 + $0x260] sm:$0xff]
    %v7317 = vld [vmem:[#allocation3 + $0x268] sm:$0xff]
    %v7318 = vld [vmem:[#allocation3 + $0x270] sm:$0xff]
    %v7319 = vld [vmem:[#allocation3 + $0x278] sm:$0xff]
    %v7320 = vld [vmem:[#allocation3 + $0x280] sm:$0xff]
    %v7321 = vld [vmem:[#allocation3 + $0x288] sm:$0xff]
    %v7322 = vld [vmem:[#allocation3 + $0x290] sm:$0xff]
    %v7323 = vld [vmem:[#allocation3 + $0x298] sm:$0xff]
    %v7324 = vld [vmem:[#allocation3 + $0x2a0] sm:$0xff]
    %v7325 = vld [vmem:[#allocation3 + $0x2a8] sm:$0xff]
    %v7326 = vld [vmem:[#allocation3 + $0x2b0] sm:$0xff]
    %v7327 = vld [vmem:[#allocation3 + $0x2b8] sm:$0xff]
    %v7328 = vld [vmem:[#allocation3 + $0x2c0] sm:$0xff]
    %v7329 = vld [vmem:[#allocation3 + $0x2c8] sm:$0xff]
    %v7330 = vld [vmem:[#allocation3 + $0x2d0] sm:$0xff]
    %v7331 = vld [vmem:[#allocation3 + $0x2d8] sm:$0xff]
    %v7332 = vld [vmem:[#allocation3 + $0x2e0] sm:$0xff]
    %v7333 = vld [vmem:[#allocation3 + $0x2e8] sm:$0xff]
    %v7334 = vld [vmem:[#allocation3 + $0x2f0] sm:$0xff]
    %v7335 = vld [vmem:[#allocation3 + $0x2f8] sm:$0xff]
    %v7368 = vunpack.c.l.b16 %v7304
    %v7369 = vunpack.c.h.b16 %v7304
    %v7370 = vunpack.c.l.b16 %v7305
    %v7371 = vunpack.c.h.b16 %v7305
    %v7372 = vunpack.c.l.b16 %v7306
    %v7373 = vunpack.c.h.b16 %v7306
    %v7374 = vunpack.c.l.b16 %v7307
    %v7375 = vunpack.c.h.b16 %v7307
    %v7376 = vunpack.c.l.b16 %v7308
    %v7377 = vunpack.c.h.b16 %v7308
    %v7378 = vunpack.c.l.b16 %v7309
    %v7379 = vunpack.c.h.b16 %v7309
    %v7380 = vunpack.c.l.b16 %v7310
    %v7381 = vunpack.c.h.b16 %v7310
    %v7382 = vunpack.c.l.b16 %v7311
    %v7383 = vunpack.c.h.b16 %v7311
    %v7384 = vunpack.c.l.b16 %v7312
    %v7385 = vunpack.c.h.b16 %v7312
    %v7386 = vunpack.c.l.b16 %v7313
    %v7387 = vunpack.c.h.b16 %v7313
    %v7388 = vunpack.c.l.b16 %v7314
    %v7389 = vunpack.c.h.b16 %v7314
    %v7390 = vunpack.c.l.b16 %v7315
    %v7391 = vunpack.c.h.b16 %v7315
    %v7392 = vunpack.c.l.b16 %v7316
    %v7393 = vunpack.c.h.b16 %v7316
    %v7394 = vunpack.c.l.b16 %v7317
    %v7395 = vunpack.c.h.b16 %v7317
    %v7396 = vunpack.c.l.b16 %v7318
    %v7397 = vunpack.c.h.b16 %v7318
    %v7398 = vunpack.c.l.b16 %v7319
    %v7399 = vunpack.c.h.b16 %v7319
    %v7400 = vunpack.c.l.b16 %v7320
    %v7401 = vunpack.c.h.b16 %v7320
    %v7402 = vunpack.c.l.b16 %v7321
    %v7403 = vunpack.c.h.b16 %v7321
    %v7404 = vunpack.c.l.b16 %v7322
    %v7405 = vunpack.c.h.b16 %v7322
    %v7406 = vunpack.c.l.b16 %v7323
    %v7407 = vunpack.c.h.b16 %v7323
    %v7408 = vunpack.c.l.b16 %v7324
    %v7409 = vunpack.c.h.b16 %v7324
    %v7410 = vunpack.c.l.b16 %v7325
    %v7411 = vunpack.c.h.b16 %v7325
    %v7412 = vunpack.c.l.b16 %v7326
    %v7413 = vunpack.c.h.b16 %v7326
    %v7414 = vunpack.c.l.b16 %v7327
    %v7415 = vunpack.c.h.b16 %v7327
    %v7416 = vunpack.c.l.b16 %v7328
    %v7417 = vunpack.c.h.b16 %v7328
    %v7418 = vunpack.c.l.b16 %v7329
    %v7419 = vunpack.c.h.b16 %v7329
    %v7420 = vunpack.c.l.b16 %v7330
    %v7421 = vunpack.c.h.b16 %v7330
    %v7422 = vunpack.c.l.b16 %v7331
    %v7423 = vunpack.c.h.b16 %v7331
    %v7424 = vunpack.c.l.b16 %v7332
    %v7425 = vunpack.c.h.b16 %v7332
    %v7426 = vunpack.c.l.b16 %v7333
    %v7427 = vunpack.c.h.b16 %v7333
    %v7428 = vunpack.c.l.b16 %v7334
    %v7429 = vunpack.c.h.b16 %v7334
    %v7430 = vunpack.c.l.b16 %v7335
    %v7431 = vunpack.c.h.b16 %v7335
    %v7432 = vpack.c.b16 %v7370, %v7368
    %v7433 = vpack.c.b16 %v7371, %v7369
    %v7434 = vpack.c.b16 %v7374, %v7372
    %v7435 = vpack.c.b16 %v7375, %v7373
    %v7436 = vpack.c.b16 %v7378, %v7376
    %v7437 = vpack.c.b16 %v7379, %v7377
    %v7438 = vpack.c.b16 %v7382, %v7380
    %v7439 = vpack.c.b16 %v7383, %v7381
    %v7440 = vpack.c.b16 %v7386, %v7384
    %v7441 = vpack.c.b16 %v7387, %v7385
    %v7442 = vpack.c.b16 %v7390, %v7388
    %v7443 = vpack.c.b16 %v7391, %v7389
    %v7444 = vpack.c.b16 %v7394, %v7392
    %v7445 = vpack.c.b16 %v7395, %v7393
    %v7446 = vpack.c.b16 %v7398, %v7396
    %v7447 = vpack.c.b16 %v7399, %v7397
    %v7448 = vpack.c.b16 %v7402, %v7400
    %v7449 = vpack.c.b16 %v7403, %v7401
    %v7450 = vpack.c.b16 %v7406, %v7404
    %v7451 = vpack.c.b16 %v7407, %v7405
    %v7452 = vpack.c.b16 %v7410, %v7408
    %v7453 = vpack.c.b16 %v7411, %v7409
    %v7454 = vpack.c.b16 %v7414, %v7412
    %v7455 = vpack.c.b16 %v7415, %v7413
    %v7456 = vpack.c.b16 %v7418, %v7416
    %v7457 = vpack.c.b16 %v7419, %v7417
    %v7458 = vpack.c.b16 %v7422, %v7420
    %v7459 = vpack.c.b16 %v7423, %v7421
    %v7460 = vpack.c.b16 %v7426, %v7424
    %v7461 = vpack.c.b16 %v7427, %v7425
    %v7462 = vpack.c.b16 %v7430, %v7428
    %v7463 = vpack.c.b16 %v7431, %v7429
    %7496 = vmatprep.subr.bf16.mxu0 %v7447
    %7497 = vmatpush1.bf16.msra.mxu0 %v7446
    %7498 = vmatprep.subr.bf16.mxu0 %v7445
    %7499 = vmatpush1.bf16.msra.mxu0 %v7444
    %7500 = vmatprep.subr.bf16.mxu0 %v7443
    %7501 = vmatpush1.bf16.msra.mxu0 %v7442
    %7502 = vmatprep.subr.bf16.mxu0 %v7441
    %7503 = vmatpush1.bf16.msra.mxu0 %v7440
    %7504 = vmatprep.subr.bf16.mxu0 %v7439
    %7505 = vmatpush1.bf16.msra.mxu0 %v7438
    %7506 = vmatprep.subr.bf16.mxu0 %v7437
    %7507 = vmatpush1.bf16.msra.mxu0 %v7436
    %7508 = vmatprep.subr.bf16.mxu0 %v7435
    %7509 = vmatpush1.bf16.msra.mxu0 %v7434
    %7510 = vmatprep.subr.bf16.mxu0 %v7433
    %7511 = vmatpush1.bf16.msra.mxu0 %v7432
    %7512 = vmatprep.subr.bf16.mxu0 %v7463
    %7513 = vmatpush2.bf16.msra.mxu0 %v7462
    %7514 = vmatprep.subr.bf16.mxu0 %v7461
    %7515 = vmatpush2.bf16.msra.mxu0 %v7460
    %7516 = vmatprep.subr.bf16.mxu0 %v7459
    %7517 = vmatpush2.bf16.msra.mxu0 %v7458
    %7518 = vmatprep.subr.bf16.mxu0 %v7457
    %7519 = vmatpush2.bf16.msra.mxu0 %v7456
    %7520 = vmatprep.subr.bf16.mxu0 %v7455
    %7521 = vmatpush2.bf16.msra.mxu0 %v7454
    %7522 = vmatprep.subr.bf16.mxu0 %v7453
    %7523 = vmatpush2.bf16.msra.mxu0 %v7452
    %7524 = vmatprep.subr.bf16.mxu0 %v7451
    %7525 = vmatpush2.bf16.msra.mxu0 %v7450
    %7526 = vmatprep.subr.bf16.mxu0 %v7449
    %7527 = vmatpush2.bf16.msra.mxu0 %v7448
    %7528 = vmatprep.mubr.bf16.mxu0 %v7303
    %7529 = vmatmul.mubr.bf16.gmra.mxu0 %v7302
    %v7530 = vpop.f32.mrf.mxu0
    %v7531 = vadd.f32 0.0, %v7530
    %v7532 = vpop.f32.mrf.mxu0
    %v7533 = vadd.f32 0.0, %v7532
    %v7534 = vpop.f32.mrf.mxu0
    %v7535 = vpop.f32.mrf.mxu0
    %7536 = vdwg.mxu0
    %v7537 = vadd.f32 %v7296, %v7531
    %v7538 = vadd.f32 %v7298, %v7533
    %v7539 = vpack.c.bf16 %v6794, %v6794
    %v7540 = vpack.c.bf16 %v6796, %v6796
    %v7541 = vld [vmem:[#allocation3 + $0x300] sm:$0xff]
    %v7542 = vld [vmem:[#allocation3 + $0x308] sm:$0xff]
    %v7543 = vld [vmem:[#allocation3 + $0x310] sm:$0xff]
    %v7544 = vld [vmem:[#allocation3 + $0x318] sm:$0xff]
    %v7545 = vld [vmem:[#allocation3 + $0x320] sm:$0xff]
    %v7546 = vld [vmem:[#allocation3 + $0x328] sm:$0xff]
    %v7547 = vld [vmem:[#allocation3 + $0x330] sm:$0xff]
    %v7548 = vld [vmem:[#allocation3 + $0x338] sm:$0xff]
    %v7549 = vld [vmem:[#allocation3 + $0x340] sm:$0xff]
    %v7550 = vld [vmem:[#allocation3 + $0x348] sm:$0xff]
    %v7551 = vld [vmem:[#allocation3 + $0x350] sm:$0xff]
    %v7552 = vld [vmem:[#allocation3 + $0x358] sm:$0xff]
    %v7553 = vld [vmem:[#allocation3 + $0x360] sm:$0xff]
    %v7554 = vld [vmem:[#allocation3 + $0x368] sm:$0xff]
    %v7555 = vld [vmem:[#allocation3 + $0x370] sm:$0xff]
    %v7556 = vld [vmem:[#allocation3 + $0x378] sm:$0xff]
    %v7557 = vld [vmem:[#allocation3 + $0x380] sm:$0xff]
    %v7558 = vld [vmem:[#allocation3 + $0x388] sm:$0xff]
    %v7559 = vld [vmem:[#allocation3 + $0x390] sm:$0xff]
    %v7560 = vld [vmem:[#allocation3 + $0x398] sm:$0xff]
    %v7561 = vld [vmem:[#allocation3 + $0x3a0] sm:$0xff]
    %v7562 = vld [vmem:[#allocation3 + $0x3a8] sm:$0xff]
    %v7563 = vld [vmem:[#allocation3 + $0x3b0] sm:$0xff]
    %v7564 = vld [vmem:[#allocation3 + $0x3b8] sm:$0xff]
    %v7565 = vld [vmem:[#allocation3 + $0x3c0] sm:$0xff]
    %v7566 = vld [vmem:[#allocation3 + $0x3c8] sm:$0xff]
    %v7567 = vld [vmem:[#allocation3 + $0x3d0] sm:$0xff]
    %v7568 = vld [vmem:[#allocation3 + $0x3d8] sm:$0xff]
    %v7569 = vld [vmem:[#allocation3 + $0x3e0] sm:$0xff]
    %v7570 = vld [vmem:[#allocation3 + $0x3e8] sm:$0xff]
    %v7571 = vld [vmem:[#allocation3 + $0x3f0] sm:$0xff]
    %v7572 = vld [vmem:[#allocation3 + $0x3f8] sm:$0xff]
    %v7605 = vunpack.c.l.b16 %v7541
    %v7606 = vunpack.c.h.b16 %v7541
    %v7607 = vunpack.c.l.b16 %v7542
    %v7608 = vunpack.c.h.b16 %v7542
    %v7609 = vunpack.c.l.b16 %v7543
    %v7610 = vunpack.c.h.b16 %v7543
    %v7611 = vunpack.c.l.b16 %v7544
    %v7612 = vunpack.c.h.b16 %v7544
    %v7613 = vunpack.c.l.b16 %v7545
    %v7614 = vunpack.c.h.b16 %v7545
    %v7615 = vunpack.c.l.b16 %v7546
    %v7616 = vunpack.c.h.b16 %v7546
    %v7617 = vunpack.c.l.b16 %v7547
    %v7618 = vunpack.c.h.b16 %v7547
    %v7619 = vunpack.c.l.b16 %v7548
    %v7620 = vunpack.c.h.b16 %v7548
    %v7621 = vunpack.c.l.b16 %v7549
    %v7622 = vunpack.c.h.b16 %v7549
    %v7623 = vunpack.c.l.b16 %v7550
    %v7624 = vunpack.c.h.b16 %v7550
    %v7625 = vunpack.c.l.b16 %v7551
    %v7626 = vunpack.c.h.b16 %v7551
    %v7627 = vunpack.c.l.b16 %v7552
    %v7628 = vunpack.c.h.b16 %v7552
    %v7629 = vunpack.c.l.b16 %v7553
    %v7630 = vunpack.c.h.b16 %v7553
    %v7631 = vunpack.c.l.b16 %v7554
    %v7632 = vunpack.c.h.b16 %v7554
    %v7633 = vunpack.c.l.b16 %v7555
    %v7634 = vunpack.c.h.b16 %v7555
    %v7635 = vunpack.c.l.b16 %v7556
    %v7636 = vunpack.c.h.b16 %v7556
    %v7637 = vunpack.c.l.b16 %v7557
    %v7638 = vunpack.c.h.b16 %v7557
    %v7639 = vunpack.c.l.b16 %v7558
    %v7640 = vunpack.c.h.b16 %v7558
    %v7641 = vunpack.c.l.b16 %v7559
    %v7642 = vunpack.c.h.b16 %v7559
    %v7643 = vunpack.c.l.b16 %v7560
    %v7644 = vunpack.c.h.b16 %v7560
    %v7645 = vunpack.c.l.b16 %v7561
    %v7646 = vunpack.c.h.b16 %v7561
    %v7647 = vunpack.c.l.b16 %v7562
    %v7648 = vunpack.c.h.b16 %v7562
    %v7649 = vunpack.c.l.b16 %v7563
    %v7650 = vunpack.c.h.b16 %v7563
    %v7651 = vunpack.c.l.b16 %v7564
    %v7652 = vunpack.c.h.b16 %v7564
    %v7653 = vunpack.c.l.b16 %v7565
    %v7654 = vunpack.c.h.b16 %v7565
    %v7655 = vunpack.c.l.b16 %v7566
    %v7656 = vunpack.c.h.b16 %v7566
    %v7657 = vunpack.c.l.b16 %v7567
    %v7658 = vunpack.c.h.b16 %v7567
    %v7659 = vunpack.c.l.b16 %v7568
    %v7660 = vunpack.c.h.b16 %v7568
    %v7661 = vunpack.c.l.b16 %v7569
    %v7662 = vunpack.c.h.b16 %v7569
    %v7663 = vunpack.c.l.b16 %v7570
    %v7664 = vunpack.c.h.b16 %v7570
    %v7665 = vunpack.c.l.b16 %v7571
    %v7666 = vunpack.c.h.b16 %v7571
    %v7667 = vunpack.c.l.b16 %v7572
    %v7668 = vunpack.c.h.b16 %v7572
    %v7669 = vpack.c.b16 %v7607, %v7605
    %v7670 = vpack.c.b16 %v7608, %v7606
    %v7671 = vpack.c.b16 %v7611, %v7609
    %v7672 = vpack.c.b16 %v7612, %v7610
    %v7673 = vpack.c.b16 %v7615, %v7613
    %v7674 = vpack.c.b16 %v7616, %v7614
    %v7675 = vpack.c.b16 %v7619, %v7617
    %v7676 = vpack.c.b16 %v7620, %v7618
    %v7677 = vpack.c.b16 %v7623, %v7621
    %v7678 = vpack.c.b16 %v7624, %v7622
    %v7679 = vpack.c.b16 %v7627, %v7625
    %v7680 = vpack.c.b16 %v7628, %v7626
    %v7681 = vpack.c.b16 %v7631, %v7629
    %v7682 = vpack.c.b16 %v7632, %v7630
    %v7683 = vpack.c.b16 %v7635, %v7633
    %v7684 = vpack.c.b16 %v7636, %v7634
    %v7685 = vpack.c.b16 %v7639, %v7637
    %v7686 = vpack.c.b16 %v7640, %v7638
    %v7687 = vpack.c.b16 %v7643, %v7641
    %v7688 = vpack.c.b16 %v7644, %v7642
    %v7689 = vpack.c.b16 %v7647, %v7645
    %v7690 = vpack.c.b16 %v7648, %v7646
    %v7691 = vpack.c.b16 %v7651, %v7649
    %v7692 = vpack.c.b16 %v7652, %v7650
    %v7693 = vpack.c.b16 %v7655, %v7653
    %v7694 = vpack.c.b16 %v7656, %v7654
    %v7695 = vpack.c.b16 %v7659, %v7657
    %v7696 = vpack.c.b16 %v7660, %v7658
    %v7697 = vpack.c.b16 %v7663, %v7661
    %v7698 = vpack.c.b16 %v7664, %v7662
    %v7699 = vpack.c.b16 %v7667, %v7665
    %v7700 = vpack.c.b16 %v7668, %v7666
    %7733 = vmatprep.subr.bf16.mxu0 %v7684
    %7734 = vmatpush1.bf16.msra.mxu0 %v7683
    %7735 = vmatprep.subr.bf16.mxu0 %v7682
    %7736 = vmatpush1.bf16.msra.mxu0 %v7681
    %7737 = vmatprep.subr.bf16.mxu0 %v7680
    %7738 = vmatpush1.bf16.msra.mxu0 %v7679
    %7739 = vmatprep.subr.bf16.mxu0 %v7678
    %7740 = vmatpush1.bf16.msra.mxu0 %v7677
    %7741 = vmatprep.subr.bf16.mxu0 %v7676
    %7742 = vmatpush1.bf16.msra.mxu0 %v7675
    %7743 = vmatprep.subr.bf16.mxu0 %v7674
    %7744 = vmatpush1.bf16.msra.mxu0 %v7673
    %7745 = vmatprep.subr.bf16.mxu0 %v7672
    %7746 = vmatpush1.bf16.msra.mxu0 %v7671
    %7747 = vmatprep.subr.bf16.mxu0 %v7670
    %7748 = vmatpush1.bf16.msra.mxu0 %v7669
    %7749 = vmatprep.subr.bf16.mxu0 %v7700
    %7750 = vmatpush2.bf16.msra.mxu0 %v7699
    %7751 = vmatprep.subr.bf16.mxu0 %v7698
    %7752 = vmatpush2.bf16.msra.mxu0 %v7697
    %7753 = vmatprep.subr.bf16.mxu0 %v7696
    %7754 = vmatpush2.bf16.msra.mxu0 %v7695
    %7755 = vmatprep.subr.bf16.mxu0 %v7694
    %7756 = vmatpush2.bf16.msra.mxu0 %v7693
    %7757 = vmatprep.subr.bf16.mxu0 %v7692
    %7758 = vmatpush2.bf16.msra.mxu0 %v7691
    %7759 = vmatprep.subr.bf16.mxu0 %v7690
    %7760 = vmatpush2.bf16.msra.mxu0 %v7689
    %7761 = vmatprep.subr.bf16.mxu0 %v7688
    %7762 = vmatpush2.bf16.msra.mxu0 %v7687
    %7763 = vmatprep.subr.bf16.mxu0 %v7686
    %7764 = vmatpush2.bf16.msra.mxu0 %v7685
    %7765 = vmatprep.mubr.bf16.mxu0 %v7540
    %7766 = vmatmul.mubr.bf16.gmra.mxu0 %v7539
    %v7767 = vpop.f32.mrf.mxu0
    %v7768 = vadd.f32 0.0, %v7767
    %v7769 = vpop.f32.mrf.mxu0
    %v7770 = vadd.f32 0.0, %v7769
    %v7771 = vpop.f32.mrf.mxu0
    %v7772 = vpop.f32.mrf.mxu0
    %7773 = vdwg.mxu0
    %v7774 = vadd.f32 %v7537, %v7768
    %v7775 = vadd.f32 %v7538, %v7770
    %v7776 = vpack.c.bf16 %v6800, %v6800
    %v7777 = vpack.c.bf16 %v6802, %v6802
    %v7778 = vld [vmem:[#allocation3 + $0x400] sm:$0xff]
    %v7779 = vld [vmem:[#allocation3 + $0x408] sm:$0xff]
    %v7780 = vld [vmem:[#allocation3 + $0x410] sm:$0xff]
    %v7781 = vld [vmem:[#allocation3 + $0x418] sm:$0xff]
    %v7782 = vld [vmem:[#allocation3 + $0x420] sm:$0xff]
    %v7783 = vld [vmem:[#allocation3 + $0x428] sm:$0xff]
    %v7784 = vld [vmem:[#allocation3 + $0x430] sm:$0xff]
    %v7785 = vld [vmem:[#allocation3 + $0x438] sm:$0xff]
    %v7786 = vld [vmem:[#allocation3 + $0x440] sm:$0xff]
    %v7787 = vld [vmem:[#allocation3 + $0x448] sm:$0xff]
    %v7788 = vld [vmem:[#allocation3 + $0x450] sm:$0xff]
    %v7789 = vld [vmem:[#allocation3 + $0x458] sm:$0xff]
    %v7790 = vld [vmem:[#allocation3 + $0x460] sm:$0xff]
    %v7791 = vld [vmem:[#allocation3 + $0x468] sm:$0xff]
    %v7792 = vld [vmem:[#allocation3 + $0x470] sm:$0xff]
    %v7793 = vld [vmem:[#allocation3 + $0x478] sm:$0xff]
    %v7794 = vld [vmem:[#allocation3 + $0x480] sm:$0xff]
    %v7795 = vld [vmem:[#allocation3 + $0x488] sm:$0xff]
    %v7796 = vld [vmem:[#allocation3 + $0x490] sm:$0xff]
    %v7797 = vld [vmem:[#allocation3 + $0x498] sm:$0xff]
    %v7798 = vld [vmem:[#allocation3 + $0x4a0] sm:$0xff]
    %v7799 = vld [vmem:[#allocation3 + $0x4a8] sm:$0xff]
    %v7800 = vld [vmem:[#allocation3 + $0x4b0] sm:$0xff]
    %v7801 = vld [vmem:[#allocation3 + $0x4b8] sm:$0xff]
    %v7802 = vld [vmem:[#allocation3 + $0x4c0] sm:$0xff]
    %v7803 = vld [vmem:[#allocation3 + $0x4c8] sm:$0xff]
    %v7804 = vld [vmem:[#allocation3 + $0x4d0] sm:$0xff]
    %v7805 = vld [vmem:[#allocation3 + $0x4d8] sm:$0xff]
    %v7806 = vld [vmem:[#allocation3 + $0x4e0] sm:$0xff]
    %v7807 = vld [vmem:[#allocation3 + $0x4e8] sm:$0xff]
    %v7808 = vld [vmem:[#allocation3 + $0x4f0] sm:$0xff]
    %v7809 = vld [vmem:[#allocation3 + $0x4f8] sm:$0xff]
    %v7842 = vunpack.c.l.b16 %v7778
    %v7843 = vunpack.c.h.b16 %v7778
    %v7844 = vunpack.c.l.b16 %v7779
    %v7845 = vunpack.c.h.b16 %v7779
    %v7846 = vunpack.c.l.b16 %v7780
    %v7847 = vunpack.c.h.b16 %v7780
    %v7848 = vunpack.c.l.b16 %v7781
    %v7849 = vunpack.c.h.b16 %v7781
    %v7850 = vunpack.c.l.b16 %v7782
    %v7851 = vunpack.c.h.b16 %v7782
    %v7852 = vunpack.c.l.b16 %v7783
    %v7853 = vunpack.c.h.b16 %v7783
    %v7854 = vunpack.c.l.b16 %v7784
    %v7855 = vunpack.c.h.b16 %v7784
    %v7856 = vunpack.c.l.b16 %v7785
    %v7857 = vunpack.c.h.b16 %v7785
    %v7858 = vunpack.c.l.b16 %v7786
    %v7859 = vunpack.c.h.b16 %v7786
    %v7860 = vunpack.c.l.b16 %v7787
    %v7861 = vunpack.c.h.b16 %v7787
    %v7862 = vunpack.c.l.b16 %v7788
    %v7863 = vunpack.c.h.b16 %v7788
    %v7864 = vunpack.c.l.b16 %v7789
    %v7865 = vunpack.c.h.b16 %v7789
    %v7866 = vunpack.c.l.b16 %v7790
    %v7867 = vunpack.c.h.b16 %v7790
    %v7868 = vunpack.c.l.b16 %v7791
    %v7869 = vunpack.c.h.b16 %v7791
    %v7870 = vunpack.c.l.b16 %v7792
    %v7871 = vunpack.c.h.b16 %v7792
    %v7872 = vunpack.c.l.b16 %v7793
    %v7873 = vunpack.c.h.b16 %v7793
    %v7874 = vunpack.c.l.b16 %v7794
    %v7875 = vunpack.c.h.b16 %v7794
    %v7876 = vunpack.c.l.b16 %v7795
    %v7877 = vunpack.c.h.b16 %v7795
    %v7878 = vunpack.c.l.b16 %v7796
    %v7879 = vunpack.c.h.b16 %v7796
    %v7880 = vunpack.c.l.b16 %v7797
    %v7881 = vunpack.c.h.b16 %v7797
    %v7882 = vunpack.c.l.b16 %v7798
    %v7883 = vunpack.c.h.b16 %v7798
    %v7884 = vunpack.c.l.b16 %v7799
    %v7885 = vunpack.c.h.b16 %v7799
    %v7886 = vunpack.c.l.b16 %v7800
    %v7887 = vunpack.c.h.b16 %v7800
    %v7888 = vunpack.c.l.b16 %v7801
    %v7889 = vunpack.c.h.b16 %v7801
    %v7890 = vunpack.c.l.b16 %v7802
    %v7891 = vunpack.c.h.b16 %v7802
    %v7892 = vunpack.c.l.b16 %v7803
    %v7893 = vunpack.c.h.b16 %v7803
    %v7894 = vunpack.c.l.b16 %v7804
    %v7895 = vunpack.c.h.b16 %v7804
    %v7896 = vunpack.c.l.b16 %v7805
    %v7897 = vunpack.c.h.b16 %v7805
    %v7898 = vunpack.c.l.b16 %v7806
    %v7899 = vunpack.c.h.b16 %v7806
    %v7900 = vunpack.c.l.b16 %v7807
    %v7901 = vunpack.c.h.b16 %v7807
    %v7902 = vunpack.c.l.b16 %v7808
    %v7903 = vunpack.c.h.b16 %v7808
    %v7904 = vunpack.c.l.b16 %v7809
    %v7905 = vunpack.c.h.b16 %v7809
    %v7906 = vpack.c.b16 %v7844, %v7842
    %v7907 = vpack.c.b16 %v7845, %v7843
    %v7908 = vpack.c.b16 %v7848, %v7846
    %v7909 = vpack.c.b16 %v7849, %v7847
    %v7910 = vpack.c.b16 %v7852, %v7850
    %v7911 = vpack.c.b16 %v7853, %v7851
    %v7912 = vpack.c.b16 %v7856, %v7854
    %v7913 = vpack.c.b16 %v7857, %v7855
    %v7914 = vpack.c.b16 %v7860, %v7858
    %v7915 = vpack.c.b16 %v7861, %v7859
    %v7916 = vpack.c.b16 %v7864, %v7862
    %v7917 = vpack.c.b16 %v7865, %v7863
    %v7918 = vpack.c.b16 %v7868, %v7866
    %v7919 = vpack.c.b16 %v7869, %v7867
    %v7920 = vpack.c.b16 %v7872, %v7870
    %v7921 = vpack.c.b16 %v7873, %v7871
    %v7922 = vpack.c.b16 %v7876, %v7874
    %v7923 = vpack.c.b16 %v7877, %v7875
    %v7924 = vpack.c.b16 %v7880, %v7878
    %v7925 = vpack.c.b16 %v7881, %v7879
    %v7926 = vpack.c.b16 %v7884, %v7882
    %v7927 = vpack.c.b16 %v7885, %v7883
    %v7928 = vpack.c.b16 %v7888, %v7886
    %v7929 = vpack.c.b16 %v7889, %v7887
    %v7930 = vpack.c.b16 %v7892, %v7890
    %v7931 = vpack.c.b16 %v7893, %v7891
    %v7932 = vpack.c.b16 %v7896, %v7894
    %v7933 = vpack.c.b16 %v7897, %v7895
    %v7934 = vpack.c.b16 %v7900, %v7898
    %v7935 = vpack.c.b16 %v7901, %v7899
    %v7936 = vpack.c.b16 %v7904, %v7902
    %v7937 = vpack.c.b16 %v7905, %v7903
    %7970 = vmatprep.subr.bf16.mxu0 %v7921
    %7971 = vmatpush1.bf16.msra.mxu0 %v7920
    %7972 = vmatprep.subr.bf16.mxu0 %v7919
    %7973 = vmatpush1.bf16.msra.mxu0 %v7918
    %7974 = vmatprep.subr.bf16.mxu0 %v7917
    %7975 = vmatpush1.bf16.msra.mxu0 %v7916
    %7976 = vmatprep.subr.bf16.mxu0 %v7915
    %7977 = vmatpush1.bf16.msra.mxu0 %v7914
    %7978 = vmatprep.subr.bf16.mxu0 %v7913
    %7979 = vmatpush1.bf16.msra.mxu0 %v7912
    %7980 = vmatprep.subr.bf16.mxu0 %v7911
    %7981 = vmatpush1.bf16.msra.mxu0 %v7910
    %7982 = vmatprep.subr.bf16.mxu0 %v7909
    %7983 = vmatpush1.bf16.msra.mxu0 %v7908
    %7984 = vmatprep.subr.bf16.mxu0 %v7907
    %7985 = vmatpush1.bf16.msra.mxu0 %v7906
    %7986 = vmatprep.subr.bf16.mxu0 %v7937
    %7987 = vmatpush2.bf16.msra.mxu0 %v7936
    %7988 = vmatprep.subr.bf16.mxu0 %v7935
    %7989 = vmatpush2.bf16.msra.mxu0 %v7934
    %7990 = vmatprep.subr.bf16.mxu0 %v7933
    %7991 = vmatpush2.bf16.msra.mxu0 %v7932
    %7992 = vmatprep.subr.bf16.mxu0 %v7931
    %7993 = vmatpush2.bf16.msra.mxu0 %v7930
    %7994 = vmatprep.subr.bf16.mxu0 %v7929
    %7995 = vmatpush2.bf16.msra.mxu0 %v7928
    %7996 = vmatprep.subr.bf16.mxu0 %v7927
    %7997 = vmatpush2.bf16.msra.mxu0 %v7926
    %7998 = vmatprep.subr.bf16.mxu0 %v7925
    %7999 = vmatpush2.bf16.msra.mxu0 %v7924
    %8000 = vmatprep.subr.bf16.mxu0 %v7923
    %8001 = vmatpush2.bf16.msra.mxu0 %v7922
    %8002 = vmatprep.mubr.bf16.mxu0 %v7777
    %8003 = vmatmul.mubr.bf16.gmra.mxu0 %v7776
    %v8004 = vpop.f32.mrf.mxu0
    %v8005 = vadd.f32 0.0, %v8004
    %v8006 = vpop.f32.mrf.mxu0
    %v8007 = vadd.f32 0.0, %v8006
    %v8008 = vpop.f32.mrf.mxu0
    %v8009 = vpop.f32.mrf.mxu0
    %8010 = vdwg.mxu0
    %v8011 = vadd.f32 %v7774, %v8005
    %v8012 = vadd.f32 %v7775, %v8007
    %v8013 = vpack.c.bf16 %v6804, %v6804
    %v8014 = vpack.c.bf16 %v6806, %v6806
    %v8015 = vld [vmem:[#allocation3 + $0x500] sm:$0xff]
    %v8016 = vld [vmem:[#allocation3 + $0x508] sm:$0xff]
    %v8017 = vld [vmem:[#allocation3 + $0x510] sm:$0xff]
    %v8018 = vld [vmem:[#allocation3 + $0x518] sm:$0xff]
    %v8019 = vld [vmem:[#allocation3 + $0x520] sm:$0xff]
    %v8020 = vld [vmem:[#allocation3 + $0x528] sm:$0xff]
    %v8021 = vld [vmem:[#allocation3 + $0x530] sm:$0xff]
    %v8022 = vld [vmem:[#allocation3 + $0x538] sm:$0xff]
    %v8023 = vld [vmem:[#allocation3 + $0x540] sm:$0xff]
    %v8024 = vld [vmem:[#allocation3 + $0x548] sm:$0xff]
    %v8025 = vld [vmem:[#allocation3 + $0x550] sm:$0xff]
    %v8026 = vld [vmem:[#allocation3 + $0x558] sm:$0xff]
    %v8027 = vld [vmem:[#allocation3 + $0x560] sm:$0xff]
    %v8028 = vld [vmem:[#allocation3 + $0x568] sm:$0xff]
    %v8029 = vld [vmem:[#allocation3 + $0x570] sm:$0xff]
    %v8030 = vld [vmem:[#allocation3 + $0x578] sm:$0xff]
    %v8031 = vld [vmem:[#allocation3 + $0x580] sm:$0xff]
    %v8032 = vld [vmem:[#allocation3 + $0x588] sm:$0xff]
    %v8033 = vld [vmem:[#allocation3 + $0x590] sm:$0xff]
    %v8034 = vld [vmem:[#allocation3 + $0x598] sm:$0xff]
    %v8035 = vld [vmem:[#allocation3 + $0x5a0] sm:$0xff]
    %v8036 = vld [vmem:[#allocation3 + $0x5a8] sm:$0xff]
    %v8037 = vld [vmem:[#allocation3 + $0x5b0] sm:$0xff]
    %v8038 = vld [vmem:[#allocation3 + $0x5b8] sm:$0xff]
    %v8039 = vld [vmem:[#allocation3 + $0x5c0] sm:$0xff]
    %v8040 = vld [vmem:[#allocation3 + $0x5c8] sm:$0xff]
    %v8041 = vld [vmem:[#allocation3 + $0x5d0] sm:$0xff]
    %v8042 = vld [vmem:[#allocation3 + $0x5d8] sm:$0xff]
    %v8043 = vld [vmem:[#allocation3 + $0x5e0] sm:$0xff]
    %v8044 = vld [vmem:[#allocation3 + $0x5e8] sm:$0xff]
    %v8045 = vld [vmem:[#allocation3 + $0x5f0] sm:$0xff]
    %v8046 = vld [vmem:[#allocation3 + $0x5f8] sm:$0xff]
    %v8079 = vunpack.c.l.b16 %v8015
    %v8080 = vunpack.c.h.b16 %v8015
    %v8081 = vunpack.c.l.b16 %v8016
    %v8082 = vunpack.c.h.b16 %v8016
    %v8083 = vunpack.c.l.b16 %v8017
    %v8084 = vunpack.c.h.b16 %v8017
    %v8085 = vunpack.c.l.b16 %v8018
    %v8086 = vunpack.c.h.b16 %v8018
    %v8087 = vunpack.c.l.b16 %v8019
    %v8088 = vunpack.c.h.b16 %v8019
    %v8089 = vunpack.c.l.b16 %v8020
    %v8090 = vunpack.c.h.b16 %v8020
    %v8091 = vunpack.c.l.b16 %v8021
    %v8092 = vunpack.c.h.b16 %v8021
    %v8093 = vunpack.c.l.b16 %v8022
    %v8094 = vunpack.c.h.b16 %v8022
    %v8095 = vunpack.c.l.b16 %v8023
    %v8096 = vunpack.c.h.b16 %v8023
    %v8097 = vunpack.c.l.b16 %v8024
    %v8098 = vunpack.c.h.b16 %v8024
    %v8099 = vunpack.c.l.b16 %v8025
    %v8100 = vunpack.c.h.b16 %v8025
    %v8101 = vunpack.c.l.b16 %v8026
    %v8102 = vunpack.c.h.b16 %v8026
    %v8103 = vunpack.c.l.b16 %v8027
    %v8104 = vunpack.c.h.b16 %v8027
    %v8105 = vunpack.c.l.b16 %v8028
    %v8106 = vunpack.c.h.b16 %v8028
    %v8107 = vunpack.c.l.b16 %v8029
    %v8108 = vunpack.c.h.b16 %v8029
    %v8109 = vunpack.c.l.b16 %v8030
    %v8110 = vunpack.c.h.b16 %v8030
    %v8111 = vunpack.c.l.b16 %v8031
    %v8112 = vunpack.c.h.b16 %v8031
    %v8113 = vunpack.c.l.b16 %v8032
    %v8114 = vunpack.c.h.b16 %v8032
    %v8115 = vunpack.c.l.b16 %v8033
    %v8116 = vunpack.c.h.b16 %v8033
    %v8117 = vunpack.c.l.b16 %v8034
    %v8118 = vunpack.c.h.b16 %v8034
    %v8119 = vunpack.c.l.b16 %v8035
    %v8120 = vunpack.c.h.b16 %v8035
    %v8121 = vunpack.c.l.b16 %v8036
    %v8122 = vunpack.c.h.b16 %v8036
    %v8123 = vunpack.c.l.b16 %v8037
    %v8124 = vunpack.c.h.b16 %v8037
    %v8125 = vunpack.c.l.b16 %v8038
    %v8126 = vunpack.c.h.b16 %v8038
    %v8127 = vunpack.c.l.b16 %v8039
    %v8128 = vunpack.c.h.b16 %v8039
    %v8129 = vunpack.c.l.b16 %v8040
    %v8130 = vunpack.c.h.b16 %v8040
    %v8131 = vunpack.c.l.b16 %v8041
    %v8132 = vunpack.c.h.b16 %v8041
    %v8133 = vunpack.c.l.b16 %v8042
    %v8134 = vunpack.c.h.b16 %v8042
    %v8135 = vunpack.c.l.b16 %v8043
    %v8136 = vunpack.c.h.b16 %v8043
    %v8137 = vunpack.c.l.b16 %v8044
    %v8138 = vunpack.c.h.b16 %v8044
    %v8139 = vunpack.c.l.b16 %v8045
    %v8140 = vunpack.c.h.b16 %v8045
    %v8141 = vunpack.c.l.b16 %v8046
    %v8142 = vunpack.c.h.b16 %v8046
    %v8143 = vpack.c.b16 %v8081, %v8079
    %v8144 = vpack.c.b16 %v8082, %v8080
    %v8145 = vpack.c.b16 %v8085, %v8083
    %v8146 = vpack.c.b16 %v8086, %v8084
    %v8147 = vpack.c.b16 %v8089, %v8087
    %v8148 = vpack.c.b16 %v8090, %v8088
    %v8149 = vpack.c.b16 %v8093, %v8091
    %v8150 = vpack.c.b16 %v8094, %v8092
    %v8151 = vpack.c.b16 %v8097, %v8095
    %v8152 = vpack.c.b16 %v8098, %v8096
    %v8153 = vpack.c.b16 %v8101, %v8099
    %v8154 = vpack.c.b16 %v8102, %v8100
    %v8155 = vpack.c.b16 %v8105, %v8103
    %v8156 = vpack.c.b16 %v8106, %v8104
    %v8157 = vpack.c.b16 %v8109, %v8107
    %v8158 = vpack.c.b16 %v8110, %v8108
    %v8159 = vpack.c.b16 %v8113, %v8111
    %v8160 = vpack.c.b16 %v8114, %v8112
    %v8161 = vpack.c.b16 %v8117, %v8115
    %v8162 = vpack.c.b16 %v8118, %v8116
    %v8163 = vpack.c.b16 %v8121, %v8119
    %v8164 = vpack.c.b16 %v8122, %v8120
    %v8165 = vpack.c.b16 %v8125, %v8123
    %v8166 = vpack.c.b16 %v8126, %v8124
    %v8167 = vpack.c.b16 %v8129, %v8127
    %v8168 = vpack.c.b16 %v8130, %v8128
    %v8169 = vpack.c.b16 %v8133, %v8131
    %v8170 = vpack.c.b16 %v8134, %v8132
    %v8171 = vpack.c.b16 %v8137, %v8135
    %v8172 = vpack.c.b16 %v8138, %v8136
    %v8173 = vpack.c.b16 %v8141, %v8139
    %v8174 = vpack.c.b16 %v8142, %v8140
    %8207 = vmatprep.subr.bf16.mxu0 %v8158
    %8208 = vmatpush1.bf16.msra.mxu0 %v8157
    %8209 = vmatprep.subr.bf16.mxu0 %v8156
    %8210 = vmatpush1.bf16.msra.mxu0 %v8155
    %8211 = vmatprep.subr.bf16.mxu0 %v8154
    %8212 = vmatpush1.bf16.msra.mxu0 %v8153
    %8213 = vmatprep.subr.bf16.mxu0 %v8152
    %8214 = vmatpush1.bf16.msra.mxu0 %v8151
    %8215 = vmatprep.subr.bf16.mxu0 %v8150
    %8216 = vmatpush1.bf16.msra.mxu0 %v8149
    %8217 = vmatprep.subr.bf16.mxu0 %v8148
    %8218 = vmatpush1.bf16.msra.mxu0 %v8147
    %8219 = vmatprep.subr.bf16.mxu0 %v8146
    %8220 = vmatpush1.bf16.msra.mxu0 %v8145
    %8221 = vmatprep.subr.bf16.mxu0 %v8144
    %8222 = vmatpush1.bf16.msra.mxu0 %v8143
    %8223 = vmatprep.subr.bf16.mxu0 %v8174
    %8224 = vmatpush2.bf16.msra.mxu0 %v8173
    %8225 = vmatprep.subr.bf16.mxu0 %v8172
    %8226 = vmatpush2.bf16.msra.mxu0 %v8171
    %8227 = vmatprep.subr.bf16.mxu0 %v8170
    %8228 = vmatpush2.bf16.msra.mxu0 %v8169
    %8229 = vmatprep.subr.bf16.mxu0 %v8168
    %8230 = vmatpush2.bf16.msra.mxu0 %v8167
    %8231 = vmatprep.subr.bf16.mxu0 %v8166
    %8232 = vmatpush2.bf16.msra.mxu0 %v8165
    %8233 = vmatprep.subr.bf16.mxu0 %v8164
    %8234 = vmatpush2.bf16.msra.mxu0 %v8163
    %8235 = vmatprep.subr.bf16.mxu0 %v8162
    %8236 = vmatpush2.bf16.msra.mxu0 %v8161
    %8237 = vmatprep.subr.bf16.mxu0 %v8160
    %8238 = vmatpush2.bf16.msra.mxu0 %v8159
    %8239 = vmatprep.mubr.bf16.mxu0 %v8014
    %8240 = vmatmul.mubr.bf16.gmra.mxu0 %v8013
    %v8241 = vpop.f32.mrf.mxu0
    %v8242 = vadd.f32 0.0, %v8241
    %v8243 = vpop.f32.mrf.mxu0
    %v8244 = vadd.f32 0.0, %v8243
    %v8245 = vpop.f32.mrf.mxu0
    %v8246 = vpop.f32.mrf.mxu0
    %8247 = vdwg.mxu0
    %v8248 = vadd.f32 %v8011, %v8242
    %v8249 = vadd.f32 %v8012, %v8244
    %v8250 = vpack.c.bf16 %v6810, %v6810
    %v8251 = vpack.c.bf16 %v6812, %v6812
    %v8252 = vld [vmem:[#allocation3 + $0x600] sm:$0xff]
    %v8253 = vld [vmem:[#allocation3 + $0x608] sm:$0xff]
    %v8254 = vld [vmem:[#allocation3 + $0x610] sm:$0xff]
    %v8255 = vld [vmem:[#allocation3 + $0x618] sm:$0xff]
    %v8256 = vld [vmem:[#allocation3 + $0x620] sm:$0xff]
    %v8257 = vld [vmem:[#allocation3 + $0x628] sm:$0xff]
    %v8258 = vld [vmem:[#allocation3 + $0x630] sm:$0xff]
    %v8259 = vld [vmem:[#allocation3 + $0x638] sm:$0xff]
    %v8260 = vld [vmem:[#allocation3 + $0x640] sm:$0xff]
    %v8261 = vld [vmem:[#allocation3 + $0x648] sm:$0xff]
    %v8262 = vld [vmem:[#allocation3 + $0x650] sm:$0xff]
    %v8263 = vld [vmem:[#allocation3 + $0x658] sm:$0xff]
    %v8264 = vld [vmem:[#allocation3 + $0x660] sm:$0xff]
    %v8265 = vld [vmem:[#allocation3 + $0x668] sm:$0xff]
    %v8266 = vld [vmem:[#allocation3 + $0x670] sm:$0xff]
    %v8267 = vld [vmem:[#allocation3 + $0x678] sm:$0xff]
    %v8268 = vld [vmem:[#allocation3 + $0x680] sm:$0xff]
    %v8269 = vld [vmem:[#allocation3 + $0x688] sm:$0xff]
    %v8270 = vld [vmem:[#allocation3 + $0x690] sm:$0xff]
    %v8271 = vld [vmem:[#allocation3 + $0x698] sm:$0xff]
    %v8272 = vld [vmem:[#allocation3 + $0x6a0] sm:$0xff]
    %v8273 = vld [vmem:[#allocation3 + $0x6a8] sm:$0xff]
    %v8274 = vld [vmem:[#allocation3 + $0x6b0] sm:$0xff]
    %v8275 = vld [vmem:[#allocation3 + $0x6b8] sm:$0xff]
    %v8276 = vld [vmem:[#allocation3 + $0x6c0] sm:$0xff]
    %v8277 = vld [vmem:[#allocation3 + $0x6c8] sm:$0xff]
    %v8278 = vld [vmem:[#allocation3 + $0x6d0] sm:$0xff]
    %v8279 = vld [vmem:[#allocation3 + $0x6d8] sm:$0xff]
    %v8280 = vld [vmem:[#allocation3 + $0x6e0] sm:$0xff]
    %v8281 = vld [vmem:[#allocation3 + $0x6e8] sm:$0xff]
    %v8282 = vld [vmem:[#allocation3 + $0x6f0] sm:$0xff]
    %v8283 = vld [vmem:[#allocation3 + $0x6f8] sm:$0xff]
    %v8316 = vunpack.c.l.b16 %v8252
    %v8317 = vunpack.c.h.b16 %v8252
    %v8318 = vunpack.c.l.b16 %v8253
    %v8319 = vunpack.c.h.b16 %v8253
    %v8320 = vunpack.c.l.b16 %v8254
    %v8321 = vunpack.c.h.b16 %v8254
    %v8322 = vunpack.c.l.b16 %v8255
    %v8323 = vunpack.c.h.b16 %v8255
    %v8324 = vunpack.c.l.b16 %v8256
    %v8325 = vunpack.c.h.b16 %v8256
    %v8326 = vunpack.c.l.b16 %v8257
    %v8327 = vunpack.c.h.b16 %v8257
    %v8328 = vunpack.c.l.b16 %v8258
    %v8329 = vunpack.c.h.b16 %v8258
    %v8330 = vunpack.c.l.b16 %v8259
    %v8331 = vunpack.c.h.b16 %v8259
    %v8332 = vunpack.c.l.b16 %v8260
    %v8333 = vunpack.c.h.b16 %v8260
    %v8334 = vunpack.c.l.b16 %v8261
    %v8335 = vunpack.c.h.b16 %v8261
    %v8336 = vunpack.c.l.b16 %v8262
    %v8337 = vunpack.c.h.b16 %v8262
    %v8338 = vunpack.c.l.b16 %v8263
    %v8339 = vunpack.c.h.b16 %v8263
    %v8340 = vunpack.c.l.b16 %v8264
    %v8341 = vunpack.c.h.b16 %v8264
    %v8342 = vunpack.c.l.b16 %v8265
    %v8343 = vunpack.c.h.b16 %v8265
    %v8344 = vunpack.c.l.b16 %v8266
    %v8345 = vunpack.c.h.b16 %v8266
    %v8346 = vunpack.c.l.b16 %v8267
    %v8347 = vunpack.c.h.b16 %v8267
    %v8348 = vunpack.c.l.b16 %v8268
    %v8349 = vunpack.c.h.b16 %v8268
    %v8350 = vunpack.c.l.b16 %v8269
    %v8351 = vunpack.c.h.b16 %v8269
    %v8352 = vunpack.c.l.b16 %v8270
    %v8353 = vunpack.c.h.b16 %v8270
    %v8354 = vunpack.c.l.b16 %v8271
    %v8355 = vunpack.c.h.b16 %v8271
    %v8356 = vunpack.c.l.b16 %v8272
    %v8357 = vunpack.c.h.b16 %v8272
    %v8358 = vunpack.c.l.b16 %v8273
    %v8359 = vunpack.c.h.b16 %v8273
    %v8360 = vunpack.c.l.b16 %v8274
    %v8361 = vunpack.c.h.b16 %v8274
    %v8362 = vunpack.c.l.b16 %v8275
    %v8363 = vunpack.c.h.b16 %v8275
    %v8364 = vunpack.c.l.b16 %v8276
    %v8365 = vunpack.c.h.b16 %v8276
    %v8366 = vunpack.c.l.b16 %v8277
    %v8367 = vunpack.c.h.b16 %v8277
    %v8368 = vunpack.c.l.b16 %v8278
    %v8369 = vunpack.c.h.b16 %v8278
    %v8370 = vunpack.c.l.b16 %v8279
    %v8371 = vunpack.c.h.b16 %v8279
    %v8372 = vunpack.c.l.b16 %v8280
    %v8373 = vunpack.c.h.b16 %v8280
    %v8374 = vunpack.c.l.b16 %v8281
    %v8375 = vunpack.c.h.b16 %v8281
    %v8376 = vunpack.c.l.b16 %v8282
    %v8377 = vunpack.c.h.b16 %v8282
    %v8378 = vunpack.c.l.b16 %v8283
    %v8379 = vunpack.c.h.b16 %v8283
    %v8380 = vpack.c.b16 %v8318, %v8316
    %v8381 = vpack.c.b16 %v8319, %v8317
    %v8382 = vpack.c.b16 %v8322, %v8320
    %v8383 = vpack.c.b16 %v8323, %v8321
    %v8384 = vpack.c.b16 %v8326, %v8324
    %v8385 = vpack.c.b16 %v8327, %v8325
    %v8386 = vpack.c.b16 %v8330, %v8328
    %v8387 = vpack.c.b16 %v8331, %v8329
    %v8388 = vpack.c.b16 %v8334, %v8332
    %v8389 = vpack.c.b16 %v8335, %v8333
    %v8390 = vpack.c.b16 %v8338, %v8336
    %v8391 = vpack.c.b16 %v8339, %v8337
    %v8392 = vpack.c.b16 %v8342, %v8340
    %v8393 = vpack.c.b16 %v8343, %v8341
    %v8394 = vpack.c.b16 %v8346, %v8344
    %v8395 = vpack.c.b16 %v8347, %v8345
    %v8396 = vpack.c.b16 %v8350, %v8348
    %v8397 = vpack.c.b16 %v8351, %v8349
    %v8398 = vpack.c.b16 %v8354, %v8352
    %v8399 = vpack.c.b16 %v8355, %v8353
    %v8400 = vpack.c.b16 %v8358, %v8356
    %v8401 = vpack.c.b16 %v8359, %v8357
    %v8402 = vpack.c.b16 %v8362, %v8360
    %v8403 = vpack.c.b16 %v8363, %v8361
    %v8404 = vpack.c.b16 %v8366, %v8364
    %v8405 = vpack.c.b16 %v8367, %v8365
    %v8406 = vpack.c.b16 %v8370, %v8368
    %v8407 = vpack.c.b16 %v8371, %v8369
    %v8408 = vpack.c.b16 %v8374, %v8372
    %v8409 = vpack.c.b16 %v8375, %v8373
    %v8410 = vpack.c.b16 %v8378, %v8376
    %v8411 = vpack.c.b16 %v8379, %v8377
    %8444 = vmatprep.subr.bf16.mxu0 %v8395
    %8445 = vmatpush1.bf16.msra.mxu0 %v8394
    %8446 = vmatprep.subr.bf16.mxu0 %v8393
    %8447 = vmatpush1.bf16.msra.mxu0 %v8392
    %8448 = vmatprep.subr.bf16.mxu0 %v8391
    %8449 = vmatpush1.bf16.msra.mxu0 %v8390
    %8450 = vmatprep.subr.bf16.mxu0 %v8389
    %8451 = vmatpush1.bf16.msra.mxu0 %v8388
    %8452 = vmatprep.subr.bf16.mxu0 %v8387
    %8453 = vmatpush1.bf16.msra.mxu0 %v8386
    %8454 = vmatprep.subr.bf16.mxu0 %v8385
    %8455 = vmatpush1.bf16.msra.mxu0 %v8384
    %8456 = vmatprep.subr.bf16.mxu0 %v8383
    %8457 = vmatpush1.bf16.msra.mxu0 %v8382
    %8458 = vmatprep.subr.bf16.mxu0 %v8381
    %8459 = vmatpush1.bf16.msra.mxu0 %v8380
    %8460 = vmatprep.subr.bf16.mxu0 %v8411
    %8461 = vmatpush2.bf16.msra.mxu0 %v8410
    %8462 = vmatprep.subr.bf16.mxu0 %v8409
    %8463 = vmatpush2.bf16.msra.mxu0 %v8408
    %8464 = vmatprep.subr.bf16.mxu0 %v8407
    %8465 = vmatpush2.bf16.msra.mxu0 %v8406
    %8466 = vmatprep.subr.bf16.mxu0 %v8405
    %8467 = vmatpush2.bf16.msra.mxu0 %v8404
    %8468 = vmatprep.subr.bf16.mxu0 %v8403
    %8469 = vmatpush2.bf16.msra.mxu0 %v8402
    %8470 = vmatprep.subr.bf16.mxu0 %v8401
    %8471 = vmatpush2.bf16.msra.mxu0 %v8400
    %8472 = vmatprep.subr.bf16.mxu0 %v8399
    %8473 = vmatpush2.bf16.msra.mxu0 %v8398
    %8474 = vmatprep.subr.bf16.mxu0 %v8397
    %8475 = vmatpush2.bf16.msra.mxu0 %v8396
    %8476 = vmatprep.mubr.bf16.mxu0 %v8251
    %8477 = vmatmul.mubr.bf16.gmra.mxu0 %v8250
    %v8478 = vpop.f32.mrf.mxu0
    %v8479 = vadd.f32 0.0, %v8478
    %v8480 = vpop.f32.mrf.mxu0
    %v8481 = vadd.f32 0.0, %v8480
    %v8482 = vpop.f32.mrf.mxu0
    %v8483 = vpop.f32.mrf.mxu0
    %8484 = vdwg.mxu0
    %v8485 = vadd.f32 %v8248, %v8479
    %v8486 = vadd.f32 %v8249, %v8481
    %v8487 = vpack.c.bf16 %v6814, %v6814
    %v8488 = vpack.c.bf16 %v6816, %v6816
    %v8489 = vld [vmem:[#allocation3 + $0x700] sm:$0xff]
    %v8490 = vld [vmem:[#allocation3 + $0x708] sm:$0xff]
    %v8491 = vld [vmem:[#allocation3 + $0x710] sm:$0xff]
    %v8492 = vld [vmem:[#allocation3 + $0x718] sm:$0xff]
    %v8493 = vld [vmem:[#allocation3 + $0x720] sm:$0xff]
    %v8494 = vld [vmem:[#allocation3 + $0x728] sm:$0xff]
    %v8495 = vld [vmem:[#allocation3 + $0x730] sm:$0xff]
    %v8496 = vld [vmem:[#allocation3 + $0x738] sm:$0xff]
    %v8497 = vld [vmem:[#allocation3 + $0x740] sm:$0xff]
    %v8498 = vld [vmem:[#allocation3 + $0x748] sm:$0xff]
    %v8499 = vld [vmem:[#allocation3 + $0x750] sm:$0xff]
    %v8500 = vld [vmem:[#allocation3 + $0x758] sm:$0xff]
    %v8501 = vld [vmem:[#allocation3 + $0x760] sm:$0xff]
    %v8502 = vld [vmem:[#allocation3 + $0x768] sm:$0xff]
    %v8503 = vld [vmem:[#allocation3 + $0x770] sm:$0xff]
    %v8504 = vld [vmem:[#allocation3 + $0x778] sm:$0xff]
    %v8505 = vld [vmem:[#allocation3 + $0x780] sm:$0xff]
    %v8506 = vld [vmem:[#allocation3 + $0x788] sm:$0xff]
    %v8507 = vld [vmem:[#allocation3 + $0x790] sm:$0xff]
    %v8508 = vld [vmem:[#allocation3 + $0x798] sm:$0xff]
    %v8509 = vld [vmem:[#allocation3 + $0x7a0] sm:$0xff]
    %v8510 = vld [vmem:[#allocation3 + $0x7a8] sm:$0xff]
    %v8511 = vld [vmem:[#allocation3 + $0x7b0] sm:$0xff]
    %v8512 = vld [vmem:[#allocation3 + $0x7b8] sm:$0xff]
    %v8513 = vld [vmem:[#allocation3 + $0x7c0] sm:$0xff]
    %v8514 = vld [vmem:[#allocation3 + $0x7c8] sm:$0xff]
    %v8515 = vld [vmem:[#allocation3 + $0x7d0] sm:$0xff]
    %v8516 = vld [vmem:[#allocation3 + $0x7d8] sm:$0xff]
    %v8517 = vld [vmem:[#allocation3 + $0x7e0] sm:$0xff]
    %v8518 = vld [vmem:[#allocation3 + $0x7e8] sm:$0xff]
    %v8519 = vld [vmem:[#allocation3 + $0x7f0] sm:$0xff]
    %v8520 = vld [vmem:[#allocation3 + $0x7f8] sm:$0xff]
    %v8553 = vunpack.c.l.b16 %v8489
    %v8554 = vunpack.c.h.b16 %v8489
    %v8555 = vunpack.c.l.b16 %v8490
    %v8556 = vunpack.c.h.b16 %v8490
    %v8557 = vunpack.c.l.b16 %v8491
    %v8558 = vunpack.c.h.b16 %v8491
    %v8559 = vunpack.c.l.b16 %v8492
    %v8560 = vunpack.c.h.b16 %v8492
    %v8561 = vunpack.c.l.b16 %v8493
    %v8562 = vunpack.c.h.b16 %v8493
    %v8563 = vunpack.c.l.b16 %v8494
    %v8564 = vunpack.c.h.b16 %v8494
    %v8565 = vunpack.c.l.b16 %v8495
    %v8566 = vunpack.c.h.b16 %v8495
    %v8567 = vunpack.c.l.b16 %v8496
    %v8568 = vunpack.c.h.b16 %v8496
    %v8569 = vunpack.c.l.b16 %v8497
    %v8570 = vunpack.c.h.b16 %v8497
    %v8571 = vunpack.c.l.b16 %v8498
    %v8572 = vunpack.c.h.b16 %v8498
    %v8573 = vunpack.c.l.b16 %v8499
    %v8574 = vunpack.c.h.b16 %v8499
    %v8575 = vunpack.c.l.b16 %v8500
    %v8576 = vunpack.c.h.b16 %v8500
    %v8577 = vunpack.c.l.b16 %v8501
    %v8578 = vunpack.c.h.b16 %v8501
    %v8579 = vunpack.c.l.b16 %v8502
    %v8580 = vunpack.c.h.b16 %v8502
    %v8581 = vunpack.c.l.b16 %v8503
    %v8582 = vunpack.c.h.b16 %v8503
    %v8583 = vunpack.c.l.b16 %v8504
    %v8584 = vunpack.c.h.b16 %v8504
    %v8585 = vunpack.c.l.b16 %v8505
    %v8586 = vunpack.c.h.b16 %v8505
    %v8587 = vunpack.c.l.b16 %v8506
    %v8588 = vunpack.c.h.b16 %v8506
    %v8589 = vunpack.c.l.b16 %v8507
    %v8590 = vunpack.c.h.b16 %v8507
    %v8591 = vunpack.c.l.b16 %v8508
    %v8592 = vunpack.c.h.b16 %v8508
    %v8593 = vunpack.c.l.b16 %v8509
    %v8594 = vunpack.c.h.b16 %v8509
    %v8595 = vunpack.c.l.b16 %v8510
    %v8596 = vunpack.c.h.b16 %v8510
    %v8597 = vunpack.c.l.b16 %v8511
    %v8598 = vunpack.c.h.b16 %v8511
    %v8599 = vunpack.c.l.b16 %v8512
    %v8600 = vunpack.c.h.b16 %v8512
    %v8601 = vunpack.c.l.b16 %v8513
    %v8602 = vunpack.c.h.b16 %v8513
    %v8603 = vunpack.c.l.b16 %v8514
    %v8604 = vunpack.c.h.b16 %v8514
    %v8605 = vunpack.c.l.b16 %v8515
    %v8606 = vunpack.c.h.b16 %v8515
    %v8607 = vunpack.c.l.b16 %v8516
    %v8608 = vunpack.c.h.b16 %v8516
    %v8609 = vunpack.c.l.b16 %v8517
    %v8610 = vunpack.c.h.b16 %v8517
    %v8611 = vunpack.c.l.b16 %v8518
    %v8612 = vunpack.c.h.b16 %v8518
    %v8613 = vunpack.c.l.b16 %v8519
    %v8614 = vunpack.c.h.b16 %v8519
    %v8615 = vunpack.c.l.b16 %v8520
    %v8616 = vunpack.c.h.b16 %v8520
    %v8617 = vpack.c.b16 %v8555, %v8553
    %v8618 = vpack.c.b16 %v8556, %v8554
    %v8619 = vpack.c.b16 %v8559, %v8557
    %v8620 = vpack.c.b16 %v8560, %v8558
    %v8621 = vpack.c.b16 %v8563, %v8561
    %v8622 = vpack.c.b16 %v8564, %v8562
    %v8623 = vpack.c.b16 %v8567, %v8565
    %v8624 = vpack.c.b16 %v8568, %v8566
    %v8625 = vpack.c.b16 %v8571, %v8569
    %v8626 = vpack.c.b16 %v8572, %v8570
    %v8627 = vpack.c.b16 %v8575, %v8573
    %v8628 = vpack.c.b16 %v8576, %v8574
    %v8629 = vpack.c.b16 %v8579, %v8577
    %v8630 = vpack.c.b16 %v8580, %v8578
    %v8631 = vpack.c.b16 %v8583, %v8581
    %v8632 = vpack.c.b16 %v8584, %v8582
    %v8633 = vpack.c.b16 %v8587, %v8585
    %v8634 = vpack.c.b16 %v8588, %v8586
    %v8635 = vpack.c.b16 %v8591, %v8589
    %v8636 = vpack.c.b16 %v8592, %v8590
    %v8637 = vpack.c.b16 %v8595, %v8593
    %v8638 = vpack.c.b16 %v8596, %v8594
    %v8639 = vpack.c.b16 %v8599, %v8597
    %v8640 = vpack.c.b16 %v8600, %v8598
    %v8641 = vpack.c.b16 %v8603, %v8601
    %v8642 = vpack.c.b16 %v8604, %v8602
    %v8643 = vpack.c.b16 %v8607, %v8605
    %v8644 = vpack.c.b16 %v8608, %v8606
    %v8645 = vpack.c.b16 %v8611, %v8609
    %v8646 = vpack.c.b16 %v8612, %v8610
    %v8647 = vpack.c.b16 %v8615, %v8613
    %v8648 = vpack.c.b16 %v8616, %v8614
    %8681 = vmatprep.subr.bf16.mxu0 %v8632
    %8682 = vmatpush1.bf16.msra.mxu0 %v8631
    %8683 = vmatprep.subr.bf16.mxu0 %v8630
    %8684 = vmatpush1.bf16.msra.mxu0 %v8629
    %8685 = vmatprep.subr.bf16.mxu0 %v8628
    %8686 = vmatpush1.bf16.msra.mxu0 %v8627
    %8687 = vmatprep.subr.bf16.mxu0 %v8626
    %8688 = vmatpush1.bf16.msra.mxu0 %v8625
    %8689 = vmatprep.subr.bf16.mxu0 %v8624
    %8690 = vmatpush1.bf16.msra.mxu0 %v8623
    %8691 = vmatprep.subr.bf16.mxu0 %v8622
    %8692 = vmatpush1.bf16.msra.mxu0 %v8621
    %8693 = vmatprep.subr.bf16.mxu0 %v8620
    %8694 = vmatpush1.bf16.msra.mxu0 %v8619
    %8695 = vmatprep.subr.bf16.mxu0 %v8618
    %8696 = vmatpush1.bf16.msra.mxu0 %v8617
    %8697 = vmatprep.subr.bf16.mxu0 %v8648
    %8698 = vmatpush2.bf16.msra.mxu0 %v8647
    %8699 = vmatprep.subr.bf16.mxu0 %v8646
    %8700 = vmatpush2.bf16.msra.mxu0 %v8645
    %8701 = vmatprep.subr.bf16.mxu0 %v8644
    %8702 = vmatpush2.bf16.msra.mxu0 %v8643
    %8703 = vmatprep.subr.bf16.mxu0 %v8642
    %8704 = vmatpush2.bf16.msra.mxu0 %v8641
    %8705 = vmatprep.subr.bf16.mxu0 %v8640
    %8706 = vmatpush2.bf16.msra.mxu0 %v8639
    %8707 = vmatprep.subr.bf16.mxu0 %v8638
    %8708 = vmatpush2.bf16.msra.mxu0 %v8637
    %8709 = vmatprep.subr.bf16.mxu0 %v8636
    %8710 = vmatpush2.bf16.msra.mxu0 %v8635
    %8711 = vmatprep.subr.bf16.mxu0 %v8634
    %8712 = vmatpush2.bf16.msra.mxu0 %v8633
    %8713 = vmatprep.mubr.bf16.mxu0 %v8488
    %8714 = vmatmul.mubr.bf16.gmra.mxu0 %v8487
    %v8715 = vpop.f32.mrf.mxu0
    %v8716 = vadd.f32 0.0, %v8715
    %v8717 = vpop.f32.mrf.mxu0
    %v8718 = vadd.f32 0.0, %v8717
    %v8719 = vpop.f32.mrf.mxu0
    %v8720 = vpop.f32.mrf.mxu0
    %8721 = vdwg.mxu0
    %v8722 = vadd.f32 %v8485, %v8716
    %v8723 = vadd.f32 %v8486, %v8718
    %v8724 = vpack.c.bf16 %v6820, %v6820
    %v8725 = vpack.c.bf16 %v6822, %v6822
    %v8726 = vld [vmem:[#allocation3 + $0x800] sm:$0xff]
    %v8727 = vld [vmem:[#allocation3 + $0x808] sm:$0xff]
    %v8728 = vld [vmem:[#allocation3 + $0x810] sm:$0xff]
    %v8729 = vld [vmem:[#allocation3 + $0x818] sm:$0xff]
    %v8730 = vld [vmem:[#allocation3 + $0x820] sm:$0xff]
    %v8731 = vld [vmem:[#allocation3 + $0x828] sm:$0xff]
    %v8732 = vld [vmem:[#allocation3 + $0x830] sm:$0xff]
    %v8733 = vld [vmem:[#allocation3 + $0x838] sm:$0xff]
    %v8734 = vld [vmem:[#allocation3 + $0x840] sm:$0xff]
    %v8735 = vld [vmem:[#allocation3 + $0x848] sm:$0xff]
    %v8736 = vld [vmem:[#allocation3 + $0x850] sm:$0xff]
    %v8737 = vld [vmem:[#allocation3 + $0x858] sm:$0xff]
    %v8738 = vld [vmem:[#allocation3 + $0x860] sm:$0xff]
    %v8739 = vld [vmem:[#allocation3 + $0x868] sm:$0xff]
    %v8740 = vld [vmem:[#allocation3 + $0x870] sm:$0xff]
    %v8741 = vld [vmem:[#allocation3 + $0x878] sm:$0xff]
    %v8742 = vld [vmem:[#allocation3 + $0x880] sm:$0xff]
    %v8743 = vld [vmem:[#allocation3 + $0x888] sm:$0xff]
    %v8744 = vld [vmem:[#allocation3 + $0x890] sm:$0xff]
    %v8745 = vld [vmem:[#allocation3 + $0x898] sm:$0xff]
    %v8746 = vld [vmem:[#allocation3 + $0x8a0] sm:$0xff]
    %v8747 = vld [vmem:[#allocation3 + $0x8a8] sm:$0xff]
    %v8748 = vld [vmem:[#allocation3 + $0x8b0] sm:$0xff]
    %v8749 = vld [vmem:[#allocation3 + $0x8b8] sm:$0xff]
    %v8750 = vld [vmem:[#allocation3 + $0x8c0] sm:$0xff]
    %v8751 = vld [vmem:[#allocation3 + $0x8c8] sm:$0xff]
    %v8752 = vld [vmem:[#allocation3 + $0x8d0] sm:$0xff]
    %v8753 = vld [vmem:[#allocation3 + $0x8d8] sm:$0xff]
    %v8754 = vld [vmem:[#allocation3 + $0x8e0] sm:$0xff]
    %v8755 = vld [vmem:[#allocation3 + $0x8e8] sm:$0xff]
    %v8756 = vld [vmem:[#allocation3 + $0x8f0] sm:$0xff]
    %v8757 = vld [vmem:[#allocation3 + $0x8f8] sm:$0xff]
    %v8790 = vunpack.c.l.b16 %v8726
    %v8791 = vunpack.c.h.b16 %v8726
    %v8792 = vunpack.c.l.b16 %v8727
    %v8793 = vunpack.c.h.b16 %v8727
    %v8794 = vunpack.c.l.b16 %v8728
    %v8795 = vunpack.c.h.b16 %v8728
    %v8796 = vunpack.c.l.b16 %v8729
    %v8797 = vunpack.c.h.b16 %v8729
    %v8798 = vunpack.c.l.b16 %v8730
    %v8799 = vunpack.c.h.b16 %v8730
    %v8800 = vunpack.c.l.b16 %v8731
    %v8801 = vunpack.c.h.b16 %v8731
    %v8802 = vunpack.c.l.b16 %v8732
    %v8803 = vunpack.c.h.b16 %v8732
    %v8804 = vunpack.c.l.b16 %v8733
    %v8805 = vunpack.c.h.b16 %v8733
    %v8806 = vunpack.c.l.b16 %v8734
    %v8807 = vunpack.c.h.b16 %v8734
    %v8808 = vunpack.c.l.b16 %v8735
    %v8809 = vunpack.c.h.b16 %v8735
    %v8810 = vunpack.c.l.b16 %v8736
    %v8811 = vunpack.c.h.b16 %v8736
    %v8812 = vunpack.c.l.b16 %v8737
    %v8813 = vunpack.c.h.b16 %v8737
    %v8814 = vunpack.c.l.b16 %v8738
    %v8815 = vunpack.c.h.b16 %v8738
    %v8816 = vunpack.c.l.b16 %v8739
    %v8817 = vunpack.c.h.b16 %v8739
    %v8818 = vunpack.c.l.b16 %v8740
    %v8819 = vunpack.c.h.b16 %v8740
    %v8820 = vunpack.c.l.b16 %v8741
    %v8821 = vunpack.c.h.b16 %v8741
    %v8822 = vunpack.c.l.b16 %v8742
    %v8823 = vunpack.c.h.b16 %v8742
    %v8824 = vunpack.c.l.b16 %v8743
    %v8825 = vunpack.c.h.b16 %v8743
    %v8826 = vunpack.c.l.b16 %v8744
    %v8827 = vunpack.c.h.b16 %v8744
    %v8828 = vunpack.c.l.b16 %v8745
    %v8829 = vunpack.c.h.b16 %v8745
    %v8830 = vunpack.c.l.b16 %v8746
    %v8831 = vunpack.c.h.b16 %v8746
    %v8832 = vunpack.c.l.b16 %v8747
    %v8833 = vunpack.c.h.b16 %v8747
    %v8834 = vunpack.c.l.b16 %v8748
    %v8835 = vunpack.c.h.b16 %v8748
    %v8836 = vunpack.c.l.b16 %v8749
    %v8837 = vunpack.c.h.b16 %v8749
    %v8838 = vunpack.c.l.b16 %v8750
    %v8839 = vunpack.c.h.b16 %v8750
    %v8840 = vunpack.c.l.b16 %v8751
    %v8841 = vunpack.c.h.b16 %v8751
    %v8842 = vunpack.c.l.b16 %v8752
    %v8843 = vunpack.c.h.b16 %v8752
    %v8844 = vunpack.c.l.b16 %v8753
    %v8845 = vunpack.c.h.b16 %v8753
    %v8846 = vunpack.c.l.b16 %v8754
    %v8847 = vunpack.c.h.b16 %v8754
    %v8848 = vunpack.c.l.b16 %v8755
    %v8849 = vunpack.c.h.b16 %v8755
    %v8850 = vunpack.c.l.b16 %v8756
    %v8851 = vunpack.c.h.b16 %v8756
    %v8852 = vunpack.c.l.b16 %v8757
    %v8853 = vunpack.c.h.b16 %v8757
    %v8854 = vpack.c.b16 %v8792, %v8790
    %v8855 = vpack.c.b16 %v8793, %v8791
    %v8856 = vpack.c.b16 %v8796, %v8794
    %v8857 = vpack.c.b16 %v8797, %v8795
    %v8858 = vpack.c.b16 %v8800, %v8798
    %v8859 = vpack.c.b16 %v8801, %v8799
    %v8860 = vpack.c.b16 %v8804, %v8802
    %v8861 = vpack.c.b16 %v8805, %v8803
    %v8862 = vpack.c.b16 %v8808, %v8806
    %v8863 = vpack.c.b16 %v8809, %v8807
    %v8864 = vpack.c.b16 %v8812, %v8810
    %v8865 = vpack.c.b16 %v8813, %v8811
    %v8866 = vpack.c.b16 %v8816, %v8814
    %v8867 = vpack.c.b16 %v8817, %v8815
    %v8868 = vpack.c.b16 %v8820, %v8818
    %v8869 = vpack.c.b16 %v8821, %v8819
    %v8870 = vpack.c.b16 %v8824, %v8822
    %v8871 = vpack.c.b16 %v8825, %v8823
    %v8872 = vpack.c.b16 %v8828, %v8826
    %v8873 = vpack.c.b16 %v8829, %v8827
    %v8874 = vpack.c.b16 %v8832, %v8830
    %v8875 = vpack.c.b16 %v8833, %v8831
    %v8876 = vpack.c.b16 %v8836, %v8834
    %v8877 = vpack.c.b16 %v8837, %v8835
    %v8878 = vpack.c.b16 %v8840, %v8838
    %v8879 = vpack.c.b16 %v8841, %v8839
    %v8880 = vpack.c.b16 %v8844, %v8842
    %v8881 = vpack.c.b16 %v8845, %v8843
    %v8882 = vpack.c.b16 %v8848, %v8846
    %v8883 = vpack.c.b16 %v8849, %v8847
    %v8884 = vpack.c.b16 %v8852, %v8850
    %v8885 = vpack.c.b16 %v8853, %v8851
    %8918 = vmatprep.subr.bf16.mxu0 %v8869
    %8919 = vmatpush1.bf16.msra.mxu0 %v8868
    %8920 = vmatprep.subr.bf16.mxu0 %v8867
    %8921 = vmatpush1.bf16.msra.mxu0 %v8866
    %8922 = vmatprep.subr.bf16.mxu0 %v8865
    %8923 = vmatpush1.bf16.msra.mxu0 %v8864
    %8924 = vmatprep.subr.bf16.mxu0 %v8863
    %8925 = vmatpush1.bf16.msra.mxu0 %v8862
    %8926 = vmatprep.subr.bf16.mxu0 %v8861
    %8927 = vmatpush1.bf16.msra.mxu0 %v8860
    %8928 = vmatprep.subr.bf16.mxu0 %v8859
    %8929 = vmatpush1.bf16.msra.mxu0 %v8858
    %8930 = vmatprep.subr.bf16.mxu0 %v8857
    %8931 = vmatpush1.bf16.msra.mxu0 %v8856
    %8932 = vmatprep.subr.bf16.mxu0 %v8855
    %8933 = vmatpush1.bf16.msra.mxu0 %v8854
    %8934 = vmatprep.subr.bf16.mxu0 %v8885
    %8935 = vmatpush2.bf16.msra.mxu0 %v8884
    %8936 = vmatprep.subr.bf16.mxu0 %v8883
    %8937 = vmatpush2.bf16.msra.mxu0 %v8882
    %8938 = vmatprep.subr.bf16.mxu0 %v8881
    %8939 = vmatpush2.bf16.msra.mxu0 %v8880
    %8940 = vmatprep.subr.bf16.mxu0 %v8879
    %8941 = vmatpush2.bf16.msra.mxu0 %v8878
    %8942 = vmatprep.subr.bf16.mxu0 %v8877
    %8943 = vmatpush2.bf16.msra.mxu0 %v8876
    %8944 = vmatprep.subr.bf16.mxu0 %v8875
    %8945 = vmatpush2.bf16.msra.mxu0 %v8874
    %8946 = vmatprep.subr.bf16.mxu0 %v8873
    %8947 = vmatpush2.bf16.msra.mxu0 %v8872
    %8948 = vmatprep.subr.bf16.mxu0 %v8871
    %8949 = vmatpush2.bf16.msra.mxu0 %v8870
    %8950 = vmatprep.mubr.bf16.mxu0 %v8725
    %8951 = vmatmul.mubr.bf16.gmra.mxu0 %v8724
    %v8952 = vpop.f32.mrf.mxu0
    %v8953 = vadd.f32 0.0, %v8952
    %v8954 = vpop.f32.mrf.mxu0
    %v8955 = vadd.f32 0.0, %v8954
    %v8956 = vpop.f32.mrf.mxu0
    %v8957 = vpop.f32.mrf.mxu0
    %8958 = vdwg.mxu0
    %v8959 = vadd.f32 %v8722, %v8953
    %v8960 = vadd.f32 %v8723, %v8955
    %v8962 = vlaneseq
    %v8963 = vshrl.u32 %v8962, 7
    %v8964 = vsub.s32 0, %v8963
    %v8965 = vrot.slane %v6831, %v8964
    %v8966 = vlaneseq
    %v8967 = vshrl.u32 %v8966, 7
    %v8968 = vsub.s32 1, %v8967
    %v8969 = vrot.slane %v6831, %v8968
    %v8972 = vadd.f32 %v8959, %v8965
    %v8973 = vadd.f32 %v8960, %v8969
    %v8974 = vmax.f32 %v8972, 0.0
    %v8975 = vmax.f32 %v8973, 0.0
    %v8976 = vpack.c.bf16 %v8974, %v8974
    %v8977 = vpack.c.bf16 %v8975, %v8975
    %v8978 = vld [vmem:[#allocation9 + $0x14] ss:$0 sm:$0xff]
    %v8979 = vld [vmem:[#allocation11 + $0x100] sm:$0xf]
    %v8980 = vld [vmem:[#allocation11 + $0x104] sm:$0xf]
    %v8981 = vld [vmem:[#allocation11 + $0x108] sm:$0xf]
    %v8982 = vld [vmem:[#allocation11 + $0x10c] sm:$0xf]
    %v8983 = vld [vmem:[#allocation11 + $0x110] sm:$0xf]
    %v8984 = vld [vmem:[#allocation11 + $0x114] sm:$0xf]
    %v8985 = vld [vmem:[#allocation11 + $0x118] sm:$0xf]
    %v8986 = vld [vmem:[#allocation11 + $0x11c] sm:$0xf]
    %v8987 = vld [vmem:[#allocation11 + $0x120] sm:$0xf]
    %v8988 = vld [vmem:[#allocation11 + $0x124] sm:$0xf]
    %v8989 = vld [vmem:[#allocation11 + $0x128] sm:$0xf]
    %v8990 = vld [vmem:[#allocation11 + $0x12c] sm:$0xf]
    %v8991 = vld [vmem:[#allocation11 + $0x130] sm:$0xf]
    %v8992 = vld [vmem:[#allocation11 + $0x134] sm:$0xf]
    %v8993 = vld [vmem:[#allocation11 + $0x138] sm:$0xf]
    %v8994 = vld [vmem:[#allocation11 + $0x13c] sm:$0xf]
    %v8995 = vld [vmem:[#allocation11 + $0x140] sm:$0xf]
    %v8996 = vld [vmem:[#allocation11 + $0x144] sm:$0xf]
    %v8997 = vld [vmem:[#allocation11 + $0x148] sm:$0xf]
    %v8998 = vld [vmem:[#allocation11 + $0x14c] sm:$0xf]
    %v8999 = vld [vmem:[#allocation11 + $0x150] sm:$0xf]
    %v9000 = vld [vmem:[#allocation11 + $0x154] sm:$0xf]
    %v9001 = vld [vmem:[#allocation11 + $0x158] sm:$0xf]
    %v9002 = vld [vmem:[#allocation11 + $0x15c] sm:$0xf]
    %v9003 = vld [vmem:[#allocation11 + $0x160] sm:$0xf]
    %v9004 = vld [vmem:[#allocation11 + $0x164] sm:$0xf]
    %v9005 = vld [vmem:[#allocation11 + $0x168] sm:$0xf]
    %v9006 = vld [vmem:[#allocation11 + $0x16c] sm:$0xf]
    %v9007 = vld [vmem:[#allocation11 + $0x170] sm:$0xf]
    %v9008 = vld [vmem:[#allocation11 + $0x174] sm:$0xf]
    %v9009 = vld [vmem:[#allocation11 + $0x178] sm:$0xf]
    %v9010 = vld [vmem:[#allocation11 + $0x17c] sm:$0xf]
    %v9043 = vunpack.c.l.b16 %v8979
    %v9044 = vunpack.c.l.b16 %v8980
    %v9045 = vunpack.c.l.b16 %v8981
    %v9046 = vunpack.c.l.b16 %v8982
    %v9047 = vunpack.c.l.b16 %v8983
    %v9048 = vunpack.c.l.b16 %v8984
    %v9049 = vunpack.c.l.b16 %v8985
    %v9050 = vunpack.c.l.b16 %v8986
    %v9051 = vunpack.c.l.b16 %v8987
    %v9052 = vunpack.c.l.b16 %v8988
    %v9053 = vunpack.c.l.b16 %v8989
    %v9054 = vunpack.c.l.b16 %v8990
    %v9055 = vunpack.c.l.b16 %v8991
    %v9056 = vunpack.c.l.b16 %v8992
    %v9057 = vunpack.c.l.b16 %v8993
    %v9058 = vunpack.c.l.b16 %v8994
    %v9059 = vunpack.c.l.b16 %v8995
    %v9060 = vunpack.c.l.b16 %v8996
    %v9061 = vunpack.c.l.b16 %v8997
    %v9062 = vunpack.c.l.b16 %v8998
    %v9063 = vunpack.c.l.b16 %v8999
    %v9064 = vunpack.c.l.b16 %v9000
    %v9065 = vunpack.c.l.b16 %v9001
    %v9066 = vunpack.c.l.b16 %v9002
    %v9067 = vunpack.c.l.b16 %v9003
    %v9068 = vunpack.c.l.b16 %v9004
    %v9069 = vunpack.c.l.b16 %v9005
    %v9070 = vunpack.c.l.b16 %v9006
    %v9071 = vunpack.c.l.b16 %v9007
    %v9072 = vunpack.c.l.b16 %v9008
    %v9073 = vunpack.c.l.b16 %v9009
    %v9074 = vunpack.c.l.b16 %v9010
    %v9075 = vpack.c.b16 %v9044, %v9043
    %v9076 = vpack.c.b16 %v9046, %v9045
    %v9077 = vpack.c.b16 %v9048, %v9047
    %v9078 = vpack.c.b16 %v9050, %v9049
    %v9079 = vpack.c.b16 %v9052, %v9051
    %v9080 = vpack.c.b16 %v9054, %v9053
    %v9081 = vpack.c.b16 %v9056, %v9055
    %v9082 = vpack.c.b16 %v9058, %v9057
    %v9083 = vpack.c.b16 %v9060, %v9059
    %v9084 = vpack.c.b16 %v9062, %v9061
    %v9085 = vpack.c.b16 %v9064, %v9063
    %v9086 = vpack.c.b16 %v9066, %v9065
    %v9087 = vpack.c.b16 %v9068, %v9067
    %v9088 = vpack.c.b16 %v9070, %v9069
    %v9089 = vpack.c.b16 %v9072, %v9071
    %v9090 = vpack.c.b16 %v9074, %v9073
    %9107 = vmatprep.subr.bf16.mxu0 0
    %9108 = vmatpush1.bf16.msra.mxu0 %v9082
    %9109 = vmatprep.subr.bf16.mxu0 0
    %9110 = vmatpush1.bf16.msra.mxu0 %v9081
    %9111 = vmatprep.subr.bf16.mxu0 0
    %9112 = vmatpush1.bf16.msra.mxu0 %v9080
    %9113 = vmatprep.subr.bf16.mxu0 0
    %9114 = vmatpush1.bf16.msra.mxu0 %v9079
    %9115 = vmatprep.subr.bf16.mxu0 0
    %9116 = vmatpush1.bf16.msra.mxu0 %v9078
    %9117 = vmatprep.subr.bf16.mxu0 0
    %9118 = vmatpush1.bf16.msra.mxu0 %v9077
    %9119 = vmatprep.subr.bf16.mxu0 0
    %9120 = vmatpush1.bf16.msra.mxu0 %v9076
    %9121 = vmatprep.subr.bf16.mxu0 0
    %9122 = vmatpush1.bf16.msra.mxu0 %v9075
    %9123 = vmatprep.subr.bf16.mxu0 0
    %9124 = vmatpush2.bf16.msra.mxu0 %v9090
    %9125 = vmatprep.subr.bf16.mxu0 0
    %9126 = vmatpush2.bf16.msra.mxu0 %v9089
    %9127 = vmatprep.subr.bf16.mxu0 0
    %9128 = vmatpush2.bf16.msra.mxu0 %v9088
    %9129 = vmatprep.subr.bf16.mxu0 0
    %9130 = vmatpush2.bf16.msra.mxu0 %v9087
    %9131 = vmatprep.subr.bf16.mxu0 0
    %9132 = vmatpush2.bf16.msra.mxu0 %v9086
    %9133 = vmatprep.subr.bf16.mxu0 0
    %9134 = vmatpush2.bf16.msra.mxu0 %v9085
    %9135 = vmatprep.subr.bf16.mxu0 0
    %9136 = vmatpush2.bf16.msra.mxu0 %v9084
    %9137 = vmatprep.subr.bf16.mxu0 0
    %9138 = vmatpush2.bf16.msra.mxu0 %v9083
    %9139 = vmatprep.mubr.bf16.mxu0 %v8977
    %9140 = vmatmul.mubr.bf16.gmra.mxu0 %v8976
    %v9141 = vpop.f32.mrf.mxu0
    %v9142 = vadd.f32 %v8978, %v9141
    %v9143 = vpop.f32.mrf.mxu0
    %v9144 = vpop.f32.mrf.mxu0
    %v9145 = vpop.f32.mrf.mxu0
    %9146 = vdwg.mxu0
    %v9147 = vand.u32 2147483647, %v9142
    %v9148 = vsub.f32 0.0, %v9147
    %v9149 = vmul.f32 %v9148, 1.442695
    %v9150 = vpow.pop %v9149
    %vm9151 = vcmp.ge.f32.partialorder %v9142, 0.0
    %v9152 = vadd.f32 %v9150, 1.0
    %v9153 = vrcp.pop %v9152
    %v9154 = vmul.f32 1.0, %v9153
    %v9155 = vmul.f32 %v9150, %v9153
    %v9156 = vsel %vm9151, %v9154, %v9155
    %v9157 = vpack.c.bf16 %v9156, %v9156
    %v9158 = vld [vmem:[#allocation9 + $0x15] ss:$0 sm:$0xff]
    %v9159 = vld [vmem:[#allocation11 + $0x180] sm:$0xf]
    %v9160 = vld [vmem:[#allocation11 + $0x184] sm:$0xf]
    %v9161 = vld [vmem:[#allocation11 + $0x188] sm:$0xf]
    %v9162 = vld [vmem:[#allocation11 + $0x18c] sm:$0xf]
    %v9163 = vld [vmem:[#allocation11 + $0x190] sm:$0xf]
    %v9164 = vld [vmem:[#allocation11 + $0x194] sm:$0xf]
    %v9165 = vld [vmem:[#allocation11 + $0x198] sm:$0xf]
    %v9166 = vld [vmem:[#allocation11 + $0x19c] sm:$0xf]
    %v9167 = vld [vmem:[#allocation11 + $0x1a0] sm:$0xf]
    %v9168 = vld [vmem:[#allocation11 + $0x1a4] sm:$0xf]
    %v9169 = vld [vmem:[#allocation11 + $0x1a8] sm:$0xf]
    %v9170 = vld [vmem:[#allocation11 + $0x1ac] sm:$0xf]
    %v9171 = vld [vmem:[#allocation11 + $0x1b0] sm:$0xf]
    %v9172 = vld [vmem:[#allocation11 + $0x1b4] sm:$0xf]
    %v9173 = vld [vmem:[#allocation11 + $0x1b8] sm:$0xf]
    %v9174 = vld [vmem:[#allocation11 + $0x1bc] sm:$0xf]
    %v9191 = vunpack.c.l.b16 %v9159
    %v9192 = vunpack.c.l.b16 %v9160
    %v9193 = vunpack.c.l.b16 %v9161
    %v9194 = vunpack.c.l.b16 %v9162
    %v9195 = vunpack.c.l.b16 %v9163
    %v9196 = vunpack.c.l.b16 %v9164
    %v9197 = vunpack.c.l.b16 %v9165
    %v9198 = vunpack.c.l.b16 %v9166
    %v9199 = vunpack.c.l.b16 %v9167
    %v9200 = vunpack.c.l.b16 %v9168
    %v9201 = vunpack.c.l.b16 %v9169
    %v9202 = vunpack.c.l.b16 %v9170
    %v9203 = vunpack.c.l.b16 %v9171
    %v9204 = vunpack.c.l.b16 %v9172
    %v9205 = vunpack.c.l.b16 %v9173
    %v9206 = vunpack.c.l.b16 %v9174
    %v9207 = vpack.c.b16 %v9192, %v9191
    %v9208 = vpack.c.b16 %v9194, %v9193
    %v9209 = vpack.c.b16 %v9196, %v9195
    %v9210 = vpack.c.b16 %v9198, %v9197
    %v9211 = vpack.c.b16 %v9200, %v9199
    %v9212 = vpack.c.b16 %v9202, %v9201
    %v9213 = vpack.c.b16 %v9204, %v9203
    %v9214 = vpack.c.b16 %v9206, %v9205
    %9223 = vmatprep.subr.bf16.mxu0 0
    %9224 = vmatpush1.bf16.msra.mxu0 %v9214
    %9225 = vmatprep.subr.bf16.mxu0 0
    %9226 = vmatpush1.bf16.msra.mxu0 %v9213
    %9227 = vmatprep.subr.bf16.mxu0 0
    %9228 = vmatpush1.bf16.msra.mxu0 %v9212
    %9229 = vmatprep.subr.bf16.mxu0 0
    %9230 = vmatpush1.bf16.msra.mxu0 %v9211
    %9231 = vmatprep.subr.bf16.mxu0 0
    %9232 = vmatpush1.bf16.msra.mxu0 %v9210
    %9233 = vmatprep.subr.bf16.mxu0 0
    %9234 = vmatpush1.bf16.msra.mxu0 %v9209
    %9235 = vmatprep.subr.bf16.mxu0 0
    %9236 = vmatpush1.bf16.msra.mxu0 %v9208
    %9237 = vmatprep.subr.bf16.mxu0 0
    %9238 = vmatpush1.bf16.msra.mxu0 %v9207
    %9239 = vmatprep.subr.bf16.mxu0 0
    %9240 = vmatpush2.bf16.msra.mxu0 0
    %9241 = vmatprep.subr.bf16.mxu0 0
    %9242 = vmatpush2.bf16.msra.mxu0 0
    %9243 = vmatprep.subr.bf16.mxu0 0
    %9244 = vmatpush2.bf16.msra.mxu0 0
    %9245 = vmatprep.subr.bf16.mxu0 0
    %9246 = vmatpush2.bf16.msra.mxu0 0
    %9247 = vmatprep.subr.bf16.mxu0 0
    %9248 = vmatpush2.bf16.msra.mxu0 0
    %9249 = vmatprep.subr.bf16.mxu0 0
    %9250 = vmatpush2.bf16.msra.mxu0 0
    %9251 = vmatprep.subr.bf16.mxu0 0
    %9252 = vmatpush2.bf16.msra.mxu0 0
    %9253 = vmatprep.subr.bf16.mxu0 0
    %9254 = vmatpush2.bf16.msra.mxu0 0
    %9255 = vmatprep.mubr.bf16.mxu0 0
    %9256 = vmatmul.mubr.bf16.gmra.mxu0 %v9157
    %v9257 = vpop.f32.mrf.mxu0
    %v9258 = vadd.f32 %v9158, %v9257
    %v9259 = vpop.f32.mrf.mxu0
    %v9260 = vpop.f32.mrf.mxu0
    %v9261 = vpop.f32.mrf.mxu0
    %9262 = vdwg.mxu0
    %9263 = vst [vmem:[%s6] sm:$0xff] %v9258
    // Predicated region
    $region38: #{cnn_forward.1} parent=1 // pred_check
      _
    $region39: #{cnn_forward.1} parent=1 // pred_check_branch
      %9265 = sbr.rel (0) target = $region41
    $region40: #{cnn_forward.1} parent=1 // pred_region
      _
    $region41: #{cnn_forward.1} parent=1 // pred_fallthru
      _
    // Predicated region
    $region42: #{cnn_forward.1} parent=1 // pred_check
      _
    $region43: #{cnn_forward.1} parent=1 // pred_check_branch
      %9267 = sbr.rel (0) target = $region45
    $region44: #{cnn_forward.1} parent=1 // pred_region
      _
    $region45: #{cnn_forward.1} parent=1 // pred_fallthru
      _
    %9268 = vsyncpa [#allocation10], 1
    %9269 = vsyncpa [#allocation12], 1
  %9270 = vsyncmov [#allocation8]
  %s9271 = vpop.sfrf %9270
  %p9272 = scmp.eq.s32.totalorder %s9271, 0
  %p9273 = pneg %p9272
  %9275 = shalt.err (%p9273)
  %s9276 = scalar_lea.sflag [#allocation8], 1
  %9277 = vsyncmov %s9276
  %s9278 = vpop.sfrf %9277
  %p9279 = scmp.eq.s32.totalorder %s9278, 0
  %p9280 = pneg %p9279
  %9282 = shalt.err (%p9280)

</llo_original>
